<compile_context>
chip_gen: v6e
topology: v6e:2x2x1
jax: 0.10.0
libtpu: 0.0.40
codegen_flags: <defaults>
</compile_context>

<pallas_src>
import jax
import jax.numpy as jnp
import numpy as np
from jax.experimental import pallas as pl
from jax.experimental.pallas import tpu as pltpu

C = 32           # DGCM default channel count (MSCA is hard-coded to 32 channels)
BN_EPS = 1e-5    # nn.BatchNorm2d default eps


# --------------------- constant pixel-operator matrices ---------------------

def _shift_ops_T(H, W):
    """T[t], t = kh*3+kw:  (X @ T[t])[:, h*W+w] == Xpad[:, h+kh-1, w+kw-1]
    (zero padding), for X laid out channels-major (C, H*W)."""
    P = H * W
    T = np.zeros((9, P, P), np.float32)
    for kh in range(3):
        for kw in range(3):
            t = kh * 3 + kw
            for h in range(H):
                for w in range(W):
                    hs, ws = h + kh - 1, w + kw - 1
                    if 0 <= hs < H and 0 <= ws < W:
                        T[t, hs * W + ws, h * W + w] = 1.0
    return T


def _pool_op_T(H, W):
    """(X @ PT) == 2x2 / stride-2 average pool of X, channels-major layout."""
    Hl, Wl = H // 2, W // 2
    PT = np.zeros((H * W, Hl * Wl), np.float32)
    for i in range(Hl):
        for j in range(Wl):
            for a in range(2):
                for b in range(2):
                    PT[(2 * i + a) * W + (2 * j + b), i * Wl + j] = 0.25
    return PT


def _upsample_op_T(Hl, Wl):
    """(X_l @ UT) == bilinear x2 upsample, PyTorch align_corners=False
    semantics (half-pixel centers, indices clamped at the border)."""
    H, W = 2 * Hl, 2 * Wl

    def taps(o, n):
        src = (o + 0.5) / 2.0 - 0.5
        f = int(np.floor(src))
        lam = src - f
        return [(min(max(f, 0), n - 1), 1.0 - lam),
                (min(max(f + 1, 0), n - 1), lam)]

    UT = np.zeros((Hl * Wl, H * W), np.float32)
    for h in range(H):
        for w in range(W):
            for ih, wh in taps(h, Hl):
                for iw, ww in taps(w, Wl):
                    UT[ih * Wl + iw, h * W + w] += wh * ww
    return UT


def make_operators(H, W):
    Hl, Wl = H // 2, W // 2
    t_full = _shift_ops_T(H, W)                                  # (9, P, P)
    t_low = _shift_ops_T(Hl, Wl)                                 # (9, Pl, Pl)
    pool_t = _pool_op_T(H, W)                                    # (P, Pl)
    # fold avg-pool + zero-pad + 3x3 tap shift of the low branch into one op
    pool_shift_t = np.einsum("pq,tqr->tpr", pool_t, t_low)       # (9, P, Pl)
    up_t = _upsample_op_T(Hl, Wl)                                # (Pl, P)
    # All entries (0, 1, 0.25, 0.75, 0.5625, 0.1875, 0.0625) are exact in bf16.
    ops = {
        "shift_t": jnp.asarray(t_full, jnp.bfloat16),
        "pool_shift_t": jnp.asarray(pool_shift_t, jnp.bfloat16),
        "up_t": jnp.asarray(up_t, jnp.bfloat16),
    }
    return ops, jnp.asarray(up_t, jnp.float32)


# ------------------------------ parameters -----------------------------------

def make_params(key):
    """Random DGCM parameters: returns (packed-for-kernel, raw-for-reference)."""
    Ch = C // 2
    keys = iter(jax.random.split(key, 64))

    def nrm(shape, s=0.1):
        return s * jax.random.normal(next(keys), shape, jnp.float32)

    def bn_fold(c):
        # eval-mode BatchNorm2d folded into per-channel (scale, bias)
        gamma = 1.0 + nrm((c,))
        beta = nrm((c,))
        mean = nrm((c,))
        var = 0.5 + jnp.abs(nrm((c,), 1.0))
        scale = gamma * jax.lax.rsqrt(var + BN_EPS)
        bias = beta - mean * scale
        return scale, bias

    raw = {}

    def basic_conv3x3(name):
        w = nrm((C, C, 3, 3))                   # torch layout (Cout, Cin, kh, kw)
        s, b = bn_fold(C)
        raw[name] = (w, s, b)
        # column order ((kh*3+kw)*Cin + cin) matches the kernel's tap stacking;
        # BN scale folded into the rows (per output channel).
        wmat = jnp.transpose(w, (0, 2, 3, 1)).reshape(C, 9 * C) * s[:, None]
        return wmat, b.reshape(C, 1)

    def msca(name):
        packed, branches = [], []
        for _ in range(2):                      # local_att, global_att
            w1 = nrm((Ch, C))                   # 1x1 conv == (Cout, Cin) matrix
            s1, b1 = bn_fold(Ch)
            w2 = nrm((C, Ch))
            s2, b2 = bn_fold(C)
            branches.append((w1, s1, b1, w2, s2, b2))
            packed.append((w1 * s1[:, None], b1.reshape(Ch, 1),
                           w2 * s2[:, None], b2.reshape(C, 1)))
        raw[name] = branches
        return packed

    h2h_w, h2h_b = basic_conv3x3("h2h")
    h2l_w, h2l_b = basic_conv3x3("h2l")
    fin_w, fin_b = basic_conv3x3("conv")
    mh = msca("mscah")
    ml = msca("mscal")
    br = [mh[0], mh[1], ml[0], ml[1]]           # slots 0..3: h-loc, h-glob, l-loc, l-glob

    packed = {
        "wconv": jnp.stack([h2h_w, h2l_w, fin_w], 0).astype(jnp.bfloat16),  # (3,C,9C)
        "bconv": jnp.stack([h2h_b, h2l_b, fin_b], 0),                        # (3,C,1)
        "w1": jnp.stack([b[0] for b in br], 0),                              # (4,Ch,C)
        "b1": jnp.stack([b[1] for b in br], 0),                              # (4,Ch,1)
        "w2": jnp.stack([b[2] for b in br], 0),                              # (4,C,Ch)
        "b2": jnp.stack([b[3] for b in br], 0),                              # (4,C,1)
    }
    return packed, raw


# ------------------------------ Pallas kernel ---------------------------------

def _dgcm_kernel(x_ref, shift_ref, lshift_ref, up_ref,
                 wc_ref, bc_ref, w1_ref, b1_ref, w2_ref, b2_ref, o_ref):
    f32 = jnp.float32
    bf16 = jnp.bfloat16

    x = x_ref[...]                      # (C, P) f32, one image, channels-major
    xb = x.astype(bf16)

    def conv3x3(which, tap):
        """BasicConv2d(3x3, pad=1, bn, relu), BN folded into the weights.

        tap(t) returns the t-th zero-padded tap map (C, P_out) in bf16; the 9
        taps are stacked along the contraction axis so the weight matmul is a
        single K = 9*C = 288 MXU push (im2col)."""
        a = jnp.concatenate([tap(t) for t in range(9)], axis=0)      # (9C, P_out)
        y = jnp.dot(wc_ref[which], a, preferred_element_type=f32)    # (C, P_out)
        return jnp.maximum(y + bc_ref[which], 0.0)

    def taps_full(z_bf):
        return lambda t: jnp.dot(z_bf, shift_ref[t],
                                 preferred_element_type=f32).astype(bf16)

    def taps_low(z_bf):  # avg-pool + pad + shift folded into lshift_ref
        return lambda t: jnp.dot(z_bf, lshift_ref[t],
                                 preferred_element_type=f32).astype(bf16)

    def msca_mul(z, slot):
        """z * sigmoid(local_att(z) + global_att(z)); f32 epilogue math."""
        # local: 1x1 -> bn -> relu -> 1x1 -> bn  (bn folded into w/b)
        h = jnp.maximum(
            jnp.dot(w1_ref[slot], z, preferred_element_type=f32) + b1_ref[slot], 0.0)
        xl = jnp.dot(w2_ref[slot], h, preferred_element_type=f32) + b2_ref[slot]
        # global: AdaptiveAvgPool2d(1) -> same stack.  The pool commutes with
        # the first (linear) 1x1+bn, so it is applied after it; the pooled
        # result is broadcast back over lanes so both matmul shapes match the
        # local branch.
        t1 = jnp.dot(w1_ref[slot + 1], z, preferred_element_type=f32)
        gh = jnp.maximum(jnp.mean(t1, axis=1, keepdims=True) + b1_ref[slot + 1], 0.0)
        xg = jnp.dot(w2_ref[slot + 1],
                     jnp.broadcast_to(gh, (gh.shape[0], z.shape[1])),
                     preferred_element_type=f32) + b2_ref[slot + 1]
        wei = pl.reciprocal(1.0 + jnp.exp(-(xl + xg)), approx=True)   # sigmoid
        return z * wei

    x_h = conv3x3(0, taps_full(xb))         # h2h(x)
    x_l = conv3x3(1, taps_low(xb))          # h2l(avgpool2x2(x))
    x_h = msca_mul(x_h, 0)                  # x_h * mscah(x_h)
    x_l = msca_mul(x_l, 2)                  # x_l * mscal(x_l)
    # upsample_add: bilinear x2 (align_corners=False, clamped) + x_h, as one
    # pixel-operator matmul -- interpolation AND phase interleave in one op.
    up = jnp.dot(x_l.astype(bf16), up_ref[...], preferred_element_type=f32)
    z = up + x_h
    o_ref[...] = conv3x3(2, taps_full(z.astype(bf16)))   # final conv, lane-dense store


# ------------------------------ wrapper ---------------------------------------

@jax.jit
def dgcm_forward(x_nchw, params, ops):
    """DGCM forward.  x_nchw: (N, 32, H, W) float32 (H, W even).  Returns NCHW."""
    N, Cc, H, W = x_nchw.shape
    P, Pl, Ch = H * W, (H // 2) * (W // 2), Cc // 2
    # NCHW is already channels-major; flattening H,W is free (no transpose).
    xf = x_nchw.reshape(N, Cc, P).astype(jnp.float32)

    out = pl.pallas_call(
        _dgcm_kernel,
        out_shape=jax.ShapeDtypeStruct((N, Cc, P), jnp.float32),
        grid=(N,),
        in_specs=[
            pl.BlockSpec((None, Cc, P), lambda n: (n, 0, 0)),      # x (one image)
            pl.BlockSpec((9, P, P), lambda n: (0, 0, 0)),          # full-res tap ops
            pl.BlockSpec((9, P, Pl), lambda n: (0, 0, 0)),         # pool+tap ops
            pl.BlockSpec((Pl, P), lambda n: (0, 0)),               # upsample op
            pl.BlockSpec((3, Cc, 9 * Cc), lambda n: (0, 0, 0)),    # conv weights (bf16)
            pl.BlockSpec((3, Cc, 1), lambda n: (0, 0, 0)),         # conv biases
            pl.BlockSpec((4, Ch, Cc), lambda n: (0, 0, 0)),        # MSCA w1
            pl.BlockSpec((4, Ch, 1), lambda n: (0, 0, 0)),         # MSCA b1
            pl.BlockSpec((4, Cc, Ch), lambda n: (0, 0, 0)),        # MSCA w2
            pl.BlockSpec((4, Cc, 1), lambda n: (0, 0, 0)),         # MSCA b2
        ],
        out_specs=pl.BlockSpec((None, Cc, P), lambda n: (n, 0, 0)),
        compiler_params=pltpu.CompilerParams(
            # one image per grid step -> v7x megacore shards the batch; free on v5e/v6e
            dimension_semantics=("parallel",),
        ),
    )(xf, ops["shift_t"], ops["pool_shift_t"], ops["up_t"],
      params["wconv"], params["bconv"],
      params["w1"], params["b1"], params["w2"], params["b2"])
    # TODO(synk): at real GETANet sizes (H, W >> 16) the full-frame pixel
    # operators must be tiled and vmem_limit_bytes revisited for v7x's 64 MiB
    # VMEM; at these shapes everything (~3 MB) fits comfortably.
    return out.reshape(N, Cc, H, W)


# --------------------------- plain-JAX reference -------------------------------

def ref_forward(x, raw, up_t_f32):
    """f32 XLA reference of the same forward pass (eval-mode BN)."""
    def conv_bn_relu(v, p):
        w, s, b = p
        y = jax.lax.conv_general_dilated(
            v, w, window_strides=(1, 1), padding=((1, 1), (1, 1)),
            dimension_numbers=("NCHW", "OIHW", "NCHW"))
        return jnp.maximum(y * s[None, :, None, None] + b[None, :, None, None], 0.0)

    def att(v, p):
        w1, s1, b1, w2, s2, b2 = p
        h = jnp.einsum("nchw,oc->nohw", v, w1) * s1[None, :, None, None] \
            + b1[None, :, None, None]
        h = jnp.maximum(h, 0.0)
        return jnp.einsum("nchw,oc->nohw", h, w2) * s2[None, :, None, None] \
            + b2[None, :, None, None]

    def msca(v, branches):
        xl = att(v, branches[0])
        xg = att(jnp.mean(v, axis=(2, 3), keepdims=True), branches[1])
        return v * jax.nn.sigmoid(xl + xg)

    def pool(v):
        return 0.25 * (v[:, :, 0::2, 0::2] + v[:, :, 0::2, 1::2]
                       + v[:, :, 1::2, 0::2] + v[:, :, 1::2, 1::2])

    def upsample_add(lo, hi):
        n, c, hl, wl = lo.shape
        u = jnp.einsum("ncp,pq->ncq", lo.reshape(n, c, hl * wl), up_t_f32)
        return u.reshape(hi.shape) + hi

    x_h = conv_bn_relu(x, raw["h2h"])
    x_l = conv_bn_relu(pool(x), raw["h2l"])
    x_h = msca(x_h, raw["mscah"])
    x_l = msca(x_l, raw["mscal"])
    out = upsample_add(x_l, x_h)
    return conv_bn_relu(out, raw["conv"])


# ---------------------------------- main ---------------------------------------

if __name__ == "__main__":
    key = jax.random.PRNGKey(0)
    pkey, xkey = jax.random.split(key)
    params, raw = make_params(pkey)
    H = W = 16
    ops, up_t_f32 = make_operators(H, W)
    x = jax.random.normal(xkey, (2, C, H, W), jnp.float32)   # NCHW input

    y = dgcm_forward(x, params, ops)
    y = jax.block_until_ready(y)
    assert y.shape == (2, C, H, W), y.shape
    assert bool(jnp.all(jnp.isfinite(y)))

    # correctness vs the plain-JAX f32 reference (kernel uses bf16 on the MXU)
    y_ref = ref_forward(x, raw, up_t_f32)
    err = float(jnp.max(jnp.abs(y - y_ref)))
    tol = 0.1 * float(jnp.max(jnp.abs(y_ref))) + 0.1
    assert err <= tol, (err, tol)

    print("KERNEL_OK")
</pallas_src>

<mosaic_0001>
module attributes {stable_mosaic.version = 11 : i64} {
  func.func @_dgcm_kernel(%arg0: i32, %arg1: memref<1x32x256xf32, #tpu.memory_space<vmem>>, %arg2: memref<9x256x256xbf16, #tpu.memory_space<vmem>>, %arg3: memref<9x256x64xbf16, #tpu.memory_space<vmem>>, %arg4: memref<64x256xbf16, #tpu.memory_space<vmem>>, %arg5: memref<3x32x288xbf16, #tpu.memory_space<vmem>>, %arg6: memref<3x32x1xf32, #tpu.memory_space<vmem>>, %arg7: memref<4x16x32xf32, #tpu.memory_space<vmem>>, %arg8: memref<4x16x1xf32, #tpu.memory_space<vmem>>, %arg9: memref<4x32x16xf32, #tpu.memory_space<vmem>>, %arg10: memref<4x32x1xf32, #tpu.memory_space<vmem>>, %arg11: memref<1x32x256xf32, #tpu.memory_space<vmem>>) attributes {dimension_semantics = [#tpu.dimension_semantics<parallel>], iteration_bounds = array<i64: 2>, scalar_prefetch = 0 : i64, scratch_operands = 0 : i64, tpu.core_type = #tpu.core_type<tc>, window_params = [{transform_indices = @transform_0, window_bounds = array<i64: 1, 32, 256>}, {pipeline_mode = #tpu.pipeline_mode<synchronous>, transform_indices = @transform_1, window_bounds = array<i64: 9, 256, 256>}, {pipeline_mode = #tpu.pipeline_mode<synchronous>, transform_indices = @transform_2, window_bounds = array<i64: 9, 256, 64>}, {pipeline_mode = #tpu.pipeline_mode<synchronous>, transform_indices = @transform_3, window_bounds = array<i64: 64, 256>}, {pipeline_mode = #tpu.pipeline_mode<synchronous>, transform_indices = @transform_4, window_bounds = array<i64: 3, 32, 288>}, {pipeline_mode = #tpu.pipeline_mode<synchronous>, transform_indices = @transform_5, window_bounds = array<i64: 3, 32, 1>}, {pipeline_mode = #tpu.pipeline_mode<synchronous>, transform_indices = @transform_6, window_bounds = array<i64: 4, 16, 32>}, {pipeline_mode = #tpu.pipeline_mode<synchronous>, transform_indices = @transform_7, window_bounds = array<i64: 4, 16, 1>}, {pipeline_mode = #tpu.pipeline_mode<synchronous>, transform_indices = @transform_8, window_bounds = array<i64: 4, 32, 16>}, {pipeline_mode = #tpu.pipeline_mode<synchronous>, transform_indices = @transform_9, window_bounds = array<i64: 4, 32, 1>}, {transform_indices = @transform_10, window_bounds = array<i64: 1, 32, 256>}]} {
    %c0 = arith.constant 0 : index
    %c0_0 = arith.constant 0 : index
    %c0_1 = arith.constant 0 : index
    %0 = vector.load %arg1[%c0, %c0_0, %c0_1] : memref<1x32x256xf32, #tpu.memory_space<vmem>>, vector<1x32x256xf32>
    %1 = vector.shape_cast %0 : vector<1x32x256xf32> to vector<32x256xf32>
    %2 = arith.truncf %1 : vector<32x256xf32> to vector<32x256xbf16>
    %c0_2 = arith.constant 0 : index
    %c0_3 = arith.constant 0 : index
    %c0_4 = arith.constant 0 : index
    %3 = vector.load %arg2[%c0_2, %c0_3, %c0_4] : memref<9x256x256xbf16, #tpu.memory_space<vmem>>, vector<1x256x256xbf16>
    %4 = vector.shape_cast %3 : vector<1x256x256xbf16> to vector<256x256xbf16>
    %cst = arith.constant dense<0.000000e+00> : vector<32x256xf32>
    %5 = tpu.matmul %2, %4, %cst {dimension_numbers = #tpu.dot_dimension_numbers<[1], [0], [0], [1], [0, 0, 1, 1], [], []>} : vector<32x256xbf16>, vector<256x256xbf16>, vector<32x256xf32> -> vector<32x256xf32>
    %6 = arith.truncf %5 : vector<32x256xf32> to vector<32x256xbf16>
    %c1 = arith.constant 1 : index
    %c0_5 = arith.constant 0 : index
    %c0_6 = arith.constant 0 : index
    %7 = vector.load %arg2[%c1, %c0_5, %c0_6] : memref<9x256x256xbf16, #tpu.memory_space<vmem>>, vector<1x256x256xbf16>
    %8 = vector.shape_cast %7 : vector<1x256x256xbf16> to vector<256x256xbf16>
    %cst_7 = arith.constant dense<0.000000e+00> : vector<32x256xf32>
    %9 = tpu.matmul %2, %8, %cst_7 {dimension_numbers = #tpu.dot_dimension_numbers<[1], [0], [0], [1], [0, 0, 1, 1], [], []>} : vector<32x256xbf16>, vector<256x256xbf16>, vector<32x256xf32> -> vector<32x256xf32>
    %10 = arith.truncf %9 : vector<32x256xf32> to vector<32x256xbf16>
    %c2 = arith.constant 2 : index
    %c0_8 = arith.constant 0 : index
    %c0_9 = arith.constant 0 : index
    %11 = vector.load %arg2[%c2, %c0_8, %c0_9] : memref<9x256x256xbf16, #tpu.memory_space<vmem>>, vector<1x256x256xbf16>
    %12 = vector.shape_cast %11 : vector<1x256x256xbf16> to vector<256x256xbf16>
    %cst_10 = arith.constant dense<0.000000e+00> : vector<32x256xf32>
    %13 = tpu.matmul %2, %12, %cst_10 {dimension_numbers = #tpu.dot_dimension_numbers<[1], [0], [0], [1], [0, 0, 1, 1], [], []>} : vector<32x256xbf16>, vector<256x256xbf16>, vector<32x256xf32> -> vector<32x256xf32>
    %14 = arith.truncf %13 : vector<32x256xf32> to vector<32x256xbf16>
    %c3 = arith.constant 3 : index
    %c0_11 = arith.constant 0 : index
    %c0_12 = arith.constant 0 : index
    %15 = vector.load %arg2[%c3, %c0_11, %c0_12] : memref<9x256x256xbf16, #tpu.memory_space<vmem>>, vector<1x256x256xbf16>
    %16 = vector.shape_cast %15 : vector<1x256x256xbf16> to vector<256x256xbf16>
    %cst_13 = arith.constant dense<0.000000e+00> : vector<32x256xf32>
    %17 = tpu.matmul %2, %16, %cst_13 {dimension_numbers = #tpu.dot_dimension_numbers<[1], [0], [0], [1], [0, 0, 1, 1], [], []>} : vector<32x256xbf16>, vector<256x256xbf16>, vector<32x256xf32> -> vector<32x256xf32>
    %18 = arith.truncf %17 : vector<32x256xf32> to vector<32x256xbf16>
    %c4 = arith.constant 4 : index
    %c0_14 = arith.constant 0 : index
    %c0_15 = arith.constant 0 : index
    %19 = vector.load %arg2[%c4, %c0_14, %c0_15] : memref<9x256x256xbf16, #tpu.memory_space<vmem>>, vector<1x256x256xbf16>
    %20 = vector.shape_cast %19 : vector<1x256x256xbf16> to vector<256x256xbf16>
    %cst_16 = arith.constant dense<0.000000e+00> : vector<32x256xf32>
    %21 = tpu.matmul %2, %20, %cst_16 {dimension_numbers = #tpu.dot_dimension_numbers<[1], [0], [0], [1], [0, 0, 1, 1], [], []>} : vector<32x256xbf16>, vector<256x256xbf16>, vector<32x256xf32> -> vector<32x256xf32>
    %22 = arith.truncf %21 : vector<32x256xf32> to vector<32x256xbf16>
    %c5 = arith.constant 5 : index
    %c0_17 = arith.constant 0 : index
    %c0_18 = arith.constant 0 : index
    %23 = vector.load %arg2[%c5, %c0_17, %c0_18] : memref<9x256x256xbf16, #tpu.memory_space<vmem>>, vector<1x256x256xbf16>
    %24 = vector.shape_cast %23 : vector<1x256x256xbf16> to vector<256x256xbf16>
    %cst_19 = arith.constant dense<0.000000e+00> : vector<32x256xf32>
    %25 = tpu.matmul %2, %24, %cst_19 {dimension_numbers = #tpu.dot_dimension_numbers<[1], [0], [0], [1], [0, 0, 1, 1], [], []>} : vector<32x256xbf16>, vector<256x256xbf16>, vector<32x256xf32> -> vector<32x256xf32>
    %26 = arith.truncf %25 : vector<32x256xf32> to vector<32x256xbf16>
    %c6 = arith.constant 6 : index
    %c0_20 = arith.constant 0 : index
    %c0_21 = arith.constant 0 : index
    %27 = vector.load %arg2[%c6, %c0_20, %c0_21] : memref<9x256x256xbf16, #tpu.memory_space<vmem>>, vector<1x256x256xbf16>
    %28 = vector.shape_cast %27 : vector<1x256x256xbf16> to vector<256x256xbf16>
    %cst_22 = arith.constant dense<0.000000e+00> : vector<32x256xf32>
    %29 = tpu.matmul %2, %28, %cst_22 {dimension_numbers = #tpu.dot_dimension_numbers<[1], [0], [0], [1], [0, 0, 1, 1], [], []>} : vector<32x256xbf16>, vector<256x256xbf16>, vector<32x256xf32> -> vector<32x256xf32>
    %30 = arith.truncf %29 : vector<32x256xf32> to vector<32x256xbf16>
    %c7 = arith.constant 7 : index
    %c0_23 = arith.constant 0 : index
    %c0_24 = arith.constant 0 : index
    %31 = vector.load %arg2[%c7, %c0_23, %c0_24] : memref<9x256x256xbf16, #tpu.memory_space<vmem>>, vector<1x256x256xbf16>
    %32 = vector.shape_cast %31 : vector<1x256x256xbf16> to vector<256x256xbf16>
    %cst_25 = arith.constant dense<0.000000e+00> : vector<32x256xf32>
    %33 = tpu.matmul %2, %32, %cst_25 {dimension_numbers = #tpu.dot_dimension_numbers<[1], [0], [0], [1], [0, 0, 1, 1], [], []>} : vector<32x256xbf16>, vector<256x256xbf16>, vector<32x256xf32> -> vector<32x256xf32>
    %34 = arith.truncf %33 : vector<32x256xf32> to vector<32x256xbf16>
    %c8 = arith.constant 8 : index
    %c0_26 = arith.constant 0 : index
    %c0_27 = arith.constant 0 : index
    %35 = vector.load %arg2[%c8, %c0_26, %c0_27] : memref<9x256x256xbf16, #tpu.memory_space<vmem>>, vector<1x256x256xbf16>
    %36 = vector.shape_cast %35 : vector<1x256x256xbf16> to vector<256x256xbf16>
    %cst_28 = arith.constant dense<0.000000e+00> : vector<32x256xf32>
    %37 = tpu.matmul %2, %36, %cst_28 {dimension_numbers = #tpu.dot_dimension_numbers<[1], [0], [0], [1], [0, 0, 1, 1], [], []>} : vector<32x256xbf16>, vector<256x256xbf16>, vector<32x256xf32> -> vector<32x256xf32>
    %38 = arith.truncf %37 : vector<32x256xf32> to vector<32x256xbf16>
    %39 = tpu.concatenate %6, %10, %14, %18, %22, %26, %30, %34, %38 in 0 : vector<32x256xbf16>, vector<32x256xbf16>, vector<32x256xbf16>, vector<32x256xbf16>, vector<32x256xbf16>, vector<32x256xbf16>, vector<32x256xbf16>, vector<32x256xbf16>, vector<32x256xbf16> -> vector<288x256xbf16>
    %c0_29 = arith.constant 0 : index
    %c0_30 = arith.constant 0 : index
    %c0_31 = arith.constant 0 : index
    %40 = vector.load %arg5[%c0_29, %c0_30, %c0_31] : memref<3x32x288xbf16, #tpu.memory_space<vmem>>, vector<1x32x288xbf16>
    %41 = vector.shape_cast %40 : vector<1x32x288xbf16> to vector<32x288xbf16>
    %cst_32 = arith.constant dense<0.000000e+00> : vector<32x256xf32>
    %42 = tpu.matmul %41, %39, %cst_32 {dimension_numbers = #tpu.dot_dimension_numbers<[1], [0], [0], [1], [0, 0, 1, 1], [], []>} : vector<32x288xbf16>, vector<288x256xbf16>, vector<32x256xf32> -> vector<32x256xf32>
    %c0_33 = arith.constant 0 : index
    %c0_34 = arith.constant 0 : index
    %c0_35 = arith.constant 0 : index
    %43 = vector.load %arg6[%c0_33, %c0_34, %c0_35] : memref<3x32x1xf32, #tpu.memory_space<vmem>>, vector<1x32x1xf32>
    %44 = vector.shape_cast %43 : vector<1x32x1xf32> to vector<32x1xf32>
    %45 = vector.broadcast %44 : vector<32x1xf32> to vector<32x256xf32>
    %46 = arith.addf %42, %45 : vector<32x256xf32>
    %cst_36 = arith.constant 0.000000e+00 : f32
    %47 = vector.broadcast %cst_36 : f32 to vector<32x256xf32>
    %48 = arith.maximumf %46, %47 : vector<32x256xf32>
    %c0_37 = arith.constant 0 : index
    %c0_38 = arith.constant 0 : index
    %c0_39 = arith.constant 0 : index
    %49 = vector.load %arg3[%c0_37, %c0_38, %c0_39] : memref<9x256x64xbf16, #tpu.memory_space<vmem>>, vector<1x256x64xbf16>
    %50 = vector.shape_cast %49 : vector<1x256x64xbf16> to vector<256x64xbf16>
    %cst_40 = arith.constant dense<0.000000e+00> : vector<32x64xf32>
    %51 = tpu.matmul %2, %50, %cst_40 {dimension_numbers = #tpu.dot_dimension_numbers<[1], [0], [0], [1], [0, 0, 1, 1], [], []>} : vector<32x256xbf16>, vector<256x64xbf16>, vector<32x64xf32> -> vector<32x64xf32>
    %52 = arith.truncf %51 : vector<32x64xf32> to vector<32x64xbf16>
    %c1_41 = arith.constant 1 : index
    %c0_42 = arith.constant 0 : index
    %c0_43 = arith.constant 0 : index
    %53 = vector.load %arg3[%c1_41, %c0_42, %c0_43] : memref<9x256x64xbf16, #tpu.memory_space<vmem>>, vector<1x256x64xbf16>
    %54 = vector.shape_cast %53 : vector<1x256x64xbf16> to vector<256x64xbf16>
    %cst_44 = arith.constant dense<0.000000e+00> : vector<32x64xf32>
    %55 = tpu.matmul %2, %54, %cst_44 {dimension_numbers = #tpu.dot_dimension_numbers<[1], [0], [0], [1], [0, 0, 1, 1], [], []>} : vector<32x256xbf16>, vector<256x64xbf16>, vector<32x64xf32> -> vector<32x64xf32>
    %56 = arith.truncf %55 : vector<32x64xf32> to vector<32x64xbf16>
    %c2_45 = arith.constant 2 : index
    %c0_46 = arith.constant 0 : index
    %c0_47 = arith.constant 0 : index
    %57 = vector.load %arg3[%c2_45, %c0_46, %c0_47] : memref<9x256x64xbf16, #tpu.memory_space<vmem>>, vector<1x256x64xbf16>
    %58 = vector.shape_cast %57 : vector<1x256x64xbf16> to vector<256x64xbf16>
    %cst_48 = arith.constant dense<0.000000e+00> : vector<32x64xf32>
    %59 = tpu.matmul %2, %58, %cst_48 {dimension_numbers = #tpu.dot_dimension_numbers<[1], [0], [0], [1], [0, 0, 1, 1], [], []>} : vector<32x256xbf16>, vector<256x64xbf16>, vector<32x64xf32> -> vector<32x64xf32>
    %60 = arith.truncf %59 : vector<32x64xf32> to vector<32x64xbf16>
    %c3_49 = arith.constant 3 : index
    %c0_50 = arith.constant 0 : index
    %c0_51 = arith.constant 0 : index
    %61 = vector.load %arg3[%c3_49, %c0_50, %c0_51] : memref<9x256x64xbf16, #tpu.memory_space<vmem>>, vector<1x256x64xbf16>
    %62 = vector.shape_cast %61 : vector<1x256x64xbf16> to vector<256x64xbf16>
    %cst_52 = arith.constant dense<0.000000e+00> : vector<32x64xf32>
    %63 = tpu.matmul %2, %62, %cst_52 {dimension_numbers = #tpu.dot_dimension_numbers<[1], [0], [0], [1], [0, 0, 1, 1], [], []>} : vector<32x256xbf16>, vector<256x64xbf16>, vector<32x64xf32> -> vector<32x64xf32>
    %64 = arith.truncf %63 : vector<32x64xf32> to vector<32x64xbf16>
    %c4_53 = arith.constant 4 : index
    %c0_54 = arith.constant 0 : index
    %c0_55 = arith.constant 0 : index
    %65 = vector.load %arg3[%c4_53, %c0_54, %c0_55] : memref<9x256x64xbf16, #tpu.memory_space<vmem>>, vector<1x256x64xbf16>
    %66 = vector.shape_cast %65 : vector<1x256x64xbf16> to vector<256x64xbf16>
    %cst_56 = arith.constant dense<0.000000e+00> : vector<32x64xf32>
    %67 = tpu.matmul %2, %66, %cst_56 {dimension_numbers = #tpu.dot_dimension_numbers<[1], [0], [0], [1], [0, 0, 1, 1], [], []>} : vector<32x256xbf16>, vector<256x64xbf16>, vector<32x64xf32> -> vector<32x64xf32>
    %68 = arith.truncf %67 : vector<32x64xf32> to vector<32x64xbf16>
    %c5_57 = arith.constant 5 : index
    %c0_58 = arith.constant 0 : index
    %c0_59 = arith.constant 0 : index
    %69 = vector.load %arg3[%c5_57, %c0_58, %c0_59] : memref<9x256x64xbf16, #tpu.memory_space<vmem>>, vector<1x256x64xbf16>
    %70 = vector.shape_cast %69 : vector<1x256x64xbf16> to vector<256x64xbf16>
    %cst_60 = arith.constant dense<0.000000e+00> : vector<32x64xf32>
    %71 = tpu.matmul %2, %70, %cst_60 {dimension_numbers = #tpu.dot_dimension_numbers<[1], [0], [0], [1], [0, 0, 1, 1], [], []>} : vector<32x256xbf16>, vector<256x64xbf16>, vector<32x64xf32> -> vector<32x64xf32>
    %72 = arith.truncf %71 : vector<32x64xf32> to vector<32x64xbf16>
    %c6_61 = arith.constant 6 : index
    %c0_62 = arith.constant 0 : index
    %c0_63 = arith.constant 0 : index
    %73 = vector.load %arg3[%c6_61, %c0_62, %c0_63] : memref<9x256x64xbf16, #tpu.memory_space<vmem>>, vector<1x256x64xbf16>
    %74 = vector.shape_cast %73 : vector<1x256x64xbf16> to vector<256x64xbf16>
    %cst_64 = arith.constant dense<0.000000e+00> : vector<32x64xf32>
    %75 = tpu.matmul %2, %74, %cst_64 {dimension_numbers = #tpu.dot_dimension_numbers<[1], [0], [0], [1], [0, 0, 1, 1], [], []>} : vector<32x256xbf16>, vector<256x64xbf16>, vector<32x64xf32> -> vector<32x64xf32>
    %76 = arith.truncf %75 : vector<32x64xf32> to vector<32x64xbf16>
    %c7_65 = arith.constant 7 : index
    %c0_66 = arith.constant 0 : index
    %c0_67 = arith.constant 0 : index
    %77 = vector.load %arg3[%c7_65, %c0_66, %c0_67] : memref<9x256x64xbf16, #tpu.memory_space<vmem>>, vector<1x256x64xbf16>
    %78 = vector.shape_cast %77 : vector<1x256x64xbf16> to vector<256x64xbf16>
    %cst_68 = arith.constant dense<0.000000e+00> : vector<32x64xf32>
    %79 = tpu.matmul %2, %78, %cst_68 {dimension_numbers = #tpu.dot_dimension_numbers<[1], [0], [0], [1], [0, 0, 1, 1], [], []>} : vector<32x256xbf16>, vector<256x64xbf16>, vector<32x64xf32> -> vector<32x64xf32>
    %80 = arith.truncf %79 : vector<32x64xf32> to vector<32x64xbf16>
    %c8_69 = arith.constant 8 : index
    %c0_70 = arith.constant 0 : index
    %c0_71 = arith.constant 0 : index
    %81 = vector.load %arg3[%c8_69, %c0_70, %c0_71] : memref<9x256x64xbf16, #tpu.memory_space<vmem>>, vector<1x256x64xbf16>
    %82 = vector.shape_cast %81 : vector<1x256x64xbf16> to vector<256x64xbf16>
    %cst_72 = arith.constant dense<0.000000e+00> : vector<32x64xf32>
    %83 = tpu.matmul %2, %82, %cst_72 {dimension_numbers = #tpu.dot_dimension_numbers<[1], [0], [0], [1], [0, 0, 1, 1], [], []>} : vector<32x256xbf16>, vector<256x64xbf16>, vector<32x64xf32> -> vector<32x64xf32>
    %84 = arith.truncf %83 : vector<32x64xf32> to vector<32x64xbf16>
    %85 = tpu.concatenate %52, %56, %60, %64, %68, %72, %76, %80, %84 in 0 : vector<32x64xbf16>, vector<32x64xbf16>, vector<32x64xbf16>, vector<32x64xbf16>, vector<32x64xbf16>, vector<32x64xbf16>, vector<32x64xbf16>, vector<32x64xbf16>, vector<32x64xbf16> -> vector<288x64xbf16>
    %c1_73 = arith.constant 1 : index
    %c0_74 = arith.constant 0 : index
    %c0_75 = arith.constant 0 : index
    %86 = vector.load %arg5[%c1_73, %c0_74, %c0_75] : memref<3x32x288xbf16, #tpu.memory_space<vmem>>, vector<1x32x288xbf16>
    %87 = vector.shape_cast %86 : vector<1x32x288xbf16> to vector<32x288xbf16>
    %cst_76 = arith.constant dense<0.000000e+00> : vector<32x64xf32>
    %88 = tpu.matmul %87, %85, %cst_76 {dimension_numbers = #tpu.dot_dimension_numbers<[1], [0], [0], [1], [0, 0, 1, 1], [], []>} : vector<32x288xbf16>, vector<288x64xbf16>, vector<32x64xf32> -> vector<32x64xf32>
    %c1_77 = arith.constant 1 : index
    %c0_78 = arith.constant 0 : index
    %c0_79 = arith.constant 0 : index
    %89 = vector.load %arg6[%c1_77, %c0_78, %c0_79] : memref<3x32x1xf32, #tpu.memory_space<vmem>>, vector<1x32x1xf32>
    %90 = vector.shape_cast %89 : vector<1x32x1xf32> to vector<32x1xf32>
    %91 = vector.broadcast %90 : vector<32x1xf32> to vector<32x64xf32>
    %92 = arith.addf %88, %91 : vector<32x64xf32>
    %cst_80 = arith.constant 0.000000e+00 : f32
    %93 = vector.broadcast %cst_80 : f32 to vector<32x64xf32>
    %94 = arith.maximumf %92, %93 : vector<32x64xf32>
    %c0_81 = arith.constant 0 : index
    %c0_82 = arith.constant 0 : index
    %c0_83 = arith.constant 0 : index
    %95 = vector.load %arg7[%c0_81, %c0_82, %c0_83] : memref<4x16x32xf32, #tpu.memory_space<vmem>>, vector<1x16x32xf32>
    %96 = vector.shape_cast %95 : vector<1x16x32xf32> to vector<16x32xf32>
    %cst_84 = arith.constant dense<0.000000e+00> : vector<16x256xf32>
    %97 = tpu.matmul %96, %48, %cst_84 {dimension_numbers = #tpu.dot_dimension_numbers<[1], [0], [0], [1], [0, 0, 1, 1], [], []>} : vector<16x32xf32>, vector<32x256xf32>, vector<16x256xf32> -> vector<16x256xf32>
    %c0_85 = arith.constant 0 : index
    %c0_86 = arith.constant 0 : index
    %c0_87 = arith.constant 0 : index
    %98 = vector.load %arg8[%c0_85, %c0_86, %c0_87] : memref<4x16x1xf32, #tpu.memory_space<vmem>>, vector<1x16x1xf32>
    %99 = vector.shape_cast %98 : vector<1x16x1xf32> to vector<16x1xf32>
    %100 = vector.broadcast %99 : vector<16x1xf32> to vector<16x256xf32>
    %101 = arith.addf %97, %100 : vector<16x256xf32>
    %cst_88 = arith.constant 0.000000e+00 : f32
    %102 = vector.broadcast %cst_88 : f32 to vector<16x256xf32>
    %103 = arith.maximumf %101, %102 : vector<16x256xf32>
    %c0_89 = arith.constant 0 : index
    %c0_90 = arith.constant 0 : index
    %c0_91 = arith.constant 0 : index
    %104 = vector.load %arg9[%c0_89, %c0_90, %c0_91] : memref<4x32x16xf32, #tpu.memory_space<vmem>>, vector<1x32x16xf32>
    %105 = vector.shape_cast %104 : vector<1x32x16xf32> to vector<32x16xf32>
    %cst_92 = arith.constant dense<0.000000e+00> : vector<32x256xf32>
    %106 = tpu.matmul %105, %103, %cst_92 {dimension_numbers = #tpu.dot_dimension_numbers<[1], [0], [0], [1], [0, 0, 1, 1], [], []>} : vector<32x16xf32>, vector<16x256xf32>, vector<32x256xf32> -> vector<32x256xf32>
    %c0_93 = arith.constant 0 : index
    %c0_94 = arith.constant 0 : index
    %c0_95 = arith.constant 0 : index
    %107 = vector.load %arg10[%c0_93, %c0_94, %c0_95] : memref<4x32x1xf32, #tpu.memory_space<vmem>>, vector<1x32x1xf32>
    %108 = vector.shape_cast %107 : vector<1x32x1xf32> to vector<32x1xf32>
    %109 = vector.broadcast %108 : vector<32x1xf32> to vector<32x256xf32>
    %110 = arith.addf %106, %109 : vector<32x256xf32>
    %c1_96 = arith.constant 1 : index
    %c0_97 = arith.constant 0 : index
    %c0_98 = arith.constant 0 : index
    %111 = vector.load %arg7[%c1_96, %c0_97, %c0_98] : memref<4x16x32xf32, #tpu.memory_space<vmem>>, vector<1x16x32xf32>
    %112 = vector.shape_cast %111 : vector<1x16x32xf32> to vector<16x32xf32>
    %cst_99 = arith.constant dense<0.000000e+00> : vector<16x256xf32>
    %113 = tpu.matmul %112, %48, %cst_99 {dimension_numbers = #tpu.dot_dimension_numbers<[1], [0], [0], [1], [0, 0, 1, 1], [], []>} : vector<16x32xf32>, vector<32x256xf32>, vector<16x256xf32> -> vector<16x256xf32>
    %cst_100 = arith.constant dense<0.000000e+00> : vector<16xf32>
    %114 = vector.multi_reduction <add>, %113, %cst_100 [1] : vector<16x256xf32> to vector<16xf32>
    %115 = vector.shape_cast %114 : vector<16xf32> to vector<16x1xf32>
    %cst_101 = arith.constant 2.560000e+02 : f32
    %116 = vector.broadcast %cst_101 : f32 to vector<16x1xf32>
    %117 = arith.divf %115, %116 : vector<16x1xf32>
    %c1_102 = arith.constant 1 : index
    %c0_103 = arith.constant 0 : index
    %c0_104 = arith.constant 0 : index
    %118 = vector.load %arg8[%c1_102, %c0_103, %c0_104] : memref<4x16x1xf32, #tpu.memory_space<vmem>>, vector<1x16x1xf32>
    %119 = vector.shape_cast %118 : vector<1x16x1xf32> to vector<16x1xf32>
    %120 = arith.addf %117, %119 : vector<16x1xf32>
    %cst_105 = arith.constant 0.000000e+00 : f32
    %121 = vector.broadcast %cst_105 : f32 to vector<16x1xf32>
    %122 = arith.maximumf %120, %121 : vector<16x1xf32>
    %c1_106 = arith.constant 1 : index
    %c0_107 = arith.constant 0 : index
    %c0_108 = arith.constant 0 : index
    %123 = vector.load %arg9[%c1_106, %c0_107, %c0_108] : memref<4x32x16xf32, #tpu.memory_space<vmem>>, vector<1x32x16xf32>
    %124 = vector.shape_cast %123 : vector<1x32x16xf32> to vector<32x16xf32>
    %125 = vector.shape_cast %122 : vector<16x1xf32> to vector<16x1xf32>
    %126 = vector.broadcast %125 : vector<16x1xf32> to vector<16x256xf32>
    %cst_109 = arith.constant dense<0.000000e+00> : vector<32x256xf32>
    %127 = tpu.matmul %124, %126, %cst_109 {dimension_numbers = #tpu.dot_dimension_numbers<[1], [0], [0], [1], [0, 0, 1, 1], [], []>} : vector<32x16xf32>, vector<16x256xf32>, vector<32x256xf32> -> vector<32x256xf32>
    %c1_110 = arith.constant 1 : index
    %c0_111 = arith.constant 0 : index
    %c0_112 = arith.constant 0 : index
    %128 = vector.load %arg10[%c1_110, %c0_111, %c0_112] : memref<4x32x1xf32, #tpu.memory_space<vmem>>, vector<1x32x1xf32>
    %129 = vector.shape_cast %128 : vector<1x32x1xf32> to vector<32x1xf32>
    %130 = vector.broadcast %129 : vector<32x1xf32> to vector<32x256xf32>
    %131 = arith.addf %127, %130 : vector<32x256xf32>
    %132 = arith.addf %110, %131 : vector<32x256xf32>
    %cst_113 = arith.constant 0.000000e+00 : f32
    %133 = vector.broadcast %cst_113 : f32 to vector<32x256xf32>
    %134 = arith.subf %133, %132 : vector<32x256xf32>
    %135 = math.exp %134 : vector<32x256xf32>
    %cst_114 = arith.constant 1.000000e+00 : f32
    %136 = vector.broadcast %cst_114 : f32 to vector<32x256xf32>
    %137 = arith.addf %136, %135 : vector<32x256xf32>
    %138 = tpu.reciprocal %137 {approx = true} : vector<32x256xf32> -> vector<32x256xf32>
    %139 = arith.mulf %48, %138 : vector<32x256xf32>
    %c2_115 = arith.constant 2 : index
    %c0_116 = arith.constant 0 : index
    %c0_117 = arith.constant 0 : index
    %140 = vector.load %arg7[%c2_115, %c0_116, %c0_117] : memref<4x16x32xf32, #tpu.memory_space<vmem>>, vector<1x16x32xf32>
    %141 = vector.shape_cast %140 : vector<1x16x32xf32> to vector<16x32xf32>
    %cst_118 = arith.constant dense<0.000000e+00> : vector<16x64xf32>
    %142 = tpu.matmul %141, %94, %cst_118 {dimension_numbers = #tpu.dot_dimension_numbers<[1], [0], [0], [1], [0, 0, 1, 1], [], []>} : vector<16x32xf32>, vector<32x64xf32>, vector<16x64xf32> -> vector<16x64xf32>
    %c2_119 = arith.constant 2 : index
    %c0_120 = arith.constant 0 : index
    %c0_121 = arith.constant 0 : index
    %143 = vector.load %arg8[%c2_119, %c0_120, %c0_121] : memref<4x16x1xf32, #tpu.memory_space<vmem>>, vector<1x16x1xf32>
    %144 = vector.shape_cast %143 : vector<1x16x1xf32> to vector<16x1xf32>
    %145 = vector.broadcast %144 : vector<16x1xf32> to vector<16x64xf32>
    %146 = arith.addf %142, %145 : vector<16x64xf32>
    %cst_122 = arith.constant 0.000000e+00 : f32
    %147 = vector.broadcast %cst_122 : f32 to vector<16x64xf32>
    %148 = arith.maximumf %146, %147 : vector<16x64xf32>
    %c2_123 = arith.constant 2 : index
    %c0_124 = arith.constant 0 : index
    %c0_125 = arith.constant 0 : index
    %149 = vector.load %arg9[%c2_123, %c0_124, %c0_125] : memref<4x32x16xf32, #tpu.memory_space<vmem>>, vector<1x32x16xf32>
    %150 = vector.shape_cast %149 : vector<1x32x16xf32> to vector<32x16xf32>
    %cst_126 = arith.constant dense<0.000000e+00> : vector<32x64xf32>
    %151 = tpu.matmul %150, %148, %cst_126 {dimension_numbers = #tpu.dot_dimension_numbers<[1], [0], [0], [1], [0, 0, 1, 1], [], []>} : vector<32x16xf32>, vector<16x64xf32>, vector<32x64xf32> -> vector<32x64xf32>
    %c2_127 = arith.constant 2 : index
    %c0_128 = arith.constant 0 : index
    %c0_129 = arith.constant 0 : index
    %152 = vector.load %arg10[%c2_127, %c0_128, %c0_129] : memref<4x32x1xf32, #tpu.memory_space<vmem>>, vector<1x32x1xf32>
    %153 = vector.shape_cast %152 : vector<1x32x1xf32> to vector<32x1xf32>
    %154 = vector.broadcast %153 : vector<32x1xf32> to vector<32x64xf32>
    %155 = arith.addf %151, %154 : vector<32x64xf32>
    %c3_130 = arith.constant 3 : index
    %c0_131 = arith.constant 0 : index
    %c0_132 = arith.constant 0 : index
    %156 = vector.load %arg7[%c3_130, %c0_131, %c0_132] : memref<4x16x32xf32, #tpu.memory_space<vmem>>, vector<1x16x32xf32>
    %157 = vector.shape_cast %156 : vector<1x16x32xf32> to vector<16x32xf32>
    %cst_133 = arith.constant dense<0.000000e+00> : vector<16x64xf32>
    %158 = tpu.matmul %157, %94, %cst_133 {dimension_numbers = #tpu.dot_dimension_numbers<[1], [0], [0], [1], [0, 0, 1, 1], [], []>} : vector<16x32xf32>, vector<32x64xf32>, vector<16x64xf32> -> vector<16x64xf32>
    %cst_134 = arith.constant dense<0.000000e+00> : vector<16xf32>
    %159 = vector.multi_reduction <add>, %158, %cst_134 [1] : vector<16x64xf32> to vector<16xf32>
    %160 = vector.shape_cast %159 : vector<16xf32> to vector<16x1xf32>
    %cst_135 = arith.constant 6.400000e+01 : f32
    %161 = vector.broadcast %cst_135 : f32 to vector<16x1xf32>
    %162 = arith.divf %160, %161 : vector<16x1xf32>
    %c3_136 = arith.constant 3 : index
    %c0_137 = arith.constant 0 : index
    %c0_138 = arith.constant 0 : index
    %163 = vector.load %arg8[%c3_136, %c0_137, %c0_138] : memref<4x16x1xf32, #tpu.memory_space<vmem>>, vector<1x16x1xf32>
    %164 = vector.shape_cast %163 : vector<1x16x1xf32> to vector<16x1xf32>
    %165 = arith.addf %162, %164 : vector<16x1xf32>
    %cst_139 = arith.constant 0.000000e+00 : f32
    %166 = vector.broadcast %cst_139 : f32 to vector<16x1xf32>
    %167 = arith.maximumf %165, %166 : vector<16x1xf32>
    %c3_140 = arith.constant 3 : index
    %c0_141 = arith.constant 0 : index
    %c0_142 = arith.constant 0 : index
    %168 = vector.load %arg9[%c3_140, %c0_141, %c0_142] : memref<4x32x16xf32, #tpu.memory_space<vmem>>, vector<1x32x16xf32>
    %169 = vector.shape_cast %168 : vector<1x32x16xf32> to vector<32x16xf32>
    %170 = vector.shape_cast %167 : vector<16x1xf32> to vector<16x1xf32>
    %171 = vector.broadcast %170 : vector<16x1xf32> to vector<16x64xf32>
    %cst_143 = arith.constant dense<0.000000e+00> : vector<32x64xf32>
    %172 = tpu.matmul %169, %171, %cst_143 {dimension_numbers = #tpu.dot_dimension_numbers<[1], [0], [0], [1], [0, 0, 1, 1], [], []>} : vector<32x16xf32>, vector<16x64xf32>, vector<32x64xf32> -> vector<32x64xf32>
    %c3_144 = arith.constant 3 : index
    %c0_145 = arith.constant 0 : index
    %c0_146 = arith.constant 0 : index
    %173 = vector.load %arg10[%c3_144, %c0_145, %c0_146] : memref<4x32x1xf32, #tpu.memory_space<vmem>>, vector<1x32x1xf32>
    %174 = vector.shape_cast %173 : vector<1x32x1xf32> to vector<32x1xf32>
    %175 = vector.broadcast %174 : vector<32x1xf32> to vector<32x64xf32>
    %176 = arith.addf %172, %175 : vector<32x64xf32>
    %177 = arith.addf %155, %176 : vector<32x64xf32>
    %cst_147 = arith.constant 0.000000e+00 : f32
    %178 = vector.broadcast %cst_147 : f32 to vector<32x64xf32>
    %179 = arith.subf %178, %177 : vector<32x64xf32>
    %180 = math.exp %179 : vector<32x64xf32>
    %cst_148 = arith.constant 1.000000e+00 : f32
    %181 = vector.broadcast %cst_148 : f32 to vector<32x64xf32>
    %182 = arith.addf %181, %180 : vector<32x64xf32>
    %183 = tpu.reciprocal %182 {approx = true} : vector<32x64xf32> -> vector<32x64xf32>
    %184 = arith.mulf %94, %183 : vector<32x64xf32>
    %185 = arith.truncf %184 : vector<32x64xf32> to vector<32x64xbf16>
    %c0_149 = arith.constant 0 : index
    %c0_150 = arith.constant 0 : index
    %186 = vector.load %arg4[%c0_149, %c0_150] : memref<64x256xbf16, #tpu.memory_space<vmem>>, vector<64x256xbf16>
    %cst_151 = arith.constant dense<0.000000e+00> : vector<32x256xf32>
    %187 = tpu.matmul %185, %186, %cst_151 {dimension_numbers = #tpu.dot_dimension_numbers<[1], [0], [0], [1], [0, 0, 1, 1], [], []>} : vector<32x64xbf16>, vector<64x256xbf16>, vector<32x256xf32> -> vector<32x256xf32>
    %188 = arith.addf %187, %139 : vector<32x256xf32>
    %189 = arith.truncf %188 : vector<32x256xf32> to vector<32x256xbf16>
    %c0_152 = arith.constant 0 : index
    %c0_153 = arith.constant 0 : index
    %c0_154 = arith.constant 0 : index
    %190 = vector.load %arg2[%c0_152, %c0_153, %c0_154] : memref<9x256x256xbf16, #tpu.memory_space<vmem>>, vector<1x256x256xbf16>
    %191 = vector.shape_cast %190 : vector<1x256x256xbf16> to vector<256x256xbf16>
    %cst_155 = arith.constant dense<0.000000e+00> : vector<32x256xf32>
    %192 = tpu.matmul %189, %191, %cst_155 {dimension_numbers = #tpu.dot_dimension_numbers<[1], [0], [0], [1], [0, 0, 1, 1], [], []>} : vector<32x256xbf16>, vector<256x256xbf16>, vector<32x256xf32> -> vector<32x256xf32>
    %193 = arith.truncf %192 : vector<32x256xf32> to vector<32x256xbf16>
    %c1_156 = arith.constant 1 : index
    %c0_157 = arith.constant 0 : index
    %c0_158 = arith.constant 0 : index
    %194 = vector.load %arg2[%c1_156, %c0_157, %c0_158] : memref<9x256x256xbf16, #tpu.memory_space<vmem>>, vector<1x256x256xbf16>
    %195 = vector.shape_cast %194 : vector<1x256x256xbf16> to vector<256x256xbf16>
    %cst_159 = arith.constant dense<0.000000e+00> : vector<32x256xf32>
    %196 = tpu.matmul %189, %195, %cst_159 {dimension_numbers = #tpu.dot_dimension_numbers<[1], [0], [0], [1], [0, 0, 1, 1], [], []>} : vector<32x256xbf16>, vector<256x256xbf16>, vector<32x256xf32> -> vector<32x256xf32>
    %197 = arith.truncf %196 : vector<32x256xf32> to vector<32x256xbf16>
    %c2_160 = arith.constant 2 : index
    %c0_161 = arith.constant 0 : index
    %c0_162 = arith.constant 0 : index
    %198 = vector.load %arg2[%c2_160, %c0_161, %c0_162] : memref<9x256x256xbf16, #tpu.memory_space<vmem>>, vector<1x256x256xbf16>
    %199 = vector.shape_cast %198 : vector<1x256x256xbf16> to vector<256x256xbf16>
    %cst_163 = arith.constant dense<0.000000e+00> : vector<32x256xf32>
    %200 = tpu.matmul %189, %199, %cst_163 {dimension_numbers = #tpu.dot_dimension_numbers<[1], [0], [0], [1], [0, 0, 1, 1], [], []>} : vector<32x256xbf16>, vector<256x256xbf16>, vector<32x256xf32> -> vector<32x256xf32>
    %201 = arith.truncf %200 : vector<32x256xf32> to vector<32x256xbf16>
    %c3_164 = arith.constant 3 : index
    %c0_165 = arith.constant 0 : index
    %c0_166 = arith.constant 0 : index
    %202 = vector.load %arg2[%c3_164, %c0_165, %c0_166] : memref<9x256x256xbf16, #tpu.memory_space<vmem>>, vector<1x256x256xbf16>
    %203 = vector.shape_cast %202 : vector<1x256x256xbf16> to vector<256x256xbf16>
    %cst_167 = arith.constant dense<0.000000e+00> : vector<32x256xf32>
    %204 = tpu.matmul %189, %203, %cst_167 {dimension_numbers = #tpu.dot_dimension_numbers<[1], [0], [0], [1], [0, 0, 1, 1], [], []>} : vector<32x256xbf16>, vector<256x256xbf16>, vector<32x256xf32> -> vector<32x256xf32>
    %205 = arith.truncf %204 : vector<32x256xf32> to vector<32x256xbf16>
    %c4_168 = arith.constant 4 : index
    %c0_169 = arith.constant 0 : index
    %c0_170 = arith.constant 0 : index
    %206 = vector.load %arg2[%c4_168, %c0_169, %c0_170] : memref<9x256x256xbf16, #tpu.memory_space<vmem>>, vector<1x256x256xbf16>
    %207 = vector.shape_cast %206 : vector<1x256x256xbf16> to vector<256x256xbf16>
    %cst_171 = arith.constant dense<0.000000e+00> : vector<32x256xf32>
    %208 = tpu.matmul %189, %207, %cst_171 {dimension_numbers = #tpu.dot_dimension_numbers<[1], [0], [0], [1], [0, 0, 1, 1], [], []>} : vector<32x256xbf16>, vector<256x256xbf16>, vector<32x256xf32> -> vector<32x256xf32>
    %209 = arith.truncf %208 : vector<32x256xf32> to vector<32x256xbf16>
    %c5_172 = arith.constant 5 : index
    %c0_173 = arith.constant 0 : index
    %c0_174 = arith.constant 0 : index
    %210 = vector.load %arg2[%c5_172, %c0_173, %c0_174] : memref<9x256x256xbf16, #tpu.memory_space<vmem>>, vector<1x256x256xbf16>
    %211 = vector.shape_cast %210 : vector<1x256x256xbf16> to vector<256x256xbf16>
    %cst_175 = arith.constant dense<0.000000e+00> : vector<32x256xf32>
    %212 = tpu.matmul %189, %211, %cst_175 {dimension_numbers = #tpu.dot_dimension_numbers<[1], [0], [0], [1], [0, 0, 1, 1], [], []>} : vector<32x256xbf16>, vector<256x256xbf16>, vector<32x256xf32> -> vector<32x256xf32>
    %213 = arith.truncf %212 : vector<32x256xf32> to vector<32x256xbf16>
    %c6_176 = arith.constant 6 : index
    %c0_177 = arith.constant 0 : index
    %c0_178 = arith.constant 0 : index
    %214 = vector.load %arg2[%c6_176, %c0_177, %c0_178] : memref<9x256x256xbf16, #tpu.memory_space<vmem>>, vector<1x256x256xbf16>
    %215 = vector.shape_cast %214 : vector<1x256x256xbf16> to vector<256x256xbf16>
    %cst_179 = arith.constant dense<0.000000e+00> : vector<32x256xf32>
    %216 = tpu.matmul %189, %215, %cst_179 {dimension_numbers = #tpu.dot_dimension_numbers<[1], [0], [0], [1], [0, 0, 1, 1], [], []>} : vector<32x256xbf16>, vector<256x256xbf16>, vector<32x256xf32> -> vector<32x256xf32>
    %217 = arith.truncf %216 : vector<32x256xf32> to vector<32x256xbf16>
    %c7_180 = arith.constant 7 : index
    %c0_181 = arith.constant 0 : index
    %c0_182 = arith.constant 0 : index
    %218 = vector.load %arg2[%c7_180, %c0_181, %c0_182] : memref<9x256x256xbf16, #tpu.memory_space<vmem>>, vector<1x256x256xbf16>
    %219 = vector.shape_cast %218 : vector<1x256x256xbf16> to vector<256x256xbf16>
    %cst_183 = arith.constant dense<0.000000e+00> : vector<32x256xf32>
    %220 = tpu.matmul %189, %219, %cst_183 {dimension_numbers = #tpu.dot_dimension_numbers<[1], [0], [0], [1], [0, 0, 1, 1], [], []>} : vector<32x256xbf16>, vector<256x256xbf16>, vector<32x256xf32> -> vector<32x256xf32>
    %221 = arith.truncf %220 : vector<32x256xf32> to vector<32x256xbf16>
    %c8_184 = arith.constant 8 : index
    %c0_185 = arith.constant 0 : index
    %c0_186 = arith.constant 0 : index
    %222 = vector.load %arg2[%c8_184, %c0_185, %c0_186] : memref<9x256x256xbf16, #tpu.memory_space<vmem>>, vector<1x256x256xbf16>
    %223 = vector.shape_cast %222 : vector<1x256x256xbf16> to vector<256x256xbf16>
    %cst_187 = arith.constant dense<0.000000e+00> : vector<32x256xf32>
    %224 = tpu.matmul %189, %223, %cst_187 {dimension_numbers = #tpu.dot_dimension_numbers<[1], [0], [0], [1], [0, 0, 1, 1], [], []>} : vector<32x256xbf16>, vector<256x256xbf16>, vector<32x256xf32> -> vector<32x256xf32>
    %225 = arith.truncf %224 : vector<32x256xf32> to vector<32x256xbf16>
    %226 = tpu.concatenate %193, %197, %201, %205, %209, %213, %217, %221, %225 in 0 : vector<32x256xbf16>, vector<32x256xbf16>, vector<32x256xbf16>, vector<32x256xbf16>, vector<32x256xbf16>, vector<32x256xbf16>, vector<32x256xbf16>, vector<32x256xbf16>, vector<32x256xbf16> -> vector<288x256xbf16>
    %c2_188 = arith.constant 2 : index
    %c0_189 = arith.constant 0 : index
    %c0_190 = arith.constant 0 : index
    %227 = vector.load %arg5[%c2_188, %c0_189, %c0_190] : memref<3x32x288xbf16, #tpu.memory_space<vmem>>, vector<1x32x288xbf16>
    %228 = vector.shape_cast %227 : vector<1x32x288xbf16> to vector<32x288xbf16>
    %cst_191 = arith.constant dense<0.000000e+00> : vector<32x256xf32>
    %229 = tpu.matmul %228, %226, %cst_191 {dimension_numbers = #tpu.dot_dimension_numbers<[1], [0], [0], [1], [0, 0, 1, 1], [], []>} : vector<32x288xbf16>, vector<288x256xbf16>, vector<32x256xf32> -> vector<32x256xf32>
    %c2_192 = arith.constant 2 : index
    %c0_193 = arith.constant 0 : index
    %c0_194 = arith.constant 0 : index
    %230 = vector.load %arg6[%c2_192, %c0_193, %c0_194] : memref<3x32x1xf32, #tpu.memory_space<vmem>>, vector<1x32x1xf32>
    %231 = vector.shape_cast %230 : vector<1x32x1xf32> to vector<32x1xf32>
    %232 = vector.broadcast %231 : vector<32x1xf32> to vector<32x256xf32>
    %233 = arith.addf %229, %232 : vector<32x256xf32>
    %cst_195 = arith.constant 0.000000e+00 : f32
    %234 = vector.broadcast %cst_195 : f32 to vector<32x256xf32>
    %235 = arith.maximumf %233, %234 : vector<32x256xf32>
    %c0_196 = arith.constant 0 : index
    %c0_197 = arith.constant 0 : index
    %c0_198 = arith.constant 0 : index
    %236 = vector.load %arg11[%c0_196, %c0_197, %c0_198] : memref<1x32x256xf32, #tpu.memory_space<vmem>>, vector<1x32x256xf32>
    %237 = vector.shape_cast %236 : vector<1x32x256xf32> to vector<32x256xf32>
    %238 = vector.shape_cast %235 : vector<32x256xf32> to vector<1x32x256xf32>
    tpu.vector_store %arg11[%c0_196, %c0_197, %c0_198], %238 {strides = array<i32>} : memref<1x32x256xf32, #tpu.memory_space<vmem>>, vector<1x32x256xf32>,
    return
  }
  func.func @transform_0(%arg0: i32) -> (i32, i32, i32) {
    %c0_i32 = arith.constant 0 : i32
    %c0_i32_0 = arith.constant 0 : i32
    %c0_i32_1 = arith.constant 0 : i32
    return %arg0, %c0_i32, %c0_i32_0 : i32, i32, i32
  }
  func.func @transform_1(%arg0: i32) -> (i32, i32, i32) {
    %c0_i32 = arith.constant 0 : i32
    %c0_i32_0 = arith.constant 0 : i32
    %c0_i32_1 = arith.constant 0 : i32
    %c0_i32_2 = arith.constant 0 : i32
    return %c0_i32, %c0_i32_0, %c0_i32_1 : i32, i32, i32
  }
  func.func @transform_2(%arg0: i32) -> (i32, i32, i32) {
    %c0_i32 = arith.constant 0 : i32
    %c0_i32_0 = arith.constant 0 : i32
    %c0_i32_1 = arith.constant 0 : i32
    %c0_i32_2 = arith.constant 0 : i32
    return %c0_i32, %c0_i32_0, %c0_i32_1 : i32, i32, i32
  }
  func.func @transform_3(%arg0: i32) -> (i32, i32) {
    %c0_i32 = arith.constant 0 : i32
    %c0_i32_0 = arith.constant 0 : i32
    %c0_i32_1 = arith.constant 0 : i32
    return %c0_i32, %c0_i32_0 : i32, i32
  }
  func.func @transform_4(%arg0: i32) -> (i32, i32, i32) {
    %c0_i32 = arith.constant 0 : i32
    %c0_i32_0 = arith.constant 0 : i32
    %c0_i32_1 = arith.constant 0 : i32
    %c0_i32_2 = arith.constant 0 : i32
    return %c0_i32, %c0_i32_0, %c0_i32_1 : i32, i32, i32
  }
  func.func @transform_5(%arg0: i32) -> (i32, i32, i32) {
    %c0_i32 = arith.constant 0 : i32
    %c0_i32_0 = arith.constant 0 : i32
    %c0_i32_1 = arith.constant 0 : i32
    %c0_i32_2 = arith.constant 0 : i32
    return %c0_i32, %c0_i32_0, %c0_i32_1 : i32, i32, i32
  }
  func.func @transform_6(%arg0: i32) -> (i32, i32, i32) {
    %c0_i32 = arith.constant 0 : i32
    %c0_i32_0 = arith.constant 0 : i32
    %c0_i32_1 = arith.constant 0 : i32
    %c0_i32_2 = arith.constant 0 : i32
    return %c0_i32, %c0_i32_0, %c0_i32_1 : i32, i32, i32
  }
  func.func @transform_7(%arg0: i32) -> (i32, i32, i32) {
    %c0_i32 = arith.constant 0 : i32
    %c0_i32_0 = arith.constant 0 : i32
    %c0_i32_1 = arith.constant 0 : i32
    %c0_i32_2 = arith.constant 0 : i32
    return %c0_i32, %c0_i32_0, %c0_i32_1 : i32, i32, i32
  }
  func.func @transform_8(%arg0: i32) -> (i32, i32, i32) {
    %c0_i32 = arith.constant 0 : i32
    %c0_i32_0 = arith.constant 0 : i32
    %c0_i32_1 = arith.constant 0 : i32
    %c0_i32_2 = arith.constant 0 : i32
    return %c0_i32, %c0_i32_0, %c0_i32_1 : i32, i32, i32
  }
  func.func @transform_9(%arg0: i32) -> (i32, i32, i32) {
    %c0_i32 = arith.constant 0 : i32
    %c0_i32_0 = arith.constant 0 : i32
    %c0_i32_1 = arith.constant 0 : i32
    %c0_i32_2 = arith.constant 0 : i32
    return %c0_i32, %c0_i32_0, %c0_i32_1 : i32, i32, i32
  }
  func.func @transform_10(%arg0: i32) -> (i32, i32, i32) {
    %c0_i32 = arith.constant 0 : i32
    %c0_i32_0 = arith.constant 0 : i32
    %c0_i32_1 = arith.constant 0 : i32
    return %arg0, %c0_i32, %c0_i32_0 : i32, i32, i32
  }
}

</mosaic_0001>

<llo_original>
// kernel: dgcm_forward.1
$region0: #{dgcm_forward.1}
  #allocation0 [shape = 'u32[]', space=smem, size = 0x4, offset = 0x4, fixed_abs, tag = 'smem constant byte address 0x4 - core index']
  #allocation1 [shape = 'u32[144,128]{1,0:T(1,128)}', space=vmem, size = 0x12000, scoped, tag = 'internal scratch']
  %s0 = inlined_call_operand.vmem [shape: f32[2,32,256], index: 0, kind: input, shape index: {}]
  %s1 = inlined_call_operand.vmem [shape: bf16[9,256,256], index: 1, kind: input, shape index: {}]
  %s2 = inlined_call_operand.vmem [shape: bf16[9,256,64], index: 2, kind: input, shape index: {}]
  %s3 = inlined_call_operand.vmem [shape: bf16[64,256], index: 3, kind: input, shape index: {}]
  %s4 = inlined_call_operand.vmem [shape: bf16[3,32,288], index: 4, kind: input, shape index: {}]
  %s5 = inlined_call_operand.vmem [shape: f32[3,32,1], index: 5, kind: input, shape index: {}]
  %s6 = inlined_call_operand.vmem [shape: f32[4,16,32], index: 6, kind: input, shape index: {}]
  %s7 = inlined_call_operand.vmem [shape: f32[4,16,1], index: 7, kind: input, shape index: {}]
  %s8 = inlined_call_operand.vmem [shape: f32[4,32,16], index: 8, kind: input, shape index: {}]
  %s9 = inlined_call_operand.vmem [shape: f32[4,32,1], index: 9, kind: input, shape index: {}]
  %s10 = inlined_call_operand.vmem [shape: f32[2,32,256], index: 10, kind: output, shape index: {}]
  %s11 = sld [smem:[#allocation0]]
  $region73: #{dgcm_forward.1} parent=0
    _
  %s13 = ssub.s32 1, %s11
  %s14 = scalar_select 0, %s13, %s11
  loop: start=0, step=1, limit=4
  $region2: #{dgcm_forward.1} parent=0 // loop_pre_header
    _
  $region3: #{dgcm_forward.1} parent=0 // loop_header
    %s16 = sphi 0, %s20
    %p17 = scmp.ge.s32.totalorder %s16, 4
    %s26 = sphi 0, %s28
    %s29 = sphi 0, %s26
    %s30 = sphi 0, %s29
    %s46 = sphi 0, %s30
    %s50 = sphi 0, %s50
    %s52 = sphi 0, %s50
    %s53 = sphi 0, %s52
    %s67 = sphi 0, %s53
    %s71 = sphi 0, %s71
    %s73 = sphi 0, %s71
    %s74 = sphi 0, %s73
    %s88 = sphi 0, %s74
    %s92 = sphi 0, %s92
    %s94 = sphi 0, %s92
    %s95 = sphi 0, %s94
    %s109 = sphi 0, %s95
    %s113 = sphi 0, %s113
    %s115 = sphi 0, %s113
    %s116 = sphi 0, %s115
    %s130 = sphi 0, %s116
    %s134 = sphi 0, %s134
    %s136 = sphi 0, %s134
    %s137 = sphi 0, %s136
    %s151 = sphi 0, %s137
    %s155 = sphi 0, %s155
    %s157 = sphi 0, %s155
    %s158 = sphi 0, %s157
    %s172 = sphi 0, %s158
    %s176 = sphi 0, %s176
    %s178 = sphi 0, %s176
    %s179 = sphi 0, %s178
    %s193 = sphi 0, %s179
    %s197 = sphi 0, %s197
    %s199 = sphi 0, %s197
    %s200 = sphi 0, %s199
    %s214 = sphi 0, %s200
    %s218 = sphi 0, %s218
    %s220 = sphi 0, %s218
    %s221 = sphi 0, %s220
    %s235 = sphi 0, %s221
    %s241 = sphi 0, %s243
    %s244 = sphi 0, %s241
    %s245 = sphi 0, %s244
    %s261 = sphi 0, %s245
  $region4: #{dgcm_forward.1} parent=0 // loop_header_branch
    %19 = sbr.rel (%p17) target = $region8
  $region5: #{dgcm_forward.1} parent=0 // loop_body
    %s21 = ssub.s32 %s16, 1
    %s22 = ssub.s32 %s16, 2
    %s23 = sadd.s32 %s16, 1
    %s24 = ssub.s32 %s16, %s23
    %p25 = scmp.eq.s32.totalorder %s24, 0
    %s27 = sadd.s32 %s26, 1
    %s28 = scalar_select %p25, %s26, %s27
    %p31 = pneg %p25
    %p32 = scmp.eq.s32.totalorder %s16, 1
    %p33 = por %p31, %p32
    %p34 = scmp.ne.s32.totalorder %s26, %s29
    %p35 = scmp.eq.s32.totalorder %s16, 0
    %p36 = por %p34, %p35
    %p37 = scmp.ne.s32.totalorder %s26, %s29
    %p38 = scmp.eq.s32.totalorder %s21, 1
    %p39 = por %p37, %p38
    %p40 = scmp.ne.s32.totalorder %s29, %s30
    %p41 = scmp.eq.s32.totalorder %s21, 0
    %p42 = por %p40, %p41
    %p43 = scmp.ne.s32.totalorder %s29, %s30
    %p44 = scmp.eq.s32.totalorder %s22, 1
    %p45 = por %p43, %p44
    %p47 = scmp.ne.s32.totalorder %s30, %s46
    %p48 = scmp.eq.s32.totalorder %s22, 0
    %p49 = por %p47, %p48
    %s51 = sadd.s32 %s50, 1
    %p54 = scmp.eq.s32.totalorder %s16, 1
    %p55 = scmp.ne.s32.totalorder %s50, %s52
    %p56 = scmp.eq.s32.totalorder %s16, 0
    %p57 = por %p55, %p56
    %p58 = scmp.ne.s32.totalorder %s50, %s52
    %p59 = scmp.eq.s32.totalorder %s21, 1
    %p60 = por %p58, %p59
    %p61 = scmp.ne.s32.totalorder %s52, %s53
    %p62 = scmp.eq.s32.totalorder %s21, 0
    %p63 = por %p61, %p62
    %p64 = scmp.ne.s32.totalorder %s52, %s53
    %p65 = scmp.eq.s32.totalorder %s22, 1
    %p66 = por %p64, %p65
    %p68 = scmp.ne.s32.totalorder %s53, %s67
    %p69 = scmp.eq.s32.totalorder %s22, 0
    %p70 = por %p68, %p69
    %s72 = sadd.s32 %s71, 1
    %p75 = scmp.eq.s32.totalorder %s16, 1
    %p76 = scmp.ne.s32.totalorder %s71, %s73
    %p77 = scmp.eq.s32.totalorder %s16, 0
    %p78 = por %p76, %p77
    %p79 = scmp.ne.s32.totalorder %s71, %s73
    %p80 = scmp.eq.s32.totalorder %s21, 1
    %p81 = por %p79, %p80
    %p82 = scmp.ne.s32.totalorder %s73, %s74
    %p83 = scmp.eq.s32.totalorder %s21, 0
    %p84 = por %p82, %p83
    %p85 = scmp.ne.s32.totalorder %s73, %s74
    %p86 = scmp.eq.s32.totalorder %s22, 1
    %p87 = por %p85, %p86
    %p89 = scmp.ne.s32.totalorder %s74, %s88
    %p90 = scmp.eq.s32.totalorder %s22, 0
    %p91 = por %p89, %p90
    %s93 = sadd.s32 %s92, 1
    %p96 = scmp.eq.s32.totalorder %s16, 1
    %p97 = scmp.ne.s32.totalorder %s92, %s94
    %p98 = scmp.eq.s32.totalorder %s16, 0
    %p99 = por %p97, %p98
    %p100 = scmp.ne.s32.totalorder %s92, %s94
    %p101 = scmp.eq.s32.totalorder %s21, 1
    %p102 = por %p100, %p101
    %p103 = scmp.ne.s32.totalorder %s94, %s95
    %p104 = scmp.eq.s32.totalorder %s21, 0
    %p105 = por %p103, %p104
    %p106 = scmp.ne.s32.totalorder %s94, %s95
    %p107 = scmp.eq.s32.totalorder %s22, 1
    %p108 = por %p106, %p107
    %p110 = scmp.ne.s32.totalorder %s95, %s109
    %p111 = scmp.eq.s32.totalorder %s22, 0
    %p112 = por %p110, %p111
    %s114 = sadd.s32 %s113, 1
    %p117 = scmp.eq.s32.totalorder %s16, 1
    %p118 = scmp.ne.s32.totalorder %s113, %s115
    %p119 = scmp.eq.s32.totalorder %s16, 0
    %p120 = por %p118, %p119
    %p121 = scmp.ne.s32.totalorder %s113, %s115
    %p122 = scmp.eq.s32.totalorder %s21, 1
    %p123 = por %p121, %p122
    %p124 = scmp.ne.s32.totalorder %s115, %s116
    %p125 = scmp.eq.s32.totalorder %s21, 0
    %p126 = por %p124, %p125
    %p127 = scmp.ne.s32.totalorder %s115, %s116
    %p128 = scmp.eq.s32.totalorder %s22, 1
    %p129 = por %p127, %p128
    %p131 = scmp.ne.s32.totalorder %s116, %s130
    %p132 = scmp.eq.s32.totalorder %s22, 0
    %p133 = por %p131, %p132
    %s135 = sadd.s32 %s134, 1
    %p138 = scmp.eq.s32.totalorder %s16, 1
    %p139 = scmp.ne.s32.totalorder %s134, %s136
    %p140 = scmp.eq.s32.totalorder %s16, 0
    %p141 = por %p139, %p140
    %p142 = scmp.ne.s32.totalorder %s134, %s136
    %p143 = scmp.eq.s32.totalorder %s21, 1
    %p144 = por %p142, %p143
    %p145 = scmp.ne.s32.totalorder %s136, %s137
    %p146 = scmp.eq.s32.totalorder %s21, 0
    %p147 = por %p145, %p146
    %p148 = scmp.ne.s32.totalorder %s136, %s137
    %p149 = scmp.eq.s32.totalorder %s22, 1
    %p150 = por %p148, %p149
    %p152 = scmp.ne.s32.totalorder %s137, %s151
    %p153 = scmp.eq.s32.totalorder %s22, 0
    %p154 = por %p152, %p153
    %s156 = sadd.s32 %s155, 1
    %p159 = scmp.eq.s32.totalorder %s16, 1
    %p160 = scmp.ne.s32.totalorder %s155, %s157
    %p161 = scmp.eq.s32.totalorder %s16, 0
    %p162 = por %p160, %p161
    %p163 = scmp.ne.s32.totalorder %s155, %s157
    %p164 = scmp.eq.s32.totalorder %s21, 1
    %p165 = por %p163, %p164
    %p166 = scmp.ne.s32.totalorder %s157, %s158
    %p167 = scmp.eq.s32.totalorder %s21, 0
    %p168 = por %p166, %p167
    %p169 = scmp.ne.s32.totalorder %s157, %s158
    %p170 = scmp.eq.s32.totalorder %s22, 1
    %p171 = por %p169, %p170
    %p173 = scmp.ne.s32.totalorder %s158, %s172
    %p174 = scmp.eq.s32.totalorder %s22, 0
    %p175 = por %p173, %p174
    %s177 = sadd.s32 %s176, 1
    %p180 = scmp.eq.s32.totalorder %s16, 1
    %p181 = scmp.ne.s32.totalorder %s176, %s178
    %p182 = scmp.eq.s32.totalorder %s16, 0
    %p183 = por %p181, %p182
    %p184 = scmp.ne.s32.totalorder %s176, %s178
    %p185 = scmp.eq.s32.totalorder %s21, 1
    %p186 = por %p184, %p185
    %p187 = scmp.ne.s32.totalorder %s178, %s179
    %p188 = scmp.eq.s32.totalorder %s21, 0
    %p189 = por %p187, %p188
    %p190 = scmp.ne.s32.totalorder %s178, %s179
    %p191 = scmp.eq.s32.totalorder %s22, 1
    %p192 = por %p190, %p191
    %p194 = scmp.ne.s32.totalorder %s179, %s193
    %p195 = scmp.eq.s32.totalorder %s22, 0
    %p196 = por %p194, %p195
    %s198 = sadd.s32 %s197, 1
    %p201 = scmp.eq.s32.totalorder %s16, 1
    %p202 = scmp.ne.s32.totalorder %s197, %s199
    %p203 = scmp.eq.s32.totalorder %s16, 0
    %p204 = por %p202, %p203
    %p205 = scmp.ne.s32.totalorder %s197, %s199
    %p206 = scmp.eq.s32.totalorder %s21, 1
    %p207 = por %p205, %p206
    %p208 = scmp.ne.s32.totalorder %s199, %s200
    %p209 = scmp.eq.s32.totalorder %s21, 0
    %p210 = por %p208, %p209
    %p211 = scmp.ne.s32.totalorder %s199, %s200
    %p212 = scmp.eq.s32.totalorder %s22, 1
    %p213 = por %p211, %p212
    %p215 = scmp.ne.s32.totalorder %s200, %s214
    %p216 = scmp.eq.s32.totalorder %s22, 0
    %p217 = por %p215, %p216
    %s219 = sadd.s32 %s218, 1
    %p222 = scmp.eq.s32.totalorder %s16, 1
    %p223 = scmp.ne.s32.totalorder %s218, %s220
    %p224 = scmp.eq.s32.totalorder %s16, 0
    %p225 = por %p223, %p224
    %p226 = scmp.ne.s32.totalorder %s218, %s220
    %p227 = scmp.eq.s32.totalorder %s21, 1
    %p228 = por %p226, %p227
    %p229 = scmp.ne.s32.totalorder %s220, %s221
    %p230 = scmp.eq.s32.totalorder %s21, 0
    %p231 = por %p229, %p230
    %p232 = scmp.ne.s32.totalorder %s220, %s221
    %p233 = scmp.eq.s32.totalorder %s22, 1
    %p234 = por %p232, %p233
    %p236 = scmp.ne.s32.totalorder %s221, %s235
    %p237 = scmp.eq.s32.totalorder %s22, 0
    %p238 = por %p236, %p237
    %s239 = ssub.s32 %s16, %s23
    %p240 = scmp.eq.s32.totalorder %s239, 0
    %s242 = sadd.s32 %s241, 1
    %s243 = scalar_select %p240, %s241, %s242
    %p246 = pneg %p240
    %p247 = scmp.eq.s32.totalorder %s16, 1
    %p248 = por %p246, %p247
    %p249 = scmp.ne.s32.totalorder %s241, %s244
    %p250 = scmp.eq.s32.totalorder %s16, 0
    %p251 = por %p249, %p250
    %p252 = scmp.ne.s32.totalorder %s241, %s244
    %p253 = scmp.eq.s32.totalorder %s21, 1
    %p254 = por %p252, %p253
    %p255 = scmp.ne.s32.totalorder %s244, %s245
    %p256 = scmp.eq.s32.totalorder %s21, 0
    %p257 = por %p255, %p256
    %p258 = scmp.ne.s32.totalorder %s244, %s245
    %p259 = scmp.eq.s32.totalorder %s22, 1
    %p260 = por %p258, %p259
    %p262 = scmp.ne.s32.totalorder %s245, %s261
    %p263 = scmp.eq.s32.totalorder %s22, 0
    %p264 = por %p262, %p263
    %p265 = scmp.le.s32.totalorder 1, %s16
    %p266 = scmp.lt.s32.totalorder %s16, 3
    %p267 = pnand %p265, %p266
    %p268 = pneg %p267
    // Predicated region
    $region9: #{dgcm_forward.1} parent=5 // pred_check
      _
    $region10: #{dgcm_forward.1} parent=5 // pred_check_branch
      %270 = sbr.rel (%p267) target = $region12
    $region11: #{dgcm_forward.1} parent=5 // pred_region
      %s271 = ssub.s32 %s16, 1
      // Predicated region
      $region13: #{dgcm_forward.1} parent=11 // pred_check
        %p272 = pneg %p63
      $region14: #{dgcm_forward.1} parent=11 // pred_check_branch
        %274 = sbr.rel (%p272) target = $region16
      $region15: #{dgcm_forward.1} parent=11 // pred_region
        _
      $region16: #{dgcm_forward.1} parent=11 // pred_fallthru
        _
      // Predicated region
      $region17: #{dgcm_forward.1} parent=11 // pred_check
        %p275 = pneg %p84
      $region18: #{dgcm_forward.1} parent=11 // pred_check_branch
        %277 = sbr.rel (%p275) target = $region20
      $region19: #{dgcm_forward.1} parent=11 // pred_region
        _
      $region20: #{dgcm_forward.1} parent=11 // pred_fallthru
        _
      // Predicated region
      $region21: #{dgcm_forward.1} parent=11 // pred_check
        %p278 = pneg %p105
      $region22: #{dgcm_forward.1} parent=11 // pred_check_branch
        %280 = sbr.rel (%p278) target = $region24
      $region23: #{dgcm_forward.1} parent=11 // pred_region
        _
      $region24: #{dgcm_forward.1} parent=11 // pred_fallthru
        _
      // Predicated region
      $region25: #{dgcm_forward.1} parent=11 // pred_check
        %p281 = pneg %p126
      $region26: #{dgcm_forward.1} parent=11 // pred_check_branch
        %283 = sbr.rel (%p281) target = $region28
      $region27: #{dgcm_forward.1} parent=11 // pred_region
        _
      $region28: #{dgcm_forward.1} parent=11 // pred_fallthru
        _
      // Predicated region
      $region29: #{dgcm_forward.1} parent=11 // pred_check
        %p284 = pneg %p147
      $region30: #{dgcm_forward.1} parent=11 // pred_check_branch
        %286 = sbr.rel (%p284) target = $region32
      $region31: #{dgcm_forward.1} parent=11 // pred_region
        _
      $region32: #{dgcm_forward.1} parent=11 // pred_fallthru
        _
      // Predicated region
      $region33: #{dgcm_forward.1} parent=11 // pred_check
        %p287 = pneg %p168
      $region34: #{dgcm_forward.1} parent=11 // pred_check_branch
        %289 = sbr.rel (%p287) target = $region36
      $region35: #{dgcm_forward.1} parent=11 // pred_region
        _
      $region36: #{dgcm_forward.1} parent=11 // pred_fallthru
        _
      // Predicated region
      $region37: #{dgcm_forward.1} parent=11 // pred_check
        %p290 = pneg %p189
      $region38: #{dgcm_forward.1} parent=11 // pred_check_branch
        %292 = sbr.rel (%p290) target = $region40
      $region39: #{dgcm_forward.1} parent=11 // pred_region
        _
      $region40: #{dgcm_forward.1} parent=11 // pred_fallthru
        _
      // Predicated region
      $region41: #{dgcm_forward.1} parent=11 // pred_check
        %p293 = pneg %p210
      $region42: #{dgcm_forward.1} parent=11 // pred_check_branch
        %295 = sbr.rel (%p293) target = $region44
      $region43: #{dgcm_forward.1} parent=11 // pred_region
        _
      $region44: #{dgcm_forward.1} parent=11 // pred_fallthru
        _
      // Predicated region
      $region45: #{dgcm_forward.1} parent=11 // pred_check
        %p296 = pneg %p231
      $region46: #{dgcm_forward.1} parent=11 // pred_check_branch
        %298 = sbr.rel (%p296) target = $region48
      $region47: #{dgcm_forward.1} parent=11 // pred_region
        _
      $region48: #{dgcm_forward.1} parent=11 // pred_fallthru
        _
    $region12: #{dgcm_forward.1} parent=5 // pred_fallthru
      _
    %p299 = scmp.lt.s32.totalorder %s16, 2
    // Predicated region
    $region49: #{dgcm_forward.1} parent=5 // pred_check
      %p300 = pneg %p299
    $region50: #{dgcm_forward.1} parent=5 // pred_check_branch
      %302 = sbr.rel (%p300) target = $region52
    $region51: #{dgcm_forward.1} parent=5 // pred_region
      // Predicated region
      $region53: #{dgcm_forward.1} parent=51 // pred_check
        %p303 = pneg %p36
      $region54: #{dgcm_forward.1} parent=51 // pred_check_branch
        %305 = sbr.rel (%p303) target = $region56
      $region55: #{dgcm_forward.1} parent=51 // pred_region
        %p306 = scmp.lt.s32.totalorder %s16, 1
        %s307 = scalar_select %p306, %s16, 1
        %s308 = smul.addr %s307, 8
        %s309 = smul.addr %s308, 8
        %s310 = scalar_lea.vmem %s0, %s309
      $region56: #{dgcm_forward.1} parent=51 // pred_fallthru
        _
    $region52: #{dgcm_forward.1} parent=5 // pred_fallthru
      _
    %p311 = scmp.le.s32.totalorder 1, %s16
    %p312 = scmp.lt.s32.totalorder %s16, 3
    %p313 = pnand %p311, %p312
    %p314 = pneg %p313
    // Predicated region
    $region57: #{dgcm_forward.1} parent=5 // pred_check
      _
    $region58: #{dgcm_forward.1} parent=5 // pred_check_branch
      %316 = sbr.rel (%p313) target = $region60
    $region59: #{dgcm_forward.1} parent=5 // pred_region
      %s317 = ssub.s32 %s16, 1
      %p318 = scmp.lt.s32.totalorder %s21, 1
      %s319 = scalar_select %p318, %s21, 1
      %s320 = smul.addr %s319, 8
      %s321 = smul.addr %s320, 8
      %s322 = scalar_lea.vmem %s0, %s321
      %p323 = pneg %p42
      %p324 = pneg %p39
      %p325 = pneg %p63
      %p326 = pneg %p60
      %p327 = pneg %p84
      %p328 = pneg %p81
      %p329 = pneg %p105
      %p330 = pneg %p102
      %p331 = pneg %p126
      %p332 = pneg %p123
      %p333 = pneg %p147
      %p334 = pneg %p144
      %p335 = pneg %p168
      %p336 = pneg %p165
      %p337 = pneg %p189
      %p338 = pneg %p186
      %p339 = pneg %p210
      %p340 = pneg %p207
      %p341 = pneg %p231
      %p342 = pneg %p228
      %p343 = pneg %p257
      %p344 = pneg %p254
      %p345 = scmp.lt.s32.totalorder %s21, 1
      %s346 = scalar_select %p345, %s21, 1
      %s347 = smul.addr %s346, 8
      %s348 = smul.addr %s347, 8
      %s349 = scalar_lea.vmem %s10, %s348
      %p350 = scmp.lt.s32.totalorder %s21, 1
      %s351 = scalar_select %p350, %s21, 1
      %s352 = smul.addr %s351, 8
      %s353 = smul.addr %s352, 8
      %s354 = scalar_lea.vmem %s0, %s353
      %p355 = scmp.lt.s32.totalorder %s21, 1
      %s356 = scalar_select %p355, %s21, 1
      %s357 = smul.addr %s356, 8
      %s358 = smul.addr %s357, 8
      %s359 = scalar_lea.vmem %s10, %s358
      %v361 = vld [vmem:[%s354] sm:$0xff]
      %v362 = vld [vmem:[%s354 + $0x8] sm:$0xff]
      %v363 = vld [vmem:[%s354 + $0x10] sm:$0xff]
      %v364 = vld [vmem:[%s354 + $0x18] sm:$0xff]
      %v365 = vld [vmem:[%s354 + $0x20] sm:$0xff]
      %v366 = vld [vmem:[%s354 + $0x28] sm:$0xff]
      %v367 = vld [vmem:[%s354 + $0x30] sm:$0xff]
      %v368 = vld [vmem:[%s354 + $0x38] sm:$0xff]
      %v369 = vpack.c.bf16 %v363, %v361
      %v370 = vpack.c.bf16 %v364, %v362
      %v371 = vpack.c.bf16 %v367, %v365
      %v372 = vpack.c.bf16 %v368, %v366
      %v373 = vld [vmem:[%s1] sm:$0xff]
      %v374 = vld [vmem:[%s1 + $0x8] sm:$0xff]
      %v375 = vld [vmem:[%s1 + $0x10] sm:$0xff]
      %v376 = vld [vmem:[%s1 + $0x18] sm:$0xff]
      %v377 = vld [vmem:[%s1 + $0x20] sm:$0xff]
      %v378 = vld [vmem:[%s1 + $0x28] sm:$0xff]
      %v379 = vld [vmem:[%s1 + $0x30] sm:$0xff]
      %v380 = vld [vmem:[%s1 + $0x38] sm:$0xff]
      %v381 = vld [vmem:[%s1 + $0x40] sm:$0xff]
      %v382 = vld [vmem:[%s1 + $0x48] sm:$0xff]
      %v383 = vld [vmem:[%s1 + $0x50] sm:$0xff]
      %v384 = vld [vmem:[%s1 + $0x58] sm:$0xff]
      %v385 = vld [vmem:[%s1 + $0x60] sm:$0xff]
      %v386 = vld [vmem:[%s1 + $0x68] sm:$0xff]
      %v387 = vld [vmem:[%s1 + $0x70] sm:$0xff]
      %v388 = vld [vmem:[%s1 + $0x78] sm:$0xff]
      %v389 = vld [vmem:[%s1 + $0x80] sm:$0xff]
      %v390 = vld [vmem:[%s1 + $0x88] sm:$0xff]
      %v391 = vld [vmem:[%s1 + $0x90] sm:$0xff]
      %v392 = vld [vmem:[%s1 + $0x98] sm:$0xff]
      %v393 = vld [vmem:[%s1 + $0xa0] sm:$0xff]
      %v394 = vld [vmem:[%s1 + $0xa8] sm:$0xff]
      %v395 = vld [vmem:[%s1 + $0xb0] sm:$0xff]
      %v396 = vld [vmem:[%s1 + $0xb8] sm:$0xff]
      %v397 = vld [vmem:[%s1 + $0xc0] sm:$0xff]
      %v398 = vld [vmem:[%s1 + $0xc8] sm:$0xff]
      %v399 = vld [vmem:[%s1 + $0xd0] sm:$0xff]
      %v400 = vld [vmem:[%s1 + $0xd8] sm:$0xff]
      %v401 = vld [vmem:[%s1 + $0xe0] sm:$0xff]
      %v402 = vld [vmem:[%s1 + $0xe8] sm:$0xff]
      %v403 = vld [vmem:[%s1 + $0xf0] sm:$0xff]
      %v404 = vld [vmem:[%s1 + $0xf8] sm:$0xff]
      %v437 = vunpack.c.l.b16 %v373
      %v438 = vunpack.c.h.b16 %v373
      %v439 = vunpack.c.l.b16 %v374
      %v440 = vunpack.c.h.b16 %v374
      %v441 = vunpack.c.l.b16 %v375
      %v442 = vunpack.c.h.b16 %v375
      %v443 = vunpack.c.l.b16 %v376
      %v444 = vunpack.c.h.b16 %v376
      %v445 = vunpack.c.l.b16 %v377
      %v446 = vunpack.c.h.b16 %v377
      %v447 = vunpack.c.l.b16 %v378
      %v448 = vunpack.c.h.b16 %v378
      %v449 = vunpack.c.l.b16 %v379
      %v450 = vunpack.c.h.b16 %v379
      %v451 = vunpack.c.l.b16 %v380
      %v452 = vunpack.c.h.b16 %v380
      %v453 = vunpack.c.l.b16 %v381
      %v454 = vunpack.c.h.b16 %v381
      %v455 = vunpack.c.l.b16 %v382
      %v456 = vunpack.c.h.b16 %v382
      %v457 = vunpack.c.l.b16 %v383
      %v458 = vunpack.c.h.b16 %v383
      %v459 = vunpack.c.l.b16 %v384
      %v460 = vunpack.c.h.b16 %v384
      %v461 = vunpack.c.l.b16 %v385
      %v462 = vunpack.c.h.b16 %v385
      %v463 = vunpack.c.l.b16 %v386
      %v464 = vunpack.c.h.b16 %v386
      %v465 = vunpack.c.l.b16 %v387
      %v466 = vunpack.c.h.b16 %v387
      %v467 = vunpack.c.l.b16 %v388
      %v468 = vunpack.c.h.b16 %v388
      %v469 = vunpack.c.l.b16 %v389
      %v470 = vunpack.c.h.b16 %v389
      %v471 = vunpack.c.l.b16 %v390
      %v472 = vunpack.c.h.b16 %v390
      %v473 = vunpack.c.l.b16 %v391
      %v474 = vunpack.c.h.b16 %v391
      %v475 = vunpack.c.l.b16 %v392
      %v476 = vunpack.c.h.b16 %v392
      %v477 = vunpack.c.l.b16 %v393
      %v478 = vunpack.c.h.b16 %v393
      %v479 = vunpack.c.l.b16 %v394
      %v480 = vunpack.c.h.b16 %v394
      %v481 = vunpack.c.l.b16 %v395
      %v482 = vunpack.c.h.b16 %v395
      %v483 = vunpack.c.l.b16 %v396
      %v484 = vunpack.c.h.b16 %v396
      %v485 = vunpack.c.l.b16 %v397
      %v486 = vunpack.c.h.b16 %v397
      %v487 = vunpack.c.l.b16 %v398
      %v488 = vunpack.c.h.b16 %v398
      %v489 = vunpack.c.l.b16 %v399
      %v490 = vunpack.c.h.b16 %v399
      %v491 = vunpack.c.l.b16 %v400
      %v492 = vunpack.c.h.b16 %v400
      %v493 = vunpack.c.l.b16 %v401
      %v494 = vunpack.c.h.b16 %v401
      %v495 = vunpack.c.l.b16 %v402
      %v496 = vunpack.c.h.b16 %v402
      %v497 = vunpack.c.l.b16 %v403
      %v498 = vunpack.c.h.b16 %v403
      %v499 = vunpack.c.l.b16 %v404
      %v500 = vunpack.c.h.b16 %v404
      %v501 = vpack.c.b16 %v439, %v437
      %v502 = vpack.c.b16 %v440, %v438
      %v503 = vpack.c.b16 %v443, %v441
      %v504 = vpack.c.b16 %v444, %v442
      %v505 = vpack.c.b16 %v447, %v445
      %v506 = vpack.c.b16 %v448, %v446
      %v507 = vpack.c.b16 %v451, %v449
      %v508 = vpack.c.b16 %v452, %v450
      %v509 = vpack.c.b16 %v455, %v453
      %v510 = vpack.c.b16 %v456, %v454
      %v511 = vpack.c.b16 %v459, %v457
      %v512 = vpack.c.b16 %v460, %v458
      %v513 = vpack.c.b16 %v463, %v461
      %v514 = vpack.c.b16 %v464, %v462
      %v515 = vpack.c.b16 %v467, %v465
      %v516 = vpack.c.b16 %v468, %v466
      %v517 = vpack.c.b16 %v471, %v469
      %v518 = vpack.c.b16 %v472, %v470
      %v519 = vpack.c.b16 %v475, %v473
      %v520 = vpack.c.b16 %v476, %v474
      %v521 = vpack.c.b16 %v479, %v477
      %v522 = vpack.c.b16 %v480, %v478
      %v523 = vpack.c.b16 %v483, %v481
      %v524 = vpack.c.b16 %v484, %v482
      %v525 = vpack.c.b16 %v487, %v485
      %v526 = vpack.c.b16 %v488, %v486
      %v527 = vpack.c.b16 %v491, %v489
      %v528 = vpack.c.b16 %v492, %v490
      %v529 = vpack.c.b16 %v495, %v493
      %v530 = vpack.c.b16 %v496, %v494
      %v531 = vpack.c.b16 %v499, %v497
      %v532 = vpack.c.b16 %v500, %v498
      %565 = vmatprep.subr.bf16.mxu0 %v516
      %566 = vmatpush1.bf16.msra.mxu0 %v515
      %567 = vmatprep.subr.bf16.mxu0 %v514
      %568 = vmatpush1.bf16.msra.mxu0 %v513
      %569 = vmatprep.subr.bf16.mxu0 %v512
      %570 = vmatpush1.bf16.msra.mxu0 %v511
      %571 = vmatprep.subr.bf16.mxu0 %v510
      %572 = vmatpush1.bf16.msra.mxu0 %v509
      %573 = vmatprep.subr.bf16.mxu0 %v508
      %574 = vmatpush1.bf16.msra.mxu0 %v507
      %575 = vmatprep.subr.bf16.mxu0 %v506
      %576 = vmatpush1.bf16.msra.mxu0 %v505
      %577 = vmatprep.subr.bf16.mxu0 %v504
      %578 = vmatpush1.bf16.msra.mxu0 %v503
      %579 = vmatprep.subr.bf16.mxu0 %v502
      %580 = vmatpush1.bf16.msra.mxu0 %v501
      %581 = vmatprep.subr.bf16.mxu0 %v532
      %582 = vmatpush2.bf16.msra.mxu0 %v531
      %583 = vmatprep.subr.bf16.mxu0 %v530
      %584 = vmatpush2.bf16.msra.mxu0 %v529
      %585 = vmatprep.subr.bf16.mxu0 %v528
      %586 = vmatpush2.bf16.msra.mxu0 %v527
      %587 = vmatprep.subr.bf16.mxu0 %v526
      %588 = vmatpush2.bf16.msra.mxu0 %v525
      %589 = vmatprep.subr.bf16.mxu0 %v524
      %590 = vmatpush2.bf16.msra.mxu0 %v523
      %591 = vmatprep.subr.bf16.mxu0 %v522
      %592 = vmatpush2.bf16.msra.mxu0 %v521
      %593 = vmatprep.subr.bf16.mxu0 %v520
      %594 = vmatpush2.bf16.msra.mxu0 %v519
      %595 = vmatprep.subr.bf16.mxu0 %v518
      %596 = vmatpush2.bf16.msra.mxu0 %v517
      %597 = vmatprep.mubr.bf16.mxu0 %v370
      %598 = vmatmul.mubr.bf16.gmra.mxu0 %v369
      %v599 = vpop.f32.mrf.mxu0
      %v600 = vadd.f32 0.0, %v599
      %v601 = vpop.f32.mrf.mxu0
      %v602 = vadd.f32 0.0, %v601
      %v603 = vpop.f32.mrf.mxu0
      %v604 = vadd.f32 0.0, %v603
      %v605 = vpop.f32.mrf.mxu0
      %v606 = vadd.f32 0.0, %v605
      %607 = vmatprep.mubr.bf16.mxu0 %v372
      %608 = vmatmul.mubr.bf16.gmra.mxu0 %v371
      %v609 = vpop.f32.mrf.mxu0
      %v610 = vadd.f32 0.0, %v609
      %v611 = vpop.f32.mrf.mxu0
      %v612 = vadd.f32 0.0, %v611
      %v613 = vpop.f32.mrf.mxu0
      %v614 = vadd.f32 0.0, %v613
      %v615 = vpop.f32.mrf.mxu0
      %v616 = vadd.f32 0.0, %v615
      %617 = vdwg.mxu0
      %v618 = vpack.c.bf16 %v604, %v600
      %v619 = vpack.c.bf16 %v606, %v602
      %v620 = vpack.c.bf16 %v614, %v610
      %v621 = vpack.c.bf16 %v616, %v612
      %s622 = scalar_lea.vmem %s1, 256
      %v623 = vld [vmem:[%s622] sm:$0xff]
      %v624 = vld [vmem:[%s622 + $0x8] sm:$0xff]
      %v625 = vld [vmem:[%s622 + $0x10] sm:$0xff]
      %v626 = vld [vmem:[%s622 + $0x18] sm:$0xff]
      %v627 = vld [vmem:[%s622 + $0x20] sm:$0xff]
      %v628 = vld [vmem:[%s622 + $0x28] sm:$0xff]
      %v629 = vld [vmem:[%s622 + $0x30] sm:$0xff]
      %v630 = vld [vmem:[%s622 + $0x38] sm:$0xff]
      %v631 = vld [vmem:[%s622 + $0x40] sm:$0xff]
      %v632 = vld [vmem:[%s622 + $0x48] sm:$0xff]
      %v633 = vld [vmem:[%s622 + $0x50] sm:$0xff]
      %v634 = vld [vmem:[%s622 + $0x58] sm:$0xff]
      %v635 = vld [vmem:[%s622 + $0x60] sm:$0xff]
      %v636 = vld [vmem:[%s622 + $0x68] sm:$0xff]
      %v637 = vld [vmem:[%s622 + $0x70] sm:$0xff]
      %v638 = vld [vmem:[%s622 + $0x78] sm:$0xff]
      %v639 = vld [vmem:[%s622 + $0x80] sm:$0xff]
      %v640 = vld [vmem:[%s622 + $0x88] sm:$0xff]
      %v641 = vld [vmem:[%s622 + $0x90] sm:$0xff]
      %v642 = vld [vmem:[%s622 + $0x98] sm:$0xff]
      %v643 = vld [vmem:[%s622 + $0xa0] sm:$0xff]
      %v644 = vld [vmem:[%s622 + $0xa8] sm:$0xff]
      %v645 = vld [vmem:[%s622 + $0xb0] sm:$0xff]
      %v646 = vld [vmem:[%s622 + $0xb8] sm:$0xff]
      %v647 = vld [vmem:[%s622 + $0xc0] sm:$0xff]
      %v648 = vld [vmem:[%s622 + $0xc8] sm:$0xff]
      %v649 = vld [vmem:[%s622 + $0xd0] sm:$0xff]
      %v650 = vld [vmem:[%s622 + $0xd8] sm:$0xff]
      %v651 = vld [vmem:[%s622 + $0xe0] sm:$0xff]
      %v652 = vld [vmem:[%s622 + $0xe8] sm:$0xff]
      %v653 = vld [vmem:[%s622 + $0xf0] sm:$0xff]
      %v654 = vld [vmem:[%s622 + $0xf8] sm:$0xff]
      %v687 = vunpack.c.l.b16 %v623
      %v688 = vunpack.c.h.b16 %v623
      %v689 = vunpack.c.l.b16 %v624
      %v690 = vunpack.c.h.b16 %v624
      %v691 = vunpack.c.l.b16 %v625
      %v692 = vunpack.c.h.b16 %v625
      %v693 = vunpack.c.l.b16 %v626
      %v694 = vunpack.c.h.b16 %v626
      %v695 = vunpack.c.l.b16 %v627
      %v696 = vunpack.c.h.b16 %v627
      %v697 = vunpack.c.l.b16 %v628
      %v698 = vunpack.c.h.b16 %v628
      %v699 = vunpack.c.l.b16 %v629
      %v700 = vunpack.c.h.b16 %v629
      %v701 = vunpack.c.l.b16 %v630
      %v702 = vunpack.c.h.b16 %v630
      %v703 = vunpack.c.l.b16 %v631
      %v704 = vunpack.c.h.b16 %v631
      %v705 = vunpack.c.l.b16 %v632
      %v706 = vunpack.c.h.b16 %v632
      %v707 = vunpack.c.l.b16 %v633
      %v708 = vunpack.c.h.b16 %v633
      %v709 = vunpack.c.l.b16 %v634
      %v710 = vunpack.c.h.b16 %v634
      %v711 = vunpack.c.l.b16 %v635
      %v712 = vunpack.c.h.b16 %v635
      %v713 = vunpack.c.l.b16 %v636
      %v714 = vunpack.c.h.b16 %v636
      %v715 = vunpack.c.l.b16 %v637
      %v716 = vunpack.c.h.b16 %v637
      %v717 = vunpack.c.l.b16 %v638
      %v718 = vunpack.c.h.b16 %v638
      %v719 = vunpack.c.l.b16 %v639
      %v720 = vunpack.c.h.b16 %v639
      %v721 = vunpack.c.l.b16 %v640
      %v722 = vunpack.c.h.b16 %v640
      %v723 = vunpack.c.l.b16 %v641
      %v724 = vunpack.c.h.b16 %v641
      %v725 = vunpack.c.l.b16 %v642
      %v726 = vunpack.c.h.b16 %v642
      %v727 = vunpack.c.l.b16 %v643
      %v728 = vunpack.c.h.b16 %v643
      %v729 = vunpack.c.l.b16 %v644
      %v730 = vunpack.c.h.b16 %v644
      %v731 = vunpack.c.l.b16 %v645
      %v732 = vunpack.c.h.b16 %v645
      %v733 = vunpack.c.l.b16 %v646
      %v734 = vunpack.c.h.b16 %v646
      %v735 = vunpack.c.l.b16 %v647
      %v736 = vunpack.c.h.b16 %v647
      %v737 = vunpack.c.l.b16 %v648
      %v738 = vunpack.c.h.b16 %v648
      %v739 = vunpack.c.l.b16 %v649
      %v740 = vunpack.c.h.b16 %v649
      %v741 = vunpack.c.l.b16 %v650
      %v742 = vunpack.c.h.b16 %v650
      %v743 = vunpack.c.l.b16 %v651
      %v744 = vunpack.c.h.b16 %v651
      %v745 = vunpack.c.l.b16 %v652
      %v746 = vunpack.c.h.b16 %v652
      %v747 = vunpack.c.l.b16 %v653
      %v748 = vunpack.c.h.b16 %v653
      %v749 = vunpack.c.l.b16 %v654
      %v750 = vunpack.c.h.b16 %v654
      %v751 = vpack.c.b16 %v689, %v687
      %v752 = vpack.c.b16 %v690, %v688
      %v753 = vpack.c.b16 %v693, %v691
      %v754 = vpack.c.b16 %v694, %v692
      %v755 = vpack.c.b16 %v697, %v695
      %v756 = vpack.c.b16 %v698, %v696
      %v757 = vpack.c.b16 %v701, %v699
      %v758 = vpack.c.b16 %v702, %v700
      %v759 = vpack.c.b16 %v705, %v703
      %v760 = vpack.c.b16 %v706, %v704
      %v761 = vpack.c.b16 %v709, %v707
      %v762 = vpack.c.b16 %v710, %v708
      %v763 = vpack.c.b16 %v713, %v711
      %v764 = vpack.c.b16 %v714, %v712
      %v765 = vpack.c.b16 %v717, %v715
      %v766 = vpack.c.b16 %v718, %v716
      %v767 = vpack.c.b16 %v721, %v719
      %v768 = vpack.c.b16 %v722, %v720
      %v769 = vpack.c.b16 %v725, %v723
      %v770 = vpack.c.b16 %v726, %v724
      %v771 = vpack.c.b16 %v729, %v727
      %v772 = vpack.c.b16 %v730, %v728
      %v773 = vpack.c.b16 %v733, %v731
      %v774 = vpack.c.b16 %v734, %v732
      %v775 = vpack.c.b16 %v737, %v735
      %v776 = vpack.c.b16 %v738, %v736
      %v777 = vpack.c.b16 %v741, %v739
      %v778 = vpack.c.b16 %v742, %v740
      %v779 = vpack.c.b16 %v745, %v743
      %v780 = vpack.c.b16 %v746, %v744
      %v781 = vpack.c.b16 %v749, %v747
      %v782 = vpack.c.b16 %v750, %v748
      %815 = vmatprep.subr.bf16.mxu0 %v766
      %816 = vmatpush1.bf16.msra.mxu0 %v765
      %817 = vmatprep.subr.bf16.mxu0 %v764
      %818 = vmatpush1.bf16.msra.mxu0 %v763
      %819 = vmatprep.subr.bf16.mxu0 %v762
      %820 = vmatpush1.bf16.msra.mxu0 %v761
      %821 = vmatprep.subr.bf16.mxu0 %v760
      %822 = vmatpush1.bf16.msra.mxu0 %v759
      %823 = vmatprep.subr.bf16.mxu0 %v758
      %824 = vmatpush1.bf16.msra.mxu0 %v757
      %825 = vmatprep.subr.bf16.mxu0 %v756
      %826 = vmatpush1.bf16.msra.mxu0 %v755
      %827 = vmatprep.subr.bf16.mxu0 %v754
      %828 = vmatpush1.bf16.msra.mxu0 %v753
      %829 = vmatprep.subr.bf16.mxu0 %v752
      %830 = vmatpush1.bf16.msra.mxu0 %v751
      %831 = vmatprep.subr.bf16.mxu0 %v782
      %832 = vmatpush2.bf16.msra.mxu0 %v781
      %833 = vmatprep.subr.bf16.mxu0 %v780
      %834 = vmatpush2.bf16.msra.mxu0 %v779
      %835 = vmatprep.subr.bf16.mxu0 %v778
      %836 = vmatpush2.bf16.msra.mxu0 %v777
      %837 = vmatprep.subr.bf16.mxu0 %v776
      %838 = vmatpush2.bf16.msra.mxu0 %v775
      %839 = vmatprep.subr.bf16.mxu0 %v774
      %840 = vmatpush2.bf16.msra.mxu0 %v773
      %841 = vmatprep.subr.bf16.mxu0 %v772
      %842 = vmatpush2.bf16.msra.mxu0 %v771
      %843 = vmatprep.subr.bf16.mxu0 %v770
      %844 = vmatpush2.bf16.msra.mxu0 %v769
      %845 = vmatprep.subr.bf16.mxu0 %v768
      %846 = vmatpush2.bf16.msra.mxu0 %v767
      %847 = vmatprep.mubr.bf16.mxu0 %v370
      %848 = vmatmul.mubr.bf16.gmra.mxu0 %v369
      %v849 = vpop.f32.mrf.mxu0
      %v850 = vadd.f32 0.0, %v849
      %v851 = vpop.f32.mrf.mxu0
      %v852 = vadd.f32 0.0, %v851
      %v853 = vpop.f32.mrf.mxu0
      %v854 = vadd.f32 0.0, %v853
      %v855 = vpop.f32.mrf.mxu0
      %v856 = vadd.f32 0.0, %v855
      %857 = vmatprep.mubr.bf16.mxu0 %v372
      %858 = vmatmul.mubr.bf16.gmra.mxu0 %v371
      %v859 = vpop.f32.mrf.mxu0
      %v860 = vadd.f32 0.0, %v859
      %v861 = vpop.f32.mrf.mxu0
      %v862 = vadd.f32 0.0, %v861
      %v863 = vpop.f32.mrf.mxu0
      %v864 = vadd.f32 0.0, %v863
      %v865 = vpop.f32.mrf.mxu0
      %v866 = vadd.f32 0.0, %v865
      %867 = vdwg.mxu0
      %v868 = vpack.c.bf16 %v854, %v850
      %v869 = vpack.c.bf16 %v856, %v852
      %v870 = vpack.c.bf16 %v864, %v860
      %v871 = vpack.c.bf16 %v866, %v862
      %s872 = scalar_lea.vmem %s1, 512
      %v873 = vld [vmem:[%s872] sm:$0xff]
      %v874 = vld [vmem:[%s872 + $0x8] sm:$0xff]
      %v875 = vld [vmem:[%s872 + $0x10] sm:$0xff]
      %v876 = vld [vmem:[%s872 + $0x18] sm:$0xff]
      %v877 = vld [vmem:[%s872 + $0x20] sm:$0xff]
      %v878 = vld [vmem:[%s872 + $0x28] sm:$0xff]
      %v879 = vld [vmem:[%s872 + $0x30] sm:$0xff]
      %v880 = vld [vmem:[%s872 + $0x38] sm:$0xff]
      %v881 = vld [vmem:[%s872 + $0x40] sm:$0xff]
      %v882 = vld [vmem:[%s872 + $0x48] sm:$0xff]
      %v883 = vld [vmem:[%s872 + $0x50] sm:$0xff]
      %v884 = vld [vmem:[%s872 + $0x58] sm:$0xff]
      %v885 = vld [vmem:[%s872 + $0x60] sm:$0xff]
      %v886 = vld [vmem:[%s872 + $0x68] sm:$0xff]
      %v887 = vld [vmem:[%s872 + $0x70] sm:$0xff]
      %v888 = vld [vmem:[%s872 + $0x78] sm:$0xff]
      %v889 = vld [vmem:[%s872 + $0x80] sm:$0xff]
      %v890 = vld [vmem:[%s872 + $0x88] sm:$0xff]
      %v891 = vld [vmem:[%s872 + $0x90] sm:$0xff]
      %v892 = vld [vmem:[%s872 + $0x98] sm:$0xff]
      %v893 = vld [vmem:[%s872 + $0xa0] sm:$0xff]
      %v894 = vld [vmem:[%s872 + $0xa8] sm:$0xff]
      %v895 = vld [vmem:[%s872 + $0xb0] sm:$0xff]
      %v896 = vld [vmem:[%s872 + $0xb8] sm:$0xff]
      %v897 = vld [vmem:[%s872 + $0xc0] sm:$0xff]
      %v898 = vld [vmem:[%s872 + $0xc8] sm:$0xff]
      %v899 = vld [vmem:[%s872 + $0xd0] sm:$0xff]
      %v900 = vld [vmem:[%s872 + $0xd8] sm:$0xff]
      %v901 = vld [vmem:[%s872 + $0xe0] sm:$0xff]
      %v902 = vld [vmem:[%s872 + $0xe8] sm:$0xff]
      %v903 = vld [vmem:[%s872 + $0xf0] sm:$0xff]
      %v904 = vld [vmem:[%s872 + $0xf8] sm:$0xff]
      %v937 = vunpack.c.l.b16 %v873
      %v938 = vunpack.c.h.b16 %v873
      %v939 = vunpack.c.l.b16 %v874
      %v940 = vunpack.c.h.b16 %v874
      %v941 = vunpack.c.l.b16 %v875
      %v942 = vunpack.c.h.b16 %v875
      %v943 = vunpack.c.l.b16 %v876
      %v944 = vunpack.c.h.b16 %v876
      %v945 = vunpack.c.l.b16 %v877
      %v946 = vunpack.c.h.b16 %v877
      %v947 = vunpack.c.l.b16 %v878
      %v948 = vunpack.c.h.b16 %v878
      %v949 = vunpack.c.l.b16 %v879
      %v950 = vunpack.c.h.b16 %v879
      %v951 = vunpack.c.l.b16 %v880
      %v952 = vunpack.c.h.b16 %v880
      %v953 = vunpack.c.l.b16 %v881
      %v954 = vunpack.c.h.b16 %v881
      %v955 = vunpack.c.l.b16 %v882
      %v956 = vunpack.c.h.b16 %v882
      %v957 = vunpack.c.l.b16 %v883
      %v958 = vunpack.c.h.b16 %v883
      %v959 = vunpack.c.l.b16 %v884
      %v960 = vunpack.c.h.b16 %v884
      %v961 = vunpack.c.l.b16 %v885
      %v962 = vunpack.c.h.b16 %v885
      %v963 = vunpack.c.l.b16 %v886
      %v964 = vunpack.c.h.b16 %v886
      %v965 = vunpack.c.l.b16 %v887
      %v966 = vunpack.c.h.b16 %v887
      %v967 = vunpack.c.l.b16 %v888
      %v968 = vunpack.c.h.b16 %v888
      %v969 = vunpack.c.l.b16 %v889
      %v970 = vunpack.c.h.b16 %v889
      %v971 = vunpack.c.l.b16 %v890
      %v972 = vunpack.c.h.b16 %v890
      %v973 = vunpack.c.l.b16 %v891
      %v974 = vunpack.c.h.b16 %v891
      %v975 = vunpack.c.l.b16 %v892
      %v976 = vunpack.c.h.b16 %v892
      %v977 = vunpack.c.l.b16 %v893
      %v978 = vunpack.c.h.b16 %v893
      %v979 = vunpack.c.l.b16 %v894
      %v980 = vunpack.c.h.b16 %v894
      %v981 = vunpack.c.l.b16 %v895
      %v982 = vunpack.c.h.b16 %v895
      %v983 = vunpack.c.l.b16 %v896
      %v984 = vunpack.c.h.b16 %v896
      %v985 = vunpack.c.l.b16 %v897
      %v986 = vunpack.c.h.b16 %v897
      %v987 = vunpack.c.l.b16 %v898
      %v988 = vunpack.c.h.b16 %v898
      %v989 = vunpack.c.l.b16 %v899
      %v990 = vunpack.c.h.b16 %v899
      %v991 = vunpack.c.l.b16 %v900
      %v992 = vunpack.c.h.b16 %v900
      %v993 = vunpack.c.l.b16 %v901
      %v994 = vunpack.c.h.b16 %v901
      %v995 = vunpack.c.l.b16 %v902
      %v996 = vunpack.c.h.b16 %v902
      %v997 = vunpack.c.l.b16 %v903
      %v998 = vunpack.c.h.b16 %v903
      %v999 = vunpack.c.l.b16 %v904
      %v1000 = vunpack.c.h.b16 %v904
      %v1001 = vpack.c.b16 %v939, %v937
      %v1002 = vpack.c.b16 %v940, %v938
      %v1003 = vpack.c.b16 %v943, %v941
      %v1004 = vpack.c.b16 %v944, %v942
      %v1005 = vpack.c.b16 %v947, %v945
      %v1006 = vpack.c.b16 %v948, %v946
      %v1007 = vpack.c.b16 %v951, %v949
      %v1008 = vpack.c.b16 %v952, %v950
      %v1009 = vpack.c.b16 %v955, %v953
      %v1010 = vpack.c.b16 %v956, %v954
      %v1011 = vpack.c.b16 %v959, %v957
      %v1012 = vpack.c.b16 %v960, %v958
      %v1013 = vpack.c.b16 %v963, %v961
      %v1014 = vpack.c.b16 %v964, %v962
      %v1015 = vpack.c.b16 %v967, %v965
      %v1016 = vpack.c.b16 %v968, %v966
      %v1017 = vpack.c.b16 %v971, %v969
      %v1018 = vpack.c.b16 %v972, %v970
      %v1019 = vpack.c.b16 %v975, %v973
      %v1020 = vpack.c.b16 %v976, %v974
      %v1021 = vpack.c.b16 %v979, %v977
      %v1022 = vpack.c.b16 %v980, %v978
      %v1023 = vpack.c.b16 %v983, %v981
      %v1024 = vpack.c.b16 %v984, %v982
      %v1025 = vpack.c.b16 %v987, %v985
      %v1026 = vpack.c.b16 %v988, %v986
      %v1027 = vpack.c.b16 %v991, %v989
      %v1028 = vpack.c.b16 %v992, %v990
      %v1029 = vpack.c.b16 %v995, %v993
      %v1030 = vpack.c.b16 %v996, %v994
      %v1031 = vpack.c.b16 %v999, %v997
      %v1032 = vpack.c.b16 %v1000, %v998
      %1065 = vmatprep.subr.bf16.mxu0 %v1016
      %1066 = vmatpush1.bf16.msra.mxu0 %v1015
      %1067 = vmatprep.subr.bf16.mxu0 %v1014
      %1068 = vmatpush1.bf16.msra.mxu0 %v1013
      %1069 = vmatprep.subr.bf16.mxu0 %v1012
      %1070 = vmatpush1.bf16.msra.mxu0 %v1011
      %1071 = vmatprep.subr.bf16.mxu0 %v1010
      %1072 = vmatpush1.bf16.msra.mxu0 %v1009
      %1073 = vmatprep.subr.bf16.mxu0 %v1008
      %1074 = vmatpush1.bf16.msra.mxu0 %v1007
      %1075 = vmatprep.subr.bf16.mxu0 %v1006
      %1076 = vmatpush1.bf16.msra.mxu0 %v1005
      %1077 = vmatprep.subr.bf16.mxu0 %v1004
      %1078 = vmatpush1.bf16.msra.mxu0 %v1003
      %1079 = vmatprep.subr.bf16.mxu0 %v1002
      %1080 = vmatpush1.bf16.msra.mxu0 %v1001
      %1081 = vmatprep.subr.bf16.mxu0 %v1032
      %1082 = vmatpush2.bf16.msra.mxu0 %v1031
      %1083 = vmatprep.subr.bf16.mxu0 %v1030
      %1084 = vmatpush2.bf16.msra.mxu0 %v1029
      %1085 = vmatprep.subr.bf16.mxu0 %v1028
      %1086 = vmatpush2.bf16.msra.mxu0 %v1027
      %1087 = vmatprep.subr.bf16.mxu0 %v1026
      %1088 = vmatpush2.bf16.msra.mxu0 %v1025
      %1089 = vmatprep.subr.bf16.mxu0 %v1024
      %1090 = vmatpush2.bf16.msra.mxu0 %v1023
      %1091 = vmatprep.subr.bf16.mxu0 %v1022
      %1092 = vmatpush2.bf16.msra.mxu0 %v1021
      %1093 = vmatprep.subr.bf16.mxu0 %v1020
      %1094 = vmatpush2.bf16.msra.mxu0 %v1019
      %1095 = vmatprep.subr.bf16.mxu0 %v1018
      %1096 = vmatpush2.bf16.msra.mxu0 %v1017
      %1097 = vmatprep.mubr.bf16.mxu0 %v370
      %1098 = vmatmul.mubr.bf16.gmra.mxu0 %v369
      %v1099 = vpop.f32.mrf.mxu0
      %v1100 = vadd.f32 0.0, %v1099
      %v1101 = vpop.f32.mrf.mxu0
      %v1102 = vadd.f32 0.0, %v1101
      %v1103 = vpop.f32.mrf.mxu0
      %v1104 = vadd.f32 0.0, %v1103
      %v1105 = vpop.f32.mrf.mxu0
      %v1106 = vadd.f32 0.0, %v1105
      %1107 = vmatprep.mubr.bf16.mxu0 %v372
      %1108 = vmatmul.mubr.bf16.gmra.mxu0 %v371
      %v1109 = vpop.f32.mrf.mxu0
      %v1110 = vadd.f32 0.0, %v1109
      %v1111 = vpop.f32.mrf.mxu0
      %v1112 = vadd.f32 0.0, %v1111
      %v1113 = vpop.f32.mrf.mxu0
      %v1114 = vadd.f32 0.0, %v1113
      %v1115 = vpop.f32.mrf.mxu0
      %v1116 = vadd.f32 0.0, %v1115
      %1117 = vdwg.mxu0
      %v1118 = vpack.c.bf16 %v1104, %v1100
      %v1119 = vpack.c.bf16 %v1106, %v1102
      %v1120 = vpack.c.bf16 %v1114, %v1110
      %v1121 = vpack.c.bf16 %v1116, %v1112
      %s1122 = scalar_lea.vmem %s1, 768
      %v1123 = vld [vmem:[%s1122] sm:$0xff]
      %v1124 = vld [vmem:[%s1122 + $0x8] sm:$0xff]
      %v1125 = vld [vmem:[%s1122 + $0x10] sm:$0xff]
      %v1126 = vld [vmem:[%s1122 + $0x18] sm:$0xff]
      %v1127 = vld [vmem:[%s1122 + $0x20] sm:$0xff]
      %v1128 = vld [vmem:[%s1122 + $0x28] sm:$0xff]
      %v1129 = vld [vmem:[%s1122 + $0x30] sm:$0xff]
      %v1130 = vld [vmem:[%s1122 + $0x38] sm:$0xff]
      %v1131 = vld [vmem:[%s1122 + $0x40] sm:$0xff]
      %v1132 = vld [vmem:[%s1122 + $0x48] sm:$0xff]
      %v1133 = vld [vmem:[%s1122 + $0x50] sm:$0xff]
      %v1134 = vld [vmem:[%s1122 + $0x58] sm:$0xff]
      %v1135 = vld [vmem:[%s1122 + $0x60] sm:$0xff]
      %v1136 = vld [vmem:[%s1122 + $0x68] sm:$0xff]
      %v1137 = vld [vmem:[%s1122 + $0x70] sm:$0xff]
      %v1138 = vld [vmem:[%s1122 + $0x78] sm:$0xff]
      %v1139 = vld [vmem:[%s1122 + $0x80] sm:$0xff]
      %v1140 = vld [vmem:[%s1122 + $0x88] sm:$0xff]
      %v1141 = vld [vmem:[%s1122 + $0x90] sm:$0xff]
      %v1142 = vld [vmem:[%s1122 + $0x98] sm:$0xff]
      %v1143 = vld [vmem:[%s1122 + $0xa0] sm:$0xff]
      %v1144 = vld [vmem:[%s1122 + $0xa8] sm:$0xff]
      %v1145 = vld [vmem:[%s1122 + $0xb0] sm:$0xff]
      %v1146 = vld [vmem:[%s1122 + $0xb8] sm:$0xff]
      %v1147 = vld [vmem:[%s1122 + $0xc0] sm:$0xff]
      %v1148 = vld [vmem:[%s1122 + $0xc8] sm:$0xff]
      %v1149 = vld [vmem:[%s1122 + $0xd0] sm:$0xff]
      %v1150 = vld [vmem:[%s1122 + $0xd8] sm:$0xff]
      %v1151 = vld [vmem:[%s1122 + $0xe0] sm:$0xff]
      %v1152 = vld [vmem:[%s1122 + $0xe8] sm:$0xff]
      %v1153 = vld [vmem:[%s1122 + $0xf0] sm:$0xff]
      %v1154 = vld [vmem:[%s1122 + $0xf8] sm:$0xff]
      %v1187 = vunpack.c.l.b16 %v1123
      %v1188 = vunpack.c.h.b16 %v1123
      %v1189 = vunpack.c.l.b16 %v1124
      %v1190 = vunpack.c.h.b16 %v1124
      %v1191 = vunpack.c.l.b16 %v1125
      %v1192 = vunpack.c.h.b16 %v1125
      %v1193 = vunpack.c.l.b16 %v1126
      %v1194 = vunpack.c.h.b16 %v1126
      %v1195 = vunpack.c.l.b16 %v1127
      %v1196 = vunpack.c.h.b16 %v1127
      %v1197 = vunpack.c.l.b16 %v1128
      %v1198 = vunpack.c.h.b16 %v1128
      %v1199 = vunpack.c.l.b16 %v1129
      %v1200 = vunpack.c.h.b16 %v1129
      %v1201 = vunpack.c.l.b16 %v1130
      %v1202 = vunpack.c.h.b16 %v1130
      %v1203 = vunpack.c.l.b16 %v1131
      %v1204 = vunpack.c.h.b16 %v1131
      %v1205 = vunpack.c.l.b16 %v1132
      %v1206 = vunpack.c.h.b16 %v1132
      %v1207 = vunpack.c.l.b16 %v1133
      %v1208 = vunpack.c.h.b16 %v1133
      %v1209 = vunpack.c.l.b16 %v1134
      %v1210 = vunpack.c.h.b16 %v1134
      %v1211 = vunpack.c.l.b16 %v1135
      %v1212 = vunpack.c.h.b16 %v1135
      %v1213 = vunpack.c.l.b16 %v1136
      %v1214 = vunpack.c.h.b16 %v1136
      %v1215 = vunpack.c.l.b16 %v1137
      %v1216 = vunpack.c.h.b16 %v1137
      %v1217 = vunpack.c.l.b16 %v1138
      %v1218 = vunpack.c.h.b16 %v1138
      %v1219 = vunpack.c.l.b16 %v1139
      %v1220 = vunpack.c.h.b16 %v1139
      %v1221 = vunpack.c.l.b16 %v1140
      %v1222 = vunpack.c.h.b16 %v1140
      %v1223 = vunpack.c.l.b16 %v1141
      %v1224 = vunpack.c.h.b16 %v1141
      %v1225 = vunpack.c.l.b16 %v1142
      %v1226 = vunpack.c.h.b16 %v1142
      %v1227 = vunpack.c.l.b16 %v1143
      %v1228 = vunpack.c.h.b16 %v1143
      %v1229 = vunpack.c.l.b16 %v1144
      %v1230 = vunpack.c.h.b16 %v1144
      %v1231 = vunpack.c.l.b16 %v1145
      %v1232 = vunpack.c.h.b16 %v1145
      %v1233 = vunpack.c.l.b16 %v1146
      %v1234 = vunpack.c.h.b16 %v1146
      %v1235 = vunpack.c.l.b16 %v1147
      %v1236 = vunpack.c.h.b16 %v1147
      %v1237 = vunpack.c.l.b16 %v1148
      %v1238 = vunpack.c.h.b16 %v1148
      %v1239 = vunpack.c.l.b16 %v1149
      %v1240 = vunpack.c.h.b16 %v1149
      %v1241 = vunpack.c.l.b16 %v1150
      %v1242 = vunpack.c.h.b16 %v1150
      %v1243 = vunpack.c.l.b16 %v1151
      %v1244 = vunpack.c.h.b16 %v1151
      %v1245 = vunpack.c.l.b16 %v1152
      %v1246 = vunpack.c.h.b16 %v1152
      %v1247 = vunpack.c.l.b16 %v1153
      %v1248 = vunpack.c.h.b16 %v1153
      %v1249 = vunpack.c.l.b16 %v1154
      %v1250 = vunpack.c.h.b16 %v1154
      %v1251 = vpack.c.b16 %v1189, %v1187
      %v1252 = vpack.c.b16 %v1190, %v1188
      %v1253 = vpack.c.b16 %v1193, %v1191
      %v1254 = vpack.c.b16 %v1194, %v1192
      %v1255 = vpack.c.b16 %v1197, %v1195
      %v1256 = vpack.c.b16 %v1198, %v1196
      %v1257 = vpack.c.b16 %v1201, %v1199
      %v1258 = vpack.c.b16 %v1202, %v1200
      %v1259 = vpack.c.b16 %v1205, %v1203
      %v1260 = vpack.c.b16 %v1206, %v1204
      %v1261 = vpack.c.b16 %v1209, %v1207
      %v1262 = vpack.c.b16 %v1210, %v1208
      %v1263 = vpack.c.b16 %v1213, %v1211
      %v1264 = vpack.c.b16 %v1214, %v1212
      %v1265 = vpack.c.b16 %v1217, %v1215
      %v1266 = vpack.c.b16 %v1218, %v1216
      %v1267 = vpack.c.b16 %v1221, %v1219
      %v1268 = vpack.c.b16 %v1222, %v1220
      %v1269 = vpack.c.b16 %v1225, %v1223
      %v1270 = vpack.c.b16 %v1226, %v1224
      %v1271 = vpack.c.b16 %v1229, %v1227
      %v1272 = vpack.c.b16 %v1230, %v1228
      %v1273 = vpack.c.b16 %v1233, %v1231
      %v1274 = vpack.c.b16 %v1234, %v1232
      %v1275 = vpack.c.b16 %v1237, %v1235
      %v1276 = vpack.c.b16 %v1238, %v1236
      %v1277 = vpack.c.b16 %v1241, %v1239
      %v1278 = vpack.c.b16 %v1242, %v1240
      %v1279 = vpack.c.b16 %v1245, %v1243
      %v1280 = vpack.c.b16 %v1246, %v1244
      %v1281 = vpack.c.b16 %v1249, %v1247
      %v1282 = vpack.c.b16 %v1250, %v1248
      %1315 = vmatprep.subr.bf16.mxu0 %v1266
      %1316 = vmatpush1.bf16.msra.mxu0 %v1265
      %1317 = vmatprep.subr.bf16.mxu0 %v1264
      %1318 = vmatpush1.bf16.msra.mxu0 %v1263
      %1319 = vmatprep.subr.bf16.mxu0 %v1262
      %1320 = vmatpush1.bf16.msra.mxu0 %v1261
      %1321 = vmatprep.subr.bf16.mxu0 %v1260
      %1322 = vmatpush1.bf16.msra.mxu0 %v1259
      %1323 = vmatprep.subr.bf16.mxu0 %v1258
      %1324 = vmatpush1.bf16.msra.mxu0 %v1257
      %1325 = vmatprep.subr.bf16.mxu0 %v1256
      %1326 = vmatpush1.bf16.msra.mxu0 %v1255
      %1327 = vmatprep.subr.bf16.mxu0 %v1254
      %1328 = vmatpush1.bf16.msra.mxu0 %v1253
      %1329 = vmatprep.subr.bf16.mxu0 %v1252
      %1330 = vmatpush1.bf16.msra.mxu0 %v1251
      %1331 = vmatprep.subr.bf16.mxu0 %v1282
      %1332 = vmatpush2.bf16.msra.mxu0 %v1281
      %1333 = vmatprep.subr.bf16.mxu0 %v1280
      %1334 = vmatpush2.bf16.msra.mxu0 %v1279
      %1335 = vmatprep.subr.bf16.mxu0 %v1278
      %1336 = vmatpush2.bf16.msra.mxu0 %v1277
      %1337 = vmatprep.subr.bf16.mxu0 %v1276
      %1338 = vmatpush2.bf16.msra.mxu0 %v1275
      %1339 = vmatprep.subr.bf16.mxu0 %v1274
      %1340 = vmatpush2.bf16.msra.mxu0 %v1273
      %1341 = vmatprep.subr.bf16.mxu0 %v1272
      %1342 = vmatpush2.bf16.msra.mxu0 %v1271
      %1343 = vmatprep.subr.bf16.mxu0 %v1270
      %1344 = vmatpush2.bf16.msra.mxu0 %v1269
      %1345 = vmatprep.subr.bf16.mxu0 %v1268
      %1346 = vmatpush2.bf16.msra.mxu0 %v1267
      %1347 = vmatprep.mubr.bf16.mxu0 %v370
      %1348 = vmatmul.mubr.bf16.gmra.mxu0 %v369
      %v1349 = vpop.f32.mrf.mxu0
      %v1350 = vadd.f32 0.0, %v1349
      %v1351 = vpop.f32.mrf.mxu0
      %v1352 = vadd.f32 0.0, %v1351
      %v1353 = vpop.f32.mrf.mxu0
      %v1354 = vadd.f32 0.0, %v1353
      %v1355 = vpop.f32.mrf.mxu0
      %v1356 = vadd.f32 0.0, %v1355
      %1357 = vmatprep.mubr.bf16.mxu0 %v372
      %1358 = vmatmul.mubr.bf16.gmra.mxu0 %v371
      %v1359 = vpop.f32.mrf.mxu0
      %v1360 = vadd.f32 0.0, %v1359
      %v1361 = vpop.f32.mrf.mxu0
      %v1362 = vadd.f32 0.0, %v1361
      %v1363 = vpop.f32.mrf.mxu0
      %v1364 = vadd.f32 0.0, %v1363
      %v1365 = vpop.f32.mrf.mxu0
      %v1366 = vadd.f32 0.0, %v1365
      %1367 = vdwg.mxu0
      %v1368 = vpack.c.bf16 %v1354, %v1350
      %v1369 = vpack.c.bf16 %v1356, %v1352
      %v1370 = vpack.c.bf16 %v1364, %v1360
      %v1371 = vpack.c.bf16 %v1366, %v1362
      %s1372 = scalar_lea.vmem %s1, 1024
      %v1373 = vld [vmem:[%s1372] sm:$0xff]
      %v1374 = vld [vmem:[%s1372 + $0x8] sm:$0xff]
      %v1375 = vld [vmem:[%s1372 + $0x10] sm:$0xff]
      %v1376 = vld [vmem:[%s1372 + $0x18] sm:$0xff]
      %v1377 = vld [vmem:[%s1372 + $0x20] sm:$0xff]
      %v1378 = vld [vmem:[%s1372 + $0x28] sm:$0xff]
      %v1379 = vld [vmem:[%s1372 + $0x30] sm:$0xff]
      %v1380 = vld [vmem:[%s1372 + $0x38] sm:$0xff]
      %v1381 = vld [vmem:[%s1372 + $0x40] sm:$0xff]
      %v1382 = vld [vmem:[%s1372 + $0x48] sm:$0xff]
      %v1383 = vld [vmem:[%s1372 + $0x50] sm:$0xff]
      %v1384 = vld [vmem:[%s1372 + $0x58] sm:$0xff]
      %v1385 = vld [vmem:[%s1372 + $0x60] sm:$0xff]
      %v1386 = vld [vmem:[%s1372 + $0x68] sm:$0xff]
      %v1387 = vld [vmem:[%s1372 + $0x70] sm:$0xff]
      %v1388 = vld [vmem:[%s1372 + $0x78] sm:$0xff]
      %v1389 = vld [vmem:[%s1372 + $0x80] sm:$0xff]
      %v1390 = vld [vmem:[%s1372 + $0x88] sm:$0xff]
      %v1391 = vld [vmem:[%s1372 + $0x90] sm:$0xff]
      %v1392 = vld [vmem:[%s1372 + $0x98] sm:$0xff]
      %v1393 = vld [vmem:[%s1372 + $0xa0] sm:$0xff]
      %v1394 = vld [vmem:[%s1372 + $0xa8] sm:$0xff]
      %v1395 = vld [vmem:[%s1372 + $0xb0] sm:$0xff]
      %v1396 = vld [vmem:[%s1372 + $0xb8] sm:$0xff]
      %v1397 = vld [vmem:[%s1372 + $0xc0] sm:$0xff]
      %v1398 = vld [vmem:[%s1372 + $0xc8] sm:$0xff]
      %v1399 = vld [vmem:[%s1372 + $0xd0] sm:$0xff]
      %v1400 = vld [vmem:[%s1372 + $0xd8] sm:$0xff]
      %v1401 = vld [vmem:[%s1372 + $0xe0] sm:$0xff]
      %v1402 = vld [vmem:[%s1372 + $0xe8] sm:$0xff]
      %v1403 = vld [vmem:[%s1372 + $0xf0] sm:$0xff]
      %v1404 = vld [vmem:[%s1372 + $0xf8] sm:$0xff]
      %v1437 = vunpack.c.l.b16 %v1373
      %v1438 = vunpack.c.h.b16 %v1373
      %v1439 = vunpack.c.l.b16 %v1374
      %v1440 = vunpack.c.h.b16 %v1374
      %v1441 = vunpack.c.l.b16 %v1375
      %v1442 = vunpack.c.h.b16 %v1375
      %v1443 = vunpack.c.l.b16 %v1376
      %v1444 = vunpack.c.h.b16 %v1376
      %v1445 = vunpack.c.l.b16 %v1377
      %v1446 = vunpack.c.h.b16 %v1377
      %v1447 = vunpack.c.l.b16 %v1378
      %v1448 = vunpack.c.h.b16 %v1378
      %v1449 = vunpack.c.l.b16 %v1379
      %v1450 = vunpack.c.h.b16 %v1379
      %v1451 = vunpack.c.l.b16 %v1380
      %v1452 = vunpack.c.h.b16 %v1380
      %v1453 = vunpack.c.l.b16 %v1381
      %v1454 = vunpack.c.h.b16 %v1381
      %v1455 = vunpack.c.l.b16 %v1382
      %v1456 = vunpack.c.h.b16 %v1382
      %v1457 = vunpack.c.l.b16 %v1383
      %v1458 = vunpack.c.h.b16 %v1383
      %v1459 = vunpack.c.l.b16 %v1384
      %v1460 = vunpack.c.h.b16 %v1384
      %v1461 = vunpack.c.l.b16 %v1385
      %v1462 = vunpack.c.h.b16 %v1385
      %v1463 = vunpack.c.l.b16 %v1386
      %v1464 = vunpack.c.h.b16 %v1386
      %v1465 = vunpack.c.l.b16 %v1387
      %v1466 = vunpack.c.h.b16 %v1387
      %v1467 = vunpack.c.l.b16 %v1388
      %v1468 = vunpack.c.h.b16 %v1388
      %v1469 = vunpack.c.l.b16 %v1389
      %v1470 = vunpack.c.h.b16 %v1389
      %v1471 = vunpack.c.l.b16 %v1390
      %v1472 = vunpack.c.h.b16 %v1390
      %v1473 = vunpack.c.l.b16 %v1391
      %v1474 = vunpack.c.h.b16 %v1391
      %v1475 = vunpack.c.l.b16 %v1392
      %v1476 = vunpack.c.h.b16 %v1392
      %v1477 = vunpack.c.l.b16 %v1393
      %v1478 = vunpack.c.h.b16 %v1393
      %v1479 = vunpack.c.l.b16 %v1394
      %v1480 = vunpack.c.h.b16 %v1394
      %v1481 = vunpack.c.l.b16 %v1395
      %v1482 = vunpack.c.h.b16 %v1395
      %v1483 = vunpack.c.l.b16 %v1396
      %v1484 = vunpack.c.h.b16 %v1396
      %v1485 = vunpack.c.l.b16 %v1397
      %v1486 = vunpack.c.h.b16 %v1397
      %v1487 = vunpack.c.l.b16 %v1398
      %v1488 = vunpack.c.h.b16 %v1398
      %v1489 = vunpack.c.l.b16 %v1399
      %v1490 = vunpack.c.h.b16 %v1399
      %v1491 = vunpack.c.l.b16 %v1400
      %v1492 = vunpack.c.h.b16 %v1400
      %v1493 = vunpack.c.l.b16 %v1401
      %v1494 = vunpack.c.h.b16 %v1401
      %v1495 = vunpack.c.l.b16 %v1402
      %v1496 = vunpack.c.h.b16 %v1402
      %v1497 = vunpack.c.l.b16 %v1403
      %v1498 = vunpack.c.h.b16 %v1403
      %v1499 = vunpack.c.l.b16 %v1404
      %v1500 = vunpack.c.h.b16 %v1404
      %v1501 = vpack.c.b16 %v1439, %v1437
      %v1502 = vpack.c.b16 %v1440, %v1438
      %v1503 = vpack.c.b16 %v1443, %v1441
      %v1504 = vpack.c.b16 %v1444, %v1442
      %v1505 = vpack.c.b16 %v1447, %v1445
      %v1506 = vpack.c.b16 %v1448, %v1446
      %v1507 = vpack.c.b16 %v1451, %v1449
      %v1508 = vpack.c.b16 %v1452, %v1450
      %v1509 = vpack.c.b16 %v1455, %v1453
      %v1510 = vpack.c.b16 %v1456, %v1454
      %v1511 = vpack.c.b16 %v1459, %v1457
      %v1512 = vpack.c.b16 %v1460, %v1458
      %v1513 = vpack.c.b16 %v1463, %v1461
      %v1514 = vpack.c.b16 %v1464, %v1462
      %v1515 = vpack.c.b16 %v1467, %v1465
      %v1516 = vpack.c.b16 %v1468, %v1466
      %v1517 = vpack.c.b16 %v1471, %v1469
      %v1518 = vpack.c.b16 %v1472, %v1470
      %v1519 = vpack.c.b16 %v1475, %v1473
      %v1520 = vpack.c.b16 %v1476, %v1474
      %v1521 = vpack.c.b16 %v1479, %v1477
      %v1522 = vpack.c.b16 %v1480, %v1478
      %v1523 = vpack.c.b16 %v1483, %v1481
      %v1524 = vpack.c.b16 %v1484, %v1482
      %v1525 = vpack.c.b16 %v1487, %v1485
      %v1526 = vpack.c.b16 %v1488, %v1486
      %v1527 = vpack.c.b16 %v1491, %v1489
      %v1528 = vpack.c.b16 %v1492, %v1490
      %v1529 = vpack.c.b16 %v1495, %v1493
      %v1530 = vpack.c.b16 %v1496, %v1494
      %v1531 = vpack.c.b16 %v1499, %v1497
      %v1532 = vpack.c.b16 %v1500, %v1498
      %1565 = vmatprep.subr.bf16.mxu0 %v1516
      %1566 = vmatpush1.bf16.msra.mxu0 %v1515
      %1567 = vmatprep.subr.bf16.mxu0 %v1514
      %1568 = vmatpush1.bf16.msra.mxu0 %v1513
      %1569 = vmatprep.subr.bf16.mxu0 %v1512
      %1570 = vmatpush1.bf16.msra.mxu0 %v1511
      %1571 = vmatprep.subr.bf16.mxu0 %v1510
      %1572 = vmatpush1.bf16.msra.mxu0 %v1509
      %1573 = vmatprep.subr.bf16.mxu0 %v1508
      %1574 = vmatpush1.bf16.msra.mxu0 %v1507
      %1575 = vmatprep.subr.bf16.mxu0 %v1506
      %1576 = vmatpush1.bf16.msra.mxu0 %v1505
      %1577 = vmatprep.subr.bf16.mxu0 %v1504
      %1578 = vmatpush1.bf16.msra.mxu0 %v1503
      %1579 = vmatprep.subr.bf16.mxu0 %v1502
      %1580 = vmatpush1.bf16.msra.mxu0 %v1501
      %1581 = vmatprep.subr.bf16.mxu0 %v1532
      %1582 = vmatpush2.bf16.msra.mxu0 %v1531
      %1583 = vmatprep.subr.bf16.mxu0 %v1530
      %1584 = vmatpush2.bf16.msra.mxu0 %v1529
      %1585 = vmatprep.subr.bf16.mxu0 %v1528
      %1586 = vmatpush2.bf16.msra.mxu0 %v1527
      %1587 = vmatprep.subr.bf16.mxu0 %v1526
      %1588 = vmatpush2.bf16.msra.mxu0 %v1525
      %1589 = vmatprep.subr.bf16.mxu0 %v1524
      %1590 = vmatpush2.bf16.msra.mxu0 %v1523
      %1591 = vmatprep.subr.bf16.mxu0 %v1522
      %1592 = vmatpush2.bf16.msra.mxu0 %v1521
      %1593 = vmatprep.subr.bf16.mxu0 %v1520
      %1594 = vmatpush2.bf16.msra.mxu0 %v1519
      %1595 = vmatprep.subr.bf16.mxu0 %v1518
      %1596 = vmatpush2.bf16.msra.mxu0 %v1517
      %1597 = vmatprep.mubr.bf16.mxu0 %v370
      %1598 = vmatmul.mubr.bf16.gmra.mxu0 %v369
      %v1599 = vpop.f32.mrf.mxu0
      %v1600 = vadd.f32 0.0, %v1599
      %v1601 = vpop.f32.mrf.mxu0
      %v1602 = vadd.f32 0.0, %v1601
      %v1603 = vpop.f32.mrf.mxu0
      %v1604 = vadd.f32 0.0, %v1603
      %v1605 = vpop.f32.mrf.mxu0
      %v1606 = vadd.f32 0.0, %v1605
      %1607 = vmatprep.mubr.bf16.mxu0 %v372
      %1608 = vmatmul.mubr.bf16.gmra.mxu0 %v371
      %v1609 = vpop.f32.mrf.mxu0
      %v1610 = vadd.f32 0.0, %v1609
      %v1611 = vpop.f32.mrf.mxu0
      %v1612 = vadd.f32 0.0, %v1611
      %v1613 = vpop.f32.mrf.mxu0
      %v1614 = vadd.f32 0.0, %v1613
      %v1615 = vpop.f32.mrf.mxu0
      %v1616 = vadd.f32 0.0, %v1615
      %1617 = vdwg.mxu0
      %v1618 = vpack.c.bf16 %v1604, %v1600
      %v1619 = vpack.c.bf16 %v1606, %v1602
      %v1620 = vpack.c.bf16 %v1614, %v1610
      %v1621 = vpack.c.bf16 %v1616, %v1612
      %s1622 = scalar_lea.vmem %s1, 1280
      %v1623 = vld [vmem:[%s1622] sm:$0xff]
      %v1624 = vld [vmem:[%s1622 + $0x8] sm:$0xff]
      %v1625 = vld [vmem:[%s1622 + $0x10] sm:$0xff]
      %v1626 = vld [vmem:[%s1622 + $0x18] sm:$0xff]
      %v1627 = vld [vmem:[%s1622 + $0x20] sm:$0xff]
      %v1628 = vld [vmem:[%s1622 + $0x28] sm:$0xff]
      %v1629 = vld [vmem:[%s1622 + $0x30] sm:$0xff]
      %v1630 = vld [vmem:[%s1622 + $0x38] sm:$0xff]
      %v1631 = vld [vmem:[%s1622 + $0x40] sm:$0xff]
      %v1632 = vld [vmem:[%s1622 + $0x48] sm:$0xff]
      %v1633 = vld [vmem:[%s1622 + $0x50] sm:$0xff]
      %v1634 = vld [vmem:[%s1622 + $0x58] sm:$0xff]
      %v1635 = vld [vmem:[%s1622 + $0x60] sm:$0xff]
      %v1636 = vld [vmem:[%s1622 + $0x68] sm:$0xff]
      %v1637 = vld [vmem:[%s1622 + $0x70] sm:$0xff]
      %v1638 = vld [vmem:[%s1622 + $0x78] sm:$0xff]
      %v1639 = vld [vmem:[%s1622 + $0x80] sm:$0xff]
      %v1640 = vld [vmem:[%s1622 + $0x88] sm:$0xff]
      %v1641 = vld [vmem:[%s1622 + $0x90] sm:$0xff]
      %v1642 = vld [vmem:[%s1622 + $0x98] sm:$0xff]
      %v1643 = vld [vmem:[%s1622 + $0xa0] sm:$0xff]
      %v1644 = vld [vmem:[%s1622 + $0xa8] sm:$0xff]
      %v1645 = vld [vmem:[%s1622 + $0xb0] sm:$0xff]
      %v1646 = vld [vmem:[%s1622 + $0xb8] sm:$0xff]
      %v1647 = vld [vmem:[%s1622 + $0xc0] sm:$0xff]
      %v1648 = vld [vmem:[%s1622 + $0xc8] sm:$0xff]
      %v1649 = vld [vmem:[%s1622 + $0xd0] sm:$0xff]
      %v1650 = vld [vmem:[%s1622 + $0xd8] sm:$0xff]
      %v1651 = vld [vmem:[%s1622 + $0xe0] sm:$0xff]
      %v1652 = vld [vmem:[%s1622 + $0xe8] sm:$0xff]
      %v1653 = vld [vmem:[%s1622 + $0xf0] sm:$0xff]
      %v1654 = vld [vmem:[%s1622 + $0xf8] sm:$0xff]
      %v1687 = vunpack.c.l.b16 %v1623
      %v1688 = vunpack.c.h.b16 %v1623
      %v1689 = vunpack.c.l.b16 %v1624
      %v1690 = vunpack.c.h.b16 %v1624
      %v1691 = vunpack.c.l.b16 %v1625
      %v1692 = vunpack.c.h.b16 %v1625
      %v1693 = vunpack.c.l.b16 %v1626
      %v1694 = vunpack.c.h.b16 %v1626
      %v1695 = vunpack.c.l.b16 %v1627
      %v1696 = vunpack.c.h.b16 %v1627
      %v1697 = vunpack.c.l.b16 %v1628
      %v1698 = vunpack.c.h.b16 %v1628
      %v1699 = vunpack.c.l.b16 %v1629
      %v1700 = vunpack.c.h.b16 %v1629
      %v1701 = vunpack.c.l.b16 %v1630
      %v1702 = vunpack.c.h.b16 %v1630
      %v1703 = vunpack.c.l.b16 %v1631
      %v1704 = vunpack.c.h.b16 %v1631
      %v1705 = vunpack.c.l.b16 %v1632
      %v1706 = vunpack.c.h.b16 %v1632
      %v1707 = vunpack.c.l.b16 %v1633
      %v1708 = vunpack.c.h.b16 %v1633
      %v1709 = vunpack.c.l.b16 %v1634
      %v1710 = vunpack.c.h.b16 %v1634
      %v1711 = vunpack.c.l.b16 %v1635
      %v1712 = vunpack.c.h.b16 %v1635
      %v1713 = vunpack.c.l.b16 %v1636
      %v1714 = vunpack.c.h.b16 %v1636
      %v1715 = vunpack.c.l.b16 %v1637
      %v1716 = vunpack.c.h.b16 %v1637
      %v1717 = vunpack.c.l.b16 %v1638
      %v1718 = vunpack.c.h.b16 %v1638
      %v1719 = vunpack.c.l.b16 %v1639
      %v1720 = vunpack.c.h.b16 %v1639
      %v1721 = vunpack.c.l.b16 %v1640
      %v1722 = vunpack.c.h.b16 %v1640
      %v1723 = vunpack.c.l.b16 %v1641
      %v1724 = vunpack.c.h.b16 %v1641
      %v1725 = vunpack.c.l.b16 %v1642
      %v1726 = vunpack.c.h.b16 %v1642
      %v1727 = vunpack.c.l.b16 %v1643
      %v1728 = vunpack.c.h.b16 %v1643
      %v1729 = vunpack.c.l.b16 %v1644
      %v1730 = vunpack.c.h.b16 %v1644
      %v1731 = vunpack.c.l.b16 %v1645
      %v1732 = vunpack.c.h.b16 %v1645
      %v1733 = vunpack.c.l.b16 %v1646
      %v1734 = vunpack.c.h.b16 %v1646
      %v1735 = vunpack.c.l.b16 %v1647
      %v1736 = vunpack.c.h.b16 %v1647
      %v1737 = vunpack.c.l.b16 %v1648
      %v1738 = vunpack.c.h.b16 %v1648
      %v1739 = vunpack.c.l.b16 %v1649
      %v1740 = vunpack.c.h.b16 %v1649
      %v1741 = vunpack.c.l.b16 %v1650
      %v1742 = vunpack.c.h.b16 %v1650
      %v1743 = vunpack.c.l.b16 %v1651
      %v1744 = vunpack.c.h.b16 %v1651
      %v1745 = vunpack.c.l.b16 %v1652
      %v1746 = vunpack.c.h.b16 %v1652
      %v1747 = vunpack.c.l.b16 %v1653
      %v1748 = vunpack.c.h.b16 %v1653
      %v1749 = vunpack.c.l.b16 %v1654
      %v1750 = vunpack.c.h.b16 %v1654
      %v1751 = vpack.c.b16 %v1689, %v1687
      %v1752 = vpack.c.b16 %v1690, %v1688
      %v1753 = vpack.c.b16 %v1693, %v1691
      %v1754 = vpack.c.b16 %v1694, %v1692
      %v1755 = vpack.c.b16 %v1697, %v1695
      %v1756 = vpack.c.b16 %v1698, %v1696
      %v1757 = vpack.c.b16 %v1701, %v1699
      %v1758 = vpack.c.b16 %v1702, %v1700
      %v1759 = vpack.c.b16 %v1705, %v1703
      %v1760 = vpack.c.b16 %v1706, %v1704
      %v1761 = vpack.c.b16 %v1709, %v1707
      %v1762 = vpack.c.b16 %v1710, %v1708
      %v1763 = vpack.c.b16 %v1713, %v1711
      %v1764 = vpack.c.b16 %v1714, %v1712
      %v1765 = vpack.c.b16 %v1717, %v1715
      %v1766 = vpack.c.b16 %v1718, %v1716
      %v1767 = vpack.c.b16 %v1721, %v1719
      %v1768 = vpack.c.b16 %v1722, %v1720
      %v1769 = vpack.c.b16 %v1725, %v1723
      %v1770 = vpack.c.b16 %v1726, %v1724
      %v1771 = vpack.c.b16 %v1729, %v1727
      %v1772 = vpack.c.b16 %v1730, %v1728
      %v1773 = vpack.c.b16 %v1733, %v1731
      %v1774 = vpack.c.b16 %v1734, %v1732
      %v1775 = vpack.c.b16 %v1737, %v1735
      %v1776 = vpack.c.b16 %v1738, %v1736
      %v1777 = vpack.c.b16 %v1741, %v1739
      %v1778 = vpack.c.b16 %v1742, %v1740
      %v1779 = vpack.c.b16 %v1745, %v1743
      %v1780 = vpack.c.b16 %v1746, %v1744
      %v1781 = vpack.c.b16 %v1749, %v1747
      %v1782 = vpack.c.b16 %v1750, %v1748
      %1815 = vmatprep.subr.bf16.mxu0 %v1766
      %1816 = vmatpush1.bf16.msra.mxu0 %v1765
      %1817 = vmatprep.subr.bf16.mxu0 %v1764
      %1818 = vmatpush1.bf16.msra.mxu0 %v1763
      %1819 = vmatprep.subr.bf16.mxu0 %v1762
      %1820 = vmatpush1.bf16.msra.mxu0 %v1761
      %1821 = vmatprep.subr.bf16.mxu0 %v1760
      %1822 = vmatpush1.bf16.msra.mxu0 %v1759
      %1823 = vmatprep.subr.bf16.mxu0 %v1758
      %1824 = vmatpush1.bf16.msra.mxu0 %v1757
      %1825 = vmatprep.subr.bf16.mxu0 %v1756
      %1826 = vmatpush1.bf16.msra.mxu0 %v1755
      %1827 = vmatprep.subr.bf16.mxu0 %v1754
      %1828 = vmatpush1.bf16.msra.mxu0 %v1753
      %1829 = vmatprep.subr.bf16.mxu0 %v1752
      %1830 = vmatpush1.bf16.msra.mxu0 %v1751
      %1831 = vmatprep.subr.bf16.mxu0 %v1782
      %1832 = vmatpush2.bf16.msra.mxu0 %v1781
      %1833 = vmatprep.subr.bf16.mxu0 %v1780
      %1834 = vmatpush2.bf16.msra.mxu0 %v1779
      %1835 = vmatprep.subr.bf16.mxu0 %v1778
      %1836 = vmatpush2.bf16.msra.mxu0 %v1777
      %1837 = vmatprep.subr.bf16.mxu0 %v1776
      %1838 = vmatpush2.bf16.msra.mxu0 %v1775
      %1839 = vmatprep.subr.bf16.mxu0 %v1774
      %1840 = vmatpush2.bf16.msra.mxu0 %v1773
      %1841 = vmatprep.subr.bf16.mxu0 %v1772
      %1842 = vmatpush2.bf16.msra.mxu0 %v1771
      %1843 = vmatprep.subr.bf16.mxu0 %v1770
      %1844 = vmatpush2.bf16.msra.mxu0 %v1769
      %1845 = vmatprep.subr.bf16.mxu0 %v1768
      %1846 = vmatpush2.bf16.msra.mxu0 %v1767
      %1847 = vmatprep.mubr.bf16.mxu0 %v370
      %1848 = vmatmul.mubr.bf16.gmra.mxu0 %v369
      %v1849 = vpop.f32.mrf.mxu0
      %v1850 = vadd.f32 0.0, %v1849
      %v1851 = vpop.f32.mrf.mxu0
      %v1852 = vadd.f32 0.0, %v1851
      %v1853 = vpop.f32.mrf.mxu0
      %v1854 = vadd.f32 0.0, %v1853
      %v1855 = vpop.f32.mrf.mxu0
      %v1856 = vadd.f32 0.0, %v1855
      %1857 = vmatprep.mubr.bf16.mxu0 %v372
      %1858 = vmatmul.mubr.bf16.gmra.mxu0 %v371
      %v1859 = vpop.f32.mrf.mxu0
      %v1860 = vadd.f32 0.0, %v1859
      %v1861 = vpop.f32.mrf.mxu0
      %v1862 = vadd.f32 0.0, %v1861
      %v1863 = vpop.f32.mrf.mxu0
      %v1864 = vadd.f32 0.0, %v1863
      %v1865 = vpop.f32.mrf.mxu0
      %v1866 = vadd.f32 0.0, %v1865
      %1867 = vdwg.mxu0
      %v1868 = vpack.c.bf16 %v1854, %v1850
      %v1869 = vpack.c.bf16 %v1856, %v1852
      %v1870 = vpack.c.bf16 %v1864, %v1860
      %v1871 = vpack.c.bf16 %v1866, %v1862
      %s1872 = scalar_lea.vmem %s1, 1536
      %v1873 = vld [vmem:[%s1872] sm:$0xff]
      %v1874 = vld [vmem:[%s1872 + $0x8] sm:$0xff]
      %v1875 = vld [vmem:[%s1872 + $0x10] sm:$0xff]
      %v1876 = vld [vmem:[%s1872 + $0x18] sm:$0xff]
      %v1877 = vld [vmem:[%s1872 + $0x20] sm:$0xff]
      %v1878 = vld [vmem:[%s1872 + $0x28] sm:$0xff]
      %v1879 = vld [vmem:[%s1872 + $0x30] sm:$0xff]
      %v1880 = vld [vmem:[%s1872 + $0x38] sm:$0xff]
      %v1881 = vld [vmem:[%s1872 + $0x40] sm:$0xff]
      %v1882 = vld [vmem:[%s1872 + $0x48] sm:$0xff]
      %v1883 = vld [vmem:[%s1872 + $0x50] sm:$0xff]
      %v1884 = vld [vmem:[%s1872 + $0x58] sm:$0xff]
      %v1885 = vld [vmem:[%s1872 + $0x60] sm:$0xff]
      %v1886 = vld [vmem:[%s1872 + $0x68] sm:$0xff]
      %v1887 = vld [vmem:[%s1872 + $0x70] sm:$0xff]
      %v1888 = vld [vmem:[%s1872 + $0x78] sm:$0xff]
      %v1889 = vld [vmem:[%s1872 + $0x80] sm:$0xff]
      %v1890 = vld [vmem:[%s1872 + $0x88] sm:$0xff]
      %v1891 = vld [vmem:[%s1872 + $0x90] sm:$0xff]
      %v1892 = vld [vmem:[%s1872 + $0x98] sm:$0xff]
      %v1893 = vld [vmem:[%s1872 + $0xa0] sm:$0xff]
      %v1894 = vld [vmem:[%s1872 + $0xa8] sm:$0xff]
      %v1895 = vld [vmem:[%s1872 + $0xb0] sm:$0xff]
      %v1896 = vld [vmem:[%s1872 + $0xb8] sm:$0xff]
      %v1897 = vld [vmem:[%s1872 + $0xc0] sm:$0xff]
      %v1898 = vld [vmem:[%s1872 + $0xc8] sm:$0xff]
      %v1899 = vld [vmem:[%s1872 + $0xd0] sm:$0xff]
      %v1900 = vld [vmem:[%s1872 + $0xd8] sm:$0xff]
      %v1901 = vld [vmem:[%s1872 + $0xe0] sm:$0xff]
      %v1902 = vld [vmem:[%s1872 + $0xe8] sm:$0xff]
      %v1903 = vld [vmem:[%s1872 + $0xf0] sm:$0xff]
      %v1904 = vld [vmem:[%s1872 + $0xf8] sm:$0xff]
      %v1937 = vunpack.c.l.b16 %v1873
      %v1938 = vunpack.c.h.b16 %v1873
      %v1939 = vunpack.c.l.b16 %v1874
      %v1940 = vunpack.c.h.b16 %v1874
      %v1941 = vunpack.c.l.b16 %v1875
      %v1942 = vunpack.c.h.b16 %v1875
      %v1943 = vunpack.c.l.b16 %v1876
      %v1944 = vunpack.c.h.b16 %v1876
      %v1945 = vunpack.c.l.b16 %v1877
      %v1946 = vunpack.c.h.b16 %v1877
      %v1947 = vunpack.c.l.b16 %v1878
      %v1948 = vunpack.c.h.b16 %v1878
      %v1949 = vunpack.c.l.b16 %v1879
      %v1950 = vunpack.c.h.b16 %v1879
      %v1951 = vunpack.c.l.b16 %v1880
      %v1952 = vunpack.c.h.b16 %v1880
      %v1953 = vunpack.c.l.b16 %v1881
      %v1954 = vunpack.c.h.b16 %v1881
      %v1955 = vunpack.c.l.b16 %v1882
      %v1956 = vunpack.c.h.b16 %v1882
      %v1957 = vunpack.c.l.b16 %v1883
      %v1958 = vunpack.c.h.b16 %v1883
      %v1959 = vunpack.c.l.b16 %v1884
      %v1960 = vunpack.c.h.b16 %v1884
      %v1961 = vunpack.c.l.b16 %v1885
      %v1962 = vunpack.c.h.b16 %v1885
      %v1963 = vunpack.c.l.b16 %v1886
      %v1964 = vunpack.c.h.b16 %v1886
      %v1965 = vunpack.c.l.b16 %v1887
      %v1966 = vunpack.c.h.b16 %v1887
      %v1967 = vunpack.c.l.b16 %v1888
      %v1968 = vunpack.c.h.b16 %v1888
      %v1969 = vunpack.c.l.b16 %v1889
      %v1970 = vunpack.c.h.b16 %v1889
      %v1971 = vunpack.c.l.b16 %v1890
      %v1972 = vunpack.c.h.b16 %v1890
      %v1973 = vunpack.c.l.b16 %v1891
      %v1974 = vunpack.c.h.b16 %v1891
      %v1975 = vunpack.c.l.b16 %v1892
      %v1976 = vunpack.c.h.b16 %v1892
      %v1977 = vunpack.c.l.b16 %v1893
      %v1978 = vunpack.c.h.b16 %v1893
      %v1979 = vunpack.c.l.b16 %v1894
      %v1980 = vunpack.c.h.b16 %v1894
      %v1981 = vunpack.c.l.b16 %v1895
      %v1982 = vunpack.c.h.b16 %v1895
      %v1983 = vunpack.c.l.b16 %v1896
      %v1984 = vunpack.c.h.b16 %v1896
      %v1985 = vunpack.c.l.b16 %v1897
      %v1986 = vunpack.c.h.b16 %v1897
      %v1987 = vunpack.c.l.b16 %v1898
      %v1988 = vunpack.c.h.b16 %v1898
      %v1989 = vunpack.c.l.b16 %v1899
      %v1990 = vunpack.c.h.b16 %v1899
      %v1991 = vunpack.c.l.b16 %v1900
      %v1992 = vunpack.c.h.b16 %v1900
      %v1993 = vunpack.c.l.b16 %v1901
      %v1994 = vunpack.c.h.b16 %v1901
      %v1995 = vunpack.c.l.b16 %v1902
      %v1996 = vunpack.c.h.b16 %v1902
      %v1997 = vunpack.c.l.b16 %v1903
      %v1998 = vunpack.c.h.b16 %v1903
      %v1999 = vunpack.c.l.b16 %v1904
      %v2000 = vunpack.c.h.b16 %v1904
      %v2001 = vpack.c.b16 %v1939, %v1937
      %v2002 = vpack.c.b16 %v1940, %v1938
      %v2003 = vpack.c.b16 %v1943, %v1941
      %v2004 = vpack.c.b16 %v1944, %v1942
      %v2005 = vpack.c.b16 %v1947, %v1945
      %v2006 = vpack.c.b16 %v1948, %v1946
      %v2007 = vpack.c.b16 %v1951, %v1949
      %v2008 = vpack.c.b16 %v1952, %v1950
      %v2009 = vpack.c.b16 %v1955, %v1953
      %v2010 = vpack.c.b16 %v1956, %v1954
      %v2011 = vpack.c.b16 %v1959, %v1957
      %v2012 = vpack.c.b16 %v1960, %v1958
      %v2013 = vpack.c.b16 %v1963, %v1961
      %v2014 = vpack.c.b16 %v1964, %v1962
      %v2015 = vpack.c.b16 %v1967, %v1965
      %v2016 = vpack.c.b16 %v1968, %v1966
      %v2017 = vpack.c.b16 %v1971, %v1969
      %v2018 = vpack.c.b16 %v1972, %v1970
      %v2019 = vpack.c.b16 %v1975, %v1973
      %v2020 = vpack.c.b16 %v1976, %v1974
      %v2021 = vpack.c.b16 %v1979, %v1977
      %v2022 = vpack.c.b16 %v1980, %v1978
      %v2023 = vpack.c.b16 %v1983, %v1981
      %v2024 = vpack.c.b16 %v1984, %v1982
      %v2025 = vpack.c.b16 %v1987, %v1985
      %v2026 = vpack.c.b16 %v1988, %v1986
      %v2027 = vpack.c.b16 %v1991, %v1989
      %v2028 = vpack.c.b16 %v1992, %v1990
      %v2029 = vpack.c.b16 %v1995, %v1993
      %v2030 = vpack.c.b16 %v1996, %v1994
      %v2031 = vpack.c.b16 %v1999, %v1997
      %v2032 = vpack.c.b16 %v2000, %v1998
      %2065 = vmatprep.subr.bf16.mxu0 %v2016
      %2066 = vmatpush1.bf16.msra.mxu0 %v2015
      %2067 = vmatprep.subr.bf16.mxu0 %v2014
      %2068 = vmatpush1.bf16.msra.mxu0 %v2013
      %2069 = vmatprep.subr.bf16.mxu0 %v2012
      %2070 = vmatpush1.bf16.msra.mxu0 %v2011
      %2071 = vmatprep.subr.bf16.mxu0 %v2010
      %2072 = vmatpush1.bf16.msra.mxu0 %v2009
      %2073 = vmatprep.subr.bf16.mxu0 %v2008
      %2074 = vmatpush1.bf16.msra.mxu0 %v2007
      %2075 = vmatprep.subr.bf16.mxu0 %v2006
      %2076 = vmatpush1.bf16.msra.mxu0 %v2005
      %2077 = vmatprep.subr.bf16.mxu0 %v2004
      %2078 = vmatpush1.bf16.msra.mxu0 %v2003
      %2079 = vmatprep.subr.bf16.mxu0 %v2002
      %2080 = vmatpush1.bf16.msra.mxu0 %v2001
      %2081 = vmatprep.subr.bf16.mxu0 %v2032
      %2082 = vmatpush2.bf16.msra.mxu0 %v2031
      %2083 = vmatprep.subr.bf16.mxu0 %v2030
      %2084 = vmatpush2.bf16.msra.mxu0 %v2029
      %2085 = vmatprep.subr.bf16.mxu0 %v2028
      %2086 = vmatpush2.bf16.msra.mxu0 %v2027
      %2087 = vmatprep.subr.bf16.mxu0 %v2026
      %2088 = vmatpush2.bf16.msra.mxu0 %v2025
      %2089 = vmatprep.subr.bf16.mxu0 %v2024
      %2090 = vmatpush2.bf16.msra.mxu0 %v2023
      %2091 = vmatprep.subr.bf16.mxu0 %v2022
      %2092 = vmatpush2.bf16.msra.mxu0 %v2021
      %2093 = vmatprep.subr.bf16.mxu0 %v2020
      %2094 = vmatpush2.bf16.msra.mxu0 %v2019
      %2095 = vmatprep.subr.bf16.mxu0 %v2018
      %2096 = vmatpush2.bf16.msra.mxu0 %v2017
      %2097 = vmatprep.mubr.bf16.mxu0 %v370
      %2098 = vmatmul.mubr.bf16.gmra.mxu0 %v369
      %v2099 = vpop.f32.mrf.mxu0
      %v2100 = vadd.f32 0.0, %v2099
      %v2101 = vpop.f32.mrf.mxu0
      %v2102 = vadd.f32 0.0, %v2101
      %v2103 = vpop.f32.mrf.mxu0
      %v2104 = vadd.f32 0.0, %v2103
      %v2105 = vpop.f32.mrf.mxu0
      %v2106 = vadd.f32 0.0, %v2105
      %2107 = vmatprep.mubr.bf16.mxu0 %v372
      %2108 = vmatmul.mubr.bf16.gmra.mxu0 %v371
      %v2109 = vpop.f32.mrf.mxu0
      %v2110 = vadd.f32 0.0, %v2109
      %v2111 = vpop.f32.mrf.mxu0
      %v2112 = vadd.f32 0.0, %v2111
      %v2113 = vpop.f32.mrf.mxu0
      %v2114 = vadd.f32 0.0, %v2113
      %v2115 = vpop.f32.mrf.mxu0
      %v2116 = vadd.f32 0.0, %v2115
      %2117 = vdwg.mxu0
      %v2118 = vpack.c.bf16 %v2104, %v2100
      %v2119 = vpack.c.bf16 %v2106, %v2102
      %v2120 = vpack.c.bf16 %v2114, %v2110
      %v2121 = vpack.c.bf16 %v2116, %v2112
      %s2122 = scalar_lea.vmem %s1, 1792
      %v2123 = vld [vmem:[%s2122] sm:$0xff]
      %v2124 = vld [vmem:[%s2122 + $0x8] sm:$0xff]
      %v2125 = vld [vmem:[%s2122 + $0x10] sm:$0xff]
      %v2126 = vld [vmem:[%s2122 + $0x18] sm:$0xff]
      %v2127 = vld [vmem:[%s2122 + $0x20] sm:$0xff]
      %v2128 = vld [vmem:[%s2122 + $0x28] sm:$0xff]
      %v2129 = vld [vmem:[%s2122 + $0x30] sm:$0xff]
      %v2130 = vld [vmem:[%s2122 + $0x38] sm:$0xff]
      %v2131 = vld [vmem:[%s2122 + $0x40] sm:$0xff]
      %v2132 = vld [vmem:[%s2122 + $0x48] sm:$0xff]
      %v2133 = vld [vmem:[%s2122 + $0x50] sm:$0xff]
      %v2134 = vld [vmem:[%s2122 + $0x58] sm:$0xff]
      %v2135 = vld [vmem:[%s2122 + $0x60] sm:$0xff]
      %v2136 = vld [vmem:[%s2122 + $0x68] sm:$0xff]
      %v2137 = vld [vmem:[%s2122 + $0x70] sm:$0xff]
      %v2138 = vld [vmem:[%s2122 + $0x78] sm:$0xff]
      %v2139 = vld [vmem:[%s2122 + $0x80] sm:$0xff]
      %v2140 = vld [vmem:[%s2122 + $0x88] sm:$0xff]
      %v2141 = vld [vmem:[%s2122 + $0x90] sm:$0xff]
      %v2142 = vld [vmem:[%s2122 + $0x98] sm:$0xff]
      %v2143 = vld [vmem:[%s2122 + $0xa0] sm:$0xff]
      %v2144 = vld [vmem:[%s2122 + $0xa8] sm:$0xff]
      %v2145 = vld [vmem:[%s2122 + $0xb0] sm:$0xff]
      %v2146 = vld [vmem:[%s2122 + $0xb8] sm:$0xff]
      %v2147 = vld [vmem:[%s2122 + $0xc0] sm:$0xff]
      %v2148 = vld [vmem:[%s2122 + $0xc8] sm:$0xff]
      %v2149 = vld [vmem:[%s2122 + $0xd0] sm:$0xff]
      %v2150 = vld [vmem:[%s2122 + $0xd8] sm:$0xff]
      %v2151 = vld [vmem:[%s2122 + $0xe0] sm:$0xff]
      %v2152 = vld [vmem:[%s2122 + $0xe8] sm:$0xff]
      %v2153 = vld [vmem:[%s2122 + $0xf0] sm:$0xff]
      %v2154 = vld [vmem:[%s2122 + $0xf8] sm:$0xff]
      %v2187 = vunpack.c.l.b16 %v2123
      %v2188 = vunpack.c.h.b16 %v2123
      %v2189 = vunpack.c.l.b16 %v2124
      %v2190 = vunpack.c.h.b16 %v2124
      %v2191 = vunpack.c.l.b16 %v2125
      %v2192 = vunpack.c.h.b16 %v2125
      %v2193 = vunpack.c.l.b16 %v2126
      %v2194 = vunpack.c.h.b16 %v2126
      %v2195 = vunpack.c.l.b16 %v2127
      %v2196 = vunpack.c.h.b16 %v2127
      %v2197 = vunpack.c.l.b16 %v2128
      %v2198 = vunpack.c.h.b16 %v2128
      %v2199 = vunpack.c.l.b16 %v2129
      %v2200 = vunpack.c.h.b16 %v2129
      %v2201 = vunpack.c.l.b16 %v2130
      %v2202 = vunpack.c.h.b16 %v2130
      %v2203 = vunpack.c.l.b16 %v2131
      %v2204 = vunpack.c.h.b16 %v2131
      %v2205 = vunpack.c.l.b16 %v2132
      %v2206 = vunpack.c.h.b16 %v2132
      %v2207 = vunpack.c.l.b16 %v2133
      %v2208 = vunpack.c.h.b16 %v2133
      %v2209 = vunpack.c.l.b16 %v2134
      %v2210 = vunpack.c.h.b16 %v2134
      %v2211 = vunpack.c.l.b16 %v2135
      %v2212 = vunpack.c.h.b16 %v2135
      %v2213 = vunpack.c.l.b16 %v2136
      %v2214 = vunpack.c.h.b16 %v2136
      %v2215 = vunpack.c.l.b16 %v2137
      %v2216 = vunpack.c.h.b16 %v2137
      %v2217 = vunpack.c.l.b16 %v2138
      %v2218 = vunpack.c.h.b16 %v2138
      %v2219 = vunpack.c.l.b16 %v2139
      %v2220 = vunpack.c.h.b16 %v2139
      %v2221 = vunpack.c.l.b16 %v2140
      %v2222 = vunpack.c.h.b16 %v2140
      %v2223 = vunpack.c.l.b16 %v2141
      %v2224 = vunpack.c.h.b16 %v2141
      %v2225 = vunpack.c.l.b16 %v2142
      %v2226 = vunpack.c.h.b16 %v2142
      %v2227 = vunpack.c.l.b16 %v2143
      %v2228 = vunpack.c.h.b16 %v2143
      %v2229 = vunpack.c.l.b16 %v2144
      %v2230 = vunpack.c.h.b16 %v2144
      %v2231 = vunpack.c.l.b16 %v2145
      %v2232 = vunpack.c.h.b16 %v2145
      %v2233 = vunpack.c.l.b16 %v2146
      %v2234 = vunpack.c.h.b16 %v2146
      %v2235 = vunpack.c.l.b16 %v2147
      %v2236 = vunpack.c.h.b16 %v2147
      %v2237 = vunpack.c.l.b16 %v2148
      %v2238 = vunpack.c.h.b16 %v2148
      %v2239 = vunpack.c.l.b16 %v2149
      %v2240 = vunpack.c.h.b16 %v2149
      %v2241 = vunpack.c.l.b16 %v2150
      %v2242 = vunpack.c.h.b16 %v2150
      %v2243 = vunpack.c.l.b16 %v2151
      %v2244 = vunpack.c.h.b16 %v2151
      %v2245 = vunpack.c.l.b16 %v2152
      %v2246 = vunpack.c.h.b16 %v2152
      %v2247 = vunpack.c.l.b16 %v2153
      %v2248 = vunpack.c.h.b16 %v2153
      %v2249 = vunpack.c.l.b16 %v2154
      %v2250 = vunpack.c.h.b16 %v2154
      %v2251 = vpack.c.b16 %v2189, %v2187
      %v2252 = vpack.c.b16 %v2190, %v2188
      %v2253 = vpack.c.b16 %v2193, %v2191
      %v2254 = vpack.c.b16 %v2194, %v2192
      %v2255 = vpack.c.b16 %v2197, %v2195
      %v2256 = vpack.c.b16 %v2198, %v2196
      %v2257 = vpack.c.b16 %v2201, %v2199
      %v2258 = vpack.c.b16 %v2202, %v2200
      %v2259 = vpack.c.b16 %v2205, %v2203
      %v2260 = vpack.c.b16 %v2206, %v2204
      %v2261 = vpack.c.b16 %v2209, %v2207
      %v2262 = vpack.c.b16 %v2210, %v2208
      %v2263 = vpack.c.b16 %v2213, %v2211
      %v2264 = vpack.c.b16 %v2214, %v2212
      %v2265 = vpack.c.b16 %v2217, %v2215
      %v2266 = vpack.c.b16 %v2218, %v2216
      %v2267 = vpack.c.b16 %v2221, %v2219
      %v2268 = vpack.c.b16 %v2222, %v2220
      %v2269 = vpack.c.b16 %v2225, %v2223
      %v2270 = vpack.c.b16 %v2226, %v2224
      %v2271 = vpack.c.b16 %v2229, %v2227
      %v2272 = vpack.c.b16 %v2230, %v2228
      %v2273 = vpack.c.b16 %v2233, %v2231
      %v2274 = vpack.c.b16 %v2234, %v2232
      %v2275 = vpack.c.b16 %v2237, %v2235
      %v2276 = vpack.c.b16 %v2238, %v2236
      %v2277 = vpack.c.b16 %v2241, %v2239
      %v2278 = vpack.c.b16 %v2242, %v2240
      %v2279 = vpack.c.b16 %v2245, %v2243
      %v2280 = vpack.c.b16 %v2246, %v2244
      %v2281 = vpack.c.b16 %v2249, %v2247
      %v2282 = vpack.c.b16 %v2250, %v2248
      %2315 = vmatprep.subr.bf16.mxu0 %v2266
      %2316 = vmatpush1.bf16.msra.mxu0 %v2265
      %2317 = vmatprep.subr.bf16.mxu0 %v2264
      %2318 = vmatpush1.bf16.msra.mxu0 %v2263
      %2319 = vmatprep.subr.bf16.mxu0 %v2262
      %2320 = vmatpush1.bf16.msra.mxu0 %v2261
      %2321 = vmatprep.subr.bf16.mxu0 %v2260
      %2322 = vmatpush1.bf16.msra.mxu0 %v2259
      %2323 = vmatprep.subr.bf16.mxu0 %v2258
      %2324 = vmatpush1.bf16.msra.mxu0 %v2257
      %2325 = vmatprep.subr.bf16.mxu0 %v2256
      %2326 = vmatpush1.bf16.msra.mxu0 %v2255
      %2327 = vmatprep.subr.bf16.mxu0 %v2254
      %2328 = vmatpush1.bf16.msra.mxu0 %v2253
      %2329 = vmatprep.subr.bf16.mxu0 %v2252
      %2330 = vmatpush1.bf16.msra.mxu0 %v2251
      %2331 = vmatprep.subr.bf16.mxu0 %v2282
      %2332 = vmatpush2.bf16.msra.mxu0 %v2281
      %2333 = vmatprep.subr.bf16.mxu0 %v2280
      %2334 = vmatpush2.bf16.msra.mxu0 %v2279
      %2335 = vmatprep.subr.bf16.mxu0 %v2278
      %2336 = vmatpush2.bf16.msra.mxu0 %v2277
      %2337 = vmatprep.subr.bf16.mxu0 %v2276
      %2338 = vmatpush2.bf16.msra.mxu0 %v2275
      %2339 = vmatprep.subr.bf16.mxu0 %v2274
      %2340 = vmatpush2.bf16.msra.mxu0 %v2273
      %2341 = vmatprep.subr.bf16.mxu0 %v2272
      %2342 = vmatpush2.bf16.msra.mxu0 %v2271
      %2343 = vmatprep.subr.bf16.mxu0 %v2270
      %2344 = vmatpush2.bf16.msra.mxu0 %v2269
      %2345 = vmatprep.subr.bf16.mxu0 %v2268
      %2346 = vmatpush2.bf16.msra.mxu0 %v2267
      %2347 = vmatprep.mubr.bf16.mxu0 %v370
      %2348 = vmatmul.mubr.bf16.gmra.mxu0 %v369
      %v2349 = vpop.f32.mrf.mxu0
      %v2350 = vadd.f32 0.0, %v2349
      %v2351 = vpop.f32.mrf.mxu0
      %v2352 = vadd.f32 0.0, %v2351
      %v2353 = vpop.f32.mrf.mxu0
      %v2354 = vadd.f32 0.0, %v2353
      %v2355 = vpop.f32.mrf.mxu0
      %v2356 = vadd.f32 0.0, %v2355
      %2357 = vmatprep.mubr.bf16.mxu0 %v372
      %2358 = vmatmul.mubr.bf16.gmra.mxu0 %v371
      %v2359 = vpop.f32.mrf.mxu0
      %v2360 = vadd.f32 0.0, %v2359
      %v2361 = vpop.f32.mrf.mxu0
      %v2362 = vadd.f32 0.0, %v2361
      %v2363 = vpop.f32.mrf.mxu0
      %v2364 = vadd.f32 0.0, %v2363
      %v2365 = vpop.f32.mrf.mxu0
      %v2366 = vadd.f32 0.0, %v2365
      %2367 = vdwg.mxu0
      %v2368 = vpack.c.bf16 %v2354, %v2350
      %v2369 = vpack.c.bf16 %v2356, %v2352
      %v2370 = vpack.c.bf16 %v2364, %v2360
      %v2371 = vpack.c.bf16 %v2366, %v2362
      %s2372 = scalar_lea.vmem %s1, 2048
      %v2373 = vld [vmem:[%s2372] sm:$0xff]
      %v2374 = vld [vmem:[%s2372 + $0x8] sm:$0xff]
      %v2375 = vld [vmem:[%s2372 + $0x10] sm:$0xff]
      %v2376 = vld [vmem:[%s2372 + $0x18] sm:$0xff]
      %v2377 = vld [vmem:[%s2372 + $0x20] sm:$0xff]
      %v2378 = vld [vmem:[%s2372 + $0x28] sm:$0xff]
      %v2379 = vld [vmem:[%s2372 + $0x30] sm:$0xff]
      %v2380 = vld [vmem:[%s2372 + $0x38] sm:$0xff]
      %v2381 = vld [vmem:[%s2372 + $0x40] sm:$0xff]
      %v2382 = vld [vmem:[%s2372 + $0x48] sm:$0xff]
      %v2383 = vld [vmem:[%s2372 + $0x50] sm:$0xff]
      %v2384 = vld [vmem:[%s2372 + $0x58] sm:$0xff]
      %v2385 = vld [vmem:[%s2372 + $0x60] sm:$0xff]
      %v2386 = vld [vmem:[%s2372 + $0x68] sm:$0xff]
      %v2387 = vld [vmem:[%s2372 + $0x70] sm:$0xff]
      %v2388 = vld [vmem:[%s2372 + $0x78] sm:$0xff]
      %v2389 = vld [vmem:[%s2372 + $0x80] sm:$0xff]
      %v2390 = vld [vmem:[%s2372 + $0x88] sm:$0xff]
      %v2391 = vld [vmem:[%s2372 + $0x90] sm:$0xff]
      %v2392 = vld [vmem:[%s2372 + $0x98] sm:$0xff]
      %v2393 = vld [vmem:[%s2372 + $0xa0] sm:$0xff]
      %v2394 = vld [vmem:[%s2372 + $0xa8] sm:$0xff]
      %v2395 = vld [vmem:[%s2372 + $0xb0] sm:$0xff]
      %v2396 = vld [vmem:[%s2372 + $0xb8] sm:$0xff]
      %v2397 = vld [vmem:[%s2372 + $0xc0] sm:$0xff]
      %v2398 = vld [vmem:[%s2372 + $0xc8] sm:$0xff]
      %v2399 = vld [vmem:[%s2372 + $0xd0] sm:$0xff]
      %v2400 = vld [vmem:[%s2372 + $0xd8] sm:$0xff]
      %v2401 = vld [vmem:[%s2372 + $0xe0] sm:$0xff]
      %v2402 = vld [vmem:[%s2372 + $0xe8] sm:$0xff]
      %v2403 = vld [vmem:[%s2372 + $0xf0] sm:$0xff]
      %v2404 = vld [vmem:[%s2372 + $0xf8] sm:$0xff]
      %v2437 = vunpack.c.l.b16 %v2373
      %v2438 = vunpack.c.h.b16 %v2373
      %v2439 = vunpack.c.l.b16 %v2374
      %v2440 = vunpack.c.h.b16 %v2374
      %v2441 = vunpack.c.l.b16 %v2375
      %v2442 = vunpack.c.h.b16 %v2375
      %v2443 = vunpack.c.l.b16 %v2376
      %v2444 = vunpack.c.h.b16 %v2376
      %v2445 = vunpack.c.l.b16 %v2377
      %v2446 = vunpack.c.h.b16 %v2377
      %v2447 = vunpack.c.l.b16 %v2378
      %v2448 = vunpack.c.h.b16 %v2378
      %v2449 = vunpack.c.l.b16 %v2379
      %v2450 = vunpack.c.h.b16 %v2379
      %v2451 = vunpack.c.l.b16 %v2380
      %v2452 = vunpack.c.h.b16 %v2380
      %v2453 = vunpack.c.l.b16 %v2381
      %v2454 = vunpack.c.h.b16 %v2381
      %v2455 = vunpack.c.l.b16 %v2382
      %v2456 = vunpack.c.h.b16 %v2382
      %v2457 = vunpack.c.l.b16 %v2383
      %v2458 = vunpack.c.h.b16 %v2383
      %v2459 = vunpack.c.l.b16 %v2384
      %v2460 = vunpack.c.h.b16 %v2384
      %v2461 = vunpack.c.l.b16 %v2385
      %v2462 = vunpack.c.h.b16 %v2385
      %v2463 = vunpack.c.l.b16 %v2386
      %v2464 = vunpack.c.h.b16 %v2386
      %v2465 = vunpack.c.l.b16 %v2387
      %v2466 = vunpack.c.h.b16 %v2387
      %v2467 = vunpack.c.l.b16 %v2388
      %v2468 = vunpack.c.h.b16 %v2388
      %v2469 = vunpack.c.l.b16 %v2389
      %v2470 = vunpack.c.h.b16 %v2389
      %v2471 = vunpack.c.l.b16 %v2390
      %v2472 = vunpack.c.h.b16 %v2390
      %v2473 = vunpack.c.l.b16 %v2391
      %v2474 = vunpack.c.h.b16 %v2391
      %v2475 = vunpack.c.l.b16 %v2392
      %v2476 = vunpack.c.h.b16 %v2392
      %v2477 = vunpack.c.l.b16 %v2393
      %v2478 = vunpack.c.h.b16 %v2393
      %v2479 = vunpack.c.l.b16 %v2394
      %v2480 = vunpack.c.h.b16 %v2394
      %v2481 = vunpack.c.l.b16 %v2395
      %v2482 = vunpack.c.h.b16 %v2395
      %v2483 = vunpack.c.l.b16 %v2396
      %v2484 = vunpack.c.h.b16 %v2396
      %v2485 = vunpack.c.l.b16 %v2397
      %v2486 = vunpack.c.h.b16 %v2397
      %v2487 = vunpack.c.l.b16 %v2398
      %v2488 = vunpack.c.h.b16 %v2398
      %v2489 = vunpack.c.l.b16 %v2399
      %v2490 = vunpack.c.h.b16 %v2399
      %v2491 = vunpack.c.l.b16 %v2400
      %v2492 = vunpack.c.h.b16 %v2400
      %v2493 = vunpack.c.l.b16 %v2401
      %v2494 = vunpack.c.h.b16 %v2401
      %v2495 = vunpack.c.l.b16 %v2402
      %v2496 = vunpack.c.h.b16 %v2402
      %v2497 = vunpack.c.l.b16 %v2403
      %v2498 = vunpack.c.h.b16 %v2403
      %v2499 = vunpack.c.l.b16 %v2404
      %v2500 = vunpack.c.h.b16 %v2404
      %v2501 = vpack.c.b16 %v2439, %v2437
      %v2502 = vpack.c.b16 %v2440, %v2438
      %v2503 = vpack.c.b16 %v2443, %v2441
      %v2504 = vpack.c.b16 %v2444, %v2442
      %v2505 = vpack.c.b16 %v2447, %v2445
      %v2506 = vpack.c.b16 %v2448, %v2446
      %v2507 = vpack.c.b16 %v2451, %v2449
      %v2508 = vpack.c.b16 %v2452, %v2450
      %v2509 = vpack.c.b16 %v2455, %v2453
      %v2510 = vpack.c.b16 %v2456, %v2454
      %v2511 = vpack.c.b16 %v2459, %v2457
      %v2512 = vpack.c.b16 %v2460, %v2458
      %v2513 = vpack.c.b16 %v2463, %v2461
      %v2514 = vpack.c.b16 %v2464, %v2462
      %v2515 = vpack.c.b16 %v2467, %v2465
      %v2516 = vpack.c.b16 %v2468, %v2466
      %v2517 = vpack.c.b16 %v2471, %v2469
      %v2518 = vpack.c.b16 %v2472, %v2470
      %v2519 = vpack.c.b16 %v2475, %v2473
      %v2520 = vpack.c.b16 %v2476, %v2474
      %v2521 = vpack.c.b16 %v2479, %v2477
      %v2522 = vpack.c.b16 %v2480, %v2478
      %v2523 = vpack.c.b16 %v2483, %v2481
      %v2524 = vpack.c.b16 %v2484, %v2482
      %v2525 = vpack.c.b16 %v2487, %v2485
      %v2526 = vpack.c.b16 %v2488, %v2486
      %v2527 = vpack.c.b16 %v2491, %v2489
      %v2528 = vpack.c.b16 %v2492, %v2490
      %v2529 = vpack.c.b16 %v2495, %v2493
      %v2530 = vpack.c.b16 %v2496, %v2494
      %v2531 = vpack.c.b16 %v2499, %v2497
      %v2532 = vpack.c.b16 %v2500, %v2498
      %2565 = vmatprep.subr.bf16.mxu0 %v2516
      %2566 = vmatpush1.bf16.msra.mxu0 %v2515
      %2567 = vmatprep.subr.bf16.mxu0 %v2514
      %2568 = vmatpush1.bf16.msra.mxu0 %v2513
      %2569 = vmatprep.subr.bf16.mxu0 %v2512
      %2570 = vmatpush1.bf16.msra.mxu0 %v2511
      %2571 = vmatprep.subr.bf16.mxu0 %v2510
      %2572 = vmatpush1.bf16.msra.mxu0 %v2509
      %2573 = vmatprep.subr.bf16.mxu0 %v2508
      %2574 = vmatpush1.bf16.msra.mxu0 %v2507
      %2575 = vmatprep.subr.bf16.mxu0 %v2506
      %2576 = vmatpush1.bf16.msra.mxu0 %v2505
      %2577 = vmatprep.subr.bf16.mxu0 %v2504
      %2578 = vmatpush1.bf16.msra.mxu0 %v2503
      %2579 = vmatprep.subr.bf16.mxu0 %v2502
      %2580 = vmatpush1.bf16.msra.mxu0 %v2501
      %2581 = vmatprep.subr.bf16.mxu0 %v2532
      %2582 = vmatpush2.bf16.msra.mxu0 %v2531
      %2583 = vmatprep.subr.bf16.mxu0 %v2530
      %2584 = vmatpush2.bf16.msra.mxu0 %v2529
      %2585 = vmatprep.subr.bf16.mxu0 %v2528
      %2586 = vmatpush2.bf16.msra.mxu0 %v2527
      %2587 = vmatprep.subr.bf16.mxu0 %v2526
      %2588 = vmatpush2.bf16.msra.mxu0 %v2525
      %2589 = vmatprep.subr.bf16.mxu0 %v2524
      %2590 = vmatpush2.bf16.msra.mxu0 %v2523
      %2591 = vmatprep.subr.bf16.mxu0 %v2522
      %2592 = vmatpush2.bf16.msra.mxu0 %v2521
      %2593 = vmatprep.subr.bf16.mxu0 %v2520
      %2594 = vmatpush2.bf16.msra.mxu0 %v2519
      %2595 = vmatprep.subr.bf16.mxu0 %v2518
      %2596 = vmatpush2.bf16.msra.mxu0 %v2517
      %2597 = vmatprep.mubr.bf16.mxu0 %v370
      %2598 = vmatmul.mubr.bf16.gmra.mxu0 %v369
      %v2599 = vpop.f32.mrf.mxu0
      %v2600 = vadd.f32 0.0, %v2599
      %v2601 = vpop.f32.mrf.mxu0
      %v2602 = vadd.f32 0.0, %v2601
      %v2603 = vpop.f32.mrf.mxu0
      %v2604 = vadd.f32 0.0, %v2603
      %v2605 = vpop.f32.mrf.mxu0
      %v2606 = vadd.f32 0.0, %v2605
      %2607 = vmatprep.mubr.bf16.mxu0 %v372
      %2608 = vmatmul.mubr.bf16.gmra.mxu0 %v371
      %v2609 = vpop.f32.mrf.mxu0
      %v2610 = vadd.f32 0.0, %v2609
      %v2611 = vpop.f32.mrf.mxu0
      %v2612 = vadd.f32 0.0, %v2611
      %v2613 = vpop.f32.mrf.mxu0
      %v2614 = vadd.f32 0.0, %v2613
      %v2615 = vpop.f32.mrf.mxu0
      %v2616 = vadd.f32 0.0, %v2615
      %2617 = vdwg.mxu0
      %v2618 = vpack.c.bf16 %v2604, %v2600
      %v2619 = vpack.c.bf16 %v2606, %v2602
      %v2620 = vpack.c.bf16 %v2614, %v2610
      %v2621 = vpack.c.bf16 %v2616, %v2612
      %v2622 = vld [vmem:[%s4] sm:$0xff]
      %v2623 = vld [vmem:[%s4 + $0x8] sm:$0xf]
      %v2624 = vld [vmem:[%s4 + $0xc] sm:$0xff]
      %v2625 = vld [vmem:[%s4 + $0x14] sm:$0xf]
      %v2626 = vld [vmem:[%s4 + $0x18] sm:$0xff]
      %v2627 = vld [vmem:[%s4 + $0x20] sm:$0xf]
      %v2628 = vld [vmem:[%s4 + $0x24] sm:$0xff]
      %v2629 = vld [vmem:[%s4 + $0x2c] sm:$0xf]
      %v2630 = vld [vmem:[%s5] sm:$0xff]
      %v2631 = vld [vmem:[%s5 + $0x8] sm:$0xff]
      %v2632 = vld [vmem:[%s5 + $0x10] sm:$0xff]
      %v2633 = vld [vmem:[%s5 + $0x18] sm:$0xff]
      %2635 = vset.pattern.permute.xlu0 0
      %2636 = vperm.xlu0 %2635, %v2630
      %v2637 = vpop.permute.xlu0 %2636
      %2640 = vset.pattern.permute.xlu0 0
      %2641 = vperm.xlu0 %2640, %v2631
      %v2642 = vpop.permute.xlu0 %2641
      %2645 = vset.pattern.permute.xlu0 0
      %2646 = vperm.xlu0 %2645, %v2632
      %v2647 = vpop.permute.xlu0 %2646
      %2650 = vset.pattern.permute.xlu0 0
      %2651 = vperm.xlu0 %2650, %v2633
      %v2652 = vpop.permute.xlu0 %2651
      %v2662 = vunpack.c.l.b16 %v2622
      %v2663 = vunpack.c.h.b16 %v2622
      %v2664 = vunpack.c.l.b16 %v2623
      %v2665 = vunpack.c.l.b16 %v2624
      %v2666 = vunpack.c.h.b16 %v2624
      %v2667 = vunpack.c.l.b16 %v2625
      %v2668 = vunpack.c.l.b16 %v2626
      %v2669 = vunpack.c.h.b16 %v2626
      %v2670 = vunpack.c.l.b16 %v2627
      %v2671 = vunpack.c.l.b16 %v2628
      %v2672 = vunpack.c.h.b16 %v2628
      %v2673 = vunpack.c.l.b16 %v2629
      %v2674 = vpack.c.b16 %v2665, %v2662
      %v2675 = vpack.c.b16 %v2666, %v2663
      %v2676 = vpack.c.b16 %v2667, %v2664
      %v2677 = vpack.c.b16 %v2671, %v2668
      %v2678 = vpack.c.b16 %v2672, %v2669
      %v2679 = vpack.c.b16 %v2673, %v2670
      %vm2684 = vcmask 261120
      %v2686 = vsel %vm2684, %v2676, 0
      %v2689 = vsel %vm2684, %v2679, 0
      %2691 = vmatprep.subr.bf16.mxu0 %v1371
      %2692 = vmatpush1.bf16.msra.mxu0 %v1370
      %2693 = vmatprep.subr.bf16.mxu0 %v1369
      %2694 = vmatpush1.bf16.msra.mxu0 %v1368
      %2695 = vmatprep.subr.bf16.mxu0 %v1121
      %2696 = vmatpush1.bf16.msra.mxu0 %v1120
      %2697 = vmatprep.subr.bf16.mxu0 %v1119
      %2698 = vmatpush1.bf16.msra.mxu0 %v1118
      %2699 = vmatprep.subr.bf16.mxu0 %v871
      %2700 = vmatpush1.bf16.msra.mxu0 %v870
      %2701 = vmatprep.subr.bf16.mxu0 %v869
      %2702 = vmatpush1.bf16.msra.mxu0 %v868
      %2703 = vmatprep.subr.bf16.mxu0 %v621
      %2704 = vmatpush1.bf16.msra.mxu0 %v620
      %2705 = vmatprep.subr.bf16.mxu0 %v619
      %2706 = vmatpush1.bf16.msra.mxu0 %v618
      %2707 = vmatprep.subr.bf16.mxu0 %v2371
      %2708 = vmatpush2.bf16.msra.mxu0 %v2370
      %2709 = vmatprep.subr.bf16.mxu0 %v2369
      %2710 = vmatpush2.bf16.msra.mxu0 %v2368
      %2711 = vmatprep.subr.bf16.mxu0 %v2121
      %2712 = vmatpush2.bf16.msra.mxu0 %v2120
      %2713 = vmatprep.subr.bf16.mxu0 %v2119
      %2714 = vmatpush2.bf16.msra.mxu0 %v2118
      %2715 = vmatprep.subr.bf16.mxu0 %v1871
      %2716 = vmatpush2.bf16.msra.mxu0 %v1870
      %2717 = vmatprep.subr.bf16.mxu0 %v1869
      %2718 = vmatpush2.bf16.msra.mxu0 %v1868
      %2719 = vmatprep.subr.bf16.mxu0 %v1621
      %2720 = vmatpush2.bf16.msra.mxu0 %v1620
      %2721 = vmatprep.subr.bf16.mxu0 %v1619
      %2722 = vmatpush2.bf16.msra.mxu0 %v1618
      %2723 = vmatprep.mubr.bf16.mxu0 %v2675
      %2724 = vmatmul.mubr.bf16.gmra.mxu0 %v2674
      %v2725 = vpop.f32.mrf.mxu0
      %v2726 = vadd.f32 %v2637, %v2725
      %v2727 = vpop.f32.mrf.mxu0
      %v2728 = vadd.f32 %v2637, %v2727
      %v2729 = vpop.f32.mrf.mxu0
      %v2730 = vadd.f32 %v2642, %v2729
      %v2731 = vpop.f32.mrf.mxu0
      %v2732 = vadd.f32 %v2642, %v2731
      %2733 = vmatprep.mubr.bf16.mxu0 %v2678
      %2734 = vmatmul.mubr.bf16.gmra.mxu0 %v2677
      %v2735 = vpop.f32.mrf.mxu0
      %v2736 = vadd.f32 %v2647, %v2735
      %v2737 = vpop.f32.mrf.mxu0
      %v2738 = vadd.f32 %v2647, %v2737
      %v2739 = vpop.f32.mrf.mxu0
      %v2740 = vadd.f32 %v2652, %v2739
      %v2741 = vpop.f32.mrf.mxu0
      %v2742 = vadd.f32 %v2652, %v2741
      %2743 = vdwg.mxu0
      %2744 = vmatprep.subr.bf16.mxu0 0
      %2745 = vmatpush1.bf16.msra.mxu0 0
      %2746 = vmatprep.subr.bf16.mxu0 0
      %2747 = vmatpush1.bf16.msra.mxu0 0
      %2748 = vmatprep.subr.bf16.mxu0 0
      %2749 = vmatpush1.bf16.msra.mxu0 0
      %2750 = vmatprep.subr.bf16.mxu0 0
      %2751 = vmatpush1.bf16.msra.mxu0 0
      %2752 = vmatprep.subr.bf16.mxu0 0
      %2753 = vmatpush1.bf16.msra.mxu0 0
      %2754 = vmatprep.subr.bf16.mxu0 0
      %2755 = vmatpush1.bf16.msra.mxu0 0
      %2756 = vmatprep.subr.bf16.mxu0 %v2621
      %2757 = vmatpush1.bf16.msra.mxu0 %v2620
      %2758 = vmatprep.subr.bf16.mxu0 %v2619
      %2759 = vmatpush1.bf16.msra.mxu0 %v2618
      %2760 = vmatprep.subr.bf16.mxu0 0
      %2761 = vmatpush2.bf16.msra.mxu0 0
      %2762 = vmatprep.subr.bf16.mxu0 0
      %2763 = vmatpush2.bf16.msra.mxu0 0
      %2764 = vmatprep.subr.bf16.mxu0 0
      %2765 = vmatpush2.bf16.msra.mxu0 0
      %2766 = vmatprep.subr.bf16.mxu0 0
      %2767 = vmatpush2.bf16.msra.mxu0 0
      %2768 = vmatprep.subr.bf16.mxu0 0
      %2769 = vmatpush2.bf16.msra.mxu0 0
      %2770 = vmatprep.subr.bf16.mxu0 0
      %2771 = vmatpush2.bf16.msra.mxu0 0
      %2772 = vmatprep.subr.bf16.mxu0 0
      %2773 = vmatpush2.bf16.msra.mxu0 0
      %2774 = vmatprep.subr.bf16.mxu0 0
      %2775 = vmatpush2.bf16.msra.mxu0 0
      %2776 = vmatprep.mubr.bf16.mxu0 0
      %2777 = vmatmul.mubr.bf16.gmra.mxu0 %v2686
      %v2778 = vpop.f32.mrf.mxu0
      %v2779 = vadd.f32 %v2726, %v2778
      %v2780 = vpop.f32.mrf.mxu0
      %v2781 = vadd.f32 %v2728, %v2780
      %v2782 = vpop.f32.mrf.mxu0
      %v2783 = vadd.f32 %v2730, %v2782
      %v2784 = vpop.f32.mrf.mxu0
      %v2785 = vadd.f32 %v2732, %v2784
      %2786 = vmatprep.mubr.bf16.mxu0 0
      %2787 = vmatmul.mubr.bf16.gmra.mxu0 %v2689
      %v2788 = vpop.f32.mrf.mxu0
      %v2789 = vadd.f32 %v2736, %v2788
      %v2790 = vpop.f32.mrf.mxu0
      %v2791 = vadd.f32 %v2738, %v2790
      %v2792 = vpop.f32.mrf.mxu0
      %v2793 = vadd.f32 %v2740, %v2792
      %v2794 = vpop.f32.mrf.mxu0
      %v2795 = vadd.f32 %v2742, %v2794
      %2796 = vdwg.mxu0
      %v2797 = vmax.f32 %v2779, 0.0
      %v2798 = vmax.f32 %v2781, 0.0
      %v2799 = vmax.f32 %v2783, 0.0
      %v2800 = vmax.f32 %v2785, 0.0
      %v2801 = vmax.f32 %v2789, 0.0
      %v2802 = vmax.f32 %v2791, 0.0
      %v2803 = vmax.f32 %v2793, 0.0
      %v2804 = vmax.f32 %v2795, 0.0
      %v2805 = vld [vmem:[%s2] sm:$0xf]
      %v2806 = vld [vmem:[%s2 + $0x4] sm:$0xf]
      %v2807 = vld [vmem:[%s2 + $0x8] sm:$0xf]
      %v2808 = vld [vmem:[%s2 + $0xc] sm:$0xf]
      %v2809 = vld [vmem:[%s2 + $0x10] sm:$0xf]
      %v2810 = vld [vmem:[%s2 + $0x14] sm:$0xf]
      %v2811 = vld [vmem:[%s2 + $0x18] sm:$0xf]
      %v2812 = vld [vmem:[%s2 + $0x1c] sm:$0xf]
      %v2813 = vld [vmem:[%s2 + $0x20] sm:$0xf]
      %v2814 = vld [vmem:[%s2 + $0x24] sm:$0xf]
      %v2815 = vld [vmem:[%s2 + $0x28] sm:$0xf]
      %v2816 = vld [vmem:[%s2 + $0x2c] sm:$0xf]
      %v2817 = vld [vmem:[%s2 + $0x30] sm:$0xf]
      %v2818 = vld [vmem:[%s2 + $0x34] sm:$0xf]
      %v2819 = vld [vmem:[%s2 + $0x38] sm:$0xf]
      %v2820 = vld [vmem:[%s2 + $0x3c] sm:$0xf]
      %v2821 = vld [vmem:[%s2 + $0x40] sm:$0xf]
      %v2822 = vld [vmem:[%s2 + $0x44] sm:$0xf]
      %v2823 = vld [vmem:[%s2 + $0x48] sm:$0xf]
      %v2824 = vld [vmem:[%s2 + $0x4c] sm:$0xf]
      %v2825 = vld [vmem:[%s2 + $0x50] sm:$0xf]
      %v2826 = vld [vmem:[%s2 + $0x54] sm:$0xf]
      %v2827 = vld [vmem:[%s2 + $0x58] sm:$0xf]
      %v2828 = vld [vmem:[%s2 + $0x5c] sm:$0xf]
      %v2829 = vld [vmem:[%s2 + $0x60] sm:$0xf]
      %v2830 = vld [vmem:[%s2 + $0x64] sm:$0xf]
      %v2831 = vld [vmem:[%s2 + $0x68] sm:$0xf]
      %v2832 = vld [vmem:[%s2 + $0x6c] sm:$0xf]
      %v2833 = vld [vmem:[%s2 + $0x70] sm:$0xf]
      %v2834 = vld [vmem:[%s2 + $0x74] sm:$0xf]
      %v2835 = vld [vmem:[%s2 + $0x78] sm:$0xf]
      %v2836 = vld [vmem:[%s2 + $0x7c] sm:$0xf]
      %v2869 = vunpack.c.l.b16 %v2805
      %v2870 = vunpack.c.l.b16 %v2806
      %v2871 = vunpack.c.l.b16 %v2807
      %v2872 = vunpack.c.l.b16 %v2808
      %v2873 = vunpack.c.l.b16 %v2809
      %v2874 = vunpack.c.l.b16 %v2810
      %v2875 = vunpack.c.l.b16 %v2811
      %v2876 = vunpack.c.l.b16 %v2812
      %v2877 = vunpack.c.l.b16 %v2813
      %v2878 = vunpack.c.l.b16 %v2814
      %v2879 = vunpack.c.l.b16 %v2815
      %v2880 = vunpack.c.l.b16 %v2816
      %v2881 = vunpack.c.l.b16 %v2817
      %v2882 = vunpack.c.l.b16 %v2818
      %v2883 = vunpack.c.l.b16 %v2819
      %v2884 = vunpack.c.l.b16 %v2820
      %v2885 = vunpack.c.l.b16 %v2821
      %v2886 = vunpack.c.l.b16 %v2822
      %v2887 = vunpack.c.l.b16 %v2823
      %v2888 = vunpack.c.l.b16 %v2824
      %v2889 = vunpack.c.l.b16 %v2825
      %v2890 = vunpack.c.l.b16 %v2826
      %v2891 = vunpack.c.l.b16 %v2827
      %v2892 = vunpack.c.l.b16 %v2828
      %v2893 = vunpack.c.l.b16 %v2829
      %v2894 = vunpack.c.l.b16 %v2830
      %v2895 = vunpack.c.l.b16 %v2831
      %v2896 = vunpack.c.l.b16 %v2832
      %v2897 = vunpack.c.l.b16 %v2833
      %v2898 = vunpack.c.l.b16 %v2834
      %v2899 = vunpack.c.l.b16 %v2835
      %v2900 = vunpack.c.l.b16 %v2836
      %v2901 = vpack.c.b16 %v2870, %v2869
      %v2902 = vpack.c.b16 %v2872, %v2871
      %v2903 = vpack.c.b16 %v2874, %v2873
      %v2904 = vpack.c.b16 %v2876, %v2875
      %v2905 = vpack.c.b16 %v2878, %v2877
      %v2906 = vpack.c.b16 %v2880, %v2879
      %v2907 = vpack.c.b16 %v2882, %v2881
      %v2908 = vpack.c.b16 %v2884, %v2883
      %v2909 = vpack.c.b16 %v2886, %v2885
      %v2910 = vpack.c.b16 %v2888, %v2887
      %v2911 = vpack.c.b16 %v2890, %v2889
      %v2912 = vpack.c.b16 %v2892, %v2891
      %v2913 = vpack.c.b16 %v2894, %v2893
      %v2914 = vpack.c.b16 %v2896, %v2895
      %v2915 = vpack.c.b16 %v2898, %v2897
      %v2916 = vpack.c.b16 %v2900, %v2899
      %2933 = vmatprep.subr.bf16.mxu0 0
      %2934 = vmatpush1.bf16.msra.mxu0 %v2908
      %2935 = vmatprep.subr.bf16.mxu0 0
      %2936 = vmatpush1.bf16.msra.mxu0 %v2907
      %2937 = vmatprep.subr.bf16.mxu0 0
      %2938 = vmatpush1.bf16.msra.mxu0 %v2906
      %2939 = vmatprep.subr.bf16.mxu0 0
      %2940 = vmatpush1.bf16.msra.mxu0 %v2905
      %2941 = vmatprep.subr.bf16.mxu0 0
      %2942 = vmatpush1.bf16.msra.mxu0 %v2904
      %2943 = vmatprep.subr.bf16.mxu0 0
      %2944 = vmatpush1.bf16.msra.mxu0 %v2903
      %2945 = vmatprep.subr.bf16.mxu0 0
      %2946 = vmatpush1.bf16.msra.mxu0 %v2902
      %2947 = vmatprep.subr.bf16.mxu0 0
      %2948 = vmatpush1.bf16.msra.mxu0 %v2901
      %2949 = vmatprep.subr.bf16.mxu0 0
      %2950 = vmatpush2.bf16.msra.mxu0 %v2916
      %2951 = vmatprep.subr.bf16.mxu0 0
      %2952 = vmatpush2.bf16.msra.mxu0 %v2915
      %2953 = vmatprep.subr.bf16.mxu0 0
      %2954 = vmatpush2.bf16.msra.mxu0 %v2914
      %2955 = vmatprep.subr.bf16.mxu0 0
      %2956 = vmatpush2.bf16.msra.mxu0 %v2913
      %2957 = vmatprep.subr.bf16.mxu0 0
      %2958 = vmatpush2.bf16.msra.mxu0 %v2912
      %2959 = vmatprep.subr.bf16.mxu0 0
      %2960 = vmatpush2.bf16.msra.mxu0 %v2911
      %2961 = vmatprep.subr.bf16.mxu0 0
      %2962 = vmatpush2.bf16.msra.mxu0 %v2910
      %2963 = vmatprep.subr.bf16.mxu0 0
      %2964 = vmatpush2.bf16.msra.mxu0 %v2909
      %2965 = vmatprep.mubr.bf16.mxu0 %v370
      %2966 = vmatmul.mubr.bf16.gmra.mxu0 %v369
      %v2967 = vpop.f32.mrf.mxu0
      %v2968 = vadd.f32 0.0, %v2967
      %v2969 = vpop.f32.mrf.mxu0
      %v2970 = vpop.f32.mrf.mxu0
      %v2971 = vadd.f32 0.0, %v2970
      %v2972 = vpop.f32.mrf.mxu0
      %2973 = vmatprep.mubr.bf16.mxu0 %v372
      %2974 = vmatmul.mubr.bf16.gmra.mxu0 %v371
      %v2975 = vpop.f32.mrf.mxu0
      %v2976 = vadd.f32 0.0, %v2975
      %v2977 = vpop.f32.mrf.mxu0
      %v2978 = vpop.f32.mrf.mxu0
      %v2979 = vadd.f32 0.0, %v2978
      %v2980 = vpop.f32.mrf.mxu0
      %2981 = vdwg.mxu0
      %v2982 = vpack.c.bf16 %v2971, %v2968
      %v2983 = vpack.c.bf16 %v2979, %v2976
      %s2984 = scalar_lea.vmem %s2, 128
      %v2985 = vld [vmem:[%s2984] sm:$0xf]
      %v2986 = vld [vmem:[%s2984 + $0x4] sm:$0xf]
      %v2987 = vld [vmem:[%s2984 + $0x8] sm:$0xf]
      %v2988 = vld [vmem:[%s2984 + $0xc] sm:$0xf]
      %v2989 = vld [vmem:[%s2984 + $0x10] sm:$0xf]
      %v2990 = vld [vmem:[%s2984 + $0x14] sm:$0xf]
      %v2991 = vld [vmem:[%s2984 + $0x18] sm:$0xf]
      %v2992 = vld [vmem:[%s2984 + $0x1c] sm:$0xf]
      %v2993 = vld [vmem:[%s2984 + $0x20] sm:$0xf]
      %v2994 = vld [vmem:[%s2984 + $0x24] sm:$0xf]
      %v2995 = vld [vmem:[%s2984 + $0x28] sm:$0xf]
      %v2996 = vld [vmem:[%s2984 + $0x2c] sm:$0xf]
      %v2997 = vld [vmem:[%s2984 + $0x30] sm:$0xf]
      %v2998 = vld [vmem:[%s2984 + $0x34] sm:$0xf]
      %v2999 = vld [vmem:[%s2984 + $0x38] sm:$0xf]
      %v3000 = vld [vmem:[%s2984 + $0x3c] sm:$0xf]
      %v3001 = vld [vmem:[%s2984 + $0x40] sm:$0xf]
      %v3002 = vld [vmem:[%s2984 + $0x44] sm:$0xf]
      %v3003 = vld [vmem:[%s2984 + $0x48] sm:$0xf]
      %v3004 = vld [vmem:[%s2984 + $0x4c] sm:$0xf]
      %v3005 = vld [vmem:[%s2984 + $0x50] sm:$0xf]
      %v3006 = vld [vmem:[%s2984 + $0x54] sm:$0xf]
      %v3007 = vld [vmem:[%s2984 + $0x58] sm:$0xf]
      %v3008 = vld [vmem:[%s2984 + $0x5c] sm:$0xf]
      %v3009 = vld [vmem:[%s2984 + $0x60] sm:$0xf]
      %v3010 = vld [vmem:[%s2984 + $0x64] sm:$0xf]
      %v3011 = vld [vmem:[%s2984 + $0x68] sm:$0xf]
      %v3012 = vld [vmem:[%s2984 + $0x6c] sm:$0xf]
      %v3013 = vld [vmem:[%s2984 + $0x70] sm:$0xf]
      %v3014 = vld [vmem:[%s2984 + $0x74] sm:$0xf]
      %v3015 = vld [vmem:[%s2984 + $0x78] sm:$0xf]
      %v3016 = vld [vmem:[%s2984 + $0x7c] sm:$0xf]
      %v3049 = vunpack.c.l.b16 %v2985
      %v3050 = vunpack.c.l.b16 %v2986
      %v3051 = vunpack.c.l.b16 %v2987
      %v3052 = vunpack.c.l.b16 %v2988
      %v3053 = vunpack.c.l.b16 %v2989
      %v3054 = vunpack.c.l.b16 %v2990
      %v3055 = vunpack.c.l.b16 %v2991
      %v3056 = vunpack.c.l.b16 %v2992
      %v3057 = vunpack.c.l.b16 %v2993
      %v3058 = vunpack.c.l.b16 %v2994
      %v3059 = vunpack.c.l.b16 %v2995
      %v3060 = vunpack.c.l.b16 %v2996
      %v3061 = vunpack.c.l.b16 %v2997
      %v3062 = vunpack.c.l.b16 %v2998
      %v3063 = vunpack.c.l.b16 %v2999
      %v3064 = vunpack.c.l.b16 %v3000
      %v3065 = vunpack.c.l.b16 %v3001
      %v3066 = vunpack.c.l.b16 %v3002
      %v3067 = vunpack.c.l.b16 %v3003
      %v3068 = vunpack.c.l.b16 %v3004
      %v3069 = vunpack.c.l.b16 %v3005
      %v3070 = vunpack.c.l.b16 %v3006
      %v3071 = vunpack.c.l.b16 %v3007
      %v3072 = vunpack.c.l.b16 %v3008
      %v3073 = vunpack.c.l.b16 %v3009
      %v3074 = vunpack.c.l.b16 %v3010
      %v3075 = vunpack.c.l.b16 %v3011
      %v3076 = vunpack.c.l.b16 %v3012
      %v3077 = vunpack.c.l.b16 %v3013
      %v3078 = vunpack.c.l.b16 %v3014
      %v3079 = vunpack.c.l.b16 %v3015
      %v3080 = vunpack.c.l.b16 %v3016
      %v3081 = vpack.c.b16 %v3050, %v3049
      %v3082 = vpack.c.b16 %v3052, %v3051
      %v3083 = vpack.c.b16 %v3054, %v3053
      %v3084 = vpack.c.b16 %v3056, %v3055
      %v3085 = vpack.c.b16 %v3058, %v3057
      %v3086 = vpack.c.b16 %v3060, %v3059
      %v3087 = vpack.c.b16 %v3062, %v3061
      %v3088 = vpack.c.b16 %v3064, %v3063
      %v3089 = vpack.c.b16 %v3066, %v3065
      %v3090 = vpack.c.b16 %v3068, %v3067
      %v3091 = vpack.c.b16 %v3070, %v3069
      %v3092 = vpack.c.b16 %v3072, %v3071
      %v3093 = vpack.c.b16 %v3074, %v3073
      %v3094 = vpack.c.b16 %v3076, %v3075
      %v3095 = vpack.c.b16 %v3078, %v3077
      %v3096 = vpack.c.b16 %v3080, %v3079
      %3113 = vmatprep.subr.bf16.mxu0 0
      %3114 = vmatpush1.bf16.msra.mxu0 %v3088
      %3115 = vmatprep.subr.bf16.mxu0 0
      %3116 = vmatpush1.bf16.msra.mxu0 %v3087
      %3117 = vmatprep.subr.bf16.mxu0 0
      %3118 = vmatpush1.bf16.msra.mxu0 %v3086
      %3119 = vmatprep.subr.bf16.mxu0 0
      %3120 = vmatpush1.bf16.msra.mxu0 %v3085
      %3121 = vmatprep.subr.bf16.mxu0 0
      %3122 = vmatpush1.bf16.msra.mxu0 %v3084
      %3123 = vmatprep.subr.bf16.mxu0 0
      %3124 = vmatpush1.bf16.msra.mxu0 %v3083
      %3125 = vmatprep.subr.bf16.mxu0 0
      %3126 = vmatpush1.bf16.msra.mxu0 %v3082
      %3127 = vmatprep.subr.bf16.mxu0 0
      %3128 = vmatpush1.bf16.msra.mxu0 %v3081
      %3129 = vmatprep.subr.bf16.mxu0 0
      %3130 = vmatpush2.bf16.msra.mxu0 %v3096
      %3131 = vmatprep.subr.bf16.mxu0 0
      %3132 = vmatpush2.bf16.msra.mxu0 %v3095
      %3133 = vmatprep.subr.bf16.mxu0 0
      %3134 = vmatpush2.bf16.msra.mxu0 %v3094
      %3135 = vmatprep.subr.bf16.mxu0 0
      %3136 = vmatpush2.bf16.msra.mxu0 %v3093
      %3137 = vmatprep.subr.bf16.mxu0 0
      %3138 = vmatpush2.bf16.msra.mxu0 %v3092
      %3139 = vmatprep.subr.bf16.mxu0 0
      %3140 = vmatpush2.bf16.msra.mxu0 %v3091
      %3141 = vmatprep.subr.bf16.mxu0 0
      %3142 = vmatpush2.bf16.msra.mxu0 %v3090
      %3143 = vmatprep.subr.bf16.mxu0 0
      %3144 = vmatpush2.bf16.msra.mxu0 %v3089
      %3145 = vmatprep.mubr.bf16.mxu0 %v370
      %3146 = vmatmul.mubr.bf16.gmra.mxu0 %v369
      %v3147 = vpop.f32.mrf.mxu0
      %v3148 = vadd.f32 0.0, %v3147
      %v3149 = vpop.f32.mrf.mxu0
      %v3150 = vpop.f32.mrf.mxu0
      %v3151 = vadd.f32 0.0, %v3150
      %v3152 = vpop.f32.mrf.mxu0
      %3153 = vmatprep.mubr.bf16.mxu0 %v372
      %3154 = vmatmul.mubr.bf16.gmra.mxu0 %v371
      %v3155 = vpop.f32.mrf.mxu0
      %v3156 = vadd.f32 0.0, %v3155
      %v3157 = vpop.f32.mrf.mxu0
      %v3158 = vpop.f32.mrf.mxu0
      %v3159 = vadd.f32 0.0, %v3158
      %v3160 = vpop.f32.mrf.mxu0
      %3161 = vdwg.mxu0
      %v3162 = vpack.c.bf16 %v3151, %v3148
      %v3163 = vpack.c.bf16 %v3159, %v3156
      %s3164 = scalar_lea.vmem %s2, 256
      %v3165 = vld [vmem:[%s3164] sm:$0xf]
      %v3166 = vld [vmem:[%s3164 + $0x4] sm:$0xf]
      %v3167 = vld [vmem:[%s3164 + $0x8] sm:$0xf]
      %v3168 = vld [vmem:[%s3164 + $0xc] sm:$0xf]
      %v3169 = vld [vmem:[%s3164 + $0x10] sm:$0xf]
      %v3170 = vld [vmem:[%s3164 + $0x14] sm:$0xf]
      %v3171 = vld [vmem:[%s3164 + $0x18] sm:$0xf]
      %v3172 = vld [vmem:[%s3164 + $0x1c] sm:$0xf]
      %v3173 = vld [vmem:[%s3164 + $0x20] sm:$0xf]
      %v3174 = vld [vmem:[%s3164 + $0x24] sm:$0xf]
      %v3175 = vld [vmem:[%s3164 + $0x28] sm:$0xf]
      %v3176 = vld [vmem:[%s3164 + $0x2c] sm:$0xf]
      %v3177 = vld [vmem:[%s3164 + $0x30] sm:$0xf]
      %v3178 = vld [vmem:[%s3164 + $0x34] sm:$0xf]
      %v3179 = vld [vmem:[%s3164 + $0x38] sm:$0xf]
      %v3180 = vld [vmem:[%s3164 + $0x3c] sm:$0xf]
      %v3181 = vld [vmem:[%s3164 + $0x40] sm:$0xf]
      %v3182 = vld [vmem:[%s3164 + $0x44] sm:$0xf]
      %v3183 = vld [vmem:[%s3164 + $0x48] sm:$0xf]
      %v3184 = vld [vmem:[%s3164 + $0x4c] sm:$0xf]
      %v3185 = vld [vmem:[%s3164 + $0x50] sm:$0xf]
      %v3186 = vld [vmem:[%s3164 + $0x54] sm:$0xf]
      %v3187 = vld [vmem:[%s3164 + $0x58] sm:$0xf]
      %v3188 = vld [vmem:[%s3164 + $0x5c] sm:$0xf]
      %v3189 = vld [vmem:[%s3164 + $0x60] sm:$0xf]
      %v3190 = vld [vmem:[%s3164 + $0x64] sm:$0xf]
      %v3191 = vld [vmem:[%s3164 + $0x68] sm:$0xf]
      %v3192 = vld [vmem:[%s3164 + $0x6c] sm:$0xf]
      %v3193 = vld [vmem:[%s3164 + $0x70] sm:$0xf]
      %v3194 = vld [vmem:[%s3164 + $0x74] sm:$0xf]
      %v3195 = vld [vmem:[%s3164 + $0x78] sm:$0xf]
      %v3196 = vld [vmem:[%s3164 + $0x7c] sm:$0xf]
      %v3229 = vunpack.c.l.b16 %v3165
      %v3230 = vunpack.c.l.b16 %v3166
      %v3231 = vunpack.c.l.b16 %v3167
      %v3232 = vunpack.c.l.b16 %v3168
      %v3233 = vunpack.c.l.b16 %v3169
      %v3234 = vunpack.c.l.b16 %v3170
      %v3235 = vunpack.c.l.b16 %v3171
      %v3236 = vunpack.c.l.b16 %v3172
      %v3237 = vunpack.c.l.b16 %v3173
      %v3238 = vunpack.c.l.b16 %v3174
      %v3239 = vunpack.c.l.b16 %v3175
      %v3240 = vunpack.c.l.b16 %v3176
      %v3241 = vunpack.c.l.b16 %v3177
      %v3242 = vunpack.c.l.b16 %v3178
      %v3243 = vunpack.c.l.b16 %v3179
      %v3244 = vunpack.c.l.b16 %v3180
      %v3245 = vunpack.c.l.b16 %v3181
      %v3246 = vunpack.c.l.b16 %v3182
      %v3247 = vunpack.c.l.b16 %v3183
      %v3248 = vunpack.c.l.b16 %v3184
      %v3249 = vunpack.c.l.b16 %v3185
      %v3250 = vunpack.c.l.b16 %v3186
      %v3251 = vunpack.c.l.b16 %v3187
      %v3252 = vunpack.c.l.b16 %v3188
      %v3253 = vunpack.c.l.b16 %v3189
      %v3254 = vunpack.c.l.b16 %v3190
      %v3255 = vunpack.c.l.b16 %v3191
      %v3256 = vunpack.c.l.b16 %v3192
      %v3257 = vunpack.c.l.b16 %v3193
      %v3258 = vunpack.c.l.b16 %v3194
      %v3259 = vunpack.c.l.b16 %v3195
      %v3260 = vunpack.c.l.b16 %v3196
      %v3261 = vpack.c.b16 %v3230, %v3229
      %v3262 = vpack.c.b16 %v3232, %v3231
      %v3263 = vpack.c.b16 %v3234, %v3233
      %v3264 = vpack.c.b16 %v3236, %v3235
      %v3265 = vpack.c.b16 %v3238, %v3237
      %v3266 = vpack.c.b16 %v3240, %v3239
      %v3267 = vpack.c.b16 %v3242, %v3241
      %v3268 = vpack.c.b16 %v3244, %v3243
      %v3269 = vpack.c.b16 %v3246, %v3245
      %v3270 = vpack.c.b16 %v3248, %v3247
      %v3271 = vpack.c.b16 %v3250, %v3249
      %v3272 = vpack.c.b16 %v3252, %v3251
      %v3273 = vpack.c.b16 %v3254, %v3253
      %v3274 = vpack.c.b16 %v3256, %v3255
      %v3275 = vpack.c.b16 %v3258, %v3257
      %v3276 = vpack.c.b16 %v3260, %v3259
      %3293 = vmatprep.subr.bf16.mxu0 0
      %3294 = vmatpush1.bf16.msra.mxu0 %v3268
      %3295 = vmatprep.subr.bf16.mxu0 0
      %3296 = vmatpush1.bf16.msra.mxu0 %v3267
      %3297 = vmatprep.subr.bf16.mxu0 0
      %3298 = vmatpush1.bf16.msra.mxu0 %v3266
      %3299 = vmatprep.subr.bf16.mxu0 0
      %3300 = vmatpush1.bf16.msra.mxu0 %v3265
      %3301 = vmatprep.subr.bf16.mxu0 0
      %3302 = vmatpush1.bf16.msra.mxu0 %v3264
      %3303 = vmatprep.subr.bf16.mxu0 0
      %3304 = vmatpush1.bf16.msra.mxu0 %v3263
      %3305 = vmatprep.subr.bf16.mxu0 0
      %3306 = vmatpush1.bf16.msra.mxu0 %v3262
      %3307 = vmatprep.subr.bf16.mxu0 0
      %3308 = vmatpush1.bf16.msra.mxu0 %v3261
      %3309 = vmatprep.subr.bf16.mxu0 0
      %3310 = vmatpush2.bf16.msra.mxu0 %v3276
      %3311 = vmatprep.subr.bf16.mxu0 0
      %3312 = vmatpush2.bf16.msra.mxu0 %v3275
      %3313 = vmatprep.subr.bf16.mxu0 0
      %3314 = vmatpush2.bf16.msra.mxu0 %v3274
      %3315 = vmatprep.subr.bf16.mxu0 0
      %3316 = vmatpush2.bf16.msra.mxu0 %v3273
      %3317 = vmatprep.subr.bf16.mxu0 0
      %3318 = vmatpush2.bf16.msra.mxu0 %v3272
      %3319 = vmatprep.subr.bf16.mxu0 0
      %3320 = vmatpush2.bf16.msra.mxu0 %v3271
      %3321 = vmatprep.subr.bf16.mxu0 0
      %3322 = vmatpush2.bf16.msra.mxu0 %v3270
      %3323 = vmatprep.subr.bf16.mxu0 0
      %3324 = vmatpush2.bf16.msra.mxu0 %v3269
      %3325 = vmatprep.mubr.bf16.mxu0 %v370
      %3326 = vmatmul.mubr.bf16.gmra.mxu0 %v369
      %v3327 = vpop.f32.mrf.mxu0
      %v3328 = vadd.f32 0.0, %v3327
      %v3329 = vpop.f32.mrf.mxu0
      %v3330 = vpop.f32.mrf.mxu0
      %v3331 = vadd.f32 0.0, %v3330
      %v3332 = vpop.f32.mrf.mxu0
      %3333 = vmatprep.mubr.bf16.mxu0 %v372
      %3334 = vmatmul.mubr.bf16.gmra.mxu0 %v371
      %v3335 = vpop.f32.mrf.mxu0
      %v3336 = vadd.f32 0.0, %v3335
      %v3337 = vpop.f32.mrf.mxu0
      %v3338 = vpop.f32.mrf.mxu0
      %v3339 = vadd.f32 0.0, %v3338
      %v3340 = vpop.f32.mrf.mxu0
      %3341 = vdwg.mxu0
      %v3342 = vpack.c.bf16 %v3331, %v3328
      %v3343 = vpack.c.bf16 %v3339, %v3336
      %s3344 = scalar_lea.vmem %s2, 384
      %v3345 = vld [vmem:[%s3344] sm:$0xf]
      %v3346 = vld [vmem:[%s3344 + $0x4] sm:$0xf]
      %v3347 = vld [vmem:[%s3344 + $0x8] sm:$0xf]
      %v3348 = vld [vmem:[%s3344 + $0xc] sm:$0xf]
      %v3349 = vld [vmem:[%s3344 + $0x10] sm:$0xf]
      %v3350 = vld [vmem:[%s3344 + $0x14] sm:$0xf]
      %v3351 = vld [vmem:[%s3344 + $0x18] sm:$0xf]
      %v3352 = vld [vmem:[%s3344 + $0x1c] sm:$0xf]
      %v3353 = vld [vmem:[%s3344 + $0x20] sm:$0xf]
      %v3354 = vld [vmem:[%s3344 + $0x24] sm:$0xf]
      %v3355 = vld [vmem:[%s3344 + $0x28] sm:$0xf]
      %v3356 = vld [vmem:[%s3344 + $0x2c] sm:$0xf]
      %v3357 = vld [vmem:[%s3344 + $0x30] sm:$0xf]
      %v3358 = vld [vmem:[%s3344 + $0x34] sm:$0xf]
      %v3359 = vld [vmem:[%s3344 + $0x38] sm:$0xf]
      %v3360 = vld [vmem:[%s3344 + $0x3c] sm:$0xf]
      %v3361 = vld [vmem:[%s3344 + $0x40] sm:$0xf]
      %v3362 = vld [vmem:[%s3344 + $0x44] sm:$0xf]
      %v3363 = vld [vmem:[%s3344 + $0x48] sm:$0xf]
      %v3364 = vld [vmem:[%s3344 + $0x4c] sm:$0xf]
      %v3365 = vld [vmem:[%s3344 + $0x50] sm:$0xf]
      %v3366 = vld [vmem:[%s3344 + $0x54] sm:$0xf]
      %v3367 = vld [vmem:[%s3344 + $0x58] sm:$0xf]
      %v3368 = vld [vmem:[%s3344 + $0x5c] sm:$0xf]
      %v3369 = vld [vmem:[%s3344 + $0x60] sm:$0xf]
      %v3370 = vld [vmem:[%s3344 + $0x64] sm:$0xf]
      %v3371 = vld [vmem:[%s3344 + $0x68] sm:$0xf]
      %v3372 = vld [vmem:[%s3344 + $0x6c] sm:$0xf]
      %v3373 = vld [vmem:[%s3344 + $0x70] sm:$0xf]
      %v3374 = vld [vmem:[%s3344 + $0x74] sm:$0xf]
      %v3375 = vld [vmem:[%s3344 + $0x78] sm:$0xf]
      %v3376 = vld [vmem:[%s3344 + $0x7c] sm:$0xf]
      %v3409 = vunpack.c.l.b16 %v3345
      %v3410 = vunpack.c.l.b16 %v3346
      %v3411 = vunpack.c.l.b16 %v3347
      %v3412 = vunpack.c.l.b16 %v3348
      %v3413 = vunpack.c.l.b16 %v3349
      %v3414 = vunpack.c.l.b16 %v3350
      %v3415 = vunpack.c.l.b16 %v3351
      %v3416 = vunpack.c.l.b16 %v3352
      %v3417 = vunpack.c.l.b16 %v3353
      %v3418 = vunpack.c.l.b16 %v3354
      %v3419 = vunpack.c.l.b16 %v3355
      %v3420 = vunpack.c.l.b16 %v3356
      %v3421 = vunpack.c.l.b16 %v3357
      %v3422 = vunpack.c.l.b16 %v3358
      %v3423 = vunpack.c.l.b16 %v3359
      %v3424 = vunpack.c.l.b16 %v3360
      %v3425 = vunpack.c.l.b16 %v3361
      %v3426 = vunpack.c.l.b16 %v3362
      %v3427 = vunpack.c.l.b16 %v3363
      %v3428 = vunpack.c.l.b16 %v3364
      %v3429 = vunpack.c.l.b16 %v3365
      %v3430 = vunpack.c.l.b16 %v3366
      %v3431 = vunpack.c.l.b16 %v3367
      %v3432 = vunpack.c.l.b16 %v3368
      %v3433 = vunpack.c.l.b16 %v3369
      %v3434 = vunpack.c.l.b16 %v3370
      %v3435 = vunpack.c.l.b16 %v3371
      %v3436 = vunpack.c.l.b16 %v3372
      %v3437 = vunpack.c.l.b16 %v3373
      %v3438 = vunpack.c.l.b16 %v3374
      %v3439 = vunpack.c.l.b16 %v3375
      %v3440 = vunpack.c.l.b16 %v3376
      %v3441 = vpack.c.b16 %v3410, %v3409
      %v3442 = vpack.c.b16 %v3412, %v3411
      %v3443 = vpack.c.b16 %v3414, %v3413
      %v3444 = vpack.c.b16 %v3416, %v3415
      %v3445 = vpack.c.b16 %v3418, %v3417
      %v3446 = vpack.c.b16 %v3420, %v3419
      %v3447 = vpack.c.b16 %v3422, %v3421
      %v3448 = vpack.c.b16 %v3424, %v3423
      %v3449 = vpack.c.b16 %v3426, %v3425
      %v3450 = vpack.c.b16 %v3428, %v3427
      %v3451 = vpack.c.b16 %v3430, %v3429
      %v3452 = vpack.c.b16 %v3432, %v3431
      %v3453 = vpack.c.b16 %v3434, %v3433
      %v3454 = vpack.c.b16 %v3436, %v3435
      %v3455 = vpack.c.b16 %v3438, %v3437
      %v3456 = vpack.c.b16 %v3440, %v3439
      %3473 = vmatprep.subr.bf16.mxu0 0
      %3474 = vmatpush1.bf16.msra.mxu0 %v3448
      %3475 = vmatprep.subr.bf16.mxu0 0
      %3476 = vmatpush1.bf16.msra.mxu0 %v3447
      %3477 = vmatprep.subr.bf16.mxu0 0
      %3478 = vmatpush1.bf16.msra.mxu0 %v3446
      %3479 = vmatprep.subr.bf16.mxu0 0
      %3480 = vmatpush1.bf16.msra.mxu0 %v3445
      %3481 = vmatprep.subr.bf16.mxu0 0
      %3482 = vmatpush1.bf16.msra.mxu0 %v3444
      %3483 = vmatprep.subr.bf16.mxu0 0
      %3484 = vmatpush1.bf16.msra.mxu0 %v3443
      %3485 = vmatprep.subr.bf16.mxu0 0
      %3486 = vmatpush1.bf16.msra.mxu0 %v3442
      %3487 = vmatprep.subr.bf16.mxu0 0
      %3488 = vmatpush1.bf16.msra.mxu0 %v3441
      %3489 = vmatprep.subr.bf16.mxu0 0
      %3490 = vmatpush2.bf16.msra.mxu0 %v3456
      %3491 = vmatprep.subr.bf16.mxu0 0
      %3492 = vmatpush2.bf16.msra.mxu0 %v3455
      %3493 = vmatprep.subr.bf16.mxu0 0
      %3494 = vmatpush2.bf16.msra.mxu0 %v3454
      %3495 = vmatprep.subr.bf16.mxu0 0
      %3496 = vmatpush2.bf16.msra.mxu0 %v3453
      %3497 = vmatprep.subr.bf16.mxu0 0
      %3498 = vmatpush2.bf16.msra.mxu0 %v3452
      %3499 = vmatprep.subr.bf16.mxu0 0
      %3500 = vmatpush2.bf16.msra.mxu0 %v3451
      %3501 = vmatprep.subr.bf16.mxu0 0
      %3502 = vmatpush2.bf16.msra.mxu0 %v3450
      %3503 = vmatprep.subr.bf16.mxu0 0
      %3504 = vmatpush2.bf16.msra.mxu0 %v3449
      %3505 = vmatprep.mubr.bf16.mxu0 %v370
      %3506 = vmatmul.mubr.bf16.gmra.mxu0 %v369
      %v3507 = vpop.f32.mrf.mxu0
      %v3508 = vadd.f32 0.0, %v3507
      %v3509 = vpop.f32.mrf.mxu0
      %v3510 = vpop.f32.mrf.mxu0
      %v3511 = vadd.f32 0.0, %v3510
      %v3512 = vpop.f32.mrf.mxu0
      %3513 = vmatprep.mubr.bf16.mxu0 %v372
      %3514 = vmatmul.mubr.bf16.gmra.mxu0 %v371
      %v3515 = vpop.f32.mrf.mxu0
      %v3516 = vadd.f32 0.0, %v3515
      %v3517 = vpop.f32.mrf.mxu0
      %v3518 = vpop.f32.mrf.mxu0
      %v3519 = vadd.f32 0.0, %v3518
      %v3520 = vpop.f32.mrf.mxu0
      %3521 = vdwg.mxu0
      %v3522 = vpack.c.bf16 %v3511, %v3508
      %v3523 = vpack.c.bf16 %v3519, %v3516
      %s3524 = scalar_lea.vmem %s2, 512
      %v3525 = vld [vmem:[%s3524] sm:$0xf]
      %v3526 = vld [vmem:[%s3524 + $0x4] sm:$0xf]
      %v3527 = vld [vmem:[%s3524 + $0x8] sm:$0xf]
      %v3528 = vld [vmem:[%s3524 + $0xc] sm:$0xf]
      %v3529 = vld [vmem:[%s3524 + $0x10] sm:$0xf]
      %v3530 = vld [vmem:[%s3524 + $0x14] sm:$0xf]
      %v3531 = vld [vmem:[%s3524 + $0x18] sm:$0xf]
      %v3532 = vld [vmem:[%s3524 + $0x1c] sm:$0xf]
      %v3533 = vld [vmem:[%s3524 + $0x20] sm:$0xf]
      %v3534 = vld [vmem:[%s3524 + $0x24] sm:$0xf]
      %v3535 = vld [vmem:[%s3524 + $0x28] sm:$0xf]
      %v3536 = vld [vmem:[%s3524 + $0x2c] sm:$0xf]
      %v3537 = vld [vmem:[%s3524 + $0x30] sm:$0xf]
      %v3538 = vld [vmem:[%s3524 + $0x34] sm:$0xf]
      %v3539 = vld [vmem:[%s3524 + $0x38] sm:$0xf]
      %v3540 = vld [vmem:[%s3524 + $0x3c] sm:$0xf]
      %v3541 = vld [vmem:[%s3524 + $0x40] sm:$0xf]
      %v3542 = vld [vmem:[%s3524 + $0x44] sm:$0xf]
      %v3543 = vld [vmem:[%s3524 + $0x48] sm:$0xf]
      %v3544 = vld [vmem:[%s3524 + $0x4c] sm:$0xf]
      %v3545 = vld [vmem:[%s3524 + $0x50] sm:$0xf]
      %v3546 = vld [vmem:[%s3524 + $0x54] sm:$0xf]
      %v3547 = vld [vmem:[%s3524 + $0x58] sm:$0xf]
      %v3548 = vld [vmem:[%s3524 + $0x5c] sm:$0xf]
      %v3549 = vld [vmem:[%s3524 + $0x60] sm:$0xf]
      %v3550 = vld [vmem:[%s3524 + $0x64] sm:$0xf]
      %v3551 = vld [vmem:[%s3524 + $0x68] sm:$0xf]
      %v3552 = vld [vmem:[%s3524 + $0x6c] sm:$0xf]
      %v3553 = vld [vmem:[%s3524 + $0x70] sm:$0xf]
      %v3554 = vld [vmem:[%s3524 + $0x74] sm:$0xf]
      %v3555 = vld [vmem:[%s3524 + $0x78] sm:$0xf]
      %v3556 = vld [vmem:[%s3524 + $0x7c] sm:$0xf]
      %v3589 = vunpack.c.l.b16 %v3525
      %v3590 = vunpack.c.l.b16 %v3526
      %v3591 = vunpack.c.l.b16 %v3527
      %v3592 = vunpack.c.l.b16 %v3528
      %v3593 = vunpack.c.l.b16 %v3529
      %v3594 = vunpack.c.l.b16 %v3530
      %v3595 = vunpack.c.l.b16 %v3531
      %v3596 = vunpack.c.l.b16 %v3532
      %v3597 = vunpack.c.l.b16 %v3533
      %v3598 = vunpack.c.l.b16 %v3534
      %v3599 = vunpack.c.l.b16 %v3535
      %v3600 = vunpack.c.l.b16 %v3536
      %v3601 = vunpack.c.l.b16 %v3537
      %v3602 = vunpack.c.l.b16 %v3538
      %v3603 = vunpack.c.l.b16 %v3539
      %v3604 = vunpack.c.l.b16 %v3540
      %v3605 = vunpack.c.l.b16 %v3541
      %v3606 = vunpack.c.l.b16 %v3542
      %v3607 = vunpack.c.l.b16 %v3543
      %v3608 = vunpack.c.l.b16 %v3544
      %v3609 = vunpack.c.l.b16 %v3545
      %v3610 = vunpack.c.l.b16 %v3546
      %v3611 = vunpack.c.l.b16 %v3547
      %v3612 = vunpack.c.l.b16 %v3548
      %v3613 = vunpack.c.l.b16 %v3549
      %v3614 = vunpack.c.l.b16 %v3550
      %v3615 = vunpack.c.l.b16 %v3551
      %v3616 = vunpack.c.l.b16 %v3552
      %v3617 = vunpack.c.l.b16 %v3553
      %v3618 = vunpack.c.l.b16 %v3554
      %v3619 = vunpack.c.l.b16 %v3555
      %v3620 = vunpack.c.l.b16 %v3556
      %v3621 = vpack.c.b16 %v3590, %v3589
      %v3622 = vpack.c.b16 %v3592, %v3591
      %v3623 = vpack.c.b16 %v3594, %v3593
      %v3624 = vpack.c.b16 %v3596, %v3595
      %v3625 = vpack.c.b16 %v3598, %v3597
      %v3626 = vpack.c.b16 %v3600, %v3599
      %v3627 = vpack.c.b16 %v3602, %v3601
      %v3628 = vpack.c.b16 %v3604, %v3603
      %v3629 = vpack.c.b16 %v3606, %v3605
      %v3630 = vpack.c.b16 %v3608, %v3607
      %v3631 = vpack.c.b16 %v3610, %v3609
      %v3632 = vpack.c.b16 %v3612, %v3611
      %v3633 = vpack.c.b16 %v3614, %v3613
      %v3634 = vpack.c.b16 %v3616, %v3615
      %v3635 = vpack.c.b16 %v3618, %v3617
      %v3636 = vpack.c.b16 %v3620, %v3619
      %3653 = vmatprep.subr.bf16.mxu0 0
      %3654 = vmatpush1.bf16.msra.mxu0 %v3628
      %3655 = vmatprep.subr.bf16.mxu0 0
      %3656 = vmatpush1.bf16.msra.mxu0 %v3627
      %3657 = vmatprep.subr.bf16.mxu0 0
      %3658 = vmatpush1.bf16.msra.mxu0 %v3626
      %3659 = vmatprep.subr.bf16.mxu0 0
      %3660 = vmatpush1.bf16.msra.mxu0 %v3625
      %3661 = vmatprep.subr.bf16.mxu0 0
      %3662 = vmatpush1.bf16.msra.mxu0 %v3624
      %3663 = vmatprep.subr.bf16.mxu0 0
      %3664 = vmatpush1.bf16.msra.mxu0 %v3623
      %3665 = vmatprep.subr.bf16.mxu0 0
      %3666 = vmatpush1.bf16.msra.mxu0 %v3622
      %3667 = vmatprep.subr.bf16.mxu0 0
      %3668 = vmatpush1.bf16.msra.mxu0 %v3621
      %3669 = vmatprep.subr.bf16.mxu0 0
      %3670 = vmatpush2.bf16.msra.mxu0 %v3636
      %3671 = vmatprep.subr.bf16.mxu0 0
      %3672 = vmatpush2.bf16.msra.mxu0 %v3635
      %3673 = vmatprep.subr.bf16.mxu0 0
      %3674 = vmatpush2.bf16.msra.mxu0 %v3634
      %3675 = vmatprep.subr.bf16.mxu0 0
      %3676 = vmatpush2.bf16.msra.mxu0 %v3633
      %3677 = vmatprep.subr.bf16.mxu0 0
      %3678 = vmatpush2.bf16.msra.mxu0 %v3632
      %3679 = vmatprep.subr.bf16.mxu0 0
      %3680 = vmatpush2.bf16.msra.mxu0 %v3631
      %3681 = vmatprep.subr.bf16.mxu0 0
      %3682 = vmatpush2.bf16.msra.mxu0 %v3630
      %3683 = vmatprep.subr.bf16.mxu0 0
      %3684 = vmatpush2.bf16.msra.mxu0 %v3629
      %3685 = vmatprep.mubr.bf16.mxu0 %v370
      %3686 = vmatmul.mubr.bf16.gmra.mxu0 %v369
      %v3687 = vpop.f32.mrf.mxu0
      %v3688 = vadd.f32 0.0, %v3687
      %v3689 = vpop.f32.mrf.mxu0
      %v3690 = vpop.f32.mrf.mxu0
      %v3691 = vadd.f32 0.0, %v3690
      %v3692 = vpop.f32.mrf.mxu0
      %3693 = vmatprep.mubr.bf16.mxu0 %v372
      %3694 = vmatmul.mubr.bf16.gmra.mxu0 %v371
      %v3695 = vpop.f32.mrf.mxu0
      %v3696 = vadd.f32 0.0, %v3695
      %v3697 = vpop.f32.mrf.mxu0
      %v3698 = vpop.f32.mrf.mxu0
      %v3699 = vadd.f32 0.0, %v3698
      %v3700 = vpop.f32.mrf.mxu0
      %3701 = vdwg.mxu0
      %v3702 = vpack.c.bf16 %v3691, %v3688
      %v3703 = vpack.c.bf16 %v3699, %v3696
      %s3704 = scalar_lea.vmem %s2, 640
      %v3705 = vld [vmem:[%s3704] sm:$0xf]
      %v3706 = vld [vmem:[%s3704 + $0x4] sm:$0xf]
      %v3707 = vld [vmem:[%s3704 + $0x8] sm:$0xf]
      %v3708 = vld [vmem:[%s3704 + $0xc] sm:$0xf]
      %v3709 = vld [vmem:[%s3704 + $0x10] sm:$0xf]
      %v3710 = vld [vmem:[%s3704 + $0x14] sm:$0xf]
      %v3711 = vld [vmem:[%s3704 + $0x18] sm:$0xf]
      %v3712 = vld [vmem:[%s3704 + $0x1c] sm:$0xf]
      %v3713 = vld [vmem:[%s3704 + $0x20] sm:$0xf]
      %v3714 = vld [vmem:[%s3704 + $0x24] sm:$0xf]
      %v3715 = vld [vmem:[%s3704 + $0x28] sm:$0xf]
      %v3716 = vld [vmem:[%s3704 + $0x2c] sm:$0xf]
      %v3717 = vld [vmem:[%s3704 + $0x30] sm:$0xf]
      %v3718 = vld [vmem:[%s3704 + $0x34] sm:$0xf]
      %v3719 = vld [vmem:[%s3704 + $0x38] sm:$0xf]
      %v3720 = vld [vmem:[%s3704 + $0x3c] sm:$0xf]
      %v3721 = vld [vmem:[%s3704 + $0x40] sm:$0xf]
      %v3722 = vld [vmem:[%s3704 + $0x44] sm:$0xf]
      %v3723 = vld [vmem:[%s3704 + $0x48] sm:$0xf]
      %v3724 = vld [vmem:[%s3704 + $0x4c] sm:$0xf]
      %v3725 = vld [vmem:[%s3704 + $0x50] sm:$0xf]
      %v3726 = vld [vmem:[%s3704 + $0x54] sm:$0xf]
      %v3727 = vld [vmem:[%s3704 + $0x58] sm:$0xf]
      %v3728 = vld [vmem:[%s3704 + $0x5c] sm:$0xf]
      %v3729 = vld [vmem:[%s3704 + $0x60] sm:$0xf]
      %v3730 = vld [vmem:[%s3704 + $0x64] sm:$0xf]
      %v3731 = vld [vmem:[%s3704 + $0x68] sm:$0xf]
      %v3732 = vld [vmem:[%s3704 + $0x6c] sm:$0xf]
      %v3733 = vld [vmem:[%s3704 + $0x70] sm:$0xf]
      %v3734 = vld [vmem:[%s3704 + $0x74] sm:$0xf]
      %v3735 = vld [vmem:[%s3704 + $0x78] sm:$0xf]
      %v3736 = vld [vmem:[%s3704 + $0x7c] sm:$0xf]
      %v3769 = vunpack.c.l.b16 %v3705
      %v3770 = vunpack.c.l.b16 %v3706
      %v3771 = vunpack.c.l.b16 %v3707
      %v3772 = vunpack.c.l.b16 %v3708
      %v3773 = vunpack.c.l.b16 %v3709
      %v3774 = vunpack.c.l.b16 %v3710
      %v3775 = vunpack.c.l.b16 %v3711
      %v3776 = vunpack.c.l.b16 %v3712
      %v3777 = vunpack.c.l.b16 %v3713
      %v3778 = vunpack.c.l.b16 %v3714
      %v3779 = vunpack.c.l.b16 %v3715
      %v3780 = vunpack.c.l.b16 %v3716
      %v3781 = vunpack.c.l.b16 %v3717
      %v3782 = vunpack.c.l.b16 %v3718
      %v3783 = vunpack.c.l.b16 %v3719
      %v3784 = vunpack.c.l.b16 %v3720
      %v3785 = vunpack.c.l.b16 %v3721
      %v3786 = vunpack.c.l.b16 %v3722
      %v3787 = vunpack.c.l.b16 %v3723
      %v3788 = vunpack.c.l.b16 %v3724
      %v3789 = vunpack.c.l.b16 %v3725
      %v3790 = vunpack.c.l.b16 %v3726
      %v3791 = vunpack.c.l.b16 %v3727
      %v3792 = vunpack.c.l.b16 %v3728
      %v3793 = vunpack.c.l.b16 %v3729
      %v3794 = vunpack.c.l.b16 %v3730
      %v3795 = vunpack.c.l.b16 %v3731
      %v3796 = vunpack.c.l.b16 %v3732
      %v3797 = vunpack.c.l.b16 %v3733
      %v3798 = vunpack.c.l.b16 %v3734
      %v3799 = vunpack.c.l.b16 %v3735
      %v3800 = vunpack.c.l.b16 %v3736
      %v3801 = vpack.c.b16 %v3770, %v3769
      %v3802 = vpack.c.b16 %v3772, %v3771
      %v3803 = vpack.c.b16 %v3774, %v3773
      %v3804 = vpack.c.b16 %v3776, %v3775
      %v3805 = vpack.c.b16 %v3778, %v3777
      %v3806 = vpack.c.b16 %v3780, %v3779
      %v3807 = vpack.c.b16 %v3782, %v3781
      %v3808 = vpack.c.b16 %v3784, %v3783
      %v3809 = vpack.c.b16 %v3786, %v3785
      %v3810 = vpack.c.b16 %v3788, %v3787
      %v3811 = vpack.c.b16 %v3790, %v3789
      %v3812 = vpack.c.b16 %v3792, %v3791
      %v3813 = vpack.c.b16 %v3794, %v3793
      %v3814 = vpack.c.b16 %v3796, %v3795
      %v3815 = vpack.c.b16 %v3798, %v3797
      %v3816 = vpack.c.b16 %v3800, %v3799
      %3833 = vmatprep.subr.bf16.mxu0 0
      %3834 = vmatpush1.bf16.msra.mxu0 %v3808
      %3835 = vmatprep.subr.bf16.mxu0 0
      %3836 = vmatpush1.bf16.msra.mxu0 %v3807
      %3837 = vmatprep.subr.bf16.mxu0 0
      %3838 = vmatpush1.bf16.msra.mxu0 %v3806
      %3839 = vmatprep.subr.bf16.mxu0 0
      %3840 = vmatpush1.bf16.msra.mxu0 %v3805
      %3841 = vmatprep.subr.bf16.mxu0 0
      %3842 = vmatpush1.bf16.msra.mxu0 %v3804
      %3843 = vmatprep.subr.bf16.mxu0 0
      %3844 = vmatpush1.bf16.msra.mxu0 %v3803
      %3845 = vmatprep.subr.bf16.mxu0 0
      %3846 = vmatpush1.bf16.msra.mxu0 %v3802
      %3847 = vmatprep.subr.bf16.mxu0 0
      %3848 = vmatpush1.bf16.msra.mxu0 %v3801
      %3849 = vmatprep.subr.bf16.mxu0 0
      %3850 = vmatpush2.bf16.msra.mxu0 %v3816
      %3851 = vmatprep.subr.bf16.mxu0 0
      %3852 = vmatpush2.bf16.msra.mxu0 %v3815
      %3853 = vmatprep.subr.bf16.mxu0 0
      %3854 = vmatpush2.bf16.msra.mxu0 %v3814
      %3855 = vmatprep.subr.bf16.mxu0 0
      %3856 = vmatpush2.bf16.msra.mxu0 %v3813
      %3857 = vmatprep.subr.bf16.mxu0 0
      %3858 = vmatpush2.bf16.msra.mxu0 %v3812
      %3859 = vmatprep.subr.bf16.mxu0 0
      %3860 = vmatpush2.bf16.msra.mxu0 %v3811
      %3861 = vmatprep.subr.bf16.mxu0 0
      %3862 = vmatpush2.bf16.msra.mxu0 %v3810
      %3863 = vmatprep.subr.bf16.mxu0 0
      %3864 = vmatpush2.bf16.msra.mxu0 %v3809
      %3865 = vmatprep.mubr.bf16.mxu0 %v370
      %3866 = vmatmul.mubr.bf16.gmra.mxu0 %v369
      %v3867 = vpop.f32.mrf.mxu0
      %v3868 = vadd.f32 0.0, %v3867
      %v3869 = vpop.f32.mrf.mxu0
      %v3870 = vpop.f32.mrf.mxu0
      %v3871 = vadd.f32 0.0, %v3870
      %v3872 = vpop.f32.mrf.mxu0
      %3873 = vmatprep.mubr.bf16.mxu0 %v372
      %3874 = vmatmul.mubr.bf16.gmra.mxu0 %v371
      %v3875 = vpop.f32.mrf.mxu0
      %v3876 = vadd.f32 0.0, %v3875
      %v3877 = vpop.f32.mrf.mxu0
      %v3878 = vpop.f32.mrf.mxu0
      %v3879 = vadd.f32 0.0, %v3878
      %v3880 = vpop.f32.mrf.mxu0
      %3881 = vdwg.mxu0
      %v3882 = vpack.c.bf16 %v3871, %v3868
      %v3883 = vpack.c.bf16 %v3879, %v3876
      %s3884 = scalar_lea.vmem %s2, 768
      %v3885 = vld [vmem:[%s3884] sm:$0xf]
      %v3886 = vld [vmem:[%s3884 + $0x4] sm:$0xf]
      %v3887 = vld [vmem:[%s3884 + $0x8] sm:$0xf]
      %v3888 = vld [vmem:[%s3884 + $0xc] sm:$0xf]
      %v3889 = vld [vmem:[%s3884 + $0x10] sm:$0xf]
      %v3890 = vld [vmem:[%s3884 + $0x14] sm:$0xf]
      %v3891 = vld [vmem:[%s3884 + $0x18] sm:$0xf]
      %v3892 = vld [vmem:[%s3884 + $0x1c] sm:$0xf]
      %v3893 = vld [vmem:[%s3884 + $0x20] sm:$0xf]
      %v3894 = vld [vmem:[%s3884 + $0x24] sm:$0xf]
      %v3895 = vld [vmem:[%s3884 + $0x28] sm:$0xf]
      %v3896 = vld [vmem:[%s3884 + $0x2c] sm:$0xf]
      %v3897 = vld [vmem:[%s3884 + $0x30] sm:$0xf]
      %v3898 = vld [vmem:[%s3884 + $0x34] sm:$0xf]
      %v3899 = vld [vmem:[%s3884 + $0x38] sm:$0xf]
      %v3900 = vld [vmem:[%s3884 + $0x3c] sm:$0xf]
      %v3901 = vld [vmem:[%s3884 + $0x40] sm:$0xf]
      %v3902 = vld [vmem:[%s3884 + $0x44] sm:$0xf]
      %v3903 = vld [vmem:[%s3884 + $0x48] sm:$0xf]
      %v3904 = vld [vmem:[%s3884 + $0x4c] sm:$0xf]
      %v3905 = vld [vmem:[%s3884 + $0x50] sm:$0xf]
      %v3906 = vld [vmem:[%s3884 + $0x54] sm:$0xf]
      %v3907 = vld [vmem:[%s3884 + $0x58] sm:$0xf]
      %v3908 = vld [vmem:[%s3884 + $0x5c] sm:$0xf]
      %v3909 = vld [vmem:[%s3884 + $0x60] sm:$0xf]
      %v3910 = vld [vmem:[%s3884 + $0x64] sm:$0xf]
      %v3911 = vld [vmem:[%s3884 + $0x68] sm:$0xf]
      %v3912 = vld [vmem:[%s3884 + $0x6c] sm:$0xf]
      %v3913 = vld [vmem:[%s3884 + $0x70] sm:$0xf]
      %v3914 = vld [vmem:[%s3884 + $0x74] sm:$0xf]
      %v3915 = vld [vmem:[%s3884 + $0x78] sm:$0xf]
      %v3916 = vld [vmem:[%s3884 + $0x7c] sm:$0xf]
      %v3949 = vunpack.c.l.b16 %v3885
      %v3950 = vunpack.c.l.b16 %v3886
      %v3951 = vunpack.c.l.b16 %v3887
      %v3952 = vunpack.c.l.b16 %v3888
      %v3953 = vunpack.c.l.b16 %v3889
      %v3954 = vunpack.c.l.b16 %v3890
      %v3955 = vunpack.c.l.b16 %v3891
      %v3956 = vunpack.c.l.b16 %v3892
      %v3957 = vunpack.c.l.b16 %v3893
      %v3958 = vunpack.c.l.b16 %v3894
      %v3959 = vunpack.c.l.b16 %v3895
      %v3960 = vunpack.c.l.b16 %v3896
      %v3961 = vunpack.c.l.b16 %v3897
      %v3962 = vunpack.c.l.b16 %v3898
      %v3963 = vunpack.c.l.b16 %v3899
      %v3964 = vunpack.c.l.b16 %v3900
      %v3965 = vunpack.c.l.b16 %v3901
      %v3966 = vunpack.c.l.b16 %v3902
      %v3967 = vunpack.c.l.b16 %v3903
      %v3968 = vunpack.c.l.b16 %v3904
      %v3969 = vunpack.c.l.b16 %v3905
      %v3970 = vunpack.c.l.b16 %v3906
      %v3971 = vunpack.c.l.b16 %v3907
      %v3972 = vunpack.c.l.b16 %v3908
      %v3973 = vunpack.c.l.b16 %v3909
      %v3974 = vunpack.c.l.b16 %v3910
      %v3975 = vunpack.c.l.b16 %v3911
      %v3976 = vunpack.c.l.b16 %v3912
      %v3977 = vunpack.c.l.b16 %v3913
      %v3978 = vunpack.c.l.b16 %v3914
      %v3979 = vunpack.c.l.b16 %v3915
      %v3980 = vunpack.c.l.b16 %v3916
      %v3981 = vpack.c.b16 %v3950, %v3949
      %v3982 = vpack.c.b16 %v3952, %v3951
      %v3983 = vpack.c.b16 %v3954, %v3953
      %v3984 = vpack.c.b16 %v3956, %v3955
      %v3985 = vpack.c.b16 %v3958, %v3957
      %v3986 = vpack.c.b16 %v3960, %v3959
      %v3987 = vpack.c.b16 %v3962, %v3961
      %v3988 = vpack.c.b16 %v3964, %v3963
      %v3989 = vpack.c.b16 %v3966, %v3965
      %v3990 = vpack.c.b16 %v3968, %v3967
      %v3991 = vpack.c.b16 %v3970, %v3969
      %v3992 = vpack.c.b16 %v3972, %v3971
      %v3993 = vpack.c.b16 %v3974, %v3973
      %v3994 = vpack.c.b16 %v3976, %v3975
      %v3995 = vpack.c.b16 %v3978, %v3977
      %v3996 = vpack.c.b16 %v3980, %v3979
      %4013 = vmatprep.subr.bf16.mxu0 0
      %4014 = vmatpush1.bf16.msra.mxu0 %v3988
      %4015 = vmatprep.subr.bf16.mxu0 0
      %4016 = vmatpush1.bf16.msra.mxu0 %v3987
      %4017 = vmatprep.subr.bf16.mxu0 0
      %4018 = vmatpush1.bf16.msra.mxu0 %v3986
      %4019 = vmatprep.subr.bf16.mxu0 0
      %4020 = vmatpush1.bf16.msra.mxu0 %v3985
      %4021 = vmatprep.subr.bf16.mxu0 0
      %4022 = vmatpush1.bf16.msra.mxu0 %v3984
      %4023 = vmatprep.subr.bf16.mxu0 0
      %4024 = vmatpush1.bf16.msra.mxu0 %v3983
      %4025 = vmatprep.subr.bf16.mxu0 0
      %4026 = vmatpush1.bf16.msra.mxu0 %v3982
      %4027 = vmatprep.subr.bf16.mxu0 0
      %4028 = vmatpush1.bf16.msra.mxu0 %v3981
      %4029 = vmatprep.subr.bf16.mxu0 0
      %4030 = vmatpush2.bf16.msra.mxu0 %v3996
      %4031 = vmatprep.subr.bf16.mxu0 0
      %4032 = vmatpush2.bf16.msra.mxu0 %v3995
      %4033 = vmatprep.subr.bf16.mxu0 0
      %4034 = vmatpush2.bf16.msra.mxu0 %v3994
      %4035 = vmatprep.subr.bf16.mxu0 0
      %4036 = vmatpush2.bf16.msra.mxu0 %v3993
      %4037 = vmatprep.subr.bf16.mxu0 0
      %4038 = vmatpush2.bf16.msra.mxu0 %v3992
      %4039 = vmatprep.subr.bf16.mxu0 0
      %4040 = vmatpush2.bf16.msra.mxu0 %v3991
      %4041 = vmatprep.subr.bf16.mxu0 0
      %4042 = vmatpush2.bf16.msra.mxu0 %v3990
      %4043 = vmatprep.subr.bf16.mxu0 0
      %4044 = vmatpush2.bf16.msra.mxu0 %v3989
      %4045 = vmatprep.mubr.bf16.mxu0 %v370
      %4046 = vmatmul.mubr.bf16.gmra.mxu0 %v369
      %v4047 = vpop.f32.mrf.mxu0
      %v4048 = vadd.f32 0.0, %v4047
      %v4049 = vpop.f32.mrf.mxu0
      %v4050 = vpop.f32.mrf.mxu0
      %v4051 = vadd.f32 0.0, %v4050
      %v4052 = vpop.f32.mrf.mxu0
      %4053 = vmatprep.mubr.bf16.mxu0 %v372
      %4054 = vmatmul.mubr.bf16.gmra.mxu0 %v371
      %v4055 = vpop.f32.mrf.mxu0
      %v4056 = vadd.f32 0.0, %v4055
      %v4057 = vpop.f32.mrf.mxu0
      %v4058 = vpop.f32.mrf.mxu0
      %v4059 = vadd.f32 0.0, %v4058
      %v4060 = vpop.f32.mrf.mxu0
      %4061 = vdwg.mxu0
      %v4062 = vpack.c.bf16 %v4051, %v4048
      %v4063 = vpack.c.bf16 %v4059, %v4056
      %s4064 = scalar_lea.vmem %s2, 896
      %v4065 = vld [vmem:[%s4064] sm:$0xf]
      %v4066 = vld [vmem:[%s4064 + $0x4] sm:$0xf]
      %v4067 = vld [vmem:[%s4064 + $0x8] sm:$0xf]
      %v4068 = vld [vmem:[%s4064 + $0xc] sm:$0xf]
      %v4069 = vld [vmem:[%s4064 + $0x10] sm:$0xf]
      %v4070 = vld [vmem:[%s4064 + $0x14] sm:$0xf]
      %v4071 = vld [vmem:[%s4064 + $0x18] sm:$0xf]
      %v4072 = vld [vmem:[%s4064 + $0x1c] sm:$0xf]
      %v4073 = vld [vmem:[%s4064 + $0x20] sm:$0xf]
      %v4074 = vld [vmem:[%s4064 + $0x24] sm:$0xf]
      %v4075 = vld [vmem:[%s4064 + $0x28] sm:$0xf]
      %v4076 = vld [vmem:[%s4064 + $0x2c] sm:$0xf]
      %v4077 = vld [vmem:[%s4064 + $0x30] sm:$0xf]
      %v4078 = vld [vmem:[%s4064 + $0x34] sm:$0xf]
      %v4079 = vld [vmem:[%s4064 + $0x38] sm:$0xf]
      %v4080 = vld [vmem:[%s4064 + $0x3c] sm:$0xf]
      %v4081 = vld [vmem:[%s4064 + $0x40] sm:$0xf]
      %v4082 = vld [vmem:[%s4064 + $0x44] sm:$0xf]
      %v4083 = vld [vmem:[%s4064 + $0x48] sm:$0xf]
      %v4084 = vld [vmem:[%s4064 + $0x4c] sm:$0xf]
      %v4085 = vld [vmem:[%s4064 + $0x50] sm:$0xf]
      %v4086 = vld [vmem:[%s4064 + $0x54] sm:$0xf]
      %v4087 = vld [vmem:[%s4064 + $0x58] sm:$0xf]
      %v4088 = vld [vmem:[%s4064 + $0x5c] sm:$0xf]
      %v4089 = vld [vmem:[%s4064 + $0x60] sm:$0xf]
      %v4090 = vld [vmem:[%s4064 + $0x64] sm:$0xf]
      %v4091 = vld [vmem:[%s4064 + $0x68] sm:$0xf]
      %v4092 = vld [vmem:[%s4064 + $0x6c] sm:$0xf]
      %v4093 = vld [vmem:[%s4064 + $0x70] sm:$0xf]
      %v4094 = vld [vmem:[%s4064 + $0x74] sm:$0xf]
      %v4095 = vld [vmem:[%s4064 + $0x78] sm:$0xf]
      %v4096 = vld [vmem:[%s4064 + $0x7c] sm:$0xf]
      %v4129 = vunpack.c.l.b16 %v4065
      %v4130 = vunpack.c.l.b16 %v4066
      %v4131 = vunpack.c.l.b16 %v4067
      %v4132 = vunpack.c.l.b16 %v4068
      %v4133 = vunpack.c.l.b16 %v4069
      %v4134 = vunpack.c.l.b16 %v4070
      %v4135 = vunpack.c.l.b16 %v4071
      %v4136 = vunpack.c.l.b16 %v4072
      %v4137 = vunpack.c.l.b16 %v4073
      %v4138 = vunpack.c.l.b16 %v4074
      %v4139 = vunpack.c.l.b16 %v4075
      %v4140 = vunpack.c.l.b16 %v4076
      %v4141 = vunpack.c.l.b16 %v4077
      %v4142 = vunpack.c.l.b16 %v4078
      %v4143 = vunpack.c.l.b16 %v4079
      %v4144 = vunpack.c.l.b16 %v4080
      %v4145 = vunpack.c.l.b16 %v4081
      %v4146 = vunpack.c.l.b16 %v4082
      %v4147 = vunpack.c.l.b16 %v4083
      %v4148 = vunpack.c.l.b16 %v4084
      %v4149 = vunpack.c.l.b16 %v4085
      %v4150 = vunpack.c.l.b16 %v4086
      %v4151 = vunpack.c.l.b16 %v4087
      %v4152 = vunpack.c.l.b16 %v4088
      %v4153 = vunpack.c.l.b16 %v4089
      %v4154 = vunpack.c.l.b16 %v4090
      %v4155 = vunpack.c.l.b16 %v4091
      %v4156 = vunpack.c.l.b16 %v4092
      %v4157 = vunpack.c.l.b16 %v4093
      %v4158 = vunpack.c.l.b16 %v4094
      %v4159 = vunpack.c.l.b16 %v4095
      %v4160 = vunpack.c.l.b16 %v4096
      %v4161 = vpack.c.b16 %v4130, %v4129
      %v4162 = vpack.c.b16 %v4132, %v4131
      %v4163 = vpack.c.b16 %v4134, %v4133
      %v4164 = vpack.c.b16 %v4136, %v4135
      %v4165 = vpack.c.b16 %v4138, %v4137
      %v4166 = vpack.c.b16 %v4140, %v4139
      %v4167 = vpack.c.b16 %v4142, %v4141
      %v4168 = vpack.c.b16 %v4144, %v4143
      %v4169 = vpack.c.b16 %v4146, %v4145
      %v4170 = vpack.c.b16 %v4148, %v4147
      %v4171 = vpack.c.b16 %v4150, %v4149
      %v4172 = vpack.c.b16 %v4152, %v4151
      %v4173 = vpack.c.b16 %v4154, %v4153
      %v4174 = vpack.c.b16 %v4156, %v4155
      %v4175 = vpack.c.b16 %v4158, %v4157
      %v4176 = vpack.c.b16 %v4160, %v4159
      %4193 = vmatprep.subr.bf16.mxu0 0
      %4194 = vmatpush1.bf16.msra.mxu0 %v4168
      %4195 = vmatprep.subr.bf16.mxu0 0
      %4196 = vmatpush1.bf16.msra.mxu0 %v4167
      %4197 = vmatprep.subr.bf16.mxu0 0
      %4198 = vmatpush1.bf16.msra.mxu0 %v4166
      %4199 = vmatprep.subr.bf16.mxu0 0
      %4200 = vmatpush1.bf16.msra.mxu0 %v4165
      %4201 = vmatprep.subr.bf16.mxu0 0
      %4202 = vmatpush1.bf16.msra.mxu0 %v4164
      %4203 = vmatprep.subr.bf16.mxu0 0
      %4204 = vmatpush1.bf16.msra.mxu0 %v4163
      %4205 = vmatprep.subr.bf16.mxu0 0
      %4206 = vmatpush1.bf16.msra.mxu0 %v4162
      %4207 = vmatprep.subr.bf16.mxu0 0
      %4208 = vmatpush1.bf16.msra.mxu0 %v4161
      %4209 = vmatprep.subr.bf16.mxu0 0
      %4210 = vmatpush2.bf16.msra.mxu0 %v4176
      %4211 = vmatprep.subr.bf16.mxu0 0
      %4212 = vmatpush2.bf16.msra.mxu0 %v4175
      %4213 = vmatprep.subr.bf16.mxu0 0
      %4214 = vmatpush2.bf16.msra.mxu0 %v4174
      %4215 = vmatprep.subr.bf16.mxu0 0
      %4216 = vmatpush2.bf16.msra.mxu0 %v4173
      %4217 = vmatprep.subr.bf16.mxu0 0
      %4218 = vmatpush2.bf16.msra.mxu0 %v4172
      %4219 = vmatprep.subr.bf16.mxu0 0
      %4220 = vmatpush2.bf16.msra.mxu0 %v4171
      %4221 = vmatprep.subr.bf16.mxu0 0
      %4222 = vmatpush2.bf16.msra.mxu0 %v4170
      %4223 = vmatprep.subr.bf16.mxu0 0
      %4224 = vmatpush2.bf16.msra.mxu0 %v4169
      %4225 = vmatprep.mubr.bf16.mxu0 %v370
      %4226 = vmatmul.mubr.bf16.gmra.mxu0 %v369
      %v4227 = vpop.f32.mrf.mxu0
      %v4228 = vadd.f32 0.0, %v4227
      %v4229 = vpop.f32.mrf.mxu0
      %v4230 = vpop.f32.mrf.mxu0
      %v4231 = vadd.f32 0.0, %v4230
      %v4232 = vpop.f32.mrf.mxu0
      %4233 = vmatprep.mubr.bf16.mxu0 %v372
      %4234 = vmatmul.mubr.bf16.gmra.mxu0 %v371
      %v4235 = vpop.f32.mrf.mxu0
      %v4236 = vadd.f32 0.0, %v4235
      %v4237 = vpop.f32.mrf.mxu0
      %v4238 = vpop.f32.mrf.mxu0
      %v4239 = vadd.f32 0.0, %v4238
      %v4240 = vpop.f32.mrf.mxu0
      %4241 = vdwg.mxu0
      %v4242 = vpack.c.bf16 %v4231, %v4228
      %v4243 = vpack.c.bf16 %v4239, %v4236
      %s4244 = scalar_lea.vmem %s2, 1024
      %v4245 = vld [vmem:[%s4244] sm:$0xf]
      %v4246 = vld [vmem:[%s4244 + $0x4] sm:$0xf]
      %v4247 = vld [vmem:[%s4244 + $0x8] sm:$0xf]
      %v4248 = vld [vmem:[%s4244 + $0xc] sm:$0xf]
      %v4249 = vld [vmem:[%s4244 + $0x10] sm:$0xf]
      %v4250 = vld [vmem:[%s4244 + $0x14] sm:$0xf]
      %v4251 = vld [vmem:[%s4244 + $0x18] sm:$0xf]
      %v4252 = vld [vmem:[%s4244 + $0x1c] sm:$0xf]
      %v4253 = vld [vmem:[%s4244 + $0x20] sm:$0xf]
      %v4254 = vld [vmem:[%s4244 + $0x24] sm:$0xf]
      %v4255 = vld [vmem:[%s4244 + $0x28] sm:$0xf]
      %v4256 = vld [vmem:[%s4244 + $0x2c] sm:$0xf]
      %v4257 = vld [vmem:[%s4244 + $0x30] sm:$0xf]
      %v4258 = vld [vmem:[%s4244 + $0x34] sm:$0xf]
      %v4259 = vld [vmem:[%s4244 + $0x38] sm:$0xf]
      %v4260 = vld [vmem:[%s4244 + $0x3c] sm:$0xf]
      %v4261 = vld [vmem:[%s4244 + $0x40] sm:$0xf]
      %v4262 = vld [vmem:[%s4244 + $0x44] sm:$0xf]
      %v4263 = vld [vmem:[%s4244 + $0x48] sm:$0xf]
      %v4264 = vld [vmem:[%s4244 + $0x4c] sm:$0xf]
      %v4265 = vld [vmem:[%s4244 + $0x50] sm:$0xf]
      %v4266 = vld [vmem:[%s4244 + $0x54] sm:$0xf]
      %v4267 = vld [vmem:[%s4244 + $0x58] sm:$0xf]
      %v4268 = vld [vmem:[%s4244 + $0x5c] sm:$0xf]
      %v4269 = vld [vmem:[%s4244 + $0x60] sm:$0xf]
      %v4270 = vld [vmem:[%s4244 + $0x64] sm:$0xf]
      %v4271 = vld [vmem:[%s4244 + $0x68] sm:$0xf]
      %v4272 = vld [vmem:[%s4244 + $0x6c] sm:$0xf]
      %v4273 = vld [vmem:[%s4244 + $0x70] sm:$0xf]
      %v4274 = vld [vmem:[%s4244 + $0x74] sm:$0xf]
      %v4275 = vld [vmem:[%s4244 + $0x78] sm:$0xf]
      %v4276 = vld [vmem:[%s4244 + $0x7c] sm:$0xf]
      %v4309 = vunpack.c.l.b16 %v4245
      %v4310 = vunpack.c.l.b16 %v4246
      %v4311 = vunpack.c.l.b16 %v4247
      %v4312 = vunpack.c.l.b16 %v4248
      %v4313 = vunpack.c.l.b16 %v4249
      %v4314 = vunpack.c.l.b16 %v4250
      %v4315 = vunpack.c.l.b16 %v4251
      %v4316 = vunpack.c.l.b16 %v4252
      %v4317 = vunpack.c.l.b16 %v4253
      %v4318 = vunpack.c.l.b16 %v4254
      %v4319 = vunpack.c.l.b16 %v4255
      %v4320 = vunpack.c.l.b16 %v4256
      %v4321 = vunpack.c.l.b16 %v4257
      %v4322 = vunpack.c.l.b16 %v4258
      %v4323 = vunpack.c.l.b16 %v4259
      %v4324 = vunpack.c.l.b16 %v4260
      %v4325 = vunpack.c.l.b16 %v4261
      %v4326 = vunpack.c.l.b16 %v4262
      %v4327 = vunpack.c.l.b16 %v4263
      %v4328 = vunpack.c.l.b16 %v4264
      %v4329 = vunpack.c.l.b16 %v4265
      %v4330 = vunpack.c.l.b16 %v4266
      %v4331 = vunpack.c.l.b16 %v4267
      %v4332 = vunpack.c.l.b16 %v4268
      %v4333 = vunpack.c.l.b16 %v4269
      %v4334 = vunpack.c.l.b16 %v4270
      %v4335 = vunpack.c.l.b16 %v4271
      %v4336 = vunpack.c.l.b16 %v4272
      %v4337 = vunpack.c.l.b16 %v4273
      %v4338 = vunpack.c.l.b16 %v4274
      %v4339 = vunpack.c.l.b16 %v4275
      %v4340 = vunpack.c.l.b16 %v4276
      %v4341 = vpack.c.b16 %v4310, %v4309
      %v4342 = vpack.c.b16 %v4312, %v4311
      %v4343 = vpack.c.b16 %v4314, %v4313
      %v4344 = vpack.c.b16 %v4316, %v4315
      %v4345 = vpack.c.b16 %v4318, %v4317
      %v4346 = vpack.c.b16 %v4320, %v4319
      %v4347 = vpack.c.b16 %v4322, %v4321
      %v4348 = vpack.c.b16 %v4324, %v4323
      %v4349 = vpack.c.b16 %v4326, %v4325
      %v4350 = vpack.c.b16 %v4328, %v4327
      %v4351 = vpack.c.b16 %v4330, %v4329
      %v4352 = vpack.c.b16 %v4332, %v4331
      %v4353 = vpack.c.b16 %v4334, %v4333
      %v4354 = vpack.c.b16 %v4336, %v4335
      %v4355 = vpack.c.b16 %v4338, %v4337
      %v4356 = vpack.c.b16 %v4340, %v4339
      %4373 = vmatprep.subr.bf16.mxu0 0
      %4374 = vmatpush1.bf16.msra.mxu0 %v4348
      %4375 = vmatprep.subr.bf16.mxu0 0
      %4376 = vmatpush1.bf16.msra.mxu0 %v4347
      %4377 = vmatprep.subr.bf16.mxu0 0
      %4378 = vmatpush1.bf16.msra.mxu0 %v4346
      %4379 = vmatprep.subr.bf16.mxu0 0
      %4380 = vmatpush1.bf16.msra.mxu0 %v4345
      %4381 = vmatprep.subr.bf16.mxu0 0
      %4382 = vmatpush1.bf16.msra.mxu0 %v4344
      %4383 = vmatprep.subr.bf16.mxu0 0
      %4384 = vmatpush1.bf16.msra.mxu0 %v4343
      %4385 = vmatprep.subr.bf16.mxu0 0
      %4386 = vmatpush1.bf16.msra.mxu0 %v4342
      %4387 = vmatprep.subr.bf16.mxu0 0
      %4388 = vmatpush1.bf16.msra.mxu0 %v4341
      %4389 = vmatprep.subr.bf16.mxu0 0
      %4390 = vmatpush2.bf16.msra.mxu0 %v4356
      %4391 = vmatprep.subr.bf16.mxu0 0
      %4392 = vmatpush2.bf16.msra.mxu0 %v4355
      %4393 = vmatprep.subr.bf16.mxu0 0
      %4394 = vmatpush2.bf16.msra.mxu0 %v4354
      %4395 = vmatprep.subr.bf16.mxu0 0
      %4396 = vmatpush2.bf16.msra.mxu0 %v4353
      %4397 = vmatprep.subr.bf16.mxu0 0
      %4398 = vmatpush2.bf16.msra.mxu0 %v4352
      %4399 = vmatprep.subr.bf16.mxu0 0
      %4400 = vmatpush2.bf16.msra.mxu0 %v4351
      %4401 = vmatprep.subr.bf16.mxu0 0
      %4402 = vmatpush2.bf16.msra.mxu0 %v4350
      %4403 = vmatprep.subr.bf16.mxu0 0
      %4404 = vmatpush2.bf16.msra.mxu0 %v4349
      %4405 = vmatprep.mubr.bf16.mxu0 %v370
      %4406 = vmatmul.mubr.bf16.gmra.mxu0 %v369
      %v4407 = vpop.f32.mrf.mxu0
      %v4408 = vadd.f32 0.0, %v4407
      %v4409 = vpop.f32.mrf.mxu0
      %v4410 = vpop.f32.mrf.mxu0
      %v4411 = vadd.f32 0.0, %v4410
      %v4412 = vpop.f32.mrf.mxu0
      %4413 = vmatprep.mubr.bf16.mxu0 %v372
      %4414 = vmatmul.mubr.bf16.gmra.mxu0 %v371
      %v4415 = vpop.f32.mrf.mxu0
      %v4416 = vadd.f32 0.0, %v4415
      %v4417 = vpop.f32.mrf.mxu0
      %v4418 = vpop.f32.mrf.mxu0
      %v4419 = vadd.f32 0.0, %v4418
      %v4420 = vpop.f32.mrf.mxu0
      %4421 = vdwg.mxu0
      %v4422 = vpack.c.bf16 %v4411, %v4408
      %v4423 = vpack.c.bf16 %v4419, %v4416
      %s4424 = scalar_lea.vmem %s4, 48
      %v4425 = vld [vmem:[%s4424] sm:$0xff]
      %v4426 = vld [vmem:[%s4424 + $0x8] sm:$0xf]
      %v4427 = vld [vmem:[%s4424 + $0xc] sm:$0xff]
      %v4428 = vld [vmem:[%s4424 + $0x14] sm:$0xf]
      %v4429 = vld [vmem:[%s4424 + $0x18] sm:$0xff]
      %v4430 = vld [vmem:[%s4424 + $0x20] sm:$0xf]
      %v4431 = vld [vmem:[%s4424 + $0x24] sm:$0xff]
      %v4432 = vld [vmem:[%s4424 + $0x2c] sm:$0xf]
      %s4433 = scalar_lea.vmem %s5, 32
      %v4434 = vld [vmem:[%s4433] sm:$0xff]
      %v4435 = vld [vmem:[%s4433 + $0x8] sm:$0xff]
      %v4436 = vld [vmem:[%s4433 + $0x10] sm:$0xff]
      %v4437 = vld [vmem:[%s4433 + $0x18] sm:$0xff]
      %4439 = vset.pattern.permute.xlu0 0
      %4440 = vperm.xlu0 %4439, %v4434
      %v4441 = vpop.permute.xlu0 %4440
      %4444 = vset.pattern.permute.xlu0 0
      %4445 = vperm.xlu0 %4444, %v4435
      %v4446 = vpop.permute.xlu0 %4445
      %4449 = vset.pattern.permute.xlu0 0
      %4450 = vperm.xlu0 %4449, %v4436
      %v4451 = vpop.permute.xlu0 %4450
      %4454 = vset.pattern.permute.xlu0 0
      %4455 = vperm.xlu0 %4454, %v4437
      %v4456 = vpop.permute.xlu0 %4455
      %v4466 = vunpack.c.l.b16 %v4425
      %v4467 = vunpack.c.h.b16 %v4425
      %v4468 = vunpack.c.l.b16 %v4426
      %v4469 = vunpack.c.l.b16 %v4427
      %v4470 = vunpack.c.h.b16 %v4427
      %v4471 = vunpack.c.l.b16 %v4428
      %v4472 = vunpack.c.l.b16 %v4429
      %v4473 = vunpack.c.h.b16 %v4429
      %v4474 = vunpack.c.l.b16 %v4430
      %v4475 = vunpack.c.l.b16 %v4431
      %v4476 = vunpack.c.h.b16 %v4431
      %v4477 = vunpack.c.l.b16 %v4432
      %v4478 = vpack.c.b16 %v4469, %v4466
      %v4479 = vpack.c.b16 %v4470, %v4467
      %v4480 = vpack.c.b16 %v4471, %v4468
      %v4481 = vpack.c.b16 %v4475, %v4472
      %v4482 = vpack.c.b16 %v4476, %v4473
      %v4483 = vpack.c.b16 %v4477, %v4474
      %v4489 = vsel %vm2684, %v4480, 0
      %v4492 = vsel %vm2684, %v4483, 0
      %4494 = vmatprep.subr.bf16.mxu0 0
      %4495 = vmatpush1.bf16.msra.mxu0 %v3523
      %4496 = vmatprep.subr.bf16.mxu0 0
      %4497 = vmatpush1.bf16.msra.mxu0 %v3522
      %4498 = vmatprep.subr.bf16.mxu0 0
      %4499 = vmatpush1.bf16.msra.mxu0 %v3343
      %4500 = vmatprep.subr.bf16.mxu0 0
      %4501 = vmatpush1.bf16.msra.mxu0 %v3342
      %4502 = vmatprep.subr.bf16.mxu0 0
      %4503 = vmatpush1.bf16.msra.mxu0 %v3163
      %4504 = vmatprep.subr.bf16.mxu0 0
      %4505 = vmatpush1.bf16.msra.mxu0 %v3162
      %4506 = vmatprep.subr.bf16.mxu0 0
      %4507 = vmatpush1.bf16.msra.mxu0 %v2983
      %4508 = vmatprep.subr.bf16.mxu0 0
      %4509 = vmatpush1.bf16.msra.mxu0 %v2982
      %4510 = vmatprep.subr.bf16.mxu0 0
      %4511 = vmatpush2.bf16.msra.mxu0 %v4243
      %4512 = vmatprep.subr.bf16.mxu0 0
      %4513 = vmatpush2.bf16.msra.mxu0 %v4242
      %4514 = vmatprep.subr.bf16.mxu0 0
      %4515 = vmatpush2.bf16.msra.mxu0 %v4063
      %4516 = vmatprep.subr.bf16.mxu0 0
      %4517 = vmatpush2.bf16.msra.mxu0 %v4062
      %4518 = vmatprep.subr.bf16.mxu0 0
      %4519 = vmatpush2.bf16.msra.mxu0 %v3883
      %4520 = vmatprep.subr.bf16.mxu0 0
      %4521 = vmatpush2.bf16.msra.mxu0 %v3882
      %4522 = vmatprep.subr.bf16.mxu0 0
      %4523 = vmatpush2.bf16.msra.mxu0 %v3703
      %4524 = vmatprep.subr.bf16.mxu0 0
      %4525 = vmatpush2.bf16.msra.mxu0 %v3702
      %4526 = vmatprep.mubr.bf16.mxu0 %v4479
      %4527 = vmatmul.mubr.bf16.gmra.mxu0 %v4478
      %v4528 = vpop.f32.mrf.mxu0
      %v4529 = vadd.f32 %v4441, %v4528
      %v4530 = vpop.f32.mrf.mxu0
      %v4531 = vpop.f32.mrf.mxu0
      %v4532 = vadd.f32 %v4446, %v4531
      %v4533 = vpop.f32.mrf.mxu0
      %4534 = vmatprep.mubr.bf16.mxu0 %v4482
      %4535 = vmatmul.mubr.bf16.gmra.mxu0 %v4481
      %v4536 = vpop.f32.mrf.mxu0
      %v4537 = vadd.f32 %v4451, %v4536
      %v4538 = vpop.f32.mrf.mxu0
      %v4539 = vpop.f32.mrf.mxu0
      %v4540 = vadd.f32 %v4456, %v4539
      %v4541 = vpop.f32.mrf.mxu0
      %4542 = vdwg.mxu0
      %4543 = vmatprep.subr.bf16.mxu0 0
      %4544 = vmatpush1.bf16.msra.mxu0 0
      %4545 = vmatprep.subr.bf16.mxu0 0
      %4546 = vmatpush1.bf16.msra.mxu0 0
      %4547 = vmatprep.subr.bf16.mxu0 0
      %4548 = vmatpush1.bf16.msra.mxu0 0
      %4549 = vmatprep.subr.bf16.mxu0 0
      %4550 = vmatpush1.bf16.msra.mxu0 0
      %4551 = vmatprep.subr.bf16.mxu0 0
      %4552 = vmatpush1.bf16.msra.mxu0 0
      %4553 = vmatprep.subr.bf16.mxu0 0
      %4554 = vmatpush1.bf16.msra.mxu0 0
      %4555 = vmatprep.subr.bf16.mxu0 0
      %4556 = vmatpush1.bf16.msra.mxu0 %v4423
      %4557 = vmatprep.subr.bf16.mxu0 0
      %4558 = vmatpush1.bf16.msra.mxu0 %v4422
      %4559 = vmatprep.subr.bf16.mxu0 0
      %4560 = vmatpush2.bf16.msra.mxu0 0
      %4561 = vmatprep.subr.bf16.mxu0 0
      %4562 = vmatpush2.bf16.msra.mxu0 0
      %4563 = vmatprep.subr.bf16.mxu0 0
      %4564 = vmatpush2.bf16.msra.mxu0 0
      %4565 = vmatprep.subr.bf16.mxu0 0
      %4566 = vmatpush2.bf16.msra.mxu0 0
      %4567 = vmatprep.subr.bf16.mxu0 0
      %4568 = vmatpush2.bf16.msra.mxu0 0
      %4569 = vmatprep.subr.bf16.mxu0 0
      %4570 = vmatpush2.bf16.msra.mxu0 0
      %4571 = vmatprep.subr.bf16.mxu0 0
      %4572 = vmatpush2.bf16.msra.mxu0 0
      %4573 = vmatprep.subr.bf16.mxu0 0
      %4574 = vmatpush2.bf16.msra.mxu0 0
      %4575 = vmatprep.mubr.bf16.mxu0 0
      %4576 = vmatmul.mubr.bf16.gmra.mxu0 %v4489
      %v4577 = vpop.f32.mrf.mxu0
      %v4578 = vadd.f32 %v4529, %v4577
      %v4579 = vpop.f32.mrf.mxu0
      %v4580 = vpop.f32.mrf.mxu0
      %v4581 = vadd.f32 %v4532, %v4580
      %v4582 = vpop.f32.mrf.mxu0
      %4583 = vmatprep.mubr.bf16.mxu0 0
      %4584 = vmatmul.mubr.bf16.gmra.mxu0 %v4492
      %v4585 = vpop.f32.mrf.mxu0
      %v4586 = vadd.f32 %v4537, %v4585
      %v4587 = vpop.f32.mrf.mxu0
      %v4588 = vpop.f32.mrf.mxu0
      %v4589 = vadd.f32 %v4540, %v4588
      %v4590 = vpop.f32.mrf.mxu0
      %4591 = vdwg.mxu0
      %v4592 = vmax.f32 %v4578, 0.0
      %v4593 = vmax.f32 %v4581, 0.0
      %v4594 = vmax.f32 %v4586, 0.0
      %v4595 = vmax.f32 %v4589, 0.0
      %v4596 = vld [vmem:[%s6] sm:$0xff]
      %v4597 = vld [vmem:[%s6 + $0x8] sm:$0xff]
      %v4598 = vld [vmem:[%s7] sm:$0xff]
      %v4599 = vld [vmem:[%s7 + $0x8] sm:$0xff]
      %4601 = vset.pattern.permute.xlu0 0
      %4602 = vperm.xlu0 %4601, %v4598
      %v4603 = vpop.permute.xlu0 %4602
      %4606 = vset.pattern.permute.xlu0 0
      %4607 = vperm.xlu0 %4606, %v4599
      %v4608 = vpop.permute.xlu0 %4607
      %v4611 = vsel %vm2684, %v4596, 0
      %v4614 = vsel %vm2684, %v4597, 0
      %4616 = vmatprep.subr.mxu0 0.0
      %4617 = vmatpush1.msra.mxu0 0.0
      %4618 = vmatprep.subr.mxu0 0.0
      %4619 = vmatpush1.msra.mxu0 0.0
      %4620 = vmatprep.subr.mxu0 0.0
      %4621 = vmatpush1.msra.mxu0 0.0
      %4622 = vmatprep.subr.mxu0 0.0
      %4623 = vmatpush1.msra.mxu0 0.0
      %4624 = vmatprep.subr.mxu0 0.0
      %4625 = vmatpush1.msra.mxu0 0.0
      %4626 = vmatprep.subr.mxu0 0.0
      %4627 = vmatpush1.msra.mxu0 0.0
      %4628 = vmatprep.subr.mxu0 0.0
      %4629 = vmatpush1.msra.mxu0 0.0
      %4630 = vmatprep.subr.mxu0 0.0
      %4631 = vmatpush1.msra.mxu0 0.0
      %4632 = vmatprep.subr.mxu0 0.0
      %4633 = vmatpush1.msra.mxu0 0.0
      %4634 = vmatprep.subr.mxu0 0.0
      %4635 = vmatpush1.msra.mxu0 0.0
      %4636 = vmatprep.subr.mxu0 0.0
      %4637 = vmatpush1.msra.mxu0 0.0
      %4638 = vmatprep.subr.mxu0 0.0
      %4639 = vmatpush1.msra.mxu0 0.0
      %4640 = vmatprep.subr.mxu0 %v2804
      %4641 = vmatpush1.msra.mxu0 %v2803
      %4642 = vmatprep.subr.mxu0 %v2802
      %4643 = vmatpush1.msra.mxu0 %v2801
      %4644 = vmatprep.subr.mxu0 %v2800
      %4645 = vmatpush1.msra.mxu0 %v2799
      %4646 = vmatprep.subr.mxu0 %v2798
      %4647 = vmatpush1.msra.mxu0 %v2797
      %4648 = vmatprep.subr.mxu0 0.0
      %4649 = vmatpush2.msra.mxu0 0.0
      %4650 = vmatprep.subr.mxu0 0.0
      %4651 = vmatpush2.msra.mxu0 0.0
      %4652 = vmatprep.subr.mxu0 0.0
      %4653 = vmatpush2.msra.mxu0 0.0
      %4654 = vmatprep.subr.mxu0 0.0
      %4655 = vmatpush2.msra.mxu0 0.0
      %4656 = vmatprep.subr.mxu0 0.0
      %4657 = vmatpush2.msra.mxu0 0.0
      %4658 = vmatprep.subr.mxu0 0.0
      %4659 = vmatpush2.msra.mxu0 0.0
      %4660 = vmatprep.subr.mxu0 0.0
      %4661 = vmatpush2.msra.mxu0 0.0
      %4662 = vmatprep.subr.mxu0 0.0
      %4663 = vmatpush2.msra.mxu0 0.0
      %4664 = vmatprep.subr.mxu0 0.0
      %4665 = vmatpush2.msra.mxu0 0.0
      %4666 = vmatprep.subr.mxu0 0.0
      %4667 = vmatpush2.msra.mxu0 0.0
      %4668 = vmatprep.subr.mxu0 0.0
      %4669 = vmatpush2.msra.mxu0 0.0
      %4670 = vmatprep.subr.mxu0 0.0
      %4671 = vmatpush2.msra.mxu0 0.0
      %4672 = vmatprep.subr.mxu0 0.0
      %4673 = vmatpush2.msra.mxu0 0.0
      %4674 = vmatprep.subr.mxu0 0.0
      %4675 = vmatpush2.msra.mxu0 0.0
      %4676 = vmatprep.subr.mxu0 0.0
      %4677 = vmatpush2.msra.mxu0 0.0
      %4678 = vmatprep.subr.mxu0 0.0
      %4679 = vmatpush2.msra.mxu0 0.0
      %4680 = vmatprep.mubr.f32.mxu0 0.0
      %4681 = vmatmul.mubr.f32.gmra.mxu0 %v4611
      %v4682 = vpop.f32.mrf.mxu0
      %v4683 = vadd.f32 %v4603, %v4682
      %v4684 = vpop.f32.mrf.mxu0
      %v4685 = vadd.f32 %v4603, %v4684
      %4686 = vmatprep.mubr.f32.mxu0 0.0
      %4687 = vmatmul.mubr.f32.gmra.mxu0 %v4614
      %v4688 = vpop.f32.mrf.mxu0
      %v4689 = vadd.f32 %v4608, %v4688
      %v4690 = vpop.f32.mrf.mxu0
      %v4691 = vadd.f32 %v4608, %v4690
      %4692 = vdwg.mxu0
      %v4693 = vmax.f32 %v4683, 0.0
      %v4694 = vmax.f32 %v4685, 0.0
      %v4695 = vmax.f32 %v4689, 0.0
      %v4696 = vmax.f32 %v4691, 0.0
      %v4697 = vld [vmem:[%s8] sm:$0xff]
      %v4698 = vld [vmem:[%s8 + $0x8] sm:$0xff]
      %v4699 = vld [vmem:[%s8 + $0x10] sm:$0xff]
      %v4700 = vld [vmem:[%s8 + $0x18] sm:$0xff]
      %v4701 = vld [vmem:[%s9] sm:$0xff]
      %v4702 = vld [vmem:[%s9 + $0x8] sm:$0xff]
      %v4703 = vld [vmem:[%s9 + $0x10] sm:$0xff]
      %v4704 = vld [vmem:[%s9 + $0x18] sm:$0xff]
      %4706 = vset.pattern.permute.xlu0 0
      %4707 = vperm.xlu0 %4706, %v4701
      %v4708 = vpop.permute.xlu0 %4707
      %4711 = vset.pattern.permute.xlu0 0
      %4712 = vperm.xlu0 %4711, %v4702
      %v4713 = vpop.permute.xlu0 %4712
      %4716 = vset.pattern.permute.xlu0 0
      %4717 = vperm.xlu0 %4716, %v4703
      %v4718 = vpop.permute.xlu0 %4717
      %4721 = vset.pattern.permute.xlu0 0
      %4722 = vperm.xlu0 %4721, %v4704
      %v4723 = vpop.permute.xlu0 %4722
      %vm4725 = vcmask 130048
      %v4727 = vsel %vm4725, %v4697, 0
      %v4730 = vsel %vm4725, %v4698, 0
      %v4733 = vsel %vm4725, %v4699, 0
      %v4736 = vsel %vm4725, %v4700, 0
      %4738 = vmatprep.subr.mxu0 0.0
      %4739 = vmatpush1.msra.mxu0 0.0
      %4740 = vmatprep.subr.mxu0 0.0
      %4741 = vmatpush1.msra.mxu0 0.0
      %4742 = vmatprep.subr.mxu0 0.0
      %4743 = vmatpush1.msra.mxu0 0.0
      %4744 = vmatprep.subr.mxu0 0.0
      %4745 = vmatpush1.msra.mxu0 0.0
      %4746 = vmatprep.subr.mxu0 0.0
      %4747 = vmatpush1.msra.mxu0 0.0
      %4748 = vmatprep.subr.mxu0 0.0
      %4749 = vmatpush1.msra.mxu0 0.0
      %4750 = vmatprep.subr.mxu0 0.0
      %4751 = vmatpush1.msra.mxu0 0.0
      %4752 = vmatprep.subr.mxu0 0.0
      %4753 = vmatpush1.msra.mxu0 0.0
      %4754 = vmatprep.subr.mxu0 0.0
      %4755 = vmatpush1.msra.mxu0 0.0
      %4756 = vmatprep.subr.mxu0 0.0
      %4757 = vmatpush1.msra.mxu0 0.0
      %4758 = vmatprep.subr.mxu0 0.0
      %4759 = vmatpush1.msra.mxu0 0.0
      %4760 = vmatprep.subr.mxu0 0.0
      %4761 = vmatpush1.msra.mxu0 0.0
      %4762 = vmatprep.subr.mxu0 0.0
      %4763 = vmatpush1.msra.mxu0 0.0
      %4764 = vmatprep.subr.mxu0 0.0
      %4765 = vmatpush1.msra.mxu0 0.0
      %4766 = vmatprep.subr.mxu0 %v4696
      %4767 = vmatpush1.msra.mxu0 %v4695
      %4768 = vmatprep.subr.mxu0 %v4694
      %4769 = vmatpush1.msra.mxu0 %v4693
      %4770 = vmatprep.subr.mxu0 0.0
      %4771 = vmatpush2.msra.mxu0 0.0
      %4772 = vmatprep.subr.mxu0 0.0
      %4773 = vmatpush2.msra.mxu0 0.0
      %4774 = vmatprep.subr.mxu0 0.0
      %4775 = vmatpush2.msra.mxu0 0.0
      %4776 = vmatprep.subr.mxu0 0.0
      %4777 = vmatpush2.msra.mxu0 0.0
      %4778 = vmatprep.subr.mxu0 0.0
      %4779 = vmatpush2.msra.mxu0 0.0
      %4780 = vmatprep.subr.mxu0 0.0
      %4781 = vmatpush2.msra.mxu0 0.0
      %4782 = vmatprep.subr.mxu0 0.0
      %4783 = vmatpush2.msra.mxu0 0.0
      %4784 = vmatprep.subr.mxu0 0.0
      %4785 = vmatpush2.msra.mxu0 0.0
      %4786 = vmatprep.subr.mxu0 0.0
      %4787 = vmatpush2.msra.mxu0 0.0
      %4788 = vmatprep.subr.mxu0 0.0
      %4789 = vmatpush2.msra.mxu0 0.0
      %4790 = vmatprep.subr.mxu0 0.0
      %4791 = vmatpush2.msra.mxu0 0.0
      %4792 = vmatprep.subr.mxu0 0.0
      %4793 = vmatpush2.msra.mxu0 0.0
      %4794 = vmatprep.subr.mxu0 0.0
      %4795 = vmatpush2.msra.mxu0 0.0
      %4796 = vmatprep.subr.mxu0 0.0
      %4797 = vmatpush2.msra.mxu0 0.0
      %4798 = vmatprep.subr.mxu0 0.0
      %4799 = vmatpush2.msra.mxu0 0.0
      %4800 = vmatprep.subr.mxu0 0.0
      %4801 = vmatpush2.msra.mxu0 0.0
      %4802 = vmatprep.mubr.f32.mxu0 0.0
      %4803 = vmatmul.mubr.f32.gmra.mxu0 %v4727
      %v4804 = vpop.f32.mrf.mxu0
      %v4805 = vadd.f32 %v4708, %v4804
      %v4806 = vpop.f32.mrf.mxu0
      %v4807 = vadd.f32 %v4708, %v4806
      %4808 = vmatprep.mubr.f32.mxu0 0.0
      %4809 = vmatmul.mubr.f32.gmra.mxu0 %v4730
      %v4810 = vpop.f32.mrf.mxu0
      %v4811 = vadd.f32 %v4713, %v4810
      %v4812 = vpop.f32.mrf.mxu0
      %v4813 = vadd.f32 %v4713, %v4812
      %4814 = vmatprep.mubr.f32.mxu0 0.0
      %4815 = vmatmul.mubr.f32.gmra.mxu0 %v4733
      %v4816 = vpop.f32.mrf.mxu0
      %v4817 = vadd.f32 %v4718, %v4816
      %v4818 = vpop.f32.mrf.mxu0
      %v4819 = vadd.f32 %v4718, %v4818
      %4820 = vmatprep.mubr.f32.mxu0 0.0
      %4821 = vmatmul.mubr.f32.gmra.mxu0 %v4736
      %v4822 = vpop.f32.mrf.mxu0
      %v4823 = vadd.f32 %v4723, %v4822
      %v4824 = vpop.f32.mrf.mxu0
      %v4825 = vadd.f32 %v4723, %v4824
      %4826 = vdwg.mxu0
      %s4827 = scalar_lea.vmem %s6, 16
      %v4828 = vld [vmem:[%s4827] sm:$0xff]
      %v4829 = vld [vmem:[%s4827 + $0x8] sm:$0xff]
      %v4831 = vsel %vm2684, %v4828, 0
      %v4834 = vsel %vm2684, %v4829, 0
      %4836 = vmatprep.subr.mxu0 0.0
      %4837 = vmatpush1.msra.mxu0 0.0
      %4838 = vmatprep.subr.mxu0 0.0
      %4839 = vmatpush1.msra.mxu0 0.0
      %4840 = vmatprep.subr.mxu0 0.0
      %4841 = vmatpush1.msra.mxu0 0.0
      %4842 = vmatprep.subr.mxu0 0.0
      %4843 = vmatpush1.msra.mxu0 0.0
      %4844 = vmatprep.subr.mxu0 0.0
      %4845 = vmatpush1.msra.mxu0 0.0
      %4846 = vmatprep.subr.mxu0 0.0
      %4847 = vmatpush1.msra.mxu0 0.0
      %4848 = vmatprep.subr.mxu0 0.0
      %4849 = vmatpush1.msra.mxu0 0.0
      %4850 = vmatprep.subr.mxu0 0.0
      %4851 = vmatpush1.msra.mxu0 0.0
      %4852 = vmatprep.subr.mxu0 0.0
      %4853 = vmatpush1.msra.mxu0 0.0
      %4854 = vmatprep.subr.mxu0 0.0
      %4855 = vmatpush1.msra.mxu0 0.0
      %4856 = vmatprep.subr.mxu0 0.0
      %4857 = vmatpush1.msra.mxu0 0.0
      %4858 = vmatprep.subr.mxu0 0.0
      %4859 = vmatpush1.msra.mxu0 0.0
      %4860 = vmatprep.subr.mxu0 %v2804
      %4861 = vmatpush1.msra.mxu0 %v2803
      %4862 = vmatprep.subr.mxu0 %v2802
      %4863 = vmatpush1.msra.mxu0 %v2801
      %4864 = vmatprep.subr.mxu0 %v2800
      %4865 = vmatpush1.msra.mxu0 %v2799
      %4866 = vmatprep.subr.mxu0 %v2798
      %4867 = vmatpush1.msra.mxu0 %v2797
      %4868 = vmatprep.subr.mxu0 0.0
      %4869 = vmatpush2.msra.mxu0 0.0
      %4870 = vmatprep.subr.mxu0 0.0
      %4871 = vmatpush2.msra.mxu0 0.0
      %4872 = vmatprep.subr.mxu0 0.0
      %4873 = vmatpush2.msra.mxu0 0.0
      %4874 = vmatprep.subr.mxu0 0.0
      %4875 = vmatpush2.msra.mxu0 0.0
      %4876 = vmatprep.subr.mxu0 0.0
      %4877 = vmatpush2.msra.mxu0 0.0
      %4878 = vmatprep.subr.mxu0 0.0
      %4879 = vmatpush2.msra.mxu0 0.0
      %4880 = vmatprep.subr.mxu0 0.0
      %4881 = vmatpush2.msra.mxu0 0.0
      %4882 = vmatprep.subr.mxu0 0.0
      %4883 = vmatpush2.msra.mxu0 0.0
      %4884 = vmatprep.subr.mxu0 0.0
      %4885 = vmatpush2.msra.mxu0 0.0
      %4886 = vmatprep.subr.mxu0 0.0
      %4887 = vmatpush2.msra.mxu0 0.0
      %4888 = vmatprep.subr.mxu0 0.0
      %4889 = vmatpush2.msra.mxu0 0.0
      %4890 = vmatprep.subr.mxu0 0.0
      %4891 = vmatpush2.msra.mxu0 0.0
      %4892 = vmatprep.subr.mxu0 0.0
      %4893 = vmatpush2.msra.mxu0 0.0
      %4894 = vmatprep.subr.mxu0 0.0
      %4895 = vmatpush2.msra.mxu0 0.0
      %4896 = vmatprep.subr.mxu0 0.0
      %4897 = vmatpush2.msra.mxu0 0.0
      %4898 = vmatprep.subr.mxu0 0.0
      %4899 = vmatpush2.msra.mxu0 0.0
      %4900 = vmatprep.mubr.f32.mxu0 0.0
      %4901 = vmatmul.mubr.f32.gmra.mxu0 %v4831
      %v4902 = vpop.f32.mrf.mxu0
      %v4903 = vadd.f32 0.0, %v4902
      %v4904 = vpop.f32.mrf.mxu0
      %v4905 = vadd.f32 0.0, %v4904
      %4906 = vmatprep.mubr.f32.mxu0 0.0
      %4907 = vmatmul.mubr.f32.gmra.mxu0 %v4834
      %v4908 = vpop.f32.mrf.mxu0
      %v4909 = vadd.f32 0.0, %v4908
      %v4910 = vpop.f32.mrf.mxu0
      %v4911 = vadd.f32 0.0, %v4910
      %4912 = vdwg.mxu0
      %v4913 = vadd.f32 %v4903, %v4905
      %4914 = vadd.xlane.f32.xlu0 %v4913
      %v4915 = vpop.xlane.xlu0 %4914
      %v4916 = vadd.f32 %v4909, %v4911
      %4917 = vadd.xlane.f32.xlu0 %v4916
      %v4918 = vpop.xlane.xlu0 %4917
      %v4919 = vrcp.pop 256.0
      %v4920 = vmul.f32 %v4915, %v4919
      %v4921 = vmul.f32 %v4918, %v4919
      %s4922 = scalar_lea.vmem %s7, 16
      %v4923 = vld [vmem:[%s4922] sm:$0xff]
      %v4924 = vld [vmem:[%s4922 + $0x8] sm:$0xff]
      %v4925 = vadd.f32 %v4920, %v4923
      %v4926 = vadd.f32 %v4921, %v4924
      %v4927 = vmax.f32 %v4925, 0.0
      %v4928 = vmax.f32 %v4926, 0.0
      %s4929 = scalar_lea.vmem %s8, 32
      %v4930 = vld [vmem:[%s4929] sm:$0xff]
      %v4931 = vld [vmem:[%s4929 + $0x8] sm:$0xff]
      %v4932 = vld [vmem:[%s4929 + $0x10] sm:$0xff]
      %v4933 = vld [vmem:[%s4929 + $0x18] sm:$0xff]
      %4935 = vset.pattern.permute.xlu0 0
      %4936 = vperm.xlu0 %4935, %v4927
      %v4937 = vpop.permute.xlu0 %4936
      %4940 = vset.pattern.permute.xlu0 0
      %4941 = vperm.xlu0 %4940, %v4928
      %v4942 = vpop.permute.xlu0 %4941
      %s4944 = scalar_lea.vmem %s9, 32
      %v4945 = vld [vmem:[%s4944] sm:$0xff]
      %v4946 = vld [vmem:[%s4944 + $0x8] sm:$0xff]
      %v4947 = vld [vmem:[%s4944 + $0x10] sm:$0xff]
      %v4948 = vld [vmem:[%s4944 + $0x18] sm:$0xff]
      %4950 = vset.pattern.permute.xlu0 0
      %4951 = vperm.xlu0 %4950, %v4945
      %v4952 = vpop.permute.xlu0 %4951
      %4955 = vset.pattern.permute.xlu0 0
      %4956 = vperm.xlu0 %4955, %v4946
      %v4957 = vpop.permute.xlu0 %4956
      %4960 = vset.pattern.permute.xlu0 0
      %4961 = vperm.xlu0 %4960, %v4947
      %v4962 = vpop.permute.xlu0 %4961
      %4965 = vset.pattern.permute.xlu0 0
      %4966 = vperm.xlu0 %4965, %v4948
      %v4967 = vpop.permute.xlu0 %4966
      %v4970 = vsel %vm4725, %v4930, 0
      %v4973 = vsel %vm4725, %v4931, 0
      %v4976 = vsel %vm4725, %v4932, 0
      %v4979 = vsel %vm4725, %v4933, 0
      %4981 = vmatprep.subr.mxu0 0.0
      %4982 = vmatpush1.msra.mxu0 0.0
      %4983 = vmatprep.subr.mxu0 0.0
      %4984 = vmatpush1.msra.mxu0 0.0
      %4985 = vmatprep.subr.mxu0 0.0
      %4986 = vmatpush1.msra.mxu0 0.0
      %4987 = vmatprep.subr.mxu0 0.0
      %4988 = vmatpush1.msra.mxu0 0.0
      %4989 = vmatprep.subr.mxu0 0.0
      %4990 = vmatpush1.msra.mxu0 0.0
      %4991 = vmatprep.subr.mxu0 0.0
      %4992 = vmatpush1.msra.mxu0 0.0
      %4993 = vmatprep.subr.mxu0 0.0
      %4994 = vmatpush1.msra.mxu0 0.0
      %4995 = vmatprep.subr.mxu0 0.0
      %4996 = vmatpush1.msra.mxu0 0.0
      %4997 = vmatprep.subr.mxu0 0.0
      %4998 = vmatpush1.msra.mxu0 0.0
      %4999 = vmatprep.subr.mxu0 0.0
      %5000 = vmatpush1.msra.mxu0 0.0
      %5001 = vmatprep.subr.mxu0 0.0
      %5002 = vmatpush1.msra.mxu0 0.0
      %5003 = vmatprep.subr.mxu0 0.0
      %5004 = vmatpush1.msra.mxu0 0.0
      %5005 = vmatprep.subr.mxu0 0.0
      %5006 = vmatpush1.msra.mxu0 0.0
      %5007 = vmatprep.subr.mxu0 0.0
      %5008 = vmatpush1.msra.mxu0 0.0
      %5009 = vmatprep.subr.mxu0 %v4942
      %5010 = vmatpush1.msra.mxu0 %v4942
      %5011 = vmatprep.subr.mxu0 %v4937
      %5012 = vmatpush1.msra.mxu0 %v4937
      %5013 = vmatprep.subr.mxu0 0.0
      %5014 = vmatpush2.msra.mxu0 0.0
      %5015 = vmatprep.subr.mxu0 0.0
      %5016 = vmatpush2.msra.mxu0 0.0
      %5017 = vmatprep.subr.mxu0 0.0
      %5018 = vmatpush2.msra.mxu0 0.0
      %5019 = vmatprep.subr.mxu0 0.0
      %5020 = vmatpush2.msra.mxu0 0.0
      %5021 = vmatprep.subr.mxu0 0.0
      %5022 = vmatpush2.msra.mxu0 0.0
      %5023 = vmatprep.subr.mxu0 0.0
      %5024 = vmatpush2.msra.mxu0 0.0
      %5025 = vmatprep.subr.mxu0 0.0
      %5026 = vmatpush2.msra.mxu0 0.0
      %5027 = vmatprep.subr.mxu0 0.0
      %5028 = vmatpush2.msra.mxu0 0.0
      %5029 = vmatprep.subr.mxu0 0.0
      %5030 = vmatpush2.msra.mxu0 0.0
      %5031 = vmatprep.subr.mxu0 0.0
      %5032 = vmatpush2.msra.mxu0 0.0
      %5033 = vmatprep.subr.mxu0 0.0
      %5034 = vmatpush2.msra.mxu0 0.0
      %5035 = vmatprep.subr.mxu0 0.0
      %5036 = vmatpush2.msra.mxu0 0.0
      %5037 = vmatprep.subr.mxu0 0.0
      %5038 = vmatpush2.msra.mxu0 0.0
      %5039 = vmatprep.subr.mxu0 0.0
      %5040 = vmatpush2.msra.mxu0 0.0
      %5041 = vmatprep.subr.mxu0 0.0
      %5042 = vmatpush2.msra.mxu0 0.0
      %5043 = vmatprep.subr.mxu0 0.0
      %5044 = vmatpush2.msra.mxu0 0.0
      %5045 = vmatprep.mubr.f32.mxu0 0.0
      %5046 = vmatmul.mubr.f32.gmra.mxu0 %v4970
      %v5047 = vpop.f32.mrf.mxu0
      %v5048 = vadd.f32 %v4952, %v5047
      %v5049 = vpop.f32.mrf.mxu0
      %v5050 = vadd.f32 %v4952, %v5049
      %5051 = vmatprep.mubr.f32.mxu0 0.0
      %5052 = vmatmul.mubr.f32.gmra.mxu0 %v4973
      %v5053 = vpop.f32.mrf.mxu0
      %v5054 = vadd.f32 %v4957, %v5053
      %v5055 = vpop.f32.mrf.mxu0
      %v5056 = vadd.f32 %v4957, %v5055
      %5057 = vmatprep.mubr.f32.mxu0 0.0
      %5058 = vmatmul.mubr.f32.gmra.mxu0 %v4976
      %v5059 = vpop.f32.mrf.mxu0
      %v5060 = vadd.f32 %v4962, %v5059
      %v5061 = vpop.f32.mrf.mxu0
      %v5062 = vadd.f32 %v4962, %v5061
      %5063 = vmatprep.mubr.f32.mxu0 0.0
      %5064 = vmatmul.mubr.f32.gmra.mxu0 %v4979
      %v5065 = vpop.f32.mrf.mxu0
      %v5066 = vadd.f32 %v4967, %v5065
      %v5067 = vpop.f32.mrf.mxu0
      %v5068 = vadd.f32 %v4967, %v5067
      %5069 = vdwg.mxu0
      %v5070 = vadd.f32 %v4805, %v5048
      %v5071 = vadd.f32 %v4807, %v5050
      %v5072 = vadd.f32 %v4811, %v5054
      %v5073 = vadd.f32 %v4813, %v5056
      %v5074 = vadd.f32 %v4817, %v5060
      %v5075 = vadd.f32 %v4819, %v5062
      %v5076 = vadd.f32 %v4823, %v5066
      %v5077 = vadd.f32 %v4825, %v5068
      %v5078 = vsub.f32 0.0, %v5070
      %v5079 = vsub.f32 0.0, %v5071
      %v5080 = vsub.f32 0.0, %v5072
      %v5081 = vsub.f32 0.0, %v5073
      %v5082 = vsub.f32 0.0, %v5074
      %v5083 = vsub.f32 0.0, %v5075
      %v5084 = vsub.f32 0.0, %v5076
      %v5085 = vsub.f32 0.0, %v5077
      %v5086 = vmul.f32 %v5078, 1.442695
      %v5087 = vpow.pop %v5086
      %v5088 = vmul.f32 %v5079, 1.442695
      %v5089 = vpow.pop %v5088
      %v5090 = vmul.f32 %v5080, 1.442695
      %v5091 = vpow.pop %v5090
      %v5092 = vmul.f32 %v5081, 1.442695
      %v5093 = vpow.pop %v5092
      %v5094 = vmul.f32 %v5082, 1.442695
      %v5095 = vpow.pop %v5094
      %v5096 = vmul.f32 %v5083, 1.442695
      %v5097 = vpow.pop %v5096
      %v5098 = vmul.f32 %v5084, 1.442695
      %v5099 = vpow.pop %v5098
      %v5100 = vmul.f32 %v5085, 1.442695
      %v5101 = vpow.pop %v5100
      %v5102 = vadd.f32 %v5087, 1.0
      %v5103 = vadd.f32 %v5089, 1.0
      %v5104 = vadd.f32 %v5091, 1.0
      %v5105 = vadd.f32 %v5093, 1.0
      %v5106 = vadd.f32 %v5095, 1.0
      %v5107 = vadd.f32 %v5097, 1.0
      %v5108 = vadd.f32 %v5099, 1.0
      %v5109 = vadd.f32 %v5101, 1.0
      %v5110 = vrcp.pop %v5102
      %v5111 = vrcp.pop %v5103
      %v5112 = vrcp.pop %v5104
      %v5113 = vrcp.pop %v5105
      %v5114 = vrcp.pop %v5106
      %v5115 = vrcp.pop %v5107
      %v5116 = vrcp.pop %v5108
      %v5117 = vrcp.pop %v5109
      %v5118 = vmul.f32 %v2797, %v5110
      %v5119 = vmul.f32 %v2798, %v5111
      %v5120 = vmul.f32 %v2799, %v5112
      %v5121 = vmul.f32 %v2800, %v5113
      %v5122 = vmul.f32 %v2801, %v5114
      %v5123 = vmul.f32 %v2802, %v5115
      %v5124 = vmul.f32 %v2803, %v5116
      %v5125 = vmul.f32 %v2804, %v5117
      %s5126 = scalar_lea.vmem %s6, 32
      %v5127 = vld [vmem:[%s5126] sm:$0xff]
      %v5128 = vld [vmem:[%s5126 + $0x8] sm:$0xff]
      %s5129 = scalar_lea.vmem %s7, 32
      %v5130 = vld [vmem:[%s5129] sm:$0xff]
      %v5131 = vld [vmem:[%s5129 + $0x8] sm:$0xff]
      %5133 = vset.pattern.permute.xlu0 0
      %5134 = vperm.xlu0 %5133, %v5130
      %v5135 = vpop.permute.xlu0 %5134
      %5138 = vset.pattern.permute.xlu0 0
      %5139 = vperm.xlu0 %5138, %v5131
      %v5140 = vpop.permute.xlu0 %5139
      %v5143 = vsel %vm2684, %v5127, 0
      %v5146 = vsel %vm2684, %v5128, 0
      %5148 = vmatprep.subr.mxu0 0.0
      %5149 = vmatpush1.msra.mxu0 0.0
      %5150 = vmatprep.subr.mxu0 0.0
      %5151 = vmatpush1.msra.mxu0 0.0
      %5152 = vmatprep.subr.mxu0 0.0
      %5153 = vmatpush1.msra.mxu0 0.0
      %5154 = vmatprep.subr.mxu0 0.0
      %5155 = vmatpush1.msra.mxu0 0.0
      %5156 = vmatprep.subr.mxu0 0.0
      %5157 = vmatpush1.msra.mxu0 0.0
      %5158 = vmatprep.subr.mxu0 0.0
      %5159 = vmatpush1.msra.mxu0 0.0
      %5160 = vmatprep.subr.mxu0 0.0
      %5161 = vmatpush1.msra.mxu0 0.0
      %5162 = vmatprep.subr.mxu0 0.0
      %5163 = vmatpush1.msra.mxu0 0.0
      %5164 = vmatprep.subr.mxu0 0.0
      %5165 = vmatpush1.msra.mxu0 0.0
      %5166 = vmatprep.subr.mxu0 0.0
      %5167 = vmatpush1.msra.mxu0 0.0
      %5168 = vmatprep.subr.mxu0 0.0
      %5169 = vmatpush1.msra.mxu0 0.0
      %5170 = vmatprep.subr.mxu0 0.0
      %5171 = vmatpush1.msra.mxu0 0.0
      %5172 = vmatprep.subr.mxu0 0.0
      %5173 = vmatpush1.msra.mxu0 %v4595
      %5174 = vmatprep.subr.mxu0 0.0
      %5175 = vmatpush1.msra.mxu0 %v4594
      %5176 = vmatprep.subr.mxu0 0.0
      %5177 = vmatpush1.msra.mxu0 %v4593
      %5178 = vmatprep.subr.mxu0 0.0
      %5179 = vmatpush1.msra.mxu0 %v4592
      %5180 = vmatprep.subr.mxu0 0.0
      %5181 = vmatpush2.msra.mxu0 0.0
      %5182 = vmatprep.subr.mxu0 0.0
      %5183 = vmatpush2.msra.mxu0 0.0
      %5184 = vmatprep.subr.mxu0 0.0
      %5185 = vmatpush2.msra.mxu0 0.0
      %5186 = vmatprep.subr.mxu0 0.0
      %5187 = vmatpush2.msra.mxu0 0.0
      %5188 = vmatprep.subr.mxu0 0.0
      %5189 = vmatpush2.msra.mxu0 0.0
      %5190 = vmatprep.subr.mxu0 0.0
      %5191 = vmatpush2.msra.mxu0 0.0
      %5192 = vmatprep.subr.mxu0 0.0
      %5193 = vmatpush2.msra.mxu0 0.0
      %5194 = vmatprep.subr.mxu0 0.0
      %5195 = vmatpush2.msra.mxu0 0.0
      %5196 = vmatprep.subr.mxu0 0.0
      %5197 = vmatpush2.msra.mxu0 0.0
      %5198 = vmatprep.subr.mxu0 0.0
      %5199 = vmatpush2.msra.mxu0 0.0
      %5200 = vmatprep.subr.mxu0 0.0
      %5201 = vmatpush2.msra.mxu0 0.0
      %5202 = vmatprep.subr.mxu0 0.0
      %5203 = vmatpush2.msra.mxu0 0.0
      %5204 = vmatprep.subr.mxu0 0.0
      %5205 = vmatpush2.msra.mxu0 0.0
      %5206 = vmatprep.subr.mxu0 0.0
      %5207 = vmatpush2.msra.mxu0 0.0
      %5208 = vmatprep.subr.mxu0 0.0
      %5209 = vmatpush2.msra.mxu0 0.0
      %5210 = vmatprep.subr.mxu0 0.0
      %5211 = vmatpush2.msra.mxu0 0.0
      %5212 = vmatprep.mubr.f32.mxu0 0.0
      %5213 = vmatmul.mubr.f32.gmra.mxu0 %v5143
      %v5214 = vpop.f32.mrf.mxu0
      %v5215 = vadd.f32 %v5135, %v5214
      %v5216 = vpop.f32.mrf.mxu0
      %5217 = vmatprep.mubr.f32.mxu0 0.0
      %5218 = vmatmul.mubr.f32.gmra.mxu0 %v5146
      %v5219 = vpop.f32.mrf.mxu0
      %v5220 = vadd.f32 %v5140, %v5219
      %v5221 = vpop.f32.mrf.mxu0
      %5222 = vdwg.mxu0
      %v5223 = vmax.f32 %v5215, 0.0
      %v5224 = vmax.f32 %v5220, 0.0
      %s5225 = scalar_lea.vmem %s8, 64
      %v5226 = vld [vmem:[%s5225] sm:$0xff]
      %v5227 = vld [vmem:[%s5225 + $0x8] sm:$0xff]
      %v5228 = vld [vmem:[%s5225 + $0x10] sm:$0xff]
      %v5229 = vld [vmem:[%s5225 + $0x18] sm:$0xff]
      %s5230 = scalar_lea.vmem %s9, 64
      %v5231 = vld [vmem:[%s5230] sm:$0xff]
      %v5232 = vld [vmem:[%s5230 + $0x8] sm:$0xff]
      %v5233 = vld [vmem:[%s5230 + $0x10] sm:$0xff]
      %v5234 = vld [vmem:[%s5230 + $0x18] sm:$0xff]
      %5236 = vset.pattern.permute.xlu0 0
      %5237 = vperm.xlu0 %5236, %v5231
      %v5238 = vpop.permute.xlu0 %5237
      %5241 = vset.pattern.permute.xlu0 0
      %5242 = vperm.xlu0 %5241, %v5232
      %v5243 = vpop.permute.xlu0 %5242
      %5246 = vset.pattern.permute.xlu0 0
      %5247 = vperm.xlu0 %5246, %v5233
      %v5248 = vpop.permute.xlu0 %5247
      %5251 = vset.pattern.permute.xlu0 0
      %5252 = vperm.xlu0 %5251, %v5234
      %v5253 = vpop.permute.xlu0 %5252
      %v5256 = vsel %vm4725, %v5226, 0
      %v5259 = vsel %vm4725, %v5227, 0
      %v5262 = vsel %vm4725, %v5228, 0
      %v5265 = vsel %vm4725, %v5229, 0
      %5267 = vmatprep.subr.mxu0 0.0
      %5268 = vmatpush1.msra.mxu0 0.0
      %5269 = vmatprep.subr.mxu0 0.0
      %5270 = vmatpush1.msra.mxu0 0.0
      %5271 = vmatprep.subr.mxu0 0.0
      %5272 = vmatpush1.msra.mxu0 0.0
      %5273 = vmatprep.subr.mxu0 0.0
      %5274 = vmatpush1.msra.mxu0 0.0
      %5275 = vmatprep.subr.mxu0 0.0
      %5276 = vmatpush1.msra.mxu0 0.0
      %5277 = vmatprep.subr.mxu0 0.0
      %5278 = vmatpush1.msra.mxu0 0.0
      %5279 = vmatprep.subr.mxu0 0.0
      %5280 = vmatpush1.msra.mxu0 0.0
      %5281 = vmatprep.subr.mxu0 0.0
      %5282 = vmatpush1.msra.mxu0 0.0
      %5283 = vmatprep.subr.mxu0 0.0
      %5284 = vmatpush1.msra.mxu0 0.0
      %5285 = vmatprep.subr.mxu0 0.0
      %5286 = vmatpush1.msra.mxu0 0.0
      %5287 = vmatprep.subr.mxu0 0.0
      %5288 = vmatpush1.msra.mxu0 0.0
      %5289 = vmatprep.subr.mxu0 0.0
      %5290 = vmatpush1.msra.mxu0 0.0
      %5291 = vmatprep.subr.mxu0 0.0
      %5292 = vmatpush1.msra.mxu0 0.0
      %5293 = vmatprep.subr.mxu0 0.0
      %5294 = vmatpush1.msra.mxu0 0.0
      %5295 = vmatprep.subr.mxu0 0.0
      %5296 = vmatpush1.msra.mxu0 %v5224
      %5297 = vmatprep.subr.mxu0 0.0
      %5298 = vmatpush1.msra.mxu0 %v5223
      %5299 = vmatprep.subr.mxu0 0.0
      %5300 = vmatpush2.msra.mxu0 0.0
      %5301 = vmatprep.subr.mxu0 0.0
      %5302 = vmatpush2.msra.mxu0 0.0
      %5303 = vmatprep.subr.mxu0 0.0
      %5304 = vmatpush2.msra.mxu0 0.0
      %5305 = vmatprep.subr.mxu0 0.0
      %5306 = vmatpush2.msra.mxu0 0.0
      %5307 = vmatprep.subr.mxu0 0.0
      %5308 = vmatpush2.msra.mxu0 0.0
      %5309 = vmatprep.subr.mxu0 0.0
      %5310 = vmatpush2.msra.mxu0 0.0
      %5311 = vmatprep.subr.mxu0 0.0
      %5312 = vmatpush2.msra.mxu0 0.0
      %5313 = vmatprep.subr.mxu0 0.0
      %5314 = vmatpush2.msra.mxu0 0.0
      %5315 = vmatprep.subr.mxu0 0.0
      %5316 = vmatpush2.msra.mxu0 0.0
      %5317 = vmatprep.subr.mxu0 0.0
      %5318 = vmatpush2.msra.mxu0 0.0
      %5319 = vmatprep.subr.mxu0 0.0
      %5320 = vmatpush2.msra.mxu0 0.0
      %5321 = vmatprep.subr.mxu0 0.0
      %5322 = vmatpush2.msra.mxu0 0.0
      %5323 = vmatprep.subr.mxu0 0.0
      %5324 = vmatpush2.msra.mxu0 0.0
      %5325 = vmatprep.subr.mxu0 0.0
      %5326 = vmatpush2.msra.mxu0 0.0
      %5327 = vmatprep.subr.mxu0 0.0
      %5328 = vmatpush2.msra.mxu0 0.0
      %5329 = vmatprep.subr.mxu0 0.0
      %5330 = vmatpush2.msra.mxu0 0.0
      %5331 = vmatprep.mubr.f32.mxu0 0.0
      %5332 = vmatmul.mubr.f32.gmra.mxu0 %v5256
      %v5333 = vpop.f32.mrf.mxu0
      %v5334 = vadd.f32 %v5238, %v5333
      %v5335 = vpop.f32.mrf.mxu0
      %5336 = vmatprep.mubr.f32.mxu0 0.0
      %5337 = vmatmul.mubr.f32.gmra.mxu0 %v5259
      %v5338 = vpop.f32.mrf.mxu0
      %v5339 = vadd.f32 %v5243, %v5338
      %v5340 = vpop.f32.mrf.mxu0
      %5341 = vmatprep.mubr.f32.mxu0 0.0
      %5342 = vmatmul.mubr.f32.gmra.mxu0 %v5262
      %v5343 = vpop.f32.mrf.mxu0
      %v5344 = vadd.f32 %v5248, %v5343
      %v5345 = vpop.f32.mrf.mxu0
      %5346 = vmatprep.mubr.f32.mxu0 0.0
      %5347 = vmatmul.mubr.f32.gmra.mxu0 %v5265
      %v5348 = vpop.f32.mrf.mxu0
      %v5349 = vadd.f32 %v5253, %v5348
      %v5350 = vpop.f32.mrf.mxu0
      %5351 = vdwg.mxu0
      %s5352 = scalar_lea.vmem %s6, 48
      %v5353 = vld [vmem:[%s5352] sm:$0xff]
      %v5354 = vld [vmem:[%s5352 + $0x8] sm:$0xff]
      %v5356 = vsel %vm2684, %v5353, 0
      %v5359 = vsel %vm2684, %v5354, 0
      %5361 = vmatprep.subr.mxu0 0.0
      %5362 = vmatpush1.msra.mxu0 0.0
      %5363 = vmatprep.subr.mxu0 0.0
      %5364 = vmatpush1.msra.mxu0 0.0
      %5365 = vmatprep.subr.mxu0 0.0
      %5366 = vmatpush1.msra.mxu0 0.0
      %5367 = vmatprep.subr.mxu0 0.0
      %5368 = vmatpush1.msra.mxu0 0.0
      %5369 = vmatprep.subr.mxu0 0.0
      %5370 = vmatpush1.msra.mxu0 0.0
      %5371 = vmatprep.subr.mxu0 0.0
      %5372 = vmatpush1.msra.mxu0 0.0
      %5373 = vmatprep.subr.mxu0 0.0
      %5374 = vmatpush1.msra.mxu0 0.0
      %5375 = vmatprep.subr.mxu0 0.0
      %5376 = vmatpush1.msra.mxu0 0.0
      %5377 = vmatprep.subr.mxu0 0.0
      %5378 = vmatpush1.msra.mxu0 0.0
      %5379 = vmatprep.subr.mxu0 0.0
      %5380 = vmatpush1.msra.mxu0 0.0
      %5381 = vmatprep.subr.mxu0 0.0
      %5382 = vmatpush1.msra.mxu0 0.0
      %5383 = vmatprep.subr.mxu0 0.0
      %5384 = vmatpush1.msra.mxu0 0.0
      %5385 = vmatprep.subr.mxu0 0.0
      %5386 = vmatpush1.msra.mxu0 %v4595
      %5387 = vmatprep.subr.mxu0 0.0
      %5388 = vmatpush1.msra.mxu0 %v4594
      %5389 = vmatprep.subr.mxu0 0.0
      %5390 = vmatpush1.msra.mxu0 %v4593
      %5391 = vmatprep.subr.mxu0 0.0
      %5392 = vmatpush1.msra.mxu0 %v4592
      %5393 = vmatprep.subr.mxu0 0.0
      %5394 = vmatpush2.msra.mxu0 0.0
      %5395 = vmatprep.subr.mxu0 0.0
      %5396 = vmatpush2.msra.mxu0 0.0
      %5397 = vmatprep.subr.mxu0 0.0
      %5398 = vmatpush2.msra.mxu0 0.0
      %5399 = vmatprep.subr.mxu0 0.0
      %5400 = vmatpush2.msra.mxu0 0.0
      %5401 = vmatprep.subr.mxu0 0.0
      %5402 = vmatpush2.msra.mxu0 0.0
      %5403 = vmatprep.subr.mxu0 0.0
      %5404 = vmatpush2.msra.mxu0 0.0
      %5405 = vmatprep.subr.mxu0 0.0
      %5406 = vmatpush2.msra.mxu0 0.0
      %5407 = vmatprep.subr.mxu0 0.0
      %5408 = vmatpush2.msra.mxu0 0.0
      %5409 = vmatprep.subr.mxu0 0.0
      %5410 = vmatpush2.msra.mxu0 0.0
      %5411 = vmatprep.subr.mxu0 0.0
      %5412 = vmatpush2.msra.mxu0 0.0
      %5413 = vmatprep.subr.mxu0 0.0
      %5414 = vmatpush2.msra.mxu0 0.0
      %5415 = vmatprep.subr.mxu0 0.0
      %5416 = vmatpush2.msra.mxu0 0.0
      %5417 = vmatprep.subr.mxu0 0.0
      %5418 = vmatpush2.msra.mxu0 0.0
      %5419 = vmatprep.subr.mxu0 0.0
      %5420 = vmatpush2.msra.mxu0 0.0
      %5421 = vmatprep.subr.mxu0 0.0
      %5422 = vmatpush2.msra.mxu0 0.0
      %5423 = vmatprep.subr.mxu0 0.0
      %5424 = vmatpush2.msra.mxu0 0.0
      %5425 = vmatprep.mubr.f32.mxu0 0.0
      %5426 = vmatmul.mubr.f32.gmra.mxu0 %v5356
      %v5427 = vpop.f32.mrf.mxu0
      %v5428 = vadd.f32 0.0, %v5427
      %v5429 = vpop.f32.mrf.mxu0
      %5430 = vmatprep.mubr.f32.mxu0 0.0
      %5431 = vmatmul.mubr.f32.gmra.mxu0 %v5359
      %v5432 = vpop.f32.mrf.mxu0
      %v5433 = vadd.f32 0.0, %v5432
      %v5434 = vpop.f32.mrf.mxu0
      %5435 = vdwg.mxu0
      %vm5436 = vcmask 523264
      %v5437 = vsel %vm5436, %v5428, 0.0
      %5438 = vadd.xlane.f32.xlu0 %v5437
      %v5439 = vpop.xlane.xlu0 %5438
      %v5440 = vsel %vm5436, %v5433, 0.0
      %5441 = vadd.xlane.f32.xlu0 %v5440
      %v5442 = vpop.xlane.xlu0 %5441
      %v5443 = vrcp.pop 64.0
      %v5444 = vmul.f32 %v5439, %v5443
      %v5445 = vmul.f32 %v5442, %v5443
      %s5446 = scalar_lea.vmem %s7, 48
      %v5447 = vld [vmem:[%s5446] sm:$0xff]
      %v5448 = vld [vmem:[%s5446 + $0x8] sm:$0xff]
      %v5449 = vadd.f32 %v5444, %v5447
      %v5450 = vadd.f32 %v5445, %v5448
      %v5451 = vmax.f32 %v5449, 0.0
      %v5452 = vmax.f32 %v5450, 0.0
      %s5453 = scalar_lea.vmem %s8, 96
      %v5454 = vld [vmem:[%s5453] sm:$0xff]
      %v5455 = vld [vmem:[%s5453 + $0x8] sm:$0xff]
      %v5456 = vld [vmem:[%s5453 + $0x10] sm:$0xff]
      %v5457 = vld [vmem:[%s5453 + $0x18] sm:$0xff]
      %5459 = vset.pattern.permute.xlu0 0
      %5460 = vperm.xlu0 %5459, %v5451
      %v5461 = vpop.permute.xlu0 %5460
      %5464 = vset.pattern.permute.xlu0 0
      %5465 = vperm.xlu0 %5464, %v5452
      %v5466 = vpop.permute.xlu0 %5465
      %s5468 = scalar_lea.vmem %s9, 96
      %v5469 = vld [vmem:[%s5468] sm:$0xff]
      %v5470 = vld [vmem:[%s5468 + $0x8] sm:$0xff]
      %v5471 = vld [vmem:[%s5468 + $0x10] sm:$0xff]
      %v5472 = vld [vmem:[%s5468 + $0x18] sm:$0xff]
      %5474 = vset.pattern.permute.xlu0 0
      %5475 = vperm.xlu0 %5474, %v5469
      %v5476 = vpop.permute.xlu0 %5475
      %5479 = vset.pattern.permute.xlu0 0
      %5480 = vperm.xlu0 %5479, %v5470
      %v5481 = vpop.permute.xlu0 %5480
      %5484 = vset.pattern.permute.xlu0 0
      %5485 = vperm.xlu0 %5484, %v5471
      %v5486 = vpop.permute.xlu0 %5485
      %5489 = vset.pattern.permute.xlu0 0
      %5490 = vperm.xlu0 %5489, %v5472
      %v5491 = vpop.permute.xlu0 %5490
      %v5494 = vsel %vm4725, %v5454, 0
      %v5497 = vsel %vm4725, %v5455, 0
      %v5500 = vsel %vm4725, %v5456, 0
      %v5503 = vsel %vm4725, %v5457, 0
      %5505 = vmatprep.subr.mxu0 0.0
      %5506 = vmatpush1.msra.mxu0 0.0
      %5507 = vmatprep.subr.mxu0 0.0
      %5508 = vmatpush1.msra.mxu0 0.0
      %5509 = vmatprep.subr.mxu0 0.0
      %5510 = vmatpush1.msra.mxu0 0.0
      %5511 = vmatprep.subr.mxu0 0.0
      %5512 = vmatpush1.msra.mxu0 0.0
      %5513 = vmatprep.subr.mxu0 0.0
      %5514 = vmatpush1.msra.mxu0 0.0
      %5515 = vmatprep.subr.mxu0 0.0
      %5516 = vmatpush1.msra.mxu0 0.0
      %5517 = vmatprep.subr.mxu0 0.0
      %5518 = vmatpush1.msra.mxu0 0.0
      %5519 = vmatprep.subr.mxu0 0.0
      %5520 = vmatpush1.msra.mxu0 0.0
      %5521 = vmatprep.subr.mxu0 0.0
      %5522 = vmatpush1.msra.mxu0 0.0
      %5523 = vmatprep.subr.mxu0 0.0
      %5524 = vmatpush1.msra.mxu0 0.0
      %5525 = vmatprep.subr.mxu0 0.0
      %5526 = vmatpush1.msra.mxu0 0.0
      %5527 = vmatprep.subr.mxu0 0.0
      %5528 = vmatpush1.msra.mxu0 0.0
      %5529 = vmatprep.subr.mxu0 0.0
      %5530 = vmatpush1.msra.mxu0 0.0
      %5531 = vmatprep.subr.mxu0 0.0
      %5532 = vmatpush1.msra.mxu0 0.0
      %5533 = vmatprep.subr.mxu0 0.0
      %5534 = vmatpush1.msra.mxu0 %v5466
      %5535 = vmatprep.subr.mxu0 0.0
      %5536 = vmatpush1.msra.mxu0 %v5461
      %5537 = vmatprep.subr.mxu0 0.0
      %5538 = vmatpush2.msra.mxu0 0.0
      %5539 = vmatprep.subr.mxu0 0.0
      %5540 = vmatpush2.msra.mxu0 0.0
      %5541 = vmatprep.subr.mxu0 0.0
      %5542 = vmatpush2.msra.mxu0 0.0
      %5543 = vmatprep.subr.mxu0 0.0
      %5544 = vmatpush2.msra.mxu0 0.0
      %5545 = vmatprep.subr.mxu0 0.0
      %5546 = vmatpush2.msra.mxu0 0.0
      %5547 = vmatprep.subr.mxu0 0.0
      %5548 = vmatpush2.msra.mxu0 0.0
      %5549 = vmatprep.subr.mxu0 0.0
      %5550 = vmatpush2.msra.mxu0 0.0
      %5551 = vmatprep.subr.mxu0 0.0
      %5552 = vmatpush2.msra.mxu0 0.0
      %5553 = vmatprep.subr.mxu0 0.0
      %5554 = vmatpush2.msra.mxu0 0.0
      %5555 = vmatprep.subr.mxu0 0.0
      %5556 = vmatpush2.msra.mxu0 0.0
      %5557 = vmatprep.subr.mxu0 0.0
      %5558 = vmatpush2.msra.mxu0 0.0
      %5559 = vmatprep.subr.mxu0 0.0
      %5560 = vmatpush2.msra.mxu0 0.0
      %5561 = vmatprep.subr.mxu0 0.0
      %5562 = vmatpush2.msra.mxu0 0.0
      %5563 = vmatprep.subr.mxu0 0.0
      %5564 = vmatpush2.msra.mxu0 0.0
      %5565 = vmatprep.subr.mxu0 0.0
      %5566 = vmatpush2.msra.mxu0 0.0
      %5567 = vmatprep.subr.mxu0 0.0
      %5568 = vmatpush2.msra.mxu0 0.0
      %5569 = vmatprep.mubr.f32.mxu0 0.0
      %5570 = vmatmul.mubr.f32.gmra.mxu0 %v5494
      %v5571 = vpop.f32.mrf.mxu0
      %v5572 = vadd.f32 %v5476, %v5571
      %v5573 = vpop.f32.mrf.mxu0
      %5574 = vmatprep.mubr.f32.mxu0 0.0
      %5575 = vmatmul.mubr.f32.gmra.mxu0 %v5497
      %v5576 = vpop.f32.mrf.mxu0
      %v5577 = vadd.f32 %v5481, %v5576
      %v5578 = vpop.f32.mrf.mxu0
      %5579 = vmatprep.mubr.f32.mxu0 0.0
      %5580 = vmatmul.mubr.f32.gmra.mxu0 %v5500
      %v5581 = vpop.f32.mrf.mxu0
      %v5582 = vadd.f32 %v5486, %v5581
      %v5583 = vpop.f32.mrf.mxu0
      %5584 = vmatprep.mubr.f32.mxu0 0.0
      %5585 = vmatmul.mubr.f32.gmra.mxu0 %v5503
      %v5586 = vpop.f32.mrf.mxu0
      %v5587 = vadd.f32 %v5491, %v5586
      %v5588 = vpop.f32.mrf.mxu0
      %5589 = vdwg.mxu0
      %v5590 = vadd.f32 %v5334, %v5572
      %v5591 = vadd.f32 %v5339, %v5577
      %v5592 = vadd.f32 %v5344, %v5582
      %v5593 = vadd.f32 %v5349, %v5587
      %v5594 = vsub.f32 0.0, %v5590
      %v5595 = vsub.f32 0.0, %v5591
      %v5596 = vsub.f32 0.0, %v5592
      %v5597 = vsub.f32 0.0, %v5593
      %v5598 = vmul.f32 %v5594, 1.442695
      %v5599 = vpow.pop %v5598
      %v5600 = vmul.f32 %v5595, 1.442695
      %v5601 = vpow.pop %v5600
      %v5602 = vmul.f32 %v5596, 1.442695
      %v5603 = vpow.pop %v5602
      %v5604 = vmul.f32 %v5597, 1.442695
      %v5605 = vpow.pop %v5604
      %v5606 = vadd.f32 %v5599, 1.0
      %v5607 = vadd.f32 %v5601, 1.0
      %v5608 = vadd.f32 %v5603, 1.0
      %v5609 = vadd.f32 %v5605, 1.0
      %v5610 = vrcp.pop %v5606
      %v5611 = vrcp.pop %v5607
      %v5612 = vrcp.pop %v5608
      %v5613 = vrcp.pop %v5609
      %v5614 = vmul.f32 %v4592, %v5610
      %v5615 = vmul.f32 %v4593, %v5611
      %v5616 = vmul.f32 %v4594, %v5612
      %v5617 = vmul.f32 %v4595, %v5613
      %v5618 = vpack.c.bf16 %v5615, %v5614
      %v5619 = vpack.c.bf16 %v5617, %v5616
      %v5620 = vld [vmem:[%s3] sm:$0xff]
      %v5621 = vld [vmem:[%s3 + $0x8] sm:$0xff]
      %v5622 = vld [vmem:[%s3 + $0x10] sm:$0xff]
      %v5623 = vld [vmem:[%s3 + $0x18] sm:$0xff]
      %v5624 = vld [vmem:[%s3 + $0x20] sm:$0xff]
      %v5625 = vld [vmem:[%s3 + $0x28] sm:$0xff]
      %v5626 = vld [vmem:[%s3 + $0x30] sm:$0xff]
      %v5627 = vld [vmem:[%s3 + $0x38] sm:$0xff]
      %v5636 = vunpack.c.l.b16 %v5620
      %v5637 = vunpack.c.h.b16 %v5620
      %v5638 = vunpack.c.l.b16 %v5621
      %v5639 = vunpack.c.h.b16 %v5621
      %v5640 = vunpack.c.l.b16 %v5622
      %v5641 = vunpack.c.h.b16 %v5622
      %v5642 = vunpack.c.l.b16 %v5623
      %v5643 = vunpack.c.h.b16 %v5623
      %v5644 = vunpack.c.l.b16 %v5624
      %v5645 = vunpack.c.h.b16 %v5624
      %v5646 = vunpack.c.l.b16 %v5625
      %v5647 = vunpack.c.h.b16 %v5625
      %v5648 = vunpack.c.l.b16 %v5626
      %v5649 = vunpack.c.h.b16 %v5626
      %v5650 = vunpack.c.l.b16 %v5627
      %v5651 = vunpack.c.h.b16 %v5627
      %v5652 = vpack.c.b16 %v5638, %v5636
      %v5653 = vpack.c.b16 %v5639, %v5637
      %v5654 = vpack.c.b16 %v5642, %v5640
      %v5655 = vpack.c.b16 %v5643, %v5641
      %v5656 = vpack.c.b16 %v5646, %v5644
      %v5657 = vpack.c.b16 %v5647, %v5645
      %v5658 = vpack.c.b16 %v5650, %v5648
      %v5659 = vpack.c.b16 %v5651, %v5649
      %v5669 = vsel %vm5436, %v5618, 0
      %v5672 = vsel %vm5436, %v5619, 0
      %5674 = vmatprep.subr.bf16.mxu0 0
      %5675 = vmatpush1.bf16.msra.mxu0 0
      %5676 = vmatprep.subr.bf16.mxu0 0
      %5677 = vmatpush1.bf16.msra.mxu0 0
      %5678 = vmatprep.subr.bf16.mxu0 0
      %5679 = vmatpush1.bf16.msra.mxu0 0
      %5680 = vmatprep.subr.bf16.mxu0 0
      %5681 = vmatpush1.bf16.msra.mxu0 0
      %5682 = vmatprep.subr.bf16.mxu0 %v5659
      %5683 = vmatpush1.bf16.msra.mxu0 %v5658
      %5684 = vmatprep.subr.bf16.mxu0 %v5657
      %5685 = vmatpush1.bf16.msra.mxu0 %v5656
      %5686 = vmatprep.subr.bf16.mxu0 %v5655
      %5687 = vmatpush1.bf16.msra.mxu0 %v5654
      %5688 = vmatprep.subr.bf16.mxu0 %v5653
      %5689 = vmatpush1.bf16.msra.mxu0 %v5652
      %5690 = vmatprep.subr.bf16.mxu0 0
      %5691 = vmatpush2.bf16.msra.mxu0 0
      %5692 = vmatprep.subr.bf16.mxu0 0
      %5693 = vmatpush2.bf16.msra.mxu0 0
      %5694 = vmatprep.subr.bf16.mxu0 0
      %5695 = vmatpush2.bf16.msra.mxu0 0
      %5696 = vmatprep.subr.bf16.mxu0 0
      %5697 = vmatpush2.bf16.msra.mxu0 0
      %5698 = vmatprep.subr.bf16.mxu0 0
      %5699 = vmatpush2.bf16.msra.mxu0 0
      %5700 = vmatprep.subr.bf16.mxu0 0
      %5701 = vmatpush2.bf16.msra.mxu0 0
      %5702 = vmatprep.subr.bf16.mxu0 0
      %5703 = vmatpush2.bf16.msra.mxu0 0
      %5704 = vmatprep.subr.bf16.mxu0 0
      %5705 = vmatpush2.bf16.msra.mxu0 0
      %5706 = vmatprep.mubr.bf16.mxu0 0
      %5707 = vmatmul.mubr.bf16.gmra.mxu0 %v5669
      %v5708 = vpop.f32.mrf.mxu0
      %v5709 = vadd.f32 %v5118, %v5708
      %v5710 = vpop.f32.mrf.mxu0
      %v5711 = vadd.f32 %v5119, %v5710
      %v5712 = vpop.f32.mrf.mxu0
      %v5713 = vadd.f32 %v5120, %v5712
      %v5714 = vpop.f32.mrf.mxu0
      %v5715 = vadd.f32 %v5121, %v5714
      %5716 = vmatprep.mubr.bf16.mxu0 0
      %5717 = vmatmul.mubr.bf16.gmra.mxu0 %v5672
      %v5718 = vpop.f32.mrf.mxu0
      %v5719 = vadd.f32 %v5122, %v5718
      %v5720 = vpop.f32.mrf.mxu0
      %v5721 = vadd.f32 %v5123, %v5720
      %v5722 = vpop.f32.mrf.mxu0
      %v5723 = vadd.f32 %v5124, %v5722
      %v5724 = vpop.f32.mrf.mxu0
      %v5725 = vadd.f32 %v5125, %v5724
      %5726 = vdwg.mxu0
      %v5727 = vpack.c.bf16 %v5713, %v5709
      %v5728 = vpack.c.bf16 %v5715, %v5711
      %v5729 = vpack.c.bf16 %v5723, %v5719
      %v5730 = vpack.c.bf16 %v5725, %v5721
      %5731 = vmatprep.subr.bf16.mxu0 %v516
      %5732 = vmatpush1.bf16.msra.mxu0 %v515
      %5733 = vmatprep.subr.bf16.mxu0 %v514
      %5734 = vmatpush1.bf16.msra.mxu0 %v513
      %5735 = vmatprep.subr.bf16.mxu0 %v512
      %5736 = vmatpush1.bf16.msra.mxu0 %v511
      %5737 = vmatprep.subr.bf16.mxu0 %v510
      %5738 = vmatpush1.bf16.msra.mxu0 %v509
      %5739 = vmatprep.subr.bf16.mxu0 %v508
      %5740 = vmatpush1.bf16.msra.mxu0 %v507
      %5741 = vmatprep.subr.bf16.mxu0 %v506
      %5742 = vmatpush1.bf16.msra.mxu0 %v505
      %5743 = vmatprep.subr.bf16.mxu0 %v504
      %5744 = vmatpush1.bf16.msra.mxu0 %v503
      %5745 = vmatprep.subr.bf16.mxu0 %v502
      %5746 = vmatpush1.bf16.msra.mxu0 %v501
      %5747 = vmatprep.subr.bf16.mxu0 %v532
      %5748 = vmatpush2.bf16.msra.mxu0 %v531
      %5749 = vmatprep.subr.bf16.mxu0 %v530
      %5750 = vmatpush2.bf16.msra.mxu0 %v529
      %5751 = vmatprep.subr.bf16.mxu0 %v528
      %5752 = vmatpush2.bf16.msra.mxu0 %v527
      %5753 = vmatprep.subr.bf16.mxu0 %v526
      %5754 = vmatpush2.bf16.msra.mxu0 %v525
      %5755 = vmatprep.subr.bf16.mxu0 %v524
      %5756 = vmatpush2.bf16.msra.mxu0 %v523
      %5757 = vmatprep.subr.bf16.mxu0 %v522
      %5758 = vmatpush2.bf16.msra.mxu0 %v521
      %5759 = vmatprep.subr.bf16.mxu0 %v520
      %5760 = vmatpush2.bf16.msra.mxu0 %v519
      %5761 = vmatprep.subr.bf16.mxu0 %v518
      %5762 = vmatpush2.bf16.msra.mxu0 %v517
      %5763 = vmatprep.mubr.bf16.mxu0 %v5728
      %5764 = vmatmul.mubr.bf16.gmra.mxu0 %v5727
      %v5765 = vpop.f32.mrf.mxu0
      %v5766 = vadd.f32 0.0, %v5765
      %v5767 = vpop.f32.mrf.mxu0
      %v5768 = vadd.f32 0.0, %v5767
      %v5769 = vpop.f32.mrf.mxu0
      %v5770 = vadd.f32 0.0, %v5769
      %v5771 = vpop.f32.mrf.mxu0
      %v5772 = vadd.f32 0.0, %v5771
      %5773 = vmatprep.mubr.bf16.mxu0 %v5730
      %5774 = vmatmul.mubr.bf16.gmra.mxu0 %v5729
      %v5775 = vpop.f32.mrf.mxu0
      %v5776 = vadd.f32 0.0, %v5775
      %v5777 = vpop.f32.mrf.mxu0
      %v5778 = vadd.f32 0.0, %v5777
      %v5779 = vpop.f32.mrf.mxu0
      %v5780 = vadd.f32 0.0, %v5779
      %v5781 = vpop.f32.mrf.mxu0
      %v5782 = vadd.f32 0.0, %v5781
      %5783 = vdwg.mxu0
      %v5784 = vpack.c.bf16 %v5770, %v5766
      %v5785 = vpack.c.bf16 %v5772, %v5768
      %v5786 = vpack.c.bf16 %v5780, %v5776
      %v5787 = vpack.c.bf16 %v5782, %v5778
      %5788 = vmatprep.subr.bf16.mxu0 %v766
      %5789 = vmatpush1.bf16.msra.mxu0 %v765
      %5790 = vmatprep.subr.bf16.mxu0 %v764
      %5791 = vmatpush1.bf16.msra.mxu0 %v763
      %5792 = vmatprep.subr.bf16.mxu0 %v762
      %5793 = vmatpush1.bf16.msra.mxu0 %v761
      %5794 = vmatprep.subr.bf16.mxu0 %v760
      %5795 = vmatpush1.bf16.msra.mxu0 %v759
      %5796 = vmatprep.subr.bf16.mxu0 %v758
      %5797 = vmatpush1.bf16.msra.mxu0 %v757
      %5798 = vmatprep.subr.bf16.mxu0 %v756
      %5799 = vmatpush1.bf16.msra.mxu0 %v755
      %5800 = vmatprep.subr.bf16.mxu0 %v754
      %5801 = vmatpush1.bf16.msra.mxu0 %v753
      %5802 = vmatprep.subr.bf16.mxu0 %v752
      %5803 = vmatpush1.bf16.msra.mxu0 %v751
      %5804 = vmatprep.subr.bf16.mxu0 %v782
      %5805 = vmatpush2.bf16.msra.mxu0 %v781
      %5806 = vmatprep.subr.bf16.mxu0 %v780
      %5807 = vmatpush2.bf16.msra.mxu0 %v779
      %5808 = vmatprep.subr.bf16.mxu0 %v778
      %5809 = vmatpush2.bf16.msra.mxu0 %v777
      %5810 = vmatprep.subr.bf16.mxu0 %v776
      %5811 = vmatpush2.bf16.msra.mxu0 %v775
      %5812 = vmatprep.subr.bf16.mxu0 %v774
      %5813 = vmatpush2.bf16.msra.mxu0 %v773
      %5814 = vmatprep.subr.bf16.mxu0 %v772
      %5815 = vmatpush2.bf16.msra.mxu0 %v771
      %5816 = vmatprep.subr.bf16.mxu0 %v770
      %5817 = vmatpush2.bf16.msra.mxu0 %v769
      %5818 = vmatprep.subr.bf16.mxu0 %v768
      %5819 = vmatpush2.bf16.msra.mxu0 %v767
      %5820 = vmatprep.mubr.bf16.mxu0 %v5728
      %5821 = vmatmul.mubr.bf16.gmra.mxu0 %v5727
      %v5822 = vpop.f32.mrf.mxu0
      %v5823 = vadd.f32 0.0, %v5822
      %v5824 = vpop.f32.mrf.mxu0
      %v5825 = vadd.f32 0.0, %v5824
      %v5826 = vpop.f32.mrf.mxu0
      %v5827 = vadd.f32 0.0, %v5826
      %v5828 = vpop.f32.mrf.mxu0
      %v5829 = vadd.f32 0.0, %v5828
      %5830 = vmatprep.mubr.bf16.mxu0 %v5730
      %5831 = vmatmul.mubr.bf16.gmra.mxu0 %v5729
      %v5832 = vpop.f32.mrf.mxu0
      %v5833 = vadd.f32 0.0, %v5832
      %v5834 = vpop.f32.mrf.mxu0
      %v5835 = vadd.f32 0.0, %v5834
      %v5836 = vpop.f32.mrf.mxu0
      %v5837 = vadd.f32 0.0, %v5836
      %v5838 = vpop.f32.mrf.mxu0
      %v5839 = vadd.f32 0.0, %v5838
      %5840 = vdwg.mxu0
      %v5841 = vpack.c.bf16 %v5827, %v5823
      %v5842 = vpack.c.bf16 %v5829, %v5825
      %v5843 = vpack.c.bf16 %v5837, %v5833
      %v5844 = vpack.c.bf16 %v5839, %v5835
      %5845 = vmatprep.subr.bf16.mxu0 %v1016
      %5846 = vmatpush1.bf16.msra.mxu0 %v1015
      %5847 = vmatprep.subr.bf16.mxu0 %v1014
      %5848 = vmatpush1.bf16.msra.mxu0 %v1013
      %5849 = vmatprep.subr.bf16.mxu0 %v1012
      %5850 = vmatpush1.bf16.msra.mxu0 %v1011
      %5851 = vmatprep.subr.bf16.mxu0 %v1010
      %5852 = vmatpush1.bf16.msra.mxu0 %v1009
      %5853 = vmatprep.subr.bf16.mxu0 %v1008
      %5854 = vmatpush1.bf16.msra.mxu0 %v1007
      %5855 = vmatprep.subr.bf16.mxu0 %v1006
      %5856 = vmatpush1.bf16.msra.mxu0 %v1005
      %5857 = vmatprep.subr.bf16.mxu0 %v1004
      %5858 = vmatpush1.bf16.msra.mxu0 %v1003
      %5859 = vmatprep.subr.bf16.mxu0 %v1002
      %5860 = vmatpush1.bf16.msra.mxu0 %v1001
      %5861 = vmatprep.subr.bf16.mxu0 %v1032
      %5862 = vmatpush2.bf16.msra.mxu0 %v1031
      %5863 = vmatprep.subr.bf16.mxu0 %v1030
      %5864 = vmatpush2.bf16.msra.mxu0 %v1029
      %5865 = vmatprep.subr.bf16.mxu0 %v1028
      %5866 = vmatpush2.bf16.msra.mxu0 %v1027
      %5867 = vmatprep.subr.bf16.mxu0 %v1026
      %5868 = vmatpush2.bf16.msra.mxu0 %v1025
      %5869 = vmatprep.subr.bf16.mxu0 %v1024
      %5870 = vmatpush2.bf16.msra.mxu0 %v1023
      %5871 = vmatprep.subr.bf16.mxu0 %v1022
      %5872 = vmatpush2.bf16.msra.mxu0 %v1021
      %5873 = vmatprep.subr.bf16.mxu0 %v1020
      %5874 = vmatpush2.bf16.msra.mxu0 %v1019
      %5875 = vmatprep.subr.bf16.mxu0 %v1018
      %5876 = vmatpush2.bf16.msra.mxu0 %v1017
      %5877 = vmatprep.mubr.bf16.mxu0 %v5728
      %5878 = vmatmul.mubr.bf16.gmra.mxu0 %v5727
      %v5879 = vpop.f32.mrf.mxu0
      %v5880 = vadd.f32 0.0, %v5879
      %v5881 = vpop.f32.mrf.mxu0
      %v5882 = vadd.f32 0.0, %v5881
      %v5883 = vpop.f32.mrf.mxu0
      %v5884 = vadd.f32 0.0, %v5883
      %v5885 = vpop.f32.mrf.mxu0
      %v5886 = vadd.f32 0.0, %v5885
      %5887 = vmatprep.mubr.bf16.mxu0 %v5730
      %5888 = vmatmul.mubr.bf16.gmra.mxu0 %v5729
      %v5889 = vpop.f32.mrf.mxu0
      %v5890 = vadd.f32 0.0, %v5889
      %v5891 = vpop.f32.mrf.mxu0
      %v5892 = vadd.f32 0.0, %v5891
      %v5893 = vpop.f32.mrf.mxu0
      %v5894 = vadd.f32 0.0, %v5893
      %v5895 = vpop.f32.mrf.mxu0
      %v5896 = vadd.f32 0.0, %v5895
      %5897 = vdwg.mxu0
      %v5898 = vpack.c.bf16 %v5884, %v5880
      %v5899 = vpack.c.bf16 %v5886, %v5882
      %v5900 = vpack.c.bf16 %v5894, %v5890
      %v5901 = vpack.c.bf16 %v5896, %v5892
      %5902 = vmatprep.subr.bf16.mxu0 %v1266
      %5903 = vmatpush1.bf16.msra.mxu0 %v1265
      %5904 = vmatprep.subr.bf16.mxu0 %v1264
      %5905 = vmatpush1.bf16.msra.mxu0 %v1263
      %5906 = vmatprep.subr.bf16.mxu0 %v1262
      %5907 = vmatpush1.bf16.msra.mxu0 %v1261
      %5908 = vmatprep.subr.bf16.mxu0 %v1260
      %5909 = vmatpush1.bf16.msra.mxu0 %v1259
      %5910 = vmatprep.subr.bf16.mxu0 %v1258
      %5911 = vmatpush1.bf16.msra.mxu0 %v1257
      %5912 = vmatprep.subr.bf16.mxu0 %v1256
      %5913 = vmatpush1.bf16.msra.mxu0 %v1255
      %5914 = vmatprep.subr.bf16.mxu0 %v1254
      %5915 = vmatpush1.bf16.msra.mxu0 %v1253
      %5916 = vmatprep.subr.bf16.mxu0 %v1252
      %5917 = vmatpush1.bf16.msra.mxu0 %v1251
      %5918 = vmatprep.subr.bf16.mxu0 %v1282
      %5919 = vmatpush2.bf16.msra.mxu0 %v1281
      %5920 = vmatprep.subr.bf16.mxu0 %v1280
      %5921 = vmatpush2.bf16.msra.mxu0 %v1279
      %5922 = vmatprep.subr.bf16.mxu0 %v1278
      %5923 = vmatpush2.bf16.msra.mxu0 %v1277
      %5924 = vmatprep.subr.bf16.mxu0 %v1276
      %5925 = vmatpush2.bf16.msra.mxu0 %v1275
      %5926 = vmatprep.subr.bf16.mxu0 %v1274
      %5927 = vmatpush2.bf16.msra.mxu0 %v1273
      %5928 = vmatprep.subr.bf16.mxu0 %v1272
      %5929 = vmatpush2.bf16.msra.mxu0 %v1271
      %5930 = vmatprep.subr.bf16.mxu0 %v1270
      %5931 = vmatpush2.bf16.msra.mxu0 %v1269
      %5932 = vmatprep.subr.bf16.mxu0 %v1268
      %5933 = vmatpush2.bf16.msra.mxu0 %v1267
      %5934 = vmatprep.mubr.bf16.mxu0 %v5728
      %5935 = vmatmul.mubr.bf16.gmra.mxu0 %v5727
      %v5936 = vpop.f32.mrf.mxu0
      %v5937 = vadd.f32 0.0, %v5936
      %v5938 = vpop.f32.mrf.mxu0
      %v5939 = vadd.f32 0.0, %v5938
      %v5940 = vpop.f32.mrf.mxu0
      %v5941 = vadd.f32 0.0, %v5940
      %v5942 = vpop.f32.mrf.mxu0
      %v5943 = vadd.f32 0.0, %v5942
      %5944 = vmatprep.mubr.bf16.mxu0 %v5730
      %5945 = vmatmul.mubr.bf16.gmra.mxu0 %v5729
      %v5946 = vpop.f32.mrf.mxu0
      %v5947 = vadd.f32 0.0, %v5946
      %v5948 = vpop.f32.mrf.mxu0
      %v5949 = vadd.f32 0.0, %v5948
      %v5950 = vpop.f32.mrf.mxu0
      %v5951 = vadd.f32 0.0, %v5950
      %v5952 = vpop.f32.mrf.mxu0
      %v5953 = vadd.f32 0.0, %v5952
      %5954 = vdwg.mxu0
      %v5955 = vpack.c.bf16 %v5941, %v5937
      %v5956 = vpack.c.bf16 %v5943, %v5939
      %v5957 = vpack.c.bf16 %v5951, %v5947
      %v5958 = vpack.c.bf16 %v5953, %v5949
      %5959 = vmatprep.subr.bf16.mxu0 %v1516
      %5960 = vmatpush1.bf16.msra.mxu0 %v1515
      %5961 = vmatprep.subr.bf16.mxu0 %v1514
      %5962 = vmatpush1.bf16.msra.mxu0 %v1513
      %5963 = vmatprep.subr.bf16.mxu0 %v1512
      %5964 = vmatpush1.bf16.msra.mxu0 %v1511
      %5965 = vmatprep.subr.bf16.mxu0 %v1510
      %5966 = vmatpush1.bf16.msra.mxu0 %v1509
      %5967 = vmatprep.subr.bf16.mxu0 %v1508
      %5968 = vmatpush1.bf16.msra.mxu0 %v1507
      %5969 = vmatprep.subr.bf16.mxu0 %v1506
      %5970 = vmatpush1.bf16.msra.mxu0 %v1505
      %5971 = vmatprep.subr.bf16.mxu0 %v1504
      %5972 = vmatpush1.bf16.msra.mxu0 %v1503
      %5973 = vmatprep.subr.bf16.mxu0 %v1502
      %5974 = vmatpush1.bf16.msra.mxu0 %v1501
      %5975 = vmatprep.subr.bf16.mxu0 %v1532
      %5976 = vmatpush2.bf16.msra.mxu0 %v1531
      %5977 = vmatprep.subr.bf16.mxu0 %v1530
      %5978 = vmatpush2.bf16.msra.mxu0 %v1529
      %5979 = vmatprep.subr.bf16.mxu0 %v1528
      %5980 = vmatpush2.bf16.msra.mxu0 %v1527
      %5981 = vmatprep.subr.bf16.mxu0 %v1526
      %5982 = vmatpush2.bf16.msra.mxu0 %v1525
      %5983 = vmatprep.subr.bf16.mxu0 %v1524
      %5984 = vmatpush2.bf16.msra.mxu0 %v1523
      %5985 = vmatprep.subr.bf16.mxu0 %v1522
      %5986 = vmatpush2.bf16.msra.mxu0 %v1521
      %5987 = vmatprep.subr.bf16.mxu0 %v1520
      %5988 = vmatpush2.bf16.msra.mxu0 %v1519
      %5989 = vmatprep.subr.bf16.mxu0 %v1518
      %5990 = vmatpush2.bf16.msra.mxu0 %v1517
      %5991 = vmatprep.mubr.bf16.mxu0 %v5728
      %5992 = vmatmul.mubr.bf16.gmra.mxu0 %v5727
      %v5993 = vpop.f32.mrf.mxu0
      %v5994 = vadd.f32 0.0, %v5993
      %v5995 = vpop.f32.mrf.mxu0
      %v5996 = vadd.f32 0.0, %v5995
      %v5997 = vpop.f32.mrf.mxu0
      %v5998 = vadd.f32 0.0, %v5997
      %v5999 = vpop.f32.mrf.mxu0
      %v6000 = vadd.f32 0.0, %v5999
      %6001 = vmatprep.mubr.bf16.mxu0 %v5730
      %6002 = vmatmul.mubr.bf16.gmra.mxu0 %v5729
      %v6003 = vpop.f32.mrf.mxu0
      %v6004 = vadd.f32 0.0, %v6003
      %v6005 = vpop.f32.mrf.mxu0
      %v6006 = vadd.f32 0.0, %v6005
      %v6007 = vpop.f32.mrf.mxu0
      %v6008 = vadd.f32 0.0, %v6007
      %v6009 = vpop.f32.mrf.mxu0
      %v6010 = vadd.f32 0.0, %v6009
      %6011 = vdwg.mxu0
      %v6012 = vpack.c.bf16 %v5998, %v5994
      %v6013 = vpack.c.bf16 %v6000, %v5996
      %v6014 = vpack.c.bf16 %v6008, %v6004
      %v6015 = vpack.c.bf16 %v6010, %v6006
      %6016 = vmatprep.subr.bf16.mxu0 %v1766
      %6017 = vmatpush1.bf16.msra.mxu0 %v1765
      %6018 = vmatprep.subr.bf16.mxu0 %v1764
      %6019 = vmatpush1.bf16.msra.mxu0 %v1763
      %6020 = vmatprep.subr.bf16.mxu0 %v1762
      %6021 = vmatpush1.bf16.msra.mxu0 %v1761
      %6022 = vmatprep.subr.bf16.mxu0 %v1760
      %6023 = vmatpush1.bf16.msra.mxu0 %v1759
      %6024 = vmatprep.subr.bf16.mxu0 %v1758
      %6025 = vmatpush1.bf16.msra.mxu0 %v1757
      %6026 = vmatprep.subr.bf16.mxu0 %v1756
      %6027 = vmatpush1.bf16.msra.mxu0 %v1755
      %6028 = vmatprep.subr.bf16.mxu0 %v1754
      %6029 = vmatpush1.bf16.msra.mxu0 %v1753
      %6030 = vmatprep.subr.bf16.mxu0 %v1752
      %6031 = vmatpush1.bf16.msra.mxu0 %v1751
      %6032 = vmatprep.subr.bf16.mxu0 %v1782
      %6033 = vmatpush2.bf16.msra.mxu0 %v1781
      %6034 = vmatprep.subr.bf16.mxu0 %v1780
      %6035 = vmatpush2.bf16.msra.mxu0 %v1779
      %6036 = vmatprep.subr.bf16.mxu0 %v1778
      %6037 = vmatpush2.bf16.msra.mxu0 %v1777
      %6038 = vmatprep.subr.bf16.mxu0 %v1776
      %6039 = vmatpush2.bf16.msra.mxu0 %v1775
      %6040 = vmatprep.subr.bf16.mxu0 %v1774
      %6041 = vmatpush2.bf16.msra.mxu0 %v1773
      %6042 = vmatprep.subr.bf16.mxu0 %v1772
      %6043 = vmatpush2.bf16.msra.mxu0 %v1771
      %6044 = vmatprep.subr.bf16.mxu0 %v1770
      %6045 = vmatpush2.bf16.msra.mxu0 %v1769
      %6046 = vmatprep.subr.bf16.mxu0 %v1768
      %6047 = vmatpush2.bf16.msra.mxu0 %v1767
      %6048 = vmatprep.mubr.bf16.mxu0 %v5728
      %6049 = vmatmul.mubr.bf16.gmra.mxu0 %v5727
      %v6050 = vpop.f32.mrf.mxu0
      %v6051 = vadd.f32 0.0, %v6050
      %v6052 = vpop.f32.mrf.mxu0
      %v6053 = vadd.f32 0.0, %v6052
      %v6054 = vpop.f32.mrf.mxu0
      %v6055 = vadd.f32 0.0, %v6054
      %v6056 = vpop.f32.mrf.mxu0
      %v6057 = vadd.f32 0.0, %v6056
      %6058 = vmatprep.mubr.bf16.mxu0 %v5730
      %6059 = vmatmul.mubr.bf16.gmra.mxu0 %v5729
      %v6060 = vpop.f32.mrf.mxu0
      %v6061 = vadd.f32 0.0, %v6060
      %v6062 = vpop.f32.mrf.mxu0
      %v6063 = vadd.f32 0.0, %v6062
      %v6064 = vpop.f32.mrf.mxu0
      %v6065 = vadd.f32 0.0, %v6064
      %v6066 = vpop.f32.mrf.mxu0
      %v6067 = vadd.f32 0.0, %v6066
      %6068 = vdwg.mxu0
      %v6069 = vpack.c.bf16 %v6055, %v6051
      %v6070 = vpack.c.bf16 %v6057, %v6053
      %v6071 = vpack.c.bf16 %v6065, %v6061
      %v6072 = vpack.c.bf16 %v6067, %v6063
      %6073 = vmatprep.subr.bf16.mxu0 %v2016
      %6074 = vmatpush1.bf16.msra.mxu0 %v2015
      %6075 = vmatprep.subr.bf16.mxu0 %v2014
      %6076 = vmatpush1.bf16.msra.mxu0 %v2013
      %6077 = vmatprep.subr.bf16.mxu0 %v2012
      %6078 = vmatpush1.bf16.msra.mxu0 %v2011
      %6079 = vmatprep.subr.bf16.mxu0 %v2010
      %6080 = vmatpush1.bf16.msra.mxu0 %v2009
      %6081 = vmatprep.subr.bf16.mxu0 %v2008
      %6082 = vmatpush1.bf16.msra.mxu0 %v2007
      %6083 = vmatprep.subr.bf16.mxu0 %v2006
      %6084 = vmatpush1.bf16.msra.mxu0 %v2005
      %6085 = vmatprep.subr.bf16.mxu0 %v2004
      %6086 = vmatpush1.bf16.msra.mxu0 %v2003
      %6087 = vmatprep.subr.bf16.mxu0 %v2002
      %6088 = vmatpush1.bf16.msra.mxu0 %v2001
      %6089 = vmatprep.subr.bf16.mxu0 %v2032
      %6090 = vmatpush2.bf16.msra.mxu0 %v2031
      %6091 = vmatprep.subr.bf16.mxu0 %v2030
      %6092 = vmatpush2.bf16.msra.mxu0 %v2029
      %6093 = vmatprep.subr.bf16.mxu0 %v2028
      %6094 = vmatpush2.bf16.msra.mxu0 %v2027
      %6095 = vmatprep.subr.bf16.mxu0 %v2026
      %6096 = vmatpush2.bf16.msra.mxu0 %v2025
      %6097 = vmatprep.subr.bf16.mxu0 %v2024
      %6098 = vmatpush2.bf16.msra.mxu0 %v2023
      %6099 = vmatprep.subr.bf16.mxu0 %v2022
      %6100 = vmatpush2.bf16.msra.mxu0 %v2021
      %6101 = vmatprep.subr.bf16.mxu0 %v2020
      %6102 = vmatpush2.bf16.msra.mxu0 %v2019
      %6103 = vmatprep.subr.bf16.mxu0 %v2018
      %6104 = vmatpush2.bf16.msra.mxu0 %v2017
      %6105 = vmatprep.mubr.bf16.mxu0 %v5728
      %6106 = vmatmul.mubr.bf16.gmra.mxu0 %v5727
      %v6107 = vpop.f32.mrf.mxu0
      %v6108 = vadd.f32 0.0, %v6107
      %v6109 = vpop.f32.mrf.mxu0
      %v6110 = vadd.f32 0.0, %v6109
      %v6111 = vpop.f32.mrf.mxu0
      %v6112 = vadd.f32 0.0, %v6111
      %v6113 = vpop.f32.mrf.mxu0
      %v6114 = vadd.f32 0.0, %v6113
      %6115 = vmatprep.mubr.bf16.mxu0 %v5730
      %6116 = vmatmul.mubr.bf16.gmra.mxu0 %v5729
      %v6117 = vpop.f32.mrf.mxu0
      %v6118 = vadd.f32 0.0, %v6117
      %v6119 = vpop.f32.mrf.mxu0
      %v6120 = vadd.f32 0.0, %v6119
      %v6121 = vpop.f32.mrf.mxu0
      %v6122 = vadd.f32 0.0, %v6121
      %v6123 = vpop.f32.mrf.mxu0
      %v6124 = vadd.f32 0.0, %v6123
      %6125 = vdwg.mxu0
      %v6126 = vpack.c.bf16 %v6112, %v6108
      %v6127 = vpack.c.bf16 %v6114, %v6110
      %v6128 = vpack.c.bf16 %v6122, %v6118
      %v6129 = vpack.c.bf16 %v6124, %v6120
      %6130 = vmatprep.subr.bf16.mxu0 %v2266
      %6131 = vmatpush1.bf16.msra.mxu0 %v2265
      %6132 = vmatprep.subr.bf16.mxu0 %v2264
      %6133 = vmatpush1.bf16.msra.mxu0 %v2263
      %6134 = vmatprep.subr.bf16.mxu0 %v2262
      %6135 = vmatpush1.bf16.msra.mxu0 %v2261
      %6136 = vmatprep.subr.bf16.mxu0 %v2260
      %6137 = vmatpush1.bf16.msra.mxu0 %v2259
      %6138 = vmatprep.subr.bf16.mxu0 %v2258
      %6139 = vmatpush1.bf16.msra.mxu0 %v2257
      %6140 = vmatprep.subr.bf16.mxu0 %v2256
      %6141 = vmatpush1.bf16.msra.mxu0 %v2255
      %6142 = vmatprep.subr.bf16.mxu0 %v2254
      %6143 = vmatpush1.bf16.msra.mxu0 %v2253
      %6144 = vmatprep.subr.bf16.mxu0 %v2252
      %6145 = vmatpush1.bf16.msra.mxu0 %v2251
      %6146 = vmatprep.subr.bf16.mxu0 %v2282
      %6147 = vmatpush2.bf16.msra.mxu0 %v2281
      %6148 = vmatprep.subr.bf16.mxu0 %v2280
      %6149 = vmatpush2.bf16.msra.mxu0 %v2279
      %6150 = vmatprep.subr.bf16.mxu0 %v2278
      %6151 = vmatpush2.bf16.msra.mxu0 %v2277
      %6152 = vmatprep.subr.bf16.mxu0 %v2276
      %6153 = vmatpush2.bf16.msra.mxu0 %v2275
      %6154 = vmatprep.subr.bf16.mxu0 %v2274
      %6155 = vmatpush2.bf16.msra.mxu0 %v2273
      %6156 = vmatprep.subr.bf16.mxu0 %v2272
      %6157 = vmatpush2.bf16.msra.mxu0 %v2271
      %6158 = vmatprep.subr.bf16.mxu0 %v2270
      %6159 = vmatpush2.bf16.msra.mxu0 %v2269
      %6160 = vmatprep.subr.bf16.mxu0 %v2268
      %6161 = vmatpush2.bf16.msra.mxu0 %v2267
      %6162 = vmatprep.mubr.bf16.mxu0 %v5728
      %6163 = vmatmul.mubr.bf16.gmra.mxu0 %v5727
      %v6164 = vpop.f32.mrf.mxu0
      %v6165 = vadd.f32 0.0, %v6164
      %v6166 = vpop.f32.mrf.mxu0
      %v6167 = vadd.f32 0.0, %v6166
      %v6168 = vpop.f32.mrf.mxu0
      %v6169 = vadd.f32 0.0, %v6168
      %v6170 = vpop.f32.mrf.mxu0
      %v6171 = vadd.f32 0.0, %v6170
      %6172 = vmatprep.mubr.bf16.mxu0 %v5730
      %6173 = vmatmul.mubr.bf16.gmra.mxu0 %v5729
      %v6174 = vpop.f32.mrf.mxu0
      %v6175 = vadd.f32 0.0, %v6174
      %v6176 = vpop.f32.mrf.mxu0
      %v6177 = vadd.f32 0.0, %v6176
      %v6178 = vpop.f32.mrf.mxu0
      %v6179 = vadd.f32 0.0, %v6178
      %v6180 = vpop.f32.mrf.mxu0
      %v6181 = vadd.f32 0.0, %v6180
      %6182 = vdwg.mxu0
      %v6183 = vpack.c.bf16 %v6169, %v6165
      %v6184 = vpack.c.bf16 %v6171, %v6167
      %v6185 = vpack.c.bf16 %v6179, %v6175
      %v6186 = vpack.c.bf16 %v6181, %v6177
      %6187 = vmatprep.subr.bf16.mxu0 %v2516
      %6188 = vmatpush1.bf16.msra.mxu0 %v2515
      %6189 = vmatprep.subr.bf16.mxu0 %v2514
      %6190 = vmatpush1.bf16.msra.mxu0 %v2513
      %6191 = vmatprep.subr.bf16.mxu0 %v2512
      %6192 = vmatpush1.bf16.msra.mxu0 %v2511
      %6193 = vmatprep.subr.bf16.mxu0 %v2510
      %6194 = vmatpush1.bf16.msra.mxu0 %v2509
      %6195 = vmatprep.subr.bf16.mxu0 %v2508
      %6196 = vmatpush1.bf16.msra.mxu0 %v2507
      %6197 = vmatprep.subr.bf16.mxu0 %v2506
      %6198 = vmatpush1.bf16.msra.mxu0 %v2505
      %6199 = vmatprep.subr.bf16.mxu0 %v2504
      %6200 = vmatpush1.bf16.msra.mxu0 %v2503
      %6201 = vmatprep.subr.bf16.mxu0 %v2502
      %6202 = vmatpush1.bf16.msra.mxu0 %v2501
      %6203 = vmatprep.subr.bf16.mxu0 %v2532
      %6204 = vmatpush2.bf16.msra.mxu0 %v2531
      %6205 = vmatprep.subr.bf16.mxu0 %v2530
      %6206 = vmatpush2.bf16.msra.mxu0 %v2529
      %6207 = vmatprep.subr.bf16.mxu0 %v2528
      %6208 = vmatpush2.bf16.msra.mxu0 %v2527
      %6209 = vmatprep.subr.bf16.mxu0 %v2526
      %6210 = vmatpush2.bf16.msra.mxu0 %v2525
      %6211 = vmatprep.subr.bf16.mxu0 %v2524
      %6212 = vmatpush2.bf16.msra.mxu0 %v2523
      %6213 = vmatprep.subr.bf16.mxu0 %v2522
      %6214 = vmatpush2.bf16.msra.mxu0 %v2521
      %6215 = vmatprep.subr.bf16.mxu0 %v2520
      %6216 = vmatpush2.bf16.msra.mxu0 %v2519
      %6217 = vmatprep.subr.bf16.mxu0 %v2518
      %6218 = vmatpush2.bf16.msra.mxu0 %v2517
      %6219 = vmatprep.mubr.bf16.mxu0 %v5728
      %6220 = vmatmul.mubr.bf16.gmra.mxu0 %v5727
      %v6221 = vpop.f32.mrf.mxu0
      %v6222 = vadd.f32 0.0, %v6221
      %v6223 = vpop.f32.mrf.mxu0
      %v6224 = vadd.f32 0.0, %v6223
      %v6225 = vpop.f32.mrf.mxu0
      %v6226 = vadd.f32 0.0, %v6225
      %v6227 = vpop.f32.mrf.mxu0
      %v6228 = vadd.f32 0.0, %v6227
      %6229 = vmatprep.mubr.bf16.mxu0 %v5730
      %6230 = vmatmul.mubr.bf16.gmra.mxu0 %v5729
      %v6231 = vpop.f32.mrf.mxu0
      %v6232 = vadd.f32 0.0, %v6231
      %v6233 = vpop.f32.mrf.mxu0
      %v6234 = vadd.f32 0.0, %v6233
      %v6235 = vpop.f32.mrf.mxu0
      %v6236 = vadd.f32 0.0, %v6235
      %v6237 = vpop.f32.mrf.mxu0
      %v6238 = vadd.f32 0.0, %v6237
      %6239 = vdwg.mxu0
      %v6240 = vpack.c.bf16 %v6226, %v6222
      %v6241 = vpack.c.bf16 %v6228, %v6224
      %v6242 = vpack.c.bf16 %v6236, %v6232
      %v6243 = vpack.c.bf16 %v6238, %v6234
      %s6244 = scalar_lea.vmem %s4, 96
      %v6245 = vld [vmem:[%s6244] sm:$0xff]
      %v6246 = vld [vmem:[%s6244 + $0x8] sm:$0xf]
      %v6247 = vld [vmem:[%s6244 + $0xc] sm:$0xff]
      %v6248 = vld [vmem:[%s6244 + $0x14] sm:$0xf]
      %v6249 = vld [vmem:[%s6244 + $0x18] sm:$0xff]
      %v6250 = vld [vmem:[%s6244 + $0x20] sm:$0xf]
      %v6251 = vld [vmem:[%s6244 + $0x24] sm:$0xff]
      %v6252 = vld [vmem:[%s6244 + $0x2c] sm:$0xf]
      %s6253 = scalar_lea.vmem %s5, 64
      %v6254 = vld [vmem:[%s6253] sm:$0xff]
      %v6255 = vld [vmem:[%s6253 + $0x8] sm:$0xff]
      %v6256 = vld [vmem:[%s6253 + $0x10] sm:$0xff]
      %v6257 = vld [vmem:[%s6253 + $0x18] sm:$0xff]
      %6259 = vset.pattern.permute.xlu0 0
      %6260 = vperm.xlu0 %6259, %v6254
      %v6261 = vpop.permute.xlu0 %6260
      %6264 = vset.pattern.permute.xlu0 0
      %6265 = vperm.xlu0 %6264, %v6255
      %v6266 = vpop.permute.xlu0 %6265
      %6269 = vset.pattern.permute.xlu0 0
      %6270 = vperm.xlu0 %6269, %v6256
      %v6271 = vpop.permute.xlu0 %6270
      %6274 = vset.pattern.permute.xlu0 0
      %6275 = vperm.xlu0 %6274, %v6257
      %v6276 = vpop.permute.xlu0 %6275
      %v6286 = vunpack.c.l.b16 %v6245
      %v6287 = vunpack.c.h.b16 %v6245
      %v6288 = vunpack.c.l.b16 %v6246
      %v6289 = vunpack.c.l.b16 %v6247
      %v6290 = vunpack.c.h.b16 %v6247
      %v6291 = vunpack.c.l.b16 %v6248
      %v6292 = vunpack.c.l.b16 %v6249
      %v6293 = vunpack.c.h.b16 %v6249
      %v6294 = vunpack.c.l.b16 %v6250
      %v6295 = vunpack.c.l.b16 %v6251
      %v6296 = vunpack.c.h.b16 %v6251
      %v6297 = vunpack.c.l.b16 %v6252
      %v6298 = vpack.c.b16 %v6289, %v6286
      %v6299 = vpack.c.b16 %v6290, %v6287
      %v6300 = vpack.c.b16 %v6291, %v6288
      %v6301 = vpack.c.b16 %v6295, %v6292
      %v6302 = vpack.c.b16 %v6296, %v6293
      %v6303 = vpack.c.b16 %v6297, %v6294
      %v6309 = vsel %vm2684, %v6300, 0
      %v6312 = vsel %vm2684, %v6303, 0
      %6314 = vmatprep.subr.bf16.mxu0 %v5958
      %6315 = vmatpush1.bf16.msra.mxu0 %v5957
      %6316 = vmatprep.subr.bf16.mxu0 %v5956
      %6317 = vmatpush1.bf16.msra.mxu0 %v5955
      %6318 = vmatprep.subr.bf16.mxu0 %v5901
      %6319 = vmatpush1.bf16.msra.mxu0 %v5900
      %6320 = vmatprep.subr.bf16.mxu0 %v5899
      %6321 = vmatpush1.bf16.msra.mxu0 %v5898
      %6322 = vmatprep.subr.bf16.mxu0 %v5844
      %6323 = vmatpush1.bf16.msra.mxu0 %v5843
      %6324 = vmatprep.subr.bf16.mxu0 %v5842
      %6325 = vmatpush1.bf16.msra.mxu0 %v5841
      %6326 = vmatprep.subr.bf16.mxu0 %v5787
      %6327 = vmatpush1.bf16.msra.mxu0 %v5786
      %6328 = vmatprep.subr.bf16.mxu0 %v5785
      %6329 = vmatpush1.bf16.msra.mxu0 %v5784
      %6330 = vmatprep.subr.bf16.mxu0 %v6186
      %6331 = vmatpush2.bf16.msra.mxu0 %v6185
      %6332 = vmatprep.subr.bf16.mxu0 %v6184
      %6333 = vmatpush2.bf16.msra.mxu0 %v6183
      %6334 = vmatprep.subr.bf16.mxu0 %v6129
      %6335 = vmatpush2.bf16.msra.mxu0 %v6128
      %6336 = vmatprep.subr.bf16.mxu0 %v6127
      %6337 = vmatpush2.bf16.msra.mxu0 %v6126
      %6338 = vmatprep.subr.bf16.mxu0 %v6072
      %6339 = vmatpush2.bf16.msra.mxu0 %v6071
      %6340 = vmatprep.subr.bf16.mxu0 %v6070
      %6341 = vmatpush2.bf16.msra.mxu0 %v6069
      %6342 = vmatprep.subr.bf16.mxu0 %v6015
      %6343 = vmatpush2.bf16.msra.mxu0 %v6014
      %6344 = vmatprep.subr.bf16.mxu0 %v6013
      %6345 = vmatpush2.bf16.msra.mxu0 %v6012
      %6346 = vmatprep.mubr.bf16.mxu0 %v6299
      %6347 = vmatmul.mubr.bf16.gmra.mxu0 %v6298
      %v6348 = vpop.f32.mrf.mxu0
      %v6349 = vadd.f32 %v6261, %v6348
      %v6350 = vpop.f32.mrf.mxu0
      %v6351 = vadd.f32 %v6261, %v6350
      %v6352 = vpop.f32.mrf.mxu0
      %v6353 = vadd.f32 %v6266, %v6352
      %v6354 = vpop.f32.mrf.mxu0
      %v6355 = vadd.f32 %v6266, %v6354
      %6356 = vmatprep.mubr.bf16.mxu0 %v6302
      %6357 = vmatmul.mubr.bf16.gmra.mxu0 %v6301
      %v6358 = vpop.f32.mrf.mxu0
      %v6359 = vadd.f32 %v6271, %v6358
      %v6360 = vpop.f32.mrf.mxu0
      %v6361 = vadd.f32 %v6271, %v6360
      %v6362 = vpop.f32.mrf.mxu0
      %v6363 = vadd.f32 %v6276, %v6362
      %v6364 = vpop.f32.mrf.mxu0
      %v6365 = vadd.f32 %v6276, %v6364
      %6366 = vdwg.mxu0
      %6367 = vmatprep.subr.bf16.mxu0 0
      %6368 = vmatpush1.bf16.msra.mxu0 0
      %6369 = vmatprep.subr.bf16.mxu0 0
      %6370 = vmatpush1.bf16.msra.mxu0 0
      %6371 = vmatprep.subr.bf16.mxu0 0
      %6372 = vmatpush1.bf16.msra.mxu0 0
      %6373 = vmatprep.subr.bf16.mxu0 0
      %6374 = vmatpush1.bf16.msra.mxu0 0
      %6375 = vmatprep.subr.bf16.mxu0 0
      %6376 = vmatpush1.bf16.msra.mxu0 0
      %6377 = vmatprep.subr.bf16.mxu0 0
      %6378 = vmatpush1.bf16.msra.mxu0 0
      %6379 = vmatprep.subr.bf16.mxu0 %v6243
      %6380 = vmatpush1.bf16.msra.mxu0 %v6242
      %6381 = vmatprep.subr.bf16.mxu0 %v6241
      %6382 = vmatpush1.bf16.msra.mxu0 %v6240
      %6383 = vmatprep.subr.bf16.mxu0 0
      %6384 = vmatpush2.bf16.msra.mxu0 0
      %6385 = vmatprep.subr.bf16.mxu0 0
      %6386 = vmatpush2.bf16.msra.mxu0 0
      %6387 = vmatprep.subr.bf16.mxu0 0
      %6388 = vmatpush2.bf16.msra.mxu0 0
      %6389 = vmatprep.subr.bf16.mxu0 0
      %6390 = vmatpush2.bf16.msra.mxu0 0
      %6391 = vmatprep.subr.bf16.mxu0 0
      %6392 = vmatpush2.bf16.msra.mxu0 0
      %6393 = vmatprep.subr.bf16.mxu0 0
      %6394 = vmatpush2.bf16.msra.mxu0 0
      %6395 = vmatprep.subr.bf16.mxu0 0
      %6396 = vmatpush2.bf16.msra.mxu0 0
      %6397 = vmatprep.subr.bf16.mxu0 0
      %6398 = vmatpush2.bf16.msra.mxu0 0
      %6399 = vmatprep.mubr.bf16.mxu0 0
      %6400 = vmatmul.mubr.bf16.gmra.mxu0 %v6309
      %v6401 = vpop.f32.mrf.mxu0
      %v6402 = vadd.f32 %v6349, %v6401
      %v6403 = vpop.f32.mrf.mxu0
      %v6404 = vadd.f32 %v6351, %v6403
      %v6405 = vpop.f32.mrf.mxu0
      %v6406 = vadd.f32 %v6353, %v6405
      %v6407 = vpop.f32.mrf.mxu0
      %v6408 = vadd.f32 %v6355, %v6407
      %6409 = vmatprep.mubr.bf16.mxu0 0
      %6410 = vmatmul.mubr.bf16.gmra.mxu0 %v6312
      %v6411 = vpop.f32.mrf.mxu0
      %v6412 = vadd.f32 %v6359, %v6411
      %v6413 = vpop.f32.mrf.mxu0
      %v6414 = vadd.f32 %v6361, %v6413
      %v6415 = vpop.f32.mrf.mxu0
      %v6416 = vadd.f32 %v6363, %v6415
      %v6417 = vpop.f32.mrf.mxu0
      %v6418 = vadd.f32 %v6365, %v6417
      %6419 = vdwg.mxu0
      %v6420 = vmax.f32 %v6402, 0.0
      %v6421 = vmax.f32 %v6404, 0.0
      %v6422 = vmax.f32 %v6406, 0.0
      %v6423 = vmax.f32 %v6408, 0.0
      %v6424 = vmax.f32 %v6412, 0.0
      %v6425 = vmax.f32 %v6414, 0.0
      %v6426 = vmax.f32 %v6416, 0.0
      %v6427 = vmax.f32 %v6418, 0.0
      %6428 = vst [vmem:[%s359] sm:$0xff] %v6420
      %6429 = vst [vmem:[%s359 + $0x8] sm:$0xff] %v6421
      %6430 = vst [vmem:[%s359 + $0x10] sm:$0xff] %v6422
      %6431 = vst [vmem:[%s359 + $0x18] sm:$0xff] %v6423
      %6432 = vst [vmem:[%s359 + $0x20] sm:$0xff] %v6424
      %6433 = vst [vmem:[%s359 + $0x28] sm:$0xff] %v6425
      %6434 = vst [vmem:[%s359 + $0x30] sm:$0xff] %v6426
      %6435 = vst [vmem:[%s359 + $0x38] sm:$0xff] %v6427
      %p6436 = scmp.lt.s32.totalorder %s21, 1
      %s6437 = scalar_select %p6436, %s21, 1
      %s6438 = smul.addr %s6437, 8
      %s6439 = smul.addr %s6438, 8
      %s6440 = scalar_lea.vmem %s10, %s6439
      // Predicated region
      $region61: #{dgcm_forward.1} parent=59 // pred_check
        %p6441 = pneg %p254
      $region62: #{dgcm_forward.1} parent=59 // pred_check_branch
        %6443 = sbr.rel (%p6441) target = $region64
      $region63: #{dgcm_forward.1} parent=59 // pred_region
        _
      $region64: #{dgcm_forward.1} parent=59 // pred_fallthru
        _
    $region60: #{dgcm_forward.1} parent=5 // pred_fallthru
      _
    %p6444 = scmp.le.s32.totalorder 2, %s16
    // Predicated region
    $region65: #{dgcm_forward.1} parent=5 // pred_check
      %p6445 = pneg %p6444
    $region66: #{dgcm_forward.1} parent=5 // pred_check_branch
      %6447 = sbr.rel (%p6445) target = $region68
    $region67: #{dgcm_forward.1} parent=5 // pred_region
      %s6448 = ssub.s32 %s16, 2
      // Predicated region
      $region69: #{dgcm_forward.1} parent=67 // pred_check
        %p6449 = pneg %p260
      $region70: #{dgcm_forward.1} parent=67 // pred_check_branch
        %6451 = sbr.rel (%p6449) target = $region72
      $region71: #{dgcm_forward.1} parent=67 // pred_region
        %p6452 = scmp.lt.s32.totalorder %s22, 1
        %s6453 = scalar_select %p6452, %s22, 1
        %s6454 = smul.addr %s6453, 8
        %s6455 = smul.addr %s6454, 8
        %s6456 = scalar_lea.vmem %s10, %s6455
      $region72: #{dgcm_forward.1} parent=67 // pred_fallthru
        _
    $region68: #{dgcm_forward.1} parent=5 // pred_fallthru
      _
  $region6: #{dgcm_forward.1} parent=0 // loop_footer
    %s20 = sadd.s32 1, %s16
  $region7: #{dgcm_forward.1} parent=0 // loop_footer_branch
    %15 = sbr.rel target = $region3
  $region8: #{dgcm_forward.1} parent=0 // loop_exit
    _

</llo_original>
